<compile_context>
chip_gen: v7x
topology: tpu7x:2x2x1
jax: 0.10.0
libtpu: 0.0.40
codegen_flags: <defaults>
</compile_context>

<pallas_src>
import functools

import jax
import jax.numpy as jnp
from jax import lax
from jax.experimental import pallas as pl
from jax.experimental.pallas import tpu as pltpu

# Packed per-channel parameter columns:
# 0:s0 1:sh0 2:b0 | 3:sp 4:shp 5:bp | 6:s1 7:b1 | 8:s2 9:b2 | 10:s3 11:b3
_NPAR = 12


# --------------------------- fused resup kernel ---------------------------
def _resup_kernel(*refs, H, W, Cin_p, Cout_p, upsample):
    """One whole resup block for one batch element, activations = (C, H*W)."""
    if upsample:
        (x_ref, y_ref, e_ref, par_ref, shb_ref,
         w0_ref, wp_ref, w123_ref, o_ref) = refs
    else:
        (x_ref, y_ref, par_ref, shb_ref,
         w0_ref, wp_ref, w123_ref, o_ref) = refs
    HW = H * W
    f32, bf16 = jnp.float32, jnp.bfloat16

    def pv(j, c):            # packed per-channel param column j -> (c, 1) f32
        return par_ref[0:c, j:j + 1]

    # ---- full-res input x (fused nearest-2x upsample when requested) ----
    if upsample:
        # One-hot (HW/4, HW) expansion matmul: exact copy of bf16 values.
        x = jnp.dot(x_ref[0], e_ref[...], preferred_element_type=f32)
    else:
        x = x_ref[0].astype(f32)
    ybr = y_ref[0].astype(f32)                     # (Cout_p, HW) skip input

    # ---- 3x3 boundary masks, built once per step from an in-kernel iota ----
    idx = lax.broadcasted_iota(jnp.int32, (1, HW), 1)
    if (W & (W - 1)) == 0:
        col = jnp.bitwise_and(idx, W - 1)
    else:
        col = idx % W  # TODO(synk): non-pow-2 widths use vector i32 mod.
    hcond = [idx >= W, None, idx < (H - 1) * W]    # h>=1 / none / h<=H-2
    wcond = [col >= 1, None, col <= W - 2]         # w>=1 / none / w<=W-2
    masks = []
    for dy in range(3):
        for dx in range(3):
            m = hcond[dy]
            if wcond[dx] is not None:
                m = wcond[dx] if m is None else (m & wcond[dx])
            masks.append(None if m is None else m.astype(f32))

    def conv3x3(act, wsel, b_col):
        # Per-dy im2col grouping: 3 matmuls (Cout_p, 3C) x (3C, HW).  Taps are
        # lane rotations (XLU) + boundary-mask multiplies; patches cast to
        # bf16 right before the MXU, accumulation stays f32.
        acc = None
        for dy in range(3):
            taps = []
            for dx in range(3):
                off = (dy - 1) * W + (dx - 1)
                t = act if off == 0 else pltpu.roll(act, shift=(-off) % HW,
                                                    axis=1)
                m = masks[dy * 3 + dx]
                if m is not None:
                    t = t * m
                taps.append(t)
            patch = jnp.concatenate(taps, axis=0).astype(bf16)
            part = jnp.dot(wsel(dy), patch, preferred_element_type=f32)
            acc = part if acc is None else acc + part
        return acc + b_col

    # conv_0: BN(Cin) -> ReLU -> 3x3 ; skip connection y fused in.
    bn0 = jnp.maximum(x * pv(0, Cin_p) + pv(1, Cin_p), 0.0)
    xb = conv3x3(bn0, lambda dy: w0_ref[dy], pv(2, Cout_p)) + ybr

    # proj: BN(Cin) -> 1x1 (no ReLU).
    bnp = (x * pv(3, Cin_p) + pv(4, Cin_p)).astype(bf16)
    proj = jnp.dot(wp_ref[...], bnp, preferred_element_type=f32) + pv(5, Cout_p)

    # conv_1..conv_3: style Linear folded into the per-batch BN shift (shb).
    def styled(t, act):
        s = pv(6 + 2 * (t - 1), Cout_p)
        b = pv(7 + 2 * (t - 1), Cout_p)
        sh = shb_ref[0, :, t - 1:t]                # (Cout_p, 1) per-batch
        a = jnp.maximum(act * s + sh, 0.0)
        return conv3x3(a, lambda dy: w123_ref[3 * (t - 1) + dy], b)

    x1 = proj + styled(1, xb)
    out = x1 + styled(3, styled(2, x1))
    o_ref[0] = out.astype(o_ref.dtype)


# ------------------------------ host wrappers ------------------------------
def _round_up(n, m):
    return (n + m - 1) // m * m


def _upsample_matrix(Hs, Ws, dtype):
    """(Hs*Ws, 4*Hs*Ws) one-hot nearest-neighbour 2x expansion matrix."""
    H, W = 2 * Hs, 2 * Ws
    j = jnp.arange(H * W, dtype=jnp.int32)
    src = (j // W // 2) * Ws + (j % W) // 2
    return (jnp.arange(Hs * Ws, dtype=jnp.int32)[:, None] == src[None, :]
            ).astype(dtype)


def _pack_params(P, style, Cin_p, Cout_p, act_dtype):
    """Pack small per-channel params; fold the style Linears into BN shifts."""
    Cmax_p = max(Cin_p, Cout_p)

    def padc(v):
        return jnp.pad(v, (0, Cmax_p - v.shape[0]))

    s0, sh0, w0, b0 = P["conv0"]
    sp, shp, wp, bp = P["proj"]
    cols = [s0, sh0, b0, sp, shp, bp]
    shb_cols = []
    for t in (1, 2, 3):
        Wl, bl, s, sh, w, b = P[f"conv{t}"]
        cols += [s, b]
        # BN(x + feat) = x*scale + (shift + feat*scale)
        feat = style @ Wl.T + bl                            # (B, Cout)
        shb_t = sh[None, :] + feat * s[None, :]
        shb_cols.append(jnp.pad(shb_t,
                                ((0, 0), (0, Cout_p - shb_t.shape[1]))))
    par = jnp.stack([padc(c) for c in cols], axis=1).astype(jnp.float32)
    shb = jnp.stack(shb_cols, axis=2).astype(jnp.float32)   # (B, Cout_p, 3)

    def w3(w, cin_p, cout_p):
        cout, cin, _, _ = w.shape
        w = jnp.pad(w, ((0, cout_p - cout), (0, cin_p - cin), (0, 0), (0, 0)))
        # (cout_p, cin_p, 3, 3) -> (dy, cout_p, dx, cin_p) -> (3, cout_p, 3cin_p)
        return jnp.transpose(w, (2, 0, 3, 1)).reshape(3, cout_p, 3 * cin_p)

    w0k = w3(w0, Cin_p, Cout_p).astype(act_dtype)
    wpk = jnp.pad(wp[:, :, 0, 0],
                  ((0, Cout_p - wp.shape[0]), (0, Cin_p - wp.shape[1]))
                  ).astype(act_dtype)
    # convs 1..3, dy-grouped, stacked along the leading axis: row 3*(t-1)+dy.
    w123 = jnp.concatenate([w3(P[f"conv{t}"][4], Cout_p, Cout_p)
                            for t in (1, 2, 3)], axis=0).astype(act_dtype)
    return par, shb, w0k, wpk, w123


def resup_apply(x, y, style, P, H, W, *, upsample, act_dtype=jnp.bfloat16):
    """One fused resup block (optionally with the preceding nearest-2x up).

    x: (B, Cin_p, HW//4 if upsample else HW) kernel-layout activations,
    y: (B, Cout_p, HW) kernel-layout skip, style: (B, Cstyle) f32.
    Returns (B, Cout_p, HW) in kernel layout (stays resident between blocks).
    """
    B, Cin_p, HWx = x.shape
    _, Cout_p, HW = y.shape
    assert HW == H * W and HWx == (HW // 4 if upsample else HW)
    Cmax_p = max(Cin_p, Cout_p)

    par, shb, w0k, wpk, w123 = _pack_params(P, style, Cin_p, Cout_p, act_dtype)

    args = [x, y]
    in_specs = [pl.BlockSpec((1, Cin_p, HWx), lambda b: (b, 0, 0)),
                pl.BlockSpec((1, Cout_p, HW), lambda b: (b, 0, 0))]
    if upsample:
        args.append(_upsample_matrix(H // 2, W // 2, act_dtype))
        in_specs.append(pl.BlockSpec((HWx, HW), lambda b: (0, 0)))
    args += [par, shb, w0k, wpk, w123]
    in_specs += [
        pl.BlockSpec((Cmax_p, _NPAR), lambda b: (0, 0)),
        pl.BlockSpec((1, Cout_p, 3), lambda b: (b, 0, 0)),
        pl.BlockSpec((3, Cout_p, 3 * Cin_p), lambda b: (0, 0, 0)),
        pl.BlockSpec((Cout_p, Cin_p), lambda b: (0, 0)),
        pl.BlockSpec((9, Cout_p, 3 * Cout_p), lambda b: (0, 0, 0)),
    ]

    # VMEM budget: double-buffered activations + grid-invariant constants +
    # rough in-kernel temporaries, with headroom, clamped to [16, 64] MiB.
    bpe = jnp.dtype(act_dtype).itemsize
    est = (2 * (Cin_p * HWx + 2 * Cout_p * HW) * bpe
           + (HWx * HW * bpe if upsample else 0)
           + (w0k.size + wpk.size + w123.size) * bpe
           + (Cmax_p + 2 * Cout_p) * 128 * 4
           + (9 * HW + 14 * Cmax_p * HW) * 4)
    vmem_limit = int(min(max(4 * est, 16 * 2 ** 20), 64 * 2 ** 20))

    return pl.pallas_call(
        functools.partial(_resup_kernel, H=H, W=W, Cin_p=Cin_p,
                          Cout_p=Cout_p, upsample=upsample),
        out_shape=jax.ShapeDtypeStruct((B, Cout_p, HW), act_dtype),
        grid=(B,),
        in_specs=in_specs,
        out_specs=pl.BlockSpec((1, Cout_p, HW), lambda b: (b, 0, 0)),
        compiler_params=pltpu.CompilerParams(
            dimension_semantics=("parallel",),
            vmem_limit_bytes=vmem_limit),
    )(*args)


def _to_kernel_layout(a, c_p, act_dtype):
    """NCHW f32 -> channel-padded, lane-dense (B, C_p, H*W) in act_dtype."""
    B, C, H, W = a.shape
    a = jnp.pad(a, ((0, 0), (0, c_p - C), (0, 0), (0, 0)))
    return a.reshape(B, c_p, H * W).astype(act_dtype)


def upsample_forward(style, xd, params, act_dtype=jnp.bfloat16):
    """Pallas implementation of upsample.forward(style, xd) (NCHW tensors)."""
    style = style.astype(jnp.float32)
    L = len(params)

    def chans(P):
        return P["conv0"][0].shape[0], P["conv0"][3].shape[0]

    # Deepest block: x = y = xd[-1], no upsampling.
    Cin, Cout = chans(params[-1])
    _, _, H, W = xd[-1].shape
    x = resup_apply(_to_kernel_layout(xd[-1], _round_up(Cin, 8), act_dtype),
                    _to_kernel_layout(xd[-1], _round_up(Cout, 8), act_dtype),
                    style, params[-1], H, W, upsample=False,
                    act_dtype=act_dtype)
    # Remaining blocks: the nearest-2x upsample is fused into the consuming
    # kernel; x stays low-res, bf16 and channel-padded between pallas_calls.
    for n in range(L - 2, -1, -1):
        Cin, Cout = chans(params[n])
        _, _, H, W = xd[n].shape
        y = _to_kernel_layout(xd[n], _round_up(Cout, 8), act_dtype)
        x = resup_apply(x, y, style, params[n], H, W, upsample=True,
                        act_dtype=act_dtype)
    # Back to NCHW f32, dropping the channel padding (only once, at the end).
    C0 = params[0]["conv0"][3].shape[0]
    B, C0_p, _ = x.shape
    _, _, H, W = xd[0].shape
    return x.reshape(B, C0_p, H, W)[:, :C0].astype(jnp.float32)


# ---------------- pure-JAX reference (for a sanity check) ----------------
def _nearest_up2(x):
    B, C, H, W = x.shape
    x = jnp.broadcast_to(x[:, :, :, None, :, None], (B, C, H, 2, W, 2))
    return x.reshape(B, C, 2 * H, 2 * W)


def _ref_normconv(x, scale, shift, w, b, K, relu):
    y = x * scale.reshape(1, -1, 1, 1) + shift.reshape(1, -1, 1, 1)
    if relu:
        y = jnp.maximum(y, 0.0)
    out = lax.conv_general_dilated(
        y, w, window_strides=(1, 1), padding=[(K // 2, K // 2)] * 2,
        dimension_numbers=("NCHW", "OIHW", "NCHW"),
        precision=lax.Precision.HIGHEST)
    return out + b.reshape(1, -1, 1, 1)


def _ref_normconvstyle(style, x, p):
    Wl, bl, s, sh, w, b = p
    feat = style @ Wl.T + bl
    return _ref_normconv(x + feat[:, :, None, None], s, sh, w, b, 3, True)


def _ref_resup(x, y, style, P):
    xb = _ref_normconv(x, *P["conv0"], K=3, relu=True) + y
    x1 = _ref_normconv(x, *P["proj"], K=1, relu=False) \
        + _ref_normconvstyle(style, xb, P["conv1"])
    return x1 + _ref_normconvstyle(style, _ref_normconvstyle(style, x1,
                                                             P["conv2"]),
                                   P["conv3"])


def _ref_upsample(style, xd, params):
    x = _ref_resup(xd[-1], xd[-1], style, params[-1])
    for n in range(len(params) - 2, -1, -1):
        x = _nearest_up2(x)
        x = _ref_resup(x, xd[n], style, params[n])
    return x


# ---------------- deterministic parameter construction ----------------
def _make_bn(key, C, eps=1e-5):
    k1, k2, k3, k4 = jax.random.split(key, 4)
    gamma = 1.0 + 0.1 * jax.random.normal(k1, (C,), jnp.float32)
    beta = 0.1 * jax.random.normal(k2, (C,), jnp.float32)
    mean = 0.1 * jax.random.normal(k3, (C,), jnp.float32)
    var = jax.random.uniform(k4, (C,), jnp.float32, 0.5, 1.5)
    scale = gamma / jnp.sqrt(var + eps)
    shift = beta - mean * scale
    return scale, shift


def _make_conv(key, Cin, Cout, K):
    k1, k2 = jax.random.split(key)
    w = 0.1 * jax.random.normal(k1, (Cout, Cin, K, K), jnp.float32)
    b = 0.1 * jax.random.normal(k2, (Cout,), jnp.float32)
    return w, b


def _make_linear(key, Cin, Cout):
    k1, k2 = jax.random.split(key)
    Wl = 0.1 * jax.random.normal(k1, (Cout, Cin), jnp.float32)
    b = 0.1 * jax.random.normal(k2, (Cout,), jnp.float32)
    return Wl, b


def make_resup_params(key, in_ch, out_ch, style_ch):
    ks = jax.random.split(key, 13)
    P = {}
    s, sh = _make_bn(ks[0], in_ch)
    w, b = _make_conv(ks[1], in_ch, out_ch, 3)
    P["conv0"] = (s, sh, w, b)
    s, sh = _make_bn(ks[2], in_ch)
    w, b = _make_conv(ks[3], in_ch, out_ch, 1)
    P["proj"] = (s, sh, w, b)
    for i, t in enumerate((1, 2, 3)):
        Wl, bl = _make_linear(ks[4 + 3 * i], style_ch, out_ch)
        s, sh = _make_bn(ks[5 + 3 * i], out_ch)
        w, b = _make_conv(ks[6 + 3 * i], out_ch, out_ch, 3)
        P[f"conv{t}"] = (Wl, bl, s, sh, w, b)
    return P


if __name__ == "__main__":
    key = jax.random.PRNGKey(0)
    # Small decoder config; as in the reference model nbase[-1] == nbase[-2]
    # and the style width is nbase[-1].
    nbase = [4, 8, 8]
    B = 2
    H1, W1 = 16, 16                       # deepest feature-map resolution
    L = len(nbase) - 1                    # number of res_up blocks

    keys = jax.random.split(key, 2 + L)
    pkeys = jax.random.split(keys[0], L)
    params = [make_resup_params(pkeys[n], nbase[n + 1], nbase[n], nbase[-1])
              for n in range(L)]

    style = jax.random.normal(keys[1], (B, nbase[-1]), jnp.float32)
    xd = []
    for n in range(L):
        f = 2 ** (L - 1 - n)
        xd.append(jax.random.normal(keys[2 + n],
                                    (B, nbase[n], H1 * f, W1 * f),
                                    jnp.float32))

    fwd = jax.jit(upsample_forward)
    out = jax.block_until_ready(fwd(style, xd, params))

    ref = _ref_upsample(style, xd, params)
    expected = (B, nbase[0], H1 * 2 ** (L - 1), W1 * 2 ** (L - 1))
    assert out.shape == expected, out.shape
    assert ref.shape == expected, ref.shape
    err = float(jnp.max(jnp.abs(out - ref)))
    # bf16 storage with f32 accumulation vs. an f32 HIGHEST-precision ref.
    assert jnp.allclose(out, ref, atol=5e-2, rtol=5e-2), err

    print("KERNEL_OK")
</pallas_src>

<mosaic_0001>
module attributes {stable_mosaic.version = 11 : i64} {
  func.func @_resup_kernel(%arg0: i32, %arg1: memref<1x8x256xbf16, #tpu.memory_space<vmem>>, %arg2: memref<1x8x256xbf16, #tpu.memory_space<vmem>>, %arg3: memref<8x12xf32, #tpu.memory_space<vmem>>, %arg4: memref<1x8x3xf32, #tpu.memory_space<vmem>>, %arg5: memref<3x8x24xbf16, #tpu.memory_space<vmem>>, %arg6: memref<8x8xbf16, #tpu.memory_space<vmem>>, %arg7: memref<9x8x24xbf16, #tpu.memory_space<vmem>>, %arg8: memref<1x8x256xbf16, #tpu.memory_space<vmem>>) attributes {dimension_semantics = [#tpu.dimension_semantics<parallel>], iteration_bounds = array<i64: 2>, scalar_prefetch = 0 : i64, scratch_operands = 0 : i64, tpu.core_type = #tpu.core_type<tc>, window_params = [{transform_indices = @transform_0, window_bounds = array<i64: 1, 8, 256>}, {transform_indices = @transform_1, window_bounds = array<i64: 1, 8, 256>}, {pipeline_mode = #tpu.pipeline_mode<synchronous>, transform_indices = @transform_2, window_bounds = array<i64: 8, 12>}, {transform_indices = @transform_3, window_bounds = array<i64: 1, 8, 3>}, {pipeline_mode = #tpu.pipeline_mode<synchronous>, transform_indices = @transform_4, window_bounds = array<i64: 3, 8, 24>}, {pipeline_mode = #tpu.pipeline_mode<synchronous>, transform_indices = @transform_5, window_bounds = array<i64: 8, 8>}, {pipeline_mode = #tpu.pipeline_mode<synchronous>, transform_indices = @transform_6, window_bounds = array<i64: 9, 8, 24>}, {transform_indices = @transform_7, window_bounds = array<i64: 1, 8, 256>}]} {
    %c0 = arith.constant 0 : index
    %c0_0 = arith.constant 0 : index
    %c0_1 = arith.constant 0 : index
    %0 = vector.load %arg1[%c0, %c0_0, %c0_1] : memref<1x8x256xbf16, #tpu.memory_space<vmem>>, vector<1x8x256xbf16>
    %1 = vector.shape_cast %0 : vector<1x8x256xbf16> to vector<8x256xbf16>
    %2 = arith.extf %1 : vector<8x256xbf16> to vector<8x256xf32>
    %c0_2 = arith.constant 0 : index
    %c0_3 = arith.constant 0 : index
    %c0_4 = arith.constant 0 : index
    %3 = vector.load %arg2[%c0_2, %c0_3, %c0_4] : memref<1x8x256xbf16, #tpu.memory_space<vmem>>, vector<1x8x256xbf16>
    %4 = vector.shape_cast %3 : vector<1x8x256xbf16> to vector<8x256xbf16>
    %5 = arith.extf %4 : vector<8x256xbf16> to vector<8x256xf32>
    %6 = tpu.iota {dimensions = array<i32: 1>} : vector<1x256xi32>
    %c15_i32 = arith.constant 15 : i32
    %7 = vector.broadcast %c15_i32 : i32 to vector<1x256xi32>
    %8 = arith.andi %6, %7 : vector<1x256xi32>
    %c16_i32 = arith.constant 16 : i32
    %9 = vector.broadcast %c16_i32 : i32 to vector<1x256xi32>
    %10 = arith.cmpi sge, %6, %9 : vector<1x256xi32>
    %c240_i32 = arith.constant 240 : i32
    %11 = vector.broadcast %c240_i32 : i32 to vector<1x256xi32>
    %12 = arith.cmpi slt, %6, %11 : vector<1x256xi32>
    %c1_i32 = arith.constant 1 : i32
    %13 = vector.broadcast %c1_i32 : i32 to vector<1x256xi32>
    %14 = arith.cmpi sge, %8, %13 : vector<1x256xi32>
    %c14_i32 = arith.constant 14 : i32
    %15 = vector.broadcast %c14_i32 : i32 to vector<1x256xi32>
    %16 = arith.cmpi sle, %8, %15 : vector<1x256xi32>
    %17 = arith.andi %10, %14 : vector<1x256xi1>
    %18 = arith.extui %17 : vector<1x256xi1> to vector<1x256xi32>
    %19 = arith.sitofp %18 : vector<1x256xi32> to vector<1x256xf32>
    %20 = arith.extui %10 : vector<1x256xi1> to vector<1x256xi32>
    %21 = arith.sitofp %20 : vector<1x256xi32> to vector<1x256xf32>
    %22 = arith.andi %10, %16 : vector<1x256xi1>
    %23 = arith.extui %22 : vector<1x256xi1> to vector<1x256xi32>
    %24 = arith.sitofp %23 : vector<1x256xi32> to vector<1x256xf32>
    %25 = arith.extui %14 : vector<1x256xi1> to vector<1x256xi32>
    %26 = arith.sitofp %25 : vector<1x256xi32> to vector<1x256xf32>
    %27 = arith.extui %16 : vector<1x256xi1> to vector<1x256xi32>
    %28 = arith.sitofp %27 : vector<1x256xi32> to vector<1x256xf32>
    %29 = arith.andi %12, %14 : vector<1x256xi1>
    %30 = arith.extui %29 : vector<1x256xi1> to vector<1x256xi32>
    %31 = arith.sitofp %30 : vector<1x256xi32> to vector<1x256xf32>
    %32 = arith.extui %12 : vector<1x256xi1> to vector<1x256xi32>
    %33 = arith.sitofp %32 : vector<1x256xi32> to vector<1x256xf32>
    %34 = arith.andi %12, %16 : vector<1x256xi1>
    %35 = arith.extui %34 : vector<1x256xi1> to vector<1x256xi32>
    %36 = arith.sitofp %35 : vector<1x256xi32> to vector<1x256xf32>
    %c0_5 = arith.constant 0 : index
    %c0_6 = arith.constant 0 : index
    %37 = vector.load %arg3[%c0_5, %c0_6] : memref<8x12xf32, #tpu.memory_space<vmem>>, vector<8x1xf32>
    %38 = vector.broadcast %37 : vector<8x1xf32> to vector<8x256xf32>
    %39 = arith.mulf %2, %38 : vector<8x256xf32>
    %c0_7 = arith.constant 0 : index
    %c1 = arith.constant 1 : index
    %40 = vector.load %arg3[%c0_7, %c1] : memref<8x12xf32, #tpu.memory_space<vmem>>, vector<8x1xf32>
    %41 = vector.broadcast %40 : vector<8x1xf32> to vector<8x256xf32>
    %42 = arith.addf %39, %41 : vector<8x256xf32>
    %cst = arith.constant 0.000000e+00 : f32
    %43 = vector.broadcast %cst : f32 to vector<8x256xf32>
    %44 = arith.maximumf %42, %43 : vector<8x256xf32>
    %c0_8 = arith.constant 0 : index
    %c2 = arith.constant 2 : index
    %45 = vector.load %arg3[%c0_8, %c2] : memref<8x12xf32, #tpu.memory_space<vmem>>, vector<8x1xf32>
    %c17_i32 = arith.constant 17 : i32
    %46 = tpu.dynamic_rotate %44 by %c17_i32 dim 1 : vector<8x256xf32>, i32 -> vector<8x256xf32>
    %47 = vector.broadcast %19 : vector<1x256xf32> to vector<8x256xf32>
    %48 = arith.mulf %46, %47 : vector<8x256xf32>
    %c16_i32_9 = arith.constant 16 : i32
    %49 = tpu.dynamic_rotate %44 by %c16_i32_9 dim 1 : vector<8x256xf32>, i32 -> vector<8x256xf32>
    %50 = vector.broadcast %21 : vector<1x256xf32> to vector<8x256xf32>
    %51 = arith.mulf %49, %50 : vector<8x256xf32>
    %c15_i32_10 = arith.constant 15 : i32
    %52 = tpu.dynamic_rotate %44 by %c15_i32_10 dim 1 : vector<8x256xf32>, i32 -> vector<8x256xf32>
    %53 = vector.broadcast %24 : vector<1x256xf32> to vector<8x256xf32>
    %54 = arith.mulf %52, %53 : vector<8x256xf32>
    %55 = tpu.concatenate %48, %51, %54 in 0 : vector<8x256xf32>, vector<8x256xf32>, vector<8x256xf32> -> vector<24x256xf32>
    %56 = arith.truncf %55 : vector<24x256xf32> to vector<24x256xbf16>
    %c0_11 = arith.constant 0 : index
    %c0_12 = arith.constant 0 : index
    %c0_13 = arith.constant 0 : index
    %57 = vector.load %arg5[%c0_11, %c0_12, %c0_13] : memref<3x8x24xbf16, #tpu.memory_space<vmem>>, vector<1x8x24xbf16>
    %58 = vector.shape_cast %57 : vector<1x8x24xbf16> to vector<8x24xbf16>
    %cst_14 = arith.constant dense<0.000000e+00> : vector<8x256xf32>
    %59 = tpu.matmul %58, %56, %cst_14 {dimension_numbers = #tpu.dot_dimension_numbers<[1], [0], [0], [1], [0, 0, 1, 1], [], []>} : vector<8x24xbf16>, vector<24x256xbf16>, vector<8x256xf32> -> vector<8x256xf32>
    %c1_i32_15 = arith.constant 1 : i32
    %60 = tpu.dynamic_rotate %44 by %c1_i32_15 dim 1 : vector<8x256xf32>, i32 -> vector<8x256xf32>
    %61 = vector.broadcast %26 : vector<1x256xf32> to vector<8x256xf32>
    %62 = arith.mulf %60, %61 : vector<8x256xf32>
    %c255_i32 = arith.constant 255 : i32
    %63 = tpu.dynamic_rotate %44 by %c255_i32 dim 1 : vector<8x256xf32>, i32 -> vector<8x256xf32>
    %64 = vector.broadcast %28 : vector<1x256xf32> to vector<8x256xf32>
    %65 = arith.mulf %63, %64 : vector<8x256xf32>
    %66 = tpu.concatenate %62, %44, %65 in 0 : vector<8x256xf32>, vector<8x256xf32>, vector<8x256xf32> -> vector<24x256xf32>
    %67 = arith.truncf %66 : vector<24x256xf32> to vector<24x256xbf16>
    %c1_16 = arith.constant 1 : index
    %c0_17 = arith.constant 0 : index
    %c0_18 = arith.constant 0 : index
    %68 = vector.load %arg5[%c1_16, %c0_17, %c0_18] : memref<3x8x24xbf16, #tpu.memory_space<vmem>>, vector<1x8x24xbf16>
    %69 = vector.shape_cast %68 : vector<1x8x24xbf16> to vector<8x24xbf16>
    %cst_19 = arith.constant dense<0.000000e+00> : vector<8x256xf32>
    %70 = tpu.matmul %69, %67, %cst_19 {dimension_numbers = #tpu.dot_dimension_numbers<[1], [0], [0], [1], [0, 0, 1, 1], [], []>} : vector<8x24xbf16>, vector<24x256xbf16>, vector<8x256xf32> -> vector<8x256xf32>
    %71 = arith.addf %59, %70 : vector<8x256xf32>
    %c241_i32 = arith.constant 241 : i32
    %72 = tpu.dynamic_rotate %44 by %c241_i32 dim 1 : vector<8x256xf32>, i32 -> vector<8x256xf32>
    %73 = vector.broadcast %31 : vector<1x256xf32> to vector<8x256xf32>
    %74 = arith.mulf %72, %73 : vector<8x256xf32>
    %c240_i32_20 = arith.constant 240 : i32
    %75 = tpu.dynamic_rotate %44 by %c240_i32_20 dim 1 : vector<8x256xf32>, i32 -> vector<8x256xf32>
    %76 = vector.broadcast %33 : vector<1x256xf32> to vector<8x256xf32>
    %77 = arith.mulf %75, %76 : vector<8x256xf32>
    %c239_i32 = arith.constant 239 : i32
    %78 = tpu.dynamic_rotate %44 by %c239_i32 dim 1 : vector<8x256xf32>, i32 -> vector<8x256xf32>
    %79 = vector.broadcast %36 : vector<1x256xf32> to vector<8x256xf32>
    %80 = arith.mulf %78, %79 : vector<8x256xf32>
    %81 = tpu.concatenate %74, %77, %80 in 0 : vector<8x256xf32>, vector<8x256xf32>, vector<8x256xf32> -> vector<24x256xf32>
    %82 = arith.truncf %81 : vector<24x256xf32> to vector<24x256xbf16>
    %c2_21 = arith.constant 2 : index
    %c0_22 = arith.constant 0 : index
    %c0_23 = arith.constant 0 : index
    %83 = vector.load %arg5[%c2_21, %c0_22, %c0_23] : memref<3x8x24xbf16, #tpu.memory_space<vmem>>, vector<1x8x24xbf16>
    %84 = vector.shape_cast %83 : vector<1x8x24xbf16> to vector<8x24xbf16>
    %cst_24 = arith.constant dense<0.000000e+00> : vector<8x256xf32>
    %85 = tpu.matmul %84, %82, %cst_24 {dimension_numbers = #tpu.dot_dimension_numbers<[1], [0], [0], [1], [0, 0, 1, 1], [], []>} : vector<8x24xbf16>, vector<24x256xbf16>, vector<8x256xf32> -> vector<8x256xf32>
    %86 = arith.addf %71, %85 : vector<8x256xf32>
    %87 = vector.broadcast %45 : vector<8x1xf32> to vector<8x256xf32>
    %88 = arith.addf %86, %87 : vector<8x256xf32>
    %89 = arith.addf %88, %5 : vector<8x256xf32>
    %c0_25 = arith.constant 0 : index
    %c3 = arith.constant 3 : index
    %90 = vector.load %arg3[%c0_25, %c3] : memref<8x12xf32, #tpu.memory_space<vmem>>, vector<8x1xf32>
    %91 = vector.broadcast %90 : vector<8x1xf32> to vector<8x256xf32>
    %92 = arith.mulf %2, %91 : vector<8x256xf32>
    %c0_26 = arith.constant 0 : index
    %c4 = arith.constant 4 : index
    %93 = vector.load %arg3[%c0_26, %c4] : memref<8x12xf32, #tpu.memory_space<vmem>>, vector<8x1xf32>
    %94 = vector.broadcast %93 : vector<8x1xf32> to vector<8x256xf32>
    %95 = arith.addf %92, %94 : vector<8x256xf32>
    %96 = arith.truncf %95 : vector<8x256xf32> to vector<8x256xbf16>
    %c0_27 = arith.constant 0 : index
    %c0_28 = arith.constant 0 : index
    %97 = vector.load %arg6[%c0_27, %c0_28] : memref<8x8xbf16, #tpu.memory_space<vmem>>, vector<8x8xbf16>
    %cst_29 = arith.constant dense<0.000000e+00> : vector<8x256xf32>
    %98 = tpu.matmul %97, %96, %cst_29 {dimension_numbers = #tpu.dot_dimension_numbers<[1], [0], [0], [1], [0, 0, 1, 1], [], []>} : vector<8x8xbf16>, vector<8x256xbf16>, vector<8x256xf32> -> vector<8x256xf32>
    %c0_30 = arith.constant 0 : index
    %c5 = arith.constant 5 : index
    %99 = vector.load %arg3[%c0_30, %c5] : memref<8x12xf32, #tpu.memory_space<vmem>>, vector<8x1xf32>
    %100 = vector.broadcast %99 : vector<8x1xf32> to vector<8x256xf32>
    %101 = arith.addf %98, %100 : vector<8x256xf32>
    %c0_31 = arith.constant 0 : index
    %c6 = arith.constant 6 : index
    %102 = vector.load %arg3[%c0_31, %c6] : memref<8x12xf32, #tpu.memory_space<vmem>>, vector<8x1xf32>
    %c0_32 = arith.constant 0 : index
    %c7 = arith.constant 7 : index
    %103 = vector.load %arg3[%c0_32, %c7] : memref<8x12xf32, #tpu.memory_space<vmem>>, vector<8x1xf32>
    %c0_33 = arith.constant 0 : index
    %c0_34 = arith.constant 0 : index
    %c0_35 = arith.constant 0 : index
    %104 = vector.load %arg4[%c0_33, %c0_34, %c0_35] : memref<1x8x3xf32, #tpu.memory_space<vmem>>, vector<1x8x1xf32>
    %105 = vector.shape_cast %104 : vector<1x8x1xf32> to vector<8x1xf32>
    %106 = vector.broadcast %102 : vector<8x1xf32> to vector<8x256xf32>
    %107 = arith.mulf %89, %106 : vector<8x256xf32>
    %108 = vector.broadcast %105 : vector<8x1xf32> to vector<8x256xf32>
    %109 = arith.addf %107, %108 : vector<8x256xf32>
    %cst_36 = arith.constant 0.000000e+00 : f32
    %110 = vector.broadcast %cst_36 : f32 to vector<8x256xf32>
    %111 = arith.maximumf %109, %110 : vector<8x256xf32>
    %c17_i32_37 = arith.constant 17 : i32
    %112 = tpu.dynamic_rotate %111 by %c17_i32_37 dim 1 : vector<8x256xf32>, i32 -> vector<8x256xf32>
    %113 = vector.broadcast %19 : vector<1x256xf32> to vector<8x256xf32>
    %114 = arith.mulf %112, %113 : vector<8x256xf32>
    %c16_i32_38 = arith.constant 16 : i32
    %115 = tpu.dynamic_rotate %111 by %c16_i32_38 dim 1 : vector<8x256xf32>, i32 -> vector<8x256xf32>
    %116 = vector.broadcast %21 : vector<1x256xf32> to vector<8x256xf32>
    %117 = arith.mulf %115, %116 : vector<8x256xf32>
    %c15_i32_39 = arith.constant 15 : i32
    %118 = tpu.dynamic_rotate %111 by %c15_i32_39 dim 1 : vector<8x256xf32>, i32 -> vector<8x256xf32>
    %119 = vector.broadcast %24 : vector<1x256xf32> to vector<8x256xf32>
    %120 = arith.mulf %118, %119 : vector<8x256xf32>
    %121 = tpu.concatenate %114, %117, %120 in 0 : vector<8x256xf32>, vector<8x256xf32>, vector<8x256xf32> -> vector<24x256xf32>
    %122 = arith.truncf %121 : vector<24x256xf32> to vector<24x256xbf16>
    %c0_40 = arith.constant 0 : index
    %c0_41 = arith.constant 0 : index
    %c0_42 = arith.constant 0 : index
    %123 = vector.load %arg7[%c0_40, %c0_41, %c0_42] : memref<9x8x24xbf16, #tpu.memory_space<vmem>>, vector<1x8x24xbf16>
    %124 = vector.shape_cast %123 : vector<1x8x24xbf16> to vector<8x24xbf16>
    %cst_43 = arith.constant dense<0.000000e+00> : vector<8x256xf32>
    %125 = tpu.matmul %124, %122, %cst_43 {dimension_numbers = #tpu.dot_dimension_numbers<[1], [0], [0], [1], [0, 0, 1, 1], [], []>} : vector<8x24xbf16>, vector<24x256xbf16>, vector<8x256xf32> -> vector<8x256xf32>
    %c1_i32_44 = arith.constant 1 : i32
    %126 = tpu.dynamic_rotate %111 by %c1_i32_44 dim 1 : vector<8x256xf32>, i32 -> vector<8x256xf32>
    %127 = vector.broadcast %26 : vector<1x256xf32> to vector<8x256xf32>
    %128 = arith.mulf %126, %127 : vector<8x256xf32>
    %c255_i32_45 = arith.constant 255 : i32
    %129 = tpu.dynamic_rotate %111 by %c255_i32_45 dim 1 : vector<8x256xf32>, i32 -> vector<8x256xf32>
    %130 = vector.broadcast %28 : vector<1x256xf32> to vector<8x256xf32>
    %131 = arith.mulf %129, %130 : vector<8x256xf32>
    %132 = tpu.concatenate %128, %111, %131 in 0 : vector<8x256xf32>, vector<8x256xf32>, vector<8x256xf32> -> vector<24x256xf32>
    %133 = arith.truncf %132 : vector<24x256xf32> to vector<24x256xbf16>
    %c1_46 = arith.constant 1 : index
    %c0_47 = arith.constant 0 : index
    %c0_48 = arith.constant 0 : index
    %134 = vector.load %arg7[%c1_46, %c0_47, %c0_48] : memref<9x8x24xbf16, #tpu.memory_space<vmem>>, vector<1x8x24xbf16>
    %135 = vector.shape_cast %134 : vector<1x8x24xbf16> to vector<8x24xbf16>
    %cst_49 = arith.constant dense<0.000000e+00> : vector<8x256xf32>
    %136 = tpu.matmul %135, %133, %cst_49 {dimension_numbers = #tpu.dot_dimension_numbers<[1], [0], [0], [1], [0, 0, 1, 1], [], []>} : vector<8x24xbf16>, vector<24x256xbf16>, vector<8x256xf32> -> vector<8x256xf32>
    %137 = arith.addf %125, %136 : vector<8x256xf32>
    %c241_i32_50 = arith.constant 241 : i32
    %138 = tpu.dynamic_rotate %111 by %c241_i32_50 dim 1 : vector<8x256xf32>, i32 -> vector<8x256xf32>
    %139 = vector.broadcast %31 : vector<1x256xf32> to vector<8x256xf32>
    %140 = arith.mulf %138, %139 : vector<8x256xf32>
    %c240_i32_51 = arith.constant 240 : i32
    %141 = tpu.dynamic_rotate %111 by %c240_i32_51 dim 1 : vector<8x256xf32>, i32 -> vector<8x256xf32>
    %142 = vector.broadcast %33 : vector<1x256xf32> to vector<8x256xf32>
    %143 = arith.mulf %141, %142 : vector<8x256xf32>
    %c239_i32_52 = arith.constant 239 : i32
    %144 = tpu.dynamic_rotate %111 by %c239_i32_52 dim 1 : vector<8x256xf32>, i32 -> vector<8x256xf32>
    %145 = vector.broadcast %36 : vector<1x256xf32> to vector<8x256xf32>
    %146 = arith.mulf %144, %145 : vector<8x256xf32>
    %147 = tpu.concatenate %140, %143, %146 in 0 : vector<8x256xf32>, vector<8x256xf32>, vector<8x256xf32> -> vector<24x256xf32>
    %148 = arith.truncf %147 : vector<24x256xf32> to vector<24x256xbf16>
    %c2_53 = arith.constant 2 : index
    %c0_54 = arith.constant 0 : index
    %c0_55 = arith.constant 0 : index
    %149 = vector.load %arg7[%c2_53, %c0_54, %c0_55] : memref<9x8x24xbf16, #tpu.memory_space<vmem>>, vector<1x8x24xbf16>
    %150 = vector.shape_cast %149 : vector<1x8x24xbf16> to vector<8x24xbf16>
    %cst_56 = arith.constant dense<0.000000e+00> : vector<8x256xf32>
    %151 = tpu.matmul %150, %148, %cst_56 {dimension_numbers = #tpu.dot_dimension_numbers<[1], [0], [0], [1], [0, 0, 1, 1], [], []>} : vector<8x24xbf16>, vector<24x256xbf16>, vector<8x256xf32> -> vector<8x256xf32>
    %152 = arith.addf %137, %151 : vector<8x256xf32>
    %153 = vector.broadcast %103 : vector<8x1xf32> to vector<8x256xf32>
    %154 = arith.addf %152, %153 : vector<8x256xf32>
    %155 = arith.addf %101, %154 : vector<8x256xf32>
    %c0_57 = arith.constant 0 : index
    %c8 = arith.constant 8 : index
    %156 = vector.load %arg3[%c0_57, %c8] : memref<8x12xf32, #tpu.memory_space<vmem>>, vector<8x1xf32>
    %c0_58 = arith.constant 0 : index
    %c9 = arith.constant 9 : index
    %157 = vector.load %arg3[%c0_58, %c9] : memref<8x12xf32, #tpu.memory_space<vmem>>, vector<8x1xf32>
    %c0_59 = arith.constant 0 : index
    %c0_60 = arith.constant 0 : index
    %c1_61 = arith.constant 1 : index
    %158 = vector.load %arg4[%c0_59, %c0_60, %c1_61] : memref<1x8x3xf32, #tpu.memory_space<vmem>>, vector<1x8x1xf32>
    %159 = vector.shape_cast %158 : vector<1x8x1xf32> to vector<8x1xf32>
    %160 = vector.broadcast %156 : vector<8x1xf32> to vector<8x256xf32>
    %161 = arith.mulf %155, %160 : vector<8x256xf32>
    %162 = vector.broadcast %159 : vector<8x1xf32> to vector<8x256xf32>
    %163 = arith.addf %161, %162 : vector<8x256xf32>
    %cst_62 = arith.constant 0.000000e+00 : f32
    %164 = vector.broadcast %cst_62 : f32 to vector<8x256xf32>
    %165 = arith.maximumf %163, %164 : vector<8x256xf32>
    %c17_i32_63 = arith.constant 17 : i32
    %166 = tpu.dynamic_rotate %165 by %c17_i32_63 dim 1 : vector<8x256xf32>, i32 -> vector<8x256xf32>
    %167 = vector.broadcast %19 : vector<1x256xf32> to vector<8x256xf32>
    %168 = arith.mulf %166, %167 : vector<8x256xf32>
    %c16_i32_64 = arith.constant 16 : i32
    %169 = tpu.dynamic_rotate %165 by %c16_i32_64 dim 1 : vector<8x256xf32>, i32 -> vector<8x256xf32>
    %170 = vector.broadcast %21 : vector<1x256xf32> to vector<8x256xf32>
    %171 = arith.mulf %169, %170 : vector<8x256xf32>
    %c15_i32_65 = arith.constant 15 : i32
    %172 = tpu.dynamic_rotate %165 by %c15_i32_65 dim 1 : vector<8x256xf32>, i32 -> vector<8x256xf32>
    %173 = vector.broadcast %24 : vector<1x256xf32> to vector<8x256xf32>
    %174 = arith.mulf %172, %173 : vector<8x256xf32>
    %175 = tpu.concatenate %168, %171, %174 in 0 : vector<8x256xf32>, vector<8x256xf32>, vector<8x256xf32> -> vector<24x256xf32>
    %176 = arith.truncf %175 : vector<24x256xf32> to vector<24x256xbf16>
    %c3_66 = arith.constant 3 : index
    %c0_67 = arith.constant 0 : index
    %c0_68 = arith.constant 0 : index
    %177 = vector.load %arg7[%c3_66, %c0_67, %c0_68] : memref<9x8x24xbf16, #tpu.memory_space<vmem>>, vector<1x8x24xbf16>
    %178 = vector.shape_cast %177 : vector<1x8x24xbf16> to vector<8x24xbf16>
    %cst_69 = arith.constant dense<0.000000e+00> : vector<8x256xf32>
    %179 = tpu.matmul %178, %176, %cst_69 {dimension_numbers = #tpu.dot_dimension_numbers<[1], [0], [0], [1], [0, 0, 1, 1], [], []>} : vector<8x24xbf16>, vector<24x256xbf16>, vector<8x256xf32> -> vector<8x256xf32>
    %c1_i32_70 = arith.constant 1 : i32
    %180 = tpu.dynamic_rotate %165 by %c1_i32_70 dim 1 : vector<8x256xf32>, i32 -> vector<8x256xf32>
    %181 = vector.broadcast %26 : vector<1x256xf32> to vector<8x256xf32>
    %182 = arith.mulf %180, %181 : vector<8x256xf32>
    %c255_i32_71 = arith.constant 255 : i32
    %183 = tpu.dynamic_rotate %165 by %c255_i32_71 dim 1 : vector<8x256xf32>, i32 -> vector<8x256xf32>
    %184 = vector.broadcast %28 : vector<1x256xf32> to vector<8x256xf32>
    %185 = arith.mulf %183, %184 : vector<8x256xf32>
    %186 = tpu.concatenate %182, %165, %185 in 0 : vector<8x256xf32>, vector<8x256xf32>, vector<8x256xf32> -> vector<24x256xf32>
    %187 = arith.truncf %186 : vector<24x256xf32> to vector<24x256xbf16>
    %c4_72 = arith.constant 4 : index
    %c0_73 = arith.constant 0 : index
    %c0_74 = arith.constant 0 : index
    %188 = vector.load %arg7[%c4_72, %c0_73, %c0_74] : memref<9x8x24xbf16, #tpu.memory_space<vmem>>, vector<1x8x24xbf16>
    %189 = vector.shape_cast %188 : vector<1x8x24xbf16> to vector<8x24xbf16>
    %cst_75 = arith.constant dense<0.000000e+00> : vector<8x256xf32>
    %190 = tpu.matmul %189, %187, %cst_75 {dimension_numbers = #tpu.dot_dimension_numbers<[1], [0], [0], [1], [0, 0, 1, 1], [], []>} : vector<8x24xbf16>, vector<24x256xbf16>, vector<8x256xf32> -> vector<8x256xf32>
    %191 = arith.addf %179, %190 : vector<8x256xf32>
    %c241_i32_76 = arith.constant 241 : i32
    %192 = tpu.dynamic_rotate %165 by %c241_i32_76 dim 1 : vector<8x256xf32>, i32 -> vector<8x256xf32>
    %193 = vector.broadcast %31 : vector<1x256xf32> to vector<8x256xf32>
    %194 = arith.mulf %192, %193 : vector<8x256xf32>
    %c240_i32_77 = arith.constant 240 : i32
    %195 = tpu.dynamic_rotate %165 by %c240_i32_77 dim 1 : vector<8x256xf32>, i32 -> vector<8x256xf32>
    %196 = vector.broadcast %33 : vector<1x256xf32> to vector<8x256xf32>
    %197 = arith.mulf %195, %196 : vector<8x256xf32>
    %c239_i32_78 = arith.constant 239 : i32
    %198 = tpu.dynamic_rotate %165 by %c239_i32_78 dim 1 : vector<8x256xf32>, i32 -> vector<8x256xf32>
    %199 = vector.broadcast %36 : vector<1x256xf32> to vector<8x256xf32>
    %200 = arith.mulf %198, %199 : vector<8x256xf32>
    %201 = tpu.concatenate %194, %197, %200 in 0 : vector<8x256xf32>, vector<8x256xf32>, vector<8x256xf32> -> vector<24x256xf32>
    %202 = arith.truncf %201 : vector<24x256xf32> to vector<24x256xbf16>
    %c5_79 = arith.constant 5 : index
    %c0_80 = arith.constant 0 : index
    %c0_81 = arith.constant 0 : index
    %203 = vector.load %arg7[%c5_79, %c0_80, %c0_81] : memref<9x8x24xbf16, #tpu.memory_space<vmem>>, vector<1x8x24xbf16>
    %204 = vector.shape_cast %203 : vector<1x8x24xbf16> to vector<8x24xbf16>
    %cst_82 = arith.constant dense<0.000000e+00> : vector<8x256xf32>
    %205 = tpu.matmul %204, %202, %cst_82 {dimension_numbers = #tpu.dot_dimension_numbers<[1], [0], [0], [1], [0, 0, 1, 1], [], []>} : vector<8x24xbf16>, vector<24x256xbf16>, vector<8x256xf32> -> vector<8x256xf32>
    %206 = arith.addf %191, %205 : vector<8x256xf32>
    %207 = vector.broadcast %157 : vector<8x1xf32> to vector<8x256xf32>
    %208 = arith.addf %206, %207 : vector<8x256xf32>
    %c0_83 = arith.constant 0 : index
    %c10 = arith.constant 10 : index
    %209 = vector.load %arg3[%c0_83, %c10] : memref<8x12xf32, #tpu.memory_space<vmem>>, vector<8x1xf32>
    %c0_84 = arith.constant 0 : index
    %c11 = arith.constant 11 : index
    %210 = vector.load %arg3[%c0_84, %c11] : memref<8x12xf32, #tpu.memory_space<vmem>>, vector<8x1xf32>
    %c0_85 = arith.constant 0 : index
    %c0_86 = arith.constant 0 : index
    %c2_87 = arith.constant 2 : index
    %211 = vector.load %arg4[%c0_85, %c0_86, %c2_87] : memref<1x8x3xf32, #tpu.memory_space<vmem>>, vector<1x8x1xf32>
    %212 = vector.shape_cast %211 : vector<1x8x1xf32> to vector<8x1xf32>
    %213 = vector.broadcast %209 : vector<8x1xf32> to vector<8x256xf32>
    %214 = arith.mulf %208, %213 : vector<8x256xf32>
    %215 = vector.broadcast %212 : vector<8x1xf32> to vector<8x256xf32>
    %216 = arith.addf %214, %215 : vector<8x256xf32>
    %cst_88 = arith.constant 0.000000e+00 : f32
    %217 = vector.broadcast %cst_88 : f32 to vector<8x256xf32>
    %218 = arith.maximumf %216, %217 : vector<8x256xf32>
    %c17_i32_89 = arith.constant 17 : i32
    %219 = tpu.dynamic_rotate %218 by %c17_i32_89 dim 1 : vector<8x256xf32>, i32 -> vector<8x256xf32>
    %220 = vector.broadcast %19 : vector<1x256xf32> to vector<8x256xf32>
    %221 = arith.mulf %219, %220 : vector<8x256xf32>
    %c16_i32_90 = arith.constant 16 : i32
    %222 = tpu.dynamic_rotate %218 by %c16_i32_90 dim 1 : vector<8x256xf32>, i32 -> vector<8x256xf32>
    %223 = vector.broadcast %21 : vector<1x256xf32> to vector<8x256xf32>
    %224 = arith.mulf %222, %223 : vector<8x256xf32>
    %c15_i32_91 = arith.constant 15 : i32
    %225 = tpu.dynamic_rotate %218 by %c15_i32_91 dim 1 : vector<8x256xf32>, i32 -> vector<8x256xf32>
    %226 = vector.broadcast %24 : vector<1x256xf32> to vector<8x256xf32>
    %227 = arith.mulf %225, %226 : vector<8x256xf32>
    %228 = tpu.concatenate %221, %224, %227 in 0 : vector<8x256xf32>, vector<8x256xf32>, vector<8x256xf32> -> vector<24x256xf32>
    %229 = arith.truncf %228 : vector<24x256xf32> to vector<24x256xbf16>
    %c6_92 = arith.constant 6 : index
    %c0_93 = arith.constant 0 : index
    %c0_94 = arith.constant 0 : index
    %230 = vector.load %arg7[%c6_92, %c0_93, %c0_94] : memref<9x8x24xbf16, #tpu.memory_space<vmem>>, vector<1x8x24xbf16>
    %231 = vector.shape_cast %230 : vector<1x8x24xbf16> to vector<8x24xbf16>
    %cst_95 = arith.constant dense<0.000000e+00> : vector<8x256xf32>
    %232 = tpu.matmul %231, %229, %cst_95 {dimension_numbers = #tpu.dot_dimension_numbers<[1], [0], [0], [1], [0, 0, 1, 1], [], []>} : vector<8x24xbf16>, vector<24x256xbf16>, vector<8x256xf32> -> vector<8x256xf32>
    %c1_i32_96 = arith.constant 1 : i32
    %233 = tpu.dynamic_rotate %218 by %c1_i32_96 dim 1 : vector<8x256xf32>, i32 -> vector<8x256xf32>
    %234 = vector.broadcast %26 : vector<1x256xf32> to vector<8x256xf32>
    %235 = arith.mulf %233, %234 : vector<8x256xf32>
    %c255_i32_97 = arith.constant 255 : i32
    %236 = tpu.dynamic_rotate %218 by %c255_i32_97 dim 1 : vector<8x256xf32>, i32 -> vector<8x256xf32>
    %237 = vector.broadcast %28 : vector<1x256xf32> to vector<8x256xf32>
    %238 = arith.mulf %236, %237 : vector<8x256xf32>
    %239 = tpu.concatenate %235, %218, %238 in 0 : vector<8x256xf32>, vector<8x256xf32>, vector<8x256xf32> -> vector<24x256xf32>
    %240 = arith.truncf %239 : vector<24x256xf32> to vector<24x256xbf16>
    %c7_98 = arith.constant 7 : index
    %c0_99 = arith.constant 0 : index
    %c0_100 = arith.constant 0 : index
    %241 = vector.load %arg7[%c7_98, %c0_99, %c0_100] : memref<9x8x24xbf16, #tpu.memory_space<vmem>>, vector<1x8x24xbf16>
    %242 = vector.shape_cast %241 : vector<1x8x24xbf16> to vector<8x24xbf16>
    %cst_101 = arith.constant dense<0.000000e+00> : vector<8x256xf32>
    %243 = tpu.matmul %242, %240, %cst_101 {dimension_numbers = #tpu.dot_dimension_numbers<[1], [0], [0], [1], [0, 0, 1, 1], [], []>} : vector<8x24xbf16>, vector<24x256xbf16>, vector<8x256xf32> -> vector<8x256xf32>
    %244 = arith.addf %232, %243 : vector<8x256xf32>
    %c241_i32_102 = arith.constant 241 : i32
    %245 = tpu.dynamic_rotate %218 by %c241_i32_102 dim 1 : vector<8x256xf32>, i32 -> vector<8x256xf32>
    %246 = vector.broadcast %31 : vector<1x256xf32> to vector<8x256xf32>
    %247 = arith.mulf %245, %246 : vector<8x256xf32>
    %c240_i32_103 = arith.constant 240 : i32
    %248 = tpu.dynamic_rotate %218 by %c240_i32_103 dim 1 : vector<8x256xf32>, i32 -> vector<8x256xf32>
    %249 = vector.broadcast %33 : vector<1x256xf32> to vector<8x256xf32>
    %250 = arith.mulf %248, %249 : vector<8x256xf32>
    %c239_i32_104 = arith.constant 239 : i32
    %251 = tpu.dynamic_rotate %218 by %c239_i32_104 dim 1 : vector<8x256xf32>, i32 -> vector<8x256xf32>
    %252 = vector.broadcast %36 : vector<1x256xf32> to vector<8x256xf32>
    %253 = arith.mulf %251, %252 : vector<8x256xf32>
    %254 = tpu.concatenate %247, %250, %253 in 0 : vector<8x256xf32>, vector<8x256xf32>, vector<8x256xf32> -> vector<24x256xf32>
    %255 = arith.truncf %254 : vector<24x256xf32> to vector<24x256xbf16>
    %c8_105 = arith.constant 8 : index
    %c0_106 = arith.constant 0 : index
    %c0_107 = arith.constant 0 : index
    %256 = vector.load %arg7[%c8_105, %c0_106, %c0_107] : memref<9x8x24xbf16, #tpu.memory_space<vmem>>, vector<1x8x24xbf16>
    %257 = vector.shape_cast %256 : vector<1x8x24xbf16> to vector<8x24xbf16>
    %cst_108 = arith.constant dense<0.000000e+00> : vector<8x256xf32>
    %258 = tpu.matmul %257, %255, %cst_108 {dimension_numbers = #tpu.dot_dimension_numbers<[1], [0], [0], [1], [0, 0, 1, 1], [], []>} : vector<8x24xbf16>, vector<24x256xbf16>, vector<8x256xf32> -> vector<8x256xf32>
    %259 = arith.addf %244, %258 : vector<8x256xf32>
    %260 = vector.broadcast %210 : vector<8x1xf32> to vector<8x256xf32>
    %261 = arith.addf %259, %260 : vector<8x256xf32>
    %262 = arith.addf %155, %261 : vector<8x256xf32>
    %263 = arith.truncf %262 : vector<8x256xf32> to vector<8x256xbf16>
    %c0_109 = arith.constant 0 : index
    %c0_110 = arith.constant 0 : index
    %c0_111 = arith.constant 0 : index
    %264 = vector.load %arg8[%c0_109, %c0_110, %c0_111] : memref<1x8x256xbf16, #tpu.memory_space<vmem>>, vector<1x8x256xbf16>
    %265 = vector.shape_cast %264 : vector<1x8x256xbf16> to vector<8x256xbf16>
    %266 = vector.shape_cast %263 : vector<8x256xbf16> to vector<1x8x256xbf16>
    tpu.vector_store %arg8[%c0_109, %c0_110, %c0_111], %266 {strides = array<i32>} : memref<1x8x256xbf16, #tpu.memory_space<vmem>>, vector<1x8x256xbf16>,
    return
  }
  func.func @transform_0(%arg0: i32) -> (i32, i32, i32) {
    %c0_i32 = arith.constant 0 : i32
    %c0_i32_0 = arith.constant 0 : i32
    %c0_i32_1 = arith.constant 0 : i32
    return %arg0, %c0_i32, %c0_i32_0 : i32, i32, i32
  }
  func.func @transform_1(%arg0: i32) -> (i32, i32, i32) {
    %c0_i32 = arith.constant 0 : i32
    %c0_i32_0 = arith.constant 0 : i32
    %c0_i32_1 = arith.constant 0 : i32
    return %arg0, %c0_i32, %c0_i32_0 : i32, i32, i32
  }
  func.func @transform_2(%arg0: i32) -> (i32, i32) {
    %c0_i32 = arith.constant 0 : i32
    %c0_i32_0 = arith.constant 0 : i32
    %c0_i32_1 = arith.constant 0 : i32
    return %c0_i32, %c0_i32_0 : i32, i32
  }
  func.func @transform_3(%arg0: i32) -> (i32, i32, i32) {
    %c0_i32 = arith.constant 0 : i32
    %c0_i32_0 = arith.constant 0 : i32
    %c0_i32_1 = arith.constant 0 : i32
    return %arg0, %c0_i32, %c0_i32_0 : i32, i32, i32
  }
  func.func @transform_4(%arg0: i32) -> (i32, i32, i32) {
    %c0_i32 = arith.constant 0 : i32
    %c0_i32_0 = arith.constant 0 : i32
    %c0_i32_1 = arith.constant 0 : i32
    %c0_i32_2 = arith.constant 0 : i32
    return %c0_i32, %c0_i32_0, %c0_i32_1 : i32, i32, i32
  }
  func.func @transform_5(%arg0: i32) -> (i32, i32) {
    %c0_i32 = arith.constant 0 : i32
    %c0_i32_0 = arith.constant 0 : i32
    %c0_i32_1 = arith.constant 0 : i32
    return %c0_i32, %c0_i32_0 : i32, i32
  }
  func.func @transform_6(%arg0: i32) -> (i32, i32, i32) {
    %c0_i32 = arith.constant 0 : i32
    %c0_i32_0 = arith.constant 0 : i32
    %c0_i32_1 = arith.constant 0 : i32
    %c0_i32_2 = arith.constant 0 : i32
    return %c0_i32, %c0_i32_0, %c0_i32_1 : i32, i32, i32
  }
  func.func @transform_7(%arg0: i32) -> (i32, i32, i32) {
    %c0_i32 = arith.constant 0 : i32
    %c0_i32_0 = arith.constant 0 : i32
    %c0_i32_1 = arith.constant 0 : i32
    return %arg0, %c0_i32, %c0_i32_0 : i32, i32, i32
  }
}

module attributes {stable_mosaic.version = 11 : i64} {
  func.func @_resup_kernel(%arg0: i32, %arg1: memref<1x8x256xbf16, #tpu.memory_space<vmem>>, %arg2: memref<1x8x1024xbf16, #tpu.memory_space<vmem>>, %arg3: memref<256x1024xbf16, #tpu.memory_space<vmem>>, %arg4: memref<8x12xf32, #tpu.memory_space<vmem>>, %arg5: memref<1x8x3xf32, #tpu.memory_space<vmem>>, %arg6: memref<3x8x24xbf16, #tpu.memory_space<vmem>>, %arg7: memref<8x8xbf16, #tpu.memory_space<vmem>>, %arg8: memref<9x8x24xbf16, #tpu.memory_space<vmem>>, %arg9: memref<1x8x1024xbf16, #tpu.memory_space<vmem>>) attributes {dimension_semantics = [#tpu.dimension_semantics<parallel>], iteration_bounds = array<i64: 2>, scalar_prefetch = 0 : i64, scratch_operands = 0 : i64, tpu.core_type = #tpu.core_type<tc>, window_params = [{transform_indices = @transform_0, window_bounds = array<i64: 1, 8, 256>}, {transform_indices = @transform_1, window_bounds = array<i64: 1, 8, 1024>}, {pipeline_mode = #tpu.pipeline_mode<synchronous>, transform_indices = @transform_2, window_bounds = array<i64: 256, 1024>}, {pipeline_mode = #tpu.pipeline_mode<synchronous>, transform_indices = @transform_3, window_bounds = array<i64: 8, 12>}, {transform_indices = @transform_4, window_bounds = array<i64: 1, 8, 3>}, {pipeline_mode = #tpu.pipeline_mode<synchronous>, transform_indices = @transform_5, window_bounds = array<i64: 3, 8, 24>}, {pipeline_mode = #tpu.pipeline_mode<synchronous>, transform_indices = @transform_6, window_bounds = array<i64: 8, 8>}, {pipeline_mode = #tpu.pipeline_mode<synchronous>, transform_indices = @transform_7, window_bounds = array<i64: 9, 8, 24>}, {transform_indices = @transform_8, window_bounds = array<i64: 1, 8, 1024>}]} {
    %c0 = arith.constant 0 : index
    %c0_0 = arith.constant 0 : index
    %c0_1 = arith.constant 0 : index
    %0 = vector.load %arg1[%c0, %c0_0, %c0_1] : memref<1x8x256xbf16, #tpu.memory_space<vmem>>, vector<1x8x256xbf16>
    %1 = vector.shape_cast %0 : vector<1x8x256xbf16> to vector<8x256xbf16>
    %c0_2 = arith.constant 0 : index
    %c0_3 = arith.constant 0 : index
    %2 = vector.load %arg3[%c0_2, %c0_3] : memref<256x1024xbf16, #tpu.memory_space<vmem>>, vector<256x1024xbf16>
    %cst = arith.constant dense<0.000000e+00> : vector<8x1024xf32>
    %3 = tpu.matmul %1, %2, %cst {dimension_numbers = #tpu.dot_dimension_numbers<[1], [0], [0], [1], [0, 0, 1, 1], [], []>} : vector<8x256xbf16>, vector<256x1024xbf16>, vector<8x1024xf32> -> vector<8x1024xf32>
    %c0_4 = arith.constant 0 : index
    %c0_5 = arith.constant 0 : index
    %c0_6 = arith.constant 0 : index
    %4 = vector.load %arg2[%c0_4, %c0_5, %c0_6] : memref<1x8x1024xbf16, #tpu.memory_space<vmem>>, vector<1x8x1024xbf16>
    %5 = vector.shape_cast %4 : vector<1x8x1024xbf16> to vector<8x1024xbf16>
    %6 = arith.extf %5 : vector<8x1024xbf16> to vector<8x1024xf32>
    %7 = tpu.iota {dimensions = array<i32: 1>} : vector<1x1024xi32>
    %c31_i32 = arith.constant 31 : i32
    %8 = vector.broadcast %c31_i32 : i32 to vector<1x1024xi32>
    %9 = arith.andi %7, %8 : vector<1x1024xi32>
    %c32_i32 = arith.constant 32 : i32
    %10 = vector.broadcast %c32_i32 : i32 to vector<1x1024xi32>
    %11 = arith.cmpi sge, %7, %10 : vector<1x1024xi32>
    %c992_i32 = arith.constant 992 : i32
    %12 = vector.broadcast %c992_i32 : i32 to vector<1x1024xi32>
    %13 = arith.cmpi slt, %7, %12 : vector<1x1024xi32>
    %c1_i32 = arith.constant 1 : i32
    %14 = vector.broadcast %c1_i32 : i32 to vector<1x1024xi32>
    %15 = arith.cmpi sge, %9, %14 : vector<1x1024xi32>
    %c30_i32 = arith.constant 30 : i32
    %16 = vector.broadcast %c30_i32 : i32 to vector<1x1024xi32>
    %17 = arith.cmpi sle, %9, %16 : vector<1x1024xi32>
    %18 = arith.andi %11, %15 : vector<1x1024xi1>
    %19 = arith.extui %18 : vector<1x1024xi1> to vector<1x1024xi32>
    %20 = arith.sitofp %19 : vector<1x1024xi32> to vector<1x1024xf32>
    %21 = arith.extui %11 : vector<1x1024xi1> to vector<1x1024xi32>
    %22 = arith.sitofp %21 : vector<1x1024xi32> to vector<1x1024xf32>
    %23 = arith.andi %11, %17 : vector<1x1024xi1>
    %24 = arith.extui %23 : vector<1x1024xi1> to vector<1x1024xi32>
    %25 = arith.sitofp %24 : vector<1x1024xi32> to vector<1x1024xf32>
    %26 = arith.extui %15 : vector<1x1024xi1> to vector<1x1024xi32>
    %27 = arith.sitofp %26 : vector<1x1024xi32> to vector<1x1024xf32>
    %28 = arith.extui %17 : vector<1x1024xi1> to vector<1x1024xi32>
    %29 = arith.sitofp %28 : vector<1x1024xi32> to vector<1x1024xf32>
    %30 = arith.andi %13, %15 : vector<1x1024xi1>
    %31 = arith.extui %30 : vector<1x1024xi1> to vector<1x1024xi32>
    %32 = arith.sitofp %31 : vector<1x1024xi32> to vector<1x1024xf32>
    %33 = arith.extui %13 : vector<1x1024xi1> to vector<1x1024xi32>
    %34 = arith.sitofp %33 : vector<1x1024xi32> to vector<1x1024xf32>
    %35 = arith.andi %13, %17 : vector<1x1024xi1>
    %36 = arith.extui %35 : vector<1x1024xi1> to vector<1x1024xi32>
    %37 = arith.sitofp %36 : vector<1x1024xi32> to vector<1x1024xf32>
    %c0_7 = arith.constant 0 : index
    %c0_8 = arith.constant 0 : index
    %38 = vector.load %arg4[%c0_7, %c0_8] : memref<8x12xf32, #tpu.memory_space<vmem>>, vector<8x1xf32>
    %39 = vector.broadcast %38 : vector<8x1xf32> to vector<8x1024xf32>
    %40 = arith.mulf %3, %39 : vector<8x1024xf32>
    %c0_9 = arith.constant 0 : index
    %c1 = arith.constant 1 : index
    %41 = vector.load %arg4[%c0_9, %c1] : memref<8x12xf32, #tpu.memory_space<vmem>>, vector<8x1xf32>
    %42 = vector.broadcast %41 : vector<8x1xf32> to vector<8x1024xf32>
    %43 = arith.addf %40, %42 : vector<8x1024xf32>
    %cst_10 = arith.constant 0.000000e+00 : f32
    %44 = vector.broadcast %cst_10 : f32 to vector<8x1024xf32>
    %45 = arith.maximumf %43, %44 : vector<8x1024xf32>
    %c0_11 = arith.constant 0 : index
    %c2 = arith.constant 2 : index
    %46 = vector.load %arg4[%c0_11, %c2] : memref<8x12xf32, #tpu.memory_space<vmem>>, vector<8x1xf32>
    %c33_i32 = arith.constant 33 : i32
    %47 = tpu.dynamic_rotate %45 by %c33_i32 dim 1 : vector<8x1024xf32>, i32 -> vector<8x1024xf32>
    %48 = vector.broadcast %20 : vector<1x1024xf32> to vector<8x1024xf32>
    %49 = arith.mulf %47, %48 : vector<8x1024xf32>
    %c32_i32_12 = arith.constant 32 : i32
    %50 = tpu.dynamic_rotate %45 by %c32_i32_12 dim 1 : vector<8x1024xf32>, i32 -> vector<8x1024xf32>
    %51 = vector.broadcast %22 : vector<1x1024xf32> to vector<8x1024xf32>
    %52 = arith.mulf %50, %51 : vector<8x1024xf32>
    %c31_i32_13 = arith.constant 31 : i32
    %53 = tpu.dynamic_rotate %45 by %c31_i32_13 dim 1 : vector<8x1024xf32>, i32 -> vector<8x1024xf32>
    %54 = vector.broadcast %25 : vector<1x1024xf32> to vector<8x1024xf32>
    %55 = arith.mulf %53, %54 : vector<8x1024xf32>
    %56 = tpu.concatenate %49, %52, %55 in 0 : vector<8x1024xf32>, vector<8x1024xf32>, vector<8x1024xf32> -> vector<24x1024xf32>
    %57 = arith.truncf %56 : vector<24x1024xf32> to vector<24x1024xbf16>
    %c0_14 = arith.constant 0 : index
    %c0_15 = arith.constant 0 : index
    %c0_16 = arith.constant 0 : index
    %58 = vector.load %arg6[%c0_14, %c0_15, %c0_16] : memref<3x8x24xbf16, #tpu.memory_space<vmem>>, vector<1x8x24xbf16>
    %59 = vector.shape_cast %58 : vector<1x8x24xbf16> to vector<8x24xbf16>
    %cst_17 = arith.constant dense<0.000000e+00> : vector<8x1024xf32>
    %60 = tpu.matmul %59, %57, %cst_17 {dimension_numbers = #tpu.dot_dimension_numbers<[1], [0], [0], [1], [0, 0, 1, 1], [], []>} : vector<8x24xbf16>, vector<24x1024xbf16>, vector<8x1024xf32> -> vector<8x1024xf32>
    %c1_i32_18 = arith.constant 1 : i32
    %61 = tpu.dynamic_rotate %45 by %c1_i32_18 dim 1 : vector<8x1024xf32>, i32 -> vector<8x1024xf32>
    %62 = vector.broadcast %27 : vector<1x1024xf32> to vector<8x1024xf32>
    %63 = arith.mulf %61, %62 : vector<8x1024xf32>
    %c1023_i32 = arith.constant 1023 : i32
    %64 = tpu.dynamic_rotate %45 by %c1023_i32 dim 1 : vector<8x1024xf32>, i32 -> vector<8x1024xf32>
    %65 = vector.broadcast %29 : vector<1x1024xf32> to vector<8x1024xf32>
    %66 = arith.mulf %64, %65 : vector<8x1024xf32>
    %67 = tpu.concatenate %63, %45, %66 in 0 : vector<8x1024xf32>, vector<8x1024xf32>, vector<8x1024xf32> -> vector<24x1024xf32>
    %68 = arith.truncf %67 : vector<24x1024xf32> to vector<24x1024xbf16>
    %c1_19 = arith.constant 1 : index
    %c0_20 = arith.constant 0 : index
    %c0_21 = arith.constant 0 : index
    %69 = vector.load %arg6[%c1_19, %c0_20, %c0_21] : memref<3x8x24xbf16, #tpu.memory_space<vmem>>, vector<1x8x24xbf16>
    %70 = vector.shape_cast %69 : vector<1x8x24xbf16> to vector<8x24xbf16>
    %cst_22 = arith.constant dense<0.000000e+00> : vector<8x1024xf32>
    %71 = tpu.matmul %70, %68, %cst_22 {dimension_numbers = #tpu.dot_dimension_numbers<[1], [0], [0], [1], [0, 0, 1, 1], [], []>} : vector<8x24xbf16>, vector<24x1024xbf16>, vector<8x1024xf32> -> vector<8x1024xf32>
    %72 = arith.addf %60, %71 : vector<8x1024xf32>
    %c993_i32 = arith.constant 993 : i32
    %73 = tpu.dynamic_rotate %45 by %c993_i32 dim 1 : vector<8x1024xf32>, i32 -> vector<8x1024xf32>
    %74 = vector.broadcast %32 : vector<1x1024xf32> to vector<8x1024xf32>
    %75 = arith.mulf %73, %74 : vector<8x1024xf32>
    %c992_i32_23 = arith.constant 992 : i32
    %76 = tpu.dynamic_rotate %45 by %c992_i32_23 dim 1 : vector<8x1024xf32>, i32 -> vector<8x1024xf32>
    %77 = vector.broadcast %34 : vector<1x1024xf32> to vector<8x1024xf32>
    %78 = arith.mulf %76, %77 : vector<8x1024xf32>
    %c991_i32 = arith.constant 991 : i32
    %79 = tpu.dynamic_rotate %45 by %c991_i32 dim 1 : vector<8x1024xf32>, i32 -> vector<8x1024xf32>
    %80 = vector.broadcast %37 : vector<1x1024xf32> to vector<8x1024xf32>
    %81 = arith.mulf %79, %80 : vector<8x1024xf32>
    %82 = tpu.concatenate %75, %78, %81 in 0 : vector<8x1024xf32>, vector<8x1024xf32>, vector<8x1024xf32> -> vector<24x1024xf32>
    %83 = arith.truncf %82 : vector<24x1024xf32> to vector<24x1024xbf16>
    %c2_24 = arith.constant 2 : index
    %c0_25 = arith.constant 0 : index
    %c0_26 = arith.constant 0 : index
    %84 = vector.load %arg6[%c2_24, %c0_25, %c0_26] : memref<3x8x24xbf16, #tpu.memory_space<vmem>>, vector<1x8x24xbf16>
    %85 = vector.shape_cast %84 : vector<1x8x24xbf16> to vector<8x24xbf16>
    %cst_27 = arith.constant dense<0.000000e+00> : vector<8x1024xf32>
    %86 = tpu.matmul %85, %83, %cst_27 {dimension_numbers = #tpu.dot_dimension_numbers<[1], [0], [0], [1], [0, 0, 1, 1], [], []>} : vector<8x24xbf16>, vector<24x1024xbf16>, vector<8x1024xf32> -> vector<8x1024xf32>
    %87 = arith.addf %72, %86 : vector<8x1024xf32>
    %88 = vector.broadcast %46 : vector<8x1xf32> to vector<8x1024xf32>
    %89 = arith.addf %87, %88 : vector<8x1024xf32>
    %90 = arith.addf %89, %6 : vector<8x1024xf32>
    %c0_28 = arith.constant 0 : index
    %c3 = arith.constant 3 : index
    %91 = vector.load %arg4[%c0_28, %c3] : memref<8x12xf32, #tpu.memory_space<vmem>>, vector<8x1xf32>
    %92 = vector.broadcast %91 : vector<8x1xf32> to vector<8x1024xf32>
    %93 = arith.mulf %3, %92 : vector<8x1024xf32>
    %c0_29 = arith.constant 0 : index
    %c4 = arith.constant 4 : index
    %94 = vector.load %arg4[%c0_29, %c4] : memref<8x12xf32, #tpu.memory_space<vmem>>, vector<8x1xf32>
    %95 = vector.broadcast %94 : vector<8x1xf32> to vector<8x1024xf32>
    %96 = arith.addf %93, %95 : vector<8x1024xf32>
    %97 = arith.truncf %96 : vector<8x1024xf32> to vector<8x1024xbf16>
    %c0_30 = arith.constant 0 : index
    %c0_31 = arith.constant 0 : index
    %98 = vector.load %arg7[%c0_30, %c0_31] : memref<8x8xbf16, #tpu.memory_space<vmem>>, vector<8x8xbf16>
    %cst_32 = arith.constant dense<0.000000e+00> : vector<8x1024xf32>
    %99 = tpu.matmul %98, %97, %cst_32 {dimension_numbers = #tpu.dot_dimension_numbers<[1], [0], [0], [1], [0, 0, 1, 1], [], []>} : vector<8x8xbf16>, vector<8x1024xbf16>, vector<8x1024xf32> -> vector<8x1024xf32>
    %c0_33 = arith.constant 0 : index
    %c5 = arith.constant 5 : index
    %100 = vector.load %arg4[%c0_33, %c5] : memref<8x12xf32, #tpu.memory_space<vmem>>, vector<8x1xf32>
    %101 = vector.broadcast %100 : vector<8x1xf32> to vector<8x1024xf32>
    %102 = arith.addf %99, %101 : vector<8x1024xf32>
    %c0_34 = arith.constant 0 : index
    %c6 = arith.constant 6 : index
    %103 = vector.load %arg4[%c0_34, %c6] : memref<8x12xf32, #tpu.memory_space<vmem>>, vector<8x1xf32>
    %c0_35 = arith.constant 0 : index
    %c7 = arith.constant 7 : index
    %104 = vector.load %arg4[%c0_35, %c7] : memref<8x12xf32, #tpu.memory_space<vmem>>, vector<8x1xf32>
    %c0_36 = arith.constant 0 : index
    %c0_37 = arith.constant 0 : index
    %c0_38 = arith.constant 0 : index
    %105 = vector.load %arg5[%c0_36, %c0_37, %c0_38] : memref<1x8x3xf32, #tpu.memory_space<vmem>>, vector<1x8x1xf32>
    %106 = vector.shape_cast %105 : vector<1x8x1xf32> to vector<8x1xf32>
    %107 = vector.broadcast %103 : vector<8x1xf32> to vector<8x1024xf32>
    %108 = arith.mulf %90, %107 : vector<8x1024xf32>
    %109 = vector.broadcast %106 : vector<8x1xf32> to vector<8x1024xf32>
    %110 = arith.addf %108, %109 : vector<8x1024xf32>
    %cst_39 = arith.constant 0.000000e+00 : f32
    %111 = vector.broadcast %cst_39 : f32 to vector<8x1024xf32>
    %112 = arith.maximumf %110, %111 : vector<8x1024xf32>
    %c33_i32_40 = arith.constant 33 : i32
    %113 = tpu.dynamic_rotate %112 by %c33_i32_40 dim 1 : vector<8x1024xf32>, i32 -> vector<8x1024xf32>
    %114 = vector.broadcast %20 : vector<1x1024xf32> to vector<8x1024xf32>
    %115 = arith.mulf %113, %114 : vector<8x1024xf32>
    %c32_i32_41 = arith.constant 32 : i32
    %116 = tpu.dynamic_rotate %112 by %c32_i32_41 dim 1 : vector<8x1024xf32>, i32 -> vector<8x1024xf32>
    %117 = vector.broadcast %22 : vector<1x1024xf32> to vector<8x1024xf32>
    %118 = arith.mulf %116, %117 : vector<8x1024xf32>
    %c31_i32_42 = arith.constant 31 : i32
    %119 = tpu.dynamic_rotate %112 by %c31_i32_42 dim 1 : vector<8x1024xf32>, i32 -> vector<8x1024xf32>
    %120 = vector.broadcast %25 : vector<1x1024xf32> to vector<8x1024xf32>
    %121 = arith.mulf %119, %120 : vector<8x1024xf32>
    %122 = tpu.concatenate %115, %118, %121 in 0 : vector<8x1024xf32>, vector<8x1024xf32>, vector<8x1024xf32> -> vector<24x1024xf32>
    %123 = arith.truncf %122 : vector<24x1024xf32> to vector<24x1024xbf16>
    %c0_43 = arith.constant 0 : index
    %c0_44 = arith.constant 0 : index
    %c0_45 = arith.constant 0 : index
    %124 = vector.load %arg8[%c0_43, %c0_44, %c0_45] : memref<9x8x24xbf16, #tpu.memory_space<vmem>>, vector<1x8x24xbf16>
    %125 = vector.shape_cast %124 : vector<1x8x24xbf16> to vector<8x24xbf16>
    %cst_46 = arith.constant dense<0.000000e+00> : vector<8x1024xf32>
    %126 = tpu.matmul %125, %123, %cst_46 {dimension_numbers = #tpu.dot_dimension_numbers<[1], [0], [0], [1], [0, 0, 1, 1], [], []>} : vector<8x24xbf16>, vector<24x1024xbf16>, vector<8x1024xf32> -> vector<8x1024xf32>
    %c1_i32_47 = arith.constant 1 : i32
    %127 = tpu.dynamic_rotate %112 by %c1_i32_47 dim 1 : vector<8x1024xf32>, i32 -> vector<8x1024xf32>
    %128 = vector.broadcast %27 : vector<1x1024xf32> to vector<8x1024xf32>
    %129 = arith.mulf %127, %128 : vector<8x1024xf32>
    %c1023_i32_48 = arith.constant 1023 : i32
    %130 = tpu.dynamic_rotate %112 by %c1023_i32_48 dim 1 : vector<8x1024xf32>, i32 -> vector<8x1024xf32>
    %131 = vector.broadcast %29 : vector<1x1024xf32> to vector<8x1024xf32>
    %132 = arith.mulf %130, %131 : vector<8x1024xf32>
    %133 = tpu.concatenate %129, %112, %132 in 0 : vector<8x1024xf32>, vector<8x1024xf32>, vector<8x1024xf32> -> vector<24x1024xf32>
    %134 = arith.truncf %133 : vector<24x1024xf32> to vector<24x1024xbf16>
    %c1_49 = arith.constant 1 : index
    %c0_50 = arith.constant 0 : index
    %c0_51 = arith.constant 0 : index
    %135 = vector.load %arg8[%c1_49, %c0_50, %c0_51] : memref<9x8x24xbf16, #tpu.memory_space<vmem>>, vector<1x8x24xbf16>
    %136 = vector.shape_cast %135 : vector<1x8x24xbf16> to vector<8x24xbf16>
    %cst_52 = arith.constant dense<0.000000e+00> : vector<8x1024xf32>
    %137 = tpu.matmul %136, %134, %cst_52 {dimension_numbers = #tpu.dot_dimension_numbers<[1], [0], [0], [1], [0, 0, 1, 1], [], []>} : vector<8x24xbf16>, vector<24x1024xbf16>, vector<8x1024xf32> -> vector<8x1024xf32>
    %138 = arith.addf %126, %137 : vector<8x1024xf32>
    %c993_i32_53 = arith.constant 993 : i32
    %139 = tpu.dynamic_rotate %112 by %c993_i32_53 dim 1 : vector<8x1024xf32>, i32 -> vector<8x1024xf32>
    %140 = vector.broadcast %32 : vector<1x1024xf32> to vector<8x1024xf32>
    %141 = arith.mulf %139, %140 : vector<8x1024xf32>
    %c992_i32_54 = arith.constant 992 : i32
    %142 = tpu.dynamic_rotate %112 by %c992_i32_54 dim 1 : vector<8x1024xf32>, i32 -> vector<8x1024xf32>
    %143 = vector.broadcast %34 : vector<1x1024xf32> to vector<8x1024xf32>
    %144 = arith.mulf %142, %143 : vector<8x1024xf32>
    %c991_i32_55 = arith.constant 991 : i32
    %145 = tpu.dynamic_rotate %112 by %c991_i32_55 dim 1 : vector<8x1024xf32>, i32 -> vector<8x1024xf32>
    %146 = vector.broadcast %37 : vector<1x1024xf32> to vector<8x1024xf32>
    %147 = arith.mulf %145, %146 : vector<8x1024xf32>
    %148 = tpu.concatenate %141, %144, %147 in 0 : vector<8x1024xf32>, vector<8x1024xf32>, vector<8x1024xf32> -> vector<24x1024xf32>
    %149 = arith.truncf %148 : vector<24x1024xf32> to vector<24x1024xbf16>
    %c2_56 = arith.constant 2 : index
    %c0_57 = arith.constant 0 : index
    %c0_58 = arith.constant 0 : index
    %150 = vector.load %arg8[%c2_56, %c0_57, %c0_58] : memref<9x8x24xbf16, #tpu.memory_space<vmem>>, vector<1x8x24xbf16>
    %151 = vector.shape_cast %150 : vector<1x8x24xbf16> to vector<8x24xbf16>
    %cst_59 = arith.constant dense<0.000000e+00> : vector<8x1024xf32>
    %152 = tpu.matmul %151, %149, %cst_59 {dimension_numbers = #tpu.dot_dimension_numbers<[1], [0], [0], [1], [0, 0, 1, 1], [], []>} : vector<8x24xbf16>, vector<24x1024xbf16>, vector<8x1024xf32> -> vector<8x1024xf32>
    %153 = arith.addf %138, %152 : vector<8x1024xf32>
    %154 = vector.broadcast %104 : vector<8x1xf32> to vector<8x1024xf32>
    %155 = arith.addf %153, %154 : vector<8x1024xf32>
    %156 = arith.addf %102, %155 : vector<8x1024xf32>
    %c0_60 = arith.constant 0 : index
    %c8 = arith.constant 8 : index
    %157 = vector.load %arg4[%c0_60, %c8] : memref<8x12xf32, #tpu.memory_space<vmem>>, vector<8x1xf32>
    %c0_61 = arith.constant 0 : index
    %c9 = arith.constant 9 : index
    %158 = vector.load %arg4[%c0_61, %c9] : memref<8x12xf32, #tpu.memory_space<vmem>>, vector<8x1xf32>
    %c0_62 = arith.constant 0 : index
    %c0_63 = arith.constant 0 : index
    %c1_64 = arith.constant 1 : index
    %159 = vector.load %arg5[%c0_62, %c0_63, %c1_64] : memref<1x8x3xf32, #tpu.memory_space<vmem>>, vector<1x8x1xf32>
    %160 = vector.shape_cast %159 : vector<1x8x1xf32> to vector<8x1xf32>
    %161 = vector.broadcast %157 : vector<8x1xf32> to vector<8x1024xf32>
    %162 = arith.mulf %156, %161 : vector<8x1024xf32>
    %163 = vector.broadcast %160 : vector<8x1xf32> to vector<8x1024xf32>
    %164 = arith.addf %162, %163 : vector<8x1024xf32>
    %cst_65 = arith.constant 0.000000e+00 : f32
    %165 = vector.broadcast %cst_65 : f32 to vector<8x1024xf32>
    %166 = arith.maximumf %164, %165 : vector<8x1024xf32>
    %c33_i32_66 = arith.constant 33 : i32
    %167 = tpu.dynamic_rotate %166 by %c33_i32_66 dim 1 : vector<8x1024xf32>, i32 -> vector<8x1024xf32>
    %168 = vector.broadcast %20 : vector<1x1024xf32> to vector<8x1024xf32>
    %169 = arith.mulf %167, %168 : vector<8x1024xf32>
    %c32_i32_67 = arith.constant 32 : i32
    %170 = tpu.dynamic_rotate %166 by %c32_i32_67 dim 1 : vector<8x1024xf32>, i32 -> vector<8x1024xf32>
    %171 = vector.broadcast %22 : vector<1x1024xf32> to vector<8x1024xf32>
    %172 = arith.mulf %170, %171 : vector<8x1024xf32>
    %c31_i32_68 = arith.constant 31 : i32
    %173 = tpu.dynamic_rotate %166 by %c31_i32_68 dim 1 : vector<8x1024xf32>, i32 -> vector<8x1024xf32>
    %174 = vector.broadcast %25 : vector<1x1024xf32> to vector<8x1024xf32>
    %175 = arith.mulf %173, %174 : vector<8x1024xf32>
    %176 = tpu.concatenate %169, %172, %175 in 0 : vector<8x1024xf32>, vector<8x1024xf32>, vector<8x1024xf32> -> vector<24x1024xf32>
    %177 = arith.truncf %176 : vector<24x1024xf32> to vector<24x1024xbf16>
    %c3_69 = arith.constant 3 : index
    %c0_70 = arith.constant 0 : index
    %c0_71 = arith.constant 0 : index
    %178 = vector.load %arg8[%c3_69, %c0_70, %c0_71] : memref<9x8x24xbf16, #tpu.memory_space<vmem>>, vector<1x8x24xbf16>
    %179 = vector.shape_cast %178 : vector<1x8x24xbf16> to vector<8x24xbf16>
    %cst_72 = arith.constant dense<0.000000e+00> : vector<8x1024xf32>
    %180 = tpu.matmul %179, %177, %cst_72 {dimension_numbers = #tpu.dot_dimension_numbers<[1], [0], [0], [1], [0, 0, 1, 1], [], []>} : vector<8x24xbf16>, vector<24x1024xbf16>, vector<8x1024xf32> -> vector<8x1024xf32>
    %c1_i32_73 = arith.constant 1 : i32
    %181 = tpu.dynamic_rotate %166 by %c1_i32_73 dim 1 : vector<8x1024xf32>, i32 -> vector<8x1024xf32>
    %182 = vector.broadcast %27 : vector<1x1024xf32> to vector<8x1024xf32>
    %183 = arith.mulf %181, %182 : vector<8x1024xf32>
    %c1023_i32_74 = arith.constant 1023 : i32
    %184 = tpu.dynamic_rotate %166 by %c1023_i32_74 dim 1 : vector<8x1024xf32>, i32 -> vector<8x1024xf32>
    %185 = vector.broadcast %29 : vector<1x1024xf32> to vector<8x1024xf32>
    %186 = arith.mulf %184, %185 : vector<8x1024xf32>
    %187 = tpu.concatenate %183, %166, %186 in 0 : vector<8x1024xf32>, vector<8x1024xf32>, vector<8x1024xf32> -> vector<24x1024xf32>
    %188 = arith.truncf %187 : vector<24x1024xf32> to vector<24x1024xbf16>
    %c4_75 = arith.constant 4 : index
    %c0_76 = arith.constant 0 : index
    %c0_77 = arith.constant 0 : index
    %189 = vector.load %arg8[%c4_75, %c0_76, %c0_77] : memref<9x8x24xbf16, #tpu.memory_space<vmem>>, vector<1x8x24xbf16>
    %190 = vector.shape_cast %189 : vector<1x8x24xbf16> to vector<8x24xbf16>
    %cst_78 = arith.constant dense<0.000000e+00> : vector<8x1024xf32>
    %191 = tpu.matmul %190, %188, %cst_78 {dimension_numbers = #tpu.dot_dimension_numbers<[1], [0], [0], [1], [0, 0, 1, 1], [], []>} : vector<8x24xbf16>, vector<24x1024xbf16>, vector<8x1024xf32> -> vector<8x1024xf32>
    %192 = arith.addf %180, %191 : vector<8x1024xf32>
    %c993_i32_79 = arith.constant 993 : i32
    %193 = tpu.dynamic_rotate %166 by %c993_i32_79 dim 1 : vector<8x1024xf32>, i32 -> vector<8x1024xf32>
    %194 = vector.broadcast %32 : vector<1x1024xf32> to vector<8x1024xf32>
    %195 = arith.mulf %193, %194 : vector<8x1024xf32>
    %c992_i32_80 = arith.constant 992 : i32
    %196 = tpu.dynamic_rotate %166 by %c992_i32_80 dim 1 : vector<8x1024xf32>, i32 -> vector<8x1024xf32>
    %197 = vector.broadcast %34 : vector<1x1024xf32> to vector<8x1024xf32>
    %198 = arith.mulf %196, %197 : vector<8x1024xf32>
    %c991_i32_81 = arith.constant 991 : i32
    %199 = tpu.dynamic_rotate %166 by %c991_i32_81 dim 1 : vector<8x1024xf32>, i32 -> vector<8x1024xf32>
    %200 = vector.broadcast %37 : vector<1x1024xf32> to vector<8x1024xf32>
    %201 = arith.mulf %199, %200 : vector<8x1024xf32>
    %202 = tpu.concatenate %195, %198, %201 in 0 : vector<8x1024xf32>, vector<8x1024xf32>, vector<8x1024xf32> -> vector<24x1024xf32>
    %203 = arith.truncf %202 : vector<24x1024xf32> to vector<24x1024xbf16>
    %c5_82 = arith.constant 5 : index
    %c0_83 = arith.constant 0 : index
    %c0_84 = arith.constant 0 : index
    %204 = vector.load %arg8[%c5_82, %c0_83, %c0_84] : memref<9x8x24xbf16, #tpu.memory_space<vmem>>, vector<1x8x24xbf16>
    %205 = vector.shape_cast %204 : vector<1x8x24xbf16> to vector<8x24xbf16>
    %cst_85 = arith.constant dense<0.000000e+00> : vector<8x1024xf32>
    %206 = tpu.matmul %205, %203, %cst_85 {dimension_numbers = #tpu.dot_dimension_numbers<[1], [0], [0], [1], [0, 0, 1, 1], [], []>} : vector<8x24xbf16>, vector<24x1024xbf16>, vector<8x1024xf32> -> vector<8x1024xf32>
    %207 = arith.addf %192, %206 : vector<8x1024xf32>
    %208 = vector.broadcast %158 : vector<8x1xf32> to vector<8x1024xf32>
    %209 = arith.addf %207, %208 : vector<8x1024xf32>
    %c0_86 = arith.constant 0 : index
    %c10 = arith.constant 10 : index
    %210 = vector.load %arg4[%c0_86, %c10] : memref<8x12xf32, #tpu.memory_space<vmem>>, vector<8x1xf32>
    %c0_87 = arith.constant 0 : index
    %c11 = arith.constant 11 : index
    %211 = vector.load %arg4[%c0_87, %c11] : memref<8x12xf32, #tpu.memory_space<vmem>>, vector<8x1xf32>
    %c0_88 = arith.constant 0 : index
    %c0_89 = arith.constant 0 : index
    %c2_90 = arith.constant 2 : index
    %212 = vector.load %arg5[%c0_88, %c0_89, %c2_90] : memref<1x8x3xf32, #tpu.memory_space<vmem>>, vector<1x8x1xf32>
    %213 = vector.shape_cast %212 : vector<1x8x1xf32> to vector<8x1xf32>
    %214 = vector.broadcast %210 : vector<8x1xf32> to vector<8x1024xf32>
    %215 = arith.mulf %209, %214 : vector<8x1024xf32>
    %216 = vector.broadcast %213 : vector<8x1xf32> to vector<8x1024xf32>
    %217 = arith.addf %215, %216 : vector<8x1024xf32>
    %cst_91 = arith.constant 0.000000e+00 : f32
    %218 = vector.broadcast %cst_91 : f32 to vector<8x1024xf32>
    %219 = arith.maximumf %217, %218 : vector<8x1024xf32>
    %c33_i32_92 = arith.constant 33 : i32
    %220 = tpu.dynamic_rotate %219 by %c33_i32_92 dim 1 : vector<8x1024xf32>, i32 -> vector<8x1024xf32>
    %221 = vector.broadcast %20 : vector<1x1024xf32> to vector<8x1024xf32>
    %222 = arith.mulf %220, %221 : vector<8x1024xf32>
    %c32_i32_93 = arith.constant 32 : i32
    %223 = tpu.dynamic_rotate %219 by %c32_i32_93 dim 1 : vector<8x1024xf32>, i32 -> vector<8x1024xf32>
    %224 = vector.broadcast %22 : vector<1x1024xf32> to vector<8x1024xf32>
    %225 = arith.mulf %223, %224 : vector<8x1024xf32>
    %c31_i32_94 = arith.constant 31 : i32
    %226 = tpu.dynamic_rotate %219 by %c31_i32_94 dim 1 : vector<8x1024xf32>, i32 -> vector<8x1024xf32>
    %227 = vector.broadcast %25 : vector<1x1024xf32> to vector<8x1024xf32>
    %228 = arith.mulf %226, %227 : vector<8x1024xf32>
    %229 = tpu.concatenate %222, %225, %228 in 0 : vector<8x1024xf32>, vector<8x1024xf32>, vector<8x1024xf32> -> vector<24x1024xf32>
    %230 = arith.truncf %229 : vector<24x1024xf32> to vector<24x1024xbf16>
    %c6_95 = arith.constant 6 : index
    %c0_96 = arith.constant 0 : index
    %c0_97 = arith.constant 0 : index
    %231 = vector.load %arg8[%c6_95, %c0_96, %c0_97] : memref<9x8x24xbf16, #tpu.memory_space<vmem>>, vector<1x8x24xbf16>
    %232 = vector.shape_cast %231 : vector<1x8x24xbf16> to vector<8x24xbf16>
    %cst_98 = arith.constant dense<0.000000e+00> : vector<8x1024xf32>
    %233 = tpu.matmul %232, %230, %cst_98 {dimension_numbers = #tpu.dot_dimension_numbers<[1], [0], [0], [1], [0, 0, 1, 1], [], []>} : vector<8x24xbf16>, vector<24x1024xbf16>, vector<8x1024xf32> -> vector<8x1024xf32>
    %c1_i32_99 = arith.constant 1 : i32
    %234 = tpu.dynamic_rotate %219 by %c1_i32_99 dim 1 : vector<8x1024xf32>, i32 -> vector<8x1024xf32>
    %235 = vector.broadcast %27 : vector<1x1024xf32> to vector<8x1024xf32>
    %236 = arith.mulf %234, %235 : vector<8x1024xf32>
    %c1023_i32_100 = arith.constant 1023 : i32
    %237 = tpu.dynamic_rotate %219 by %c1023_i32_100 dim 1 : vector<8x1024xf32>, i32 -> vector<8x1024xf32>
    %238 = vector.broadcast %29 : vector<1x1024xf32> to vector<8x1024xf32>
    %239 = arith.mulf %237, %238 : vector<8x1024xf32>
    %240 = tpu.concatenate %236, %219, %239 in 0 : vector<8x1024xf32>, vector<8x1024xf32>, vector<8x1024xf32> -> vector<24x1024xf32>
    %241 = arith.truncf %240 : vector<24x1024xf32> to vector<24x1024xbf16>
    %c7_101 = arith.constant 7 : index
    %c0_102 = arith.constant 0 : index
    %c0_103 = arith.constant 0 : index
    %242 = vector.load %arg8[%c7_101, %c0_102, %c0_103] : memref<9x8x24xbf16, #tpu.memory_space<vmem>>, vector<1x8x24xbf16>
    %243 = vector.shape_cast %242 : vector<1x8x24xbf16> to vector<8x24xbf16>
    %cst_104 = arith.constant dense<0.000000e+00> : vector<8x1024xf32>
    %244 = tpu.matmul %243, %241, %cst_104 {dimension_numbers = #tpu.dot_dimension_numbers<[1], [0], [0], [1], [0, 0, 1, 1], [], []>} : vector<8x24xbf16>, vector<24x1024xbf16>, vector<8x1024xf32> -> vector<8x1024xf32>
    %245 = arith.addf %233, %244 : vector<8x1024xf32>
    %c993_i32_105 = arith.constant 993 : i32
    %246 = tpu.dynamic_rotate %219 by %c993_i32_105 dim 1 : vector<8x1024xf32>, i32 -> vector<8x1024xf32>
    %247 = vector.broadcast %32 : vector<1x1024xf32> to vector<8x1024xf32>
    %248 = arith.mulf %246, %247 : vector<8x1024xf32>
    %c992_i32_106 = arith.constant 992 : i32
    %249 = tpu.dynamic_rotate %219 by %c992_i32_106 dim 1 : vector<8x1024xf32>, i32 -> vector<8x1024xf32>
    %250 = vector.broadcast %34 : vector<1x1024xf32> to vector<8x1024xf32>
    %251 = arith.mulf %249, %250 : vector<8x1024xf32>
    %c991_i32_107 = arith.constant 991 : i32
    %252 = tpu.dynamic_rotate %219 by %c991_i32_107 dim 1 : vector<8x1024xf32>, i32 -> vector<8x1024xf32>
    %253 = vector.broadcast %37 : vector<1x1024xf32> to vector<8x1024xf32>
    %254 = arith.mulf %252, %253 : vector<8x1024xf32>
    %255 = tpu.concatenate %248, %251, %254 in 0 : vector<8x1024xf32>, vector<8x1024xf32>, vector<8x1024xf32> -> vector<24x1024xf32>
    %256 = arith.truncf %255 : vector<24x1024xf32> to vector<24x1024xbf16>
    %c8_108 = arith.constant 8 : index
    %c0_109 = arith.constant 0 : index
    %c0_110 = arith.constant 0 : index
    %257 = vector.load %arg8[%c8_108, %c0_109, %c0_110] : memref<9x8x24xbf16, #tpu.memory_space<vmem>>, vector<1x8x24xbf16>
    %258 = vector.shape_cast %257 : vector<1x8x24xbf16> to vector<8x24xbf16>
    %cst_111 = arith.constant dense<0.000000e+00> : vector<8x1024xf32>
    %259 = tpu.matmul %258, %256, %cst_111 {dimension_numbers = #tpu.dot_dimension_numbers<[1], [0], [0], [1], [0, 0, 1, 1], [], []>} : vector<8x24xbf16>, vector<24x1024xbf16>, vector<8x1024xf32> -> vector<8x1024xf32>
    %260 = arith.addf %245, %259 : vector<8x1024xf32>
    %261 = vector.broadcast %211 : vector<8x1xf32> to vector<8x1024xf32>
    %262 = arith.addf %260, %261 : vector<8x1024xf32>
    %263 = arith.addf %156, %262 : vector<8x1024xf32>
    %264 = arith.truncf %263 : vector<8x1024xf32> to vector<8x1024xbf16>
    %c0_112 = arith.constant 0 : index
    %c0_113 = arith.constant 0 : index
    %c0_114 = arith.constant 0 : index
    %265 = vector.load %arg9[%c0_112, %c0_113, %c0_114] : memref<1x8x1024xbf16, #tpu.memory_space<vmem>>, vector<1x8x1024xbf16>
    %266 = vector.shape_cast %265 : vector<1x8x1024xbf16> to vector<8x1024xbf16>
    %267 = vector.shape_cast %264 : vector<8x1024xbf16> to vector<1x8x1024xbf16>
    tpu.vector_store %arg9[%c0_112, %c0_113, %c0_114], %267 {strides = array<i32>} : memref<1x8x1024xbf16, #tpu.memory_space<vmem>>, vector<1x8x1024xbf16>,
    return
  }
  func.func @transform_0(%arg0: i32) -> (i32, i32, i32) {
    %c0_i32 = arith.constant 0 : i32
    %c0_i32_0 = arith.constant 0 : i32
    %c0_i32_1 = arith.constant 0 : i32
    return %arg0, %c0_i32, %c0_i32_0 : i32, i32, i32
  }
  func.func @transform_1(%arg0: i32) -> (i32, i32, i32) {
    %c0_i32 = arith.constant 0 : i32
    %c0_i32_0 = arith.constant 0 : i32
    %c0_i32_1 = arith.constant 0 : i32
    return %arg0, %c0_i32, %c0_i32_0 : i32, i32, i32
  }
  func.func @transform_2(%arg0: i32) -> (i32, i32) {
    %c0_i32 = arith.constant 0 : i32
    %c0_i32_0 = arith.constant 0 : i32
    %c0_i32_1 = arith.constant 0 : i32
    return %c0_i32, %c0_i32_0 : i32, i32
  }
  func.func @transform_3(%arg0: i32) -> (i32, i32) {
    %c0_i32 = arith.constant 0 : i32
    %c0_i32_0 = arith.constant 0 : i32
    %c0_i32_1 = arith.constant 0 : i32
    return %c0_i32, %c0_i32_0 : i32, i32
  }
  func.func @transform_4(%arg0: i32) -> (i32, i32, i32) {
    %c0_i32 = arith.constant 0 : i32
    %c0_i32_0 = arith.constant 0 : i32
    %c0_i32_1 = arith.constant 0 : i32
    return %arg0, %c0_i32, %c0_i32_0 : i32, i32, i32
  }
  func.func @transform_5(%arg0: i32) -> (i32, i32, i32) {
    %c0_i32 = arith.constant 0 : i32
    %c0_i32_0 = arith.constant 0 : i32
    %c0_i32_1 = arith.constant 0 : i32
    %c0_i32_2 = arith.constant 0 : i32
    return %c0_i32, %c0_i32_0, %c0_i32_1 : i32, i32, i32
  }
  func.func @transform_6(%arg0: i32) -> (i32, i32) {
    %c0_i32 = arith.constant 0 : i32
    %c0_i32_0 = arith.constant 0 : i32
    %c0_i32_1 = arith.constant 0 : i32
    return %c0_i32, %c0_i32_0 : i32, i32
  }
  func.func @transform_7(%arg0: i32) -> (i32, i32, i32) {
    %c0_i32 = arith.constant 0 : i32
    %c0_i32_0 = arith.constant 0 : i32
    %c0_i32_1 = arith.constant 0 : i32
    %c0_i32_2 = arith.constant 0 : i32
    return %c0_i32, %c0_i32_0, %c0_i32_1 : i32, i32, i32
  }
  func.func @transform_8(%arg0: i32) -> (i32, i32, i32) {
    %c0_i32 = arith.constant 0 : i32
    %c0_i32_0 = arith.constant 0 : i32
    %c0_i32_1 = arith.constant 0 : i32
    return %arg0, %c0_i32, %c0_i32_0 : i32, i32, i32
  }
}

</mosaic_0001>

<llo_original>
// kernel: upsample_forward.2
$region0: #{upsample_forward.2}
  #allocation0 [shape = 'u32[]', space=smem, size = 0x4, offset = 0x4, fixed_abs, tag = 'smem constant byte address 0x4 - core index']
  #allocation1 [shape = 'u32[144,128]{1,0:T(1,128)}', space=vmem, size = 0x12000, scoped, tag = 'internal scratch']
  %s0 = inlined_call_operand.vmem [shape: bf16[2,8,256], index: 0, kind: input, shape index: {}, may-alias: {0,1}]
  %s1 = inlined_call_operand.vmem [shape: bf16[2,8,256], index: 1, kind: input, shape index: {}, may-alias: {0,1}]
  %s2 = inlined_call_operand.vmem [shape: f32[8,12], index: 2, kind: input, shape index: {}]
  %s3 = inlined_call_operand.vmem [shape: f32[2,8,3], index: 3, kind: input, shape index: {}]
  %s4 = inlined_call_operand.vmem [shape: bf16[3,8,24], index: 4, kind: input, shape index: {}]
  %s5 = inlined_call_operand.vmem [shape: bf16[8,8], index: 5, kind: input, shape index: {}]
  %s6 = inlined_call_operand.vmem [shape: bf16[9,8,24], index: 6, kind: input, shape index: {}]
  %s7 = inlined_call_operand.vmem [shape: bf16[2,8,256], index: 7, kind: output, shape index: {}]
  %s8 = sld [smem:[#allocation0]]
  $region61: #{upsample_forward.2} parent=0
    _
  %s10 = ssub.s32 1, %s8
  %s11 = scalar_select 0, %s10, %s8
  loop: start=0, step=1, limit=4
  $region2: #{upsample_forward.2} parent=0 // loop_pre_header
    _
  $region3: #{upsample_forward.2} parent=0 // loop_header
    %s13 = sphi 0, %s17
    %p14 = scmp.ge.s32.totalorder %s13, 4
    %s23 = sphi 0, %s25
    %s26 = sphi 0, %s23
    %s27 = sphi 0, %s26
    %s43 = sphi 0, %s27
    %s49 = sphi 0, %s51
    %s52 = sphi 0, %s49
    %s53 = sphi 0, %s52
    %s69 = sphi 0, %s53
    %s73 = sphi 0, %s73
    %s75 = sphi 0, %s73
    %s76 = sphi 0, %s75
    %s90 = sphi 0, %s76
    %s96 = sphi 0, %s98
    %s99 = sphi 0, %s96
    %s100 = sphi 0, %s99
    %s116 = sphi 0, %s100
    %s120 = sphi 0, %s120
    %s122 = sphi 0, %s120
    %s123 = sphi 0, %s122
    %s137 = sphi 0, %s123
    %s141 = sphi 0, %s141
    %s143 = sphi 0, %s141
    %s144 = sphi 0, %s143
    %s158 = sphi 0, %s144
    %s162 = sphi 0, %s162
    %s164 = sphi 0, %s162
    %s165 = sphi 0, %s164
    %s179 = sphi 0, %s165
    %s185 = sphi 0, %s187
    %s188 = sphi 0, %s185
    %s189 = sphi 0, %s188
    %s205 = sphi 0, %s189
  $region4: #{upsample_forward.2} parent=0 // loop_header_branch
    %16 = sbr.rel (%p14) target = $region8
  $region5: #{upsample_forward.2} parent=0 // loop_body
    %s18 = ssub.s32 %s13, 1
    %s19 = ssub.s32 %s13, 2
    %s20 = sadd.s32 %s13, 1
    %s21 = ssub.s32 %s13, %s20
    %p22 = scmp.eq.s32.totalorder %s21, 0
    %s24 = sadd.s32 %s23, 1
    %s25 = scalar_select %p22, %s23, %s24
    %p28 = pneg %p22
    %p29 = scmp.eq.s32.totalorder %s13, 1
    %p30 = por %p28, %p29
    %p31 = scmp.ne.s32.totalorder %s23, %s26
    %p32 = scmp.eq.s32.totalorder %s13, 0
    %p33 = por %p31, %p32
    %p34 = scmp.ne.s32.totalorder %s23, %s26
    %p35 = scmp.eq.s32.totalorder %s18, 1
    %p36 = por %p34, %p35
    %p37 = scmp.ne.s32.totalorder %s26, %s27
    %p38 = scmp.eq.s32.totalorder %s18, 0
    %p39 = por %p37, %p38
    %p40 = scmp.ne.s32.totalorder %s26, %s27
    %p41 = scmp.eq.s32.totalorder %s19, 1
    %p42 = por %p40, %p41
    %p44 = scmp.ne.s32.totalorder %s27, %s43
    %p45 = scmp.eq.s32.totalorder %s19, 0
    %p46 = por %p44, %p45
    %s47 = ssub.s32 %s13, %s20
    %p48 = scmp.eq.s32.totalorder %s47, 0
    %s50 = sadd.s32 %s49, 1
    %s51 = scalar_select %p48, %s49, %s50
    %p54 = pneg %p48
    %p55 = scmp.eq.s32.totalorder %s13, 1
    %p56 = por %p54, %p55
    %p57 = scmp.ne.s32.totalorder %s49, %s52
    %p58 = scmp.eq.s32.totalorder %s13, 0
    %p59 = por %p57, %p58
    %p60 = scmp.ne.s32.totalorder %s49, %s52
    %p61 = scmp.eq.s32.totalorder %s18, 1
    %p62 = por %p60, %p61
    %p63 = scmp.ne.s32.totalorder %s52, %s53
    %p64 = scmp.eq.s32.totalorder %s18, 0
    %p65 = por %p63, %p64
    %p66 = scmp.ne.s32.totalorder %s52, %s53
    %p67 = scmp.eq.s32.totalorder %s19, 1
    %p68 = por %p66, %p67
    %p70 = scmp.ne.s32.totalorder %s53, %s69
    %p71 = scmp.eq.s32.totalorder %s19, 0
    %p72 = por %p70, %p71
    %s74 = sadd.s32 %s73, 1
    %p77 = scmp.eq.s32.totalorder %s13, 1
    %p78 = scmp.ne.s32.totalorder %s73, %s75
    %p79 = scmp.eq.s32.totalorder %s13, 0
    %p80 = por %p78, %p79
    %p81 = scmp.ne.s32.totalorder %s73, %s75
    %p82 = scmp.eq.s32.totalorder %s18, 1
    %p83 = por %p81, %p82
    %p84 = scmp.ne.s32.totalorder %s75, %s76
    %p85 = scmp.eq.s32.totalorder %s18, 0
    %p86 = por %p84, %p85
    %p87 = scmp.ne.s32.totalorder %s75, %s76
    %p88 = scmp.eq.s32.totalorder %s19, 1
    %p89 = por %p87, %p88
    %p91 = scmp.ne.s32.totalorder %s76, %s90
    %p92 = scmp.eq.s32.totalorder %s19, 0
    %p93 = por %p91, %p92
    %s94 = ssub.s32 %s13, %s20
    %p95 = scmp.eq.s32.totalorder %s94, 0
    %s97 = sadd.s32 %s96, 1
    %s98 = scalar_select %p95, %s96, %s97
    %p101 = pneg %p95
    %p102 = scmp.eq.s32.totalorder %s13, 1
    %p103 = por %p101, %p102
    %p104 = scmp.ne.s32.totalorder %s96, %s99
    %p105 = scmp.eq.s32.totalorder %s13, 0
    %p106 = por %p104, %p105
    %p107 = scmp.ne.s32.totalorder %s96, %s99
    %p108 = scmp.eq.s32.totalorder %s18, 1
    %p109 = por %p107, %p108
    %p110 = scmp.ne.s32.totalorder %s99, %s100
    %p111 = scmp.eq.s32.totalorder %s18, 0
    %p112 = por %p110, %p111
    %p113 = scmp.ne.s32.totalorder %s99, %s100
    %p114 = scmp.eq.s32.totalorder %s19, 1
    %p115 = por %p113, %p114
    %p117 = scmp.ne.s32.totalorder %s100, %s116
    %p118 = scmp.eq.s32.totalorder %s19, 0
    %p119 = por %p117, %p118
    %s121 = sadd.s32 %s120, 1
    %p124 = scmp.eq.s32.totalorder %s13, 1
    %p125 = scmp.ne.s32.totalorder %s120, %s122
    %p126 = scmp.eq.s32.totalorder %s13, 0
    %p127 = por %p125, %p126
    %p128 = scmp.ne.s32.totalorder %s120, %s122
    %p129 = scmp.eq.s32.totalorder %s18, 1
    %p130 = por %p128, %p129
    %p131 = scmp.ne.s32.totalorder %s122, %s123
    %p132 = scmp.eq.s32.totalorder %s18, 0
    %p133 = por %p131, %p132
    %p134 = scmp.ne.s32.totalorder %s122, %s123
    %p135 = scmp.eq.s32.totalorder %s19, 1
    %p136 = por %p134, %p135
    %p138 = scmp.ne.s32.totalorder %s123, %s137
    %p139 = scmp.eq.s32.totalorder %s19, 0
    %p140 = por %p138, %p139
    %s142 = sadd.s32 %s141, 1
    %p145 = scmp.eq.s32.totalorder %s13, 1
    %p146 = scmp.ne.s32.totalorder %s141, %s143
    %p147 = scmp.eq.s32.totalorder %s13, 0
    %p148 = por %p146, %p147
    %p149 = scmp.ne.s32.totalorder %s141, %s143
    %p150 = scmp.eq.s32.totalorder %s18, 1
    %p151 = por %p149, %p150
    %p152 = scmp.ne.s32.totalorder %s143, %s144
    %p153 = scmp.eq.s32.totalorder %s18, 0
    %p154 = por %p152, %p153
    %p155 = scmp.ne.s32.totalorder %s143, %s144
    %p156 = scmp.eq.s32.totalorder %s19, 1
    %p157 = por %p155, %p156
    %p159 = scmp.ne.s32.totalorder %s144, %s158
    %p160 = scmp.eq.s32.totalorder %s19, 0
    %p161 = por %p159, %p160
    %s163 = sadd.s32 %s162, 1
    %p166 = scmp.eq.s32.totalorder %s13, 1
    %p167 = scmp.ne.s32.totalorder %s162, %s164
    %p168 = scmp.eq.s32.totalorder %s13, 0
    %p169 = por %p167, %p168
    %p170 = scmp.ne.s32.totalorder %s162, %s164
    %p171 = scmp.eq.s32.totalorder %s18, 1
    %p172 = por %p170, %p171
    %p173 = scmp.ne.s32.totalorder %s164, %s165
    %p174 = scmp.eq.s32.totalorder %s18, 0
    %p175 = por %p173, %p174
    %p176 = scmp.ne.s32.totalorder %s164, %s165
    %p177 = scmp.eq.s32.totalorder %s19, 1
    %p178 = por %p176, %p177
    %p180 = scmp.ne.s32.totalorder %s165, %s179
    %p181 = scmp.eq.s32.totalorder %s19, 0
    %p182 = por %p180, %p181
    %s183 = ssub.s32 %s13, %s20
    %p184 = scmp.eq.s32.totalorder %s183, 0
    %s186 = sadd.s32 %s185, 1
    %s187 = scalar_select %p184, %s185, %s186
    %p190 = pneg %p184
    %p191 = scmp.eq.s32.totalorder %s13, 1
    %p192 = por %p190, %p191
    %p193 = scmp.ne.s32.totalorder %s185, %s188
    %p194 = scmp.eq.s32.totalorder %s13, 0
    %p195 = por %p193, %p194
    %p196 = scmp.ne.s32.totalorder %s185, %s188
    %p197 = scmp.eq.s32.totalorder %s18, 1
    %p198 = por %p196, %p197
    %p199 = scmp.ne.s32.totalorder %s188, %s189
    %p200 = scmp.eq.s32.totalorder %s18, 0
    %p201 = por %p199, %p200
    %p202 = scmp.ne.s32.totalorder %s188, %s189
    %p203 = scmp.eq.s32.totalorder %s19, 1
    %p204 = por %p202, %p203
    %p206 = scmp.ne.s32.totalorder %s189, %s205
    %p207 = scmp.eq.s32.totalorder %s19, 0
    %p208 = por %p206, %p207
    %p209 = scmp.le.s32.totalorder 1, %s13
    %p210 = scmp.lt.s32.totalorder %s13, 3
    %p211 = pnand %p209, %p210
    %p212 = pneg %p211
    // Predicated region
    $region9: #{upsample_forward.2} parent=5 // pred_check
      _
    $region10: #{upsample_forward.2} parent=5 // pred_check_branch
      %214 = sbr.rel (%p211) target = $region12
    $region11: #{upsample_forward.2} parent=5 // pred_region
      %s215 = ssub.s32 %s13, 1
      // Predicated region
      $region13: #{upsample_forward.2} parent=11 // pred_check
        %p216 = pneg %p86
      $region14: #{upsample_forward.2} parent=11 // pred_check_branch
        %218 = sbr.rel (%p216) target = $region16
      $region15: #{upsample_forward.2} parent=11 // pred_region
        _
      $region16: #{upsample_forward.2} parent=11 // pred_fallthru
        _
      // Predicated region
      $region17: #{upsample_forward.2} parent=11 // pred_check
        %p219 = pneg %p133
      $region18: #{upsample_forward.2} parent=11 // pred_check_branch
        %221 = sbr.rel (%p219) target = $region20
      $region19: #{upsample_forward.2} parent=11 // pred_region
        _
      $region20: #{upsample_forward.2} parent=11 // pred_fallthru
        _
      // Predicated region
      $region21: #{upsample_forward.2} parent=11 // pred_check
        %p222 = pneg %p154
      $region22: #{upsample_forward.2} parent=11 // pred_check_branch
        %224 = sbr.rel (%p222) target = $region24
      $region23: #{upsample_forward.2} parent=11 // pred_region
        _
      $region24: #{upsample_forward.2} parent=11 // pred_fallthru
        _
      // Predicated region
      $region25: #{upsample_forward.2} parent=11 // pred_check
        %p225 = pneg %p175
      $region26: #{upsample_forward.2} parent=11 // pred_check_branch
        %227 = sbr.rel (%p225) target = $region28
      $region27: #{upsample_forward.2} parent=11 // pred_region
        _
      $region28: #{upsample_forward.2} parent=11 // pred_fallthru
        _
    $region12: #{upsample_forward.2} parent=5 // pred_fallthru
      _
    %p228 = scmp.lt.s32.totalorder %s13, 2
    // Predicated region
    $region29: #{upsample_forward.2} parent=5 // pred_check
      %p229 = pneg %p228
    $region30: #{upsample_forward.2} parent=5 // pred_check_branch
      %231 = sbr.rel (%p229) target = $region32
    $region31: #{upsample_forward.2} parent=5 // pred_region
      // Predicated region
      $region33: #{upsample_forward.2} parent=31 // pred_check
        %p232 = pneg %p33
      $region34: #{upsample_forward.2} parent=31 // pred_check_branch
        %234 = sbr.rel (%p232) target = $region36
      $region35: #{upsample_forward.2} parent=31 // pred_region
        %p235 = scmp.lt.s32.totalorder %s13, 1
        %s236 = scalar_select %p235, %s13, 1
        %s237 = smul.addr %s236, 2
        %s238 = smul.addr %s237, 4
        %s239 = scalar_lea.vmem %s0, %s238
      $region36: #{upsample_forward.2} parent=31 // pred_fallthru
        _
      // Predicated region
      $region37: #{upsample_forward.2} parent=31 // pred_check
        %p240 = pneg %p59
      $region38: #{upsample_forward.2} parent=31 // pred_check_branch
        %242 = sbr.rel (%p240) target = $region40
      $region39: #{upsample_forward.2} parent=31 // pred_region
        %p243 = scmp.lt.s32.totalorder %s13, 1
        %s244 = scalar_select %p243, %s13, 1
        %s245 = smul.addr %s244, 2
        %s246 = smul.addr %s245, 4
        %s247 = scalar_lea.vmem %s1, %s246
      $region40: #{upsample_forward.2} parent=31 // pred_fallthru
        _
      // Predicated region
      $region41: #{upsample_forward.2} parent=31 // pred_check
        %p248 = pneg %p106
      $region42: #{upsample_forward.2} parent=31 // pred_check_branch
        %250 = sbr.rel (%p248) target = $region44
      $region43: #{upsample_forward.2} parent=31 // pred_region
        %p251 = scmp.lt.s32.totalorder %s13, 1
        %s252 = scalar_select %p251, %s13, 1
        %s253 = smul.addr %s252, 8
        %s254 = scalar_lea.vmem %s3, %s253
      $region44: #{upsample_forward.2} parent=31 // pred_fallthru
        _
    $region32: #{upsample_forward.2} parent=5 // pred_fallthru
      _
    %p255 = scmp.le.s32.totalorder 1, %s13
    %p256 = scmp.lt.s32.totalorder %s13, 3
    %p257 = pnand %p255, %p256
    %p258 = pneg %p257
    // Predicated region
    $region45: #{upsample_forward.2} parent=5 // pred_check
      _
    $region46: #{upsample_forward.2} parent=5 // pred_check_branch
      %260 = sbr.rel (%p257) target = $region48
    $region47: #{upsample_forward.2} parent=5 // pred_region
      %s261 = ssub.s32 %s13, 1
      %p262 = scmp.lt.s32.totalorder %s18, 1
      %s263 = scalar_select %p262, %s18, 1
      %s264 = smul.addr %s263, 2
      %s265 = smul.addr %s264, 4
      %s266 = scalar_lea.vmem %s0, %s265
      %p267 = pneg %p39
      %p268 = pneg %p36
      %p269 = scmp.lt.s32.totalorder %s18, 1
      %s270 = scalar_select %p269, %s18, 1
      %s271 = smul.addr %s270, 2
      %s272 = smul.addr %s271, 4
      %s273 = scalar_lea.vmem %s1, %s272
      %p274 = pneg %p65
      %p275 = pneg %p62
      %p276 = pneg %p86
      %p277 = pneg %p83
      %p278 = scmp.lt.s32.totalorder %s18, 1
      %s279 = scalar_select %p278, %s18, 1
      %s280 = smul.addr %s279, 8
      %s281 = scalar_lea.vmem %s3, %s280
      %p282 = pneg %p112
      %p283 = pneg %p109
      %p284 = pneg %p133
      %p285 = pneg %p130
      %p286 = pneg %p154
      %p287 = pneg %p151
      %p288 = pneg %p175
      %p289 = pneg %p172
      %p290 = pneg %p201
      %p291 = pneg %p198
      %p292 = scmp.lt.s32.totalorder %s18, 1
      %s293 = scalar_select %p292, %s18, 1
      %s294 = smul.addr %s293, 2
      %s295 = smul.addr %s294, 4
      %s296 = scalar_lea.vmem %s7, %s295
      %p297 = scmp.lt.s32.totalorder %s18, 1
      %s298 = scalar_select %p297, %s18, 1
      %s299 = smul.addr %s298, 2
      %s300 = smul.addr %s299, 4
      %s301 = scalar_lea.vmem %s0, %s300
      %p302 = scmp.lt.s32.totalorder %s18, 1
      %s303 = scalar_select %p302, %s18, 1
      %s304 = smul.addr %s303, 2
      %s305 = smul.addr %s304, 4
      %s306 = scalar_lea.vmem %s1, %s305
      %p307 = scmp.lt.s32.totalorder %s18, 1
      %s308 = scalar_select %p307, %s18, 1
      %s309 = smul.addr %s308, 8
      %s310 = scalar_lea.vmem %s3, %s309
      %p311 = scmp.lt.s32.totalorder %s18, 1
      %s312 = scalar_select %p311, %s18, 1
      %s313 = smul.addr %s312, 2
      %s314 = smul.addr %s313, 4
      %s315 = scalar_lea.vmem %s7, %s314
      %v317 = vld [vmem:[%s301] sm:$0xff]
      %v318 = vunpack.c.l.bf16 %v317
      %v319 = vunpack.c.h.bf16 %v317
      %v320 = vld [vmem:[%s306] sm:$0xff]
      %v321 = vunpack.c.l.bf16 %v320
      %v322 = vunpack.c.h.bf16 %v320
      %v323 = vlaneseq
      %v324 = vand.u32 %v323, 127
      %v325 = vadd.s32 %v324, 128
      %v326 = vand.u32 %v324, 15
      %v327 = vand.u32 %v325, 15
      %vm328 = vcmp.ge.s32.totalorder %v324, 16
      %vm329 = vcmp.ge.s32.totalorder %v325, 16
      %vm330 = vcmp.lt.s32.totalorder %v324, 240
      %vm331 = vcmp.lt.s32.totalorder %v325, 240
      %vm332 = vcmp.ge.s32.totalorder %v326, 1
      %vm333 = vcmp.ge.s32.totalorder %v327, 1
      %vm334 = vcmp.le.s32.totalorder %v326, 14
      %vm335 = vcmp.le.s32.totalorder %v327, 14
      %vm336 = vmand %vm328, %vm332
      %vm337 = vmand %vm329, %vm333
      %v338 = vsel %vm336, 1, 0
      %v339 = vsel %vm337, 1, 0
      %v340 = vcvt.s32.f32 %v338
      %v341 = vcvt.s32.f32 %v339
      %v342 = vsel %vm328, 1, 0
      %v343 = vsel %vm329, 1, 0
      %v344 = vcvt.s32.f32 %v342
      %v345 = vcvt.s32.f32 %v343
      %vm346 = vmand %vm328, %vm334
      %vm347 = vmand %vm329, %vm335
      %v348 = vsel %vm346, 1, 0
      %v349 = vsel %vm347, 1, 0
      %v350 = vcvt.s32.f32 %v348
      %v351 = vcvt.s32.f32 %v349
      %v352 = vsel %vm332, 1, 0
      %v353 = vsel %vm333, 1, 0
      %v354 = vcvt.s32.f32 %v352
      %v355 = vcvt.s32.f32 %v353
      %v356 = vsel %vm334, 1, 0
      %v357 = vsel %vm335, 1, 0
      %v358 = vcvt.s32.f32 %v356
      %v359 = vcvt.s32.f32 %v357
      %vm360 = vmand %vm330, %vm332
      %vm361 = vmand %vm331, %vm333
      %v362 = vsel %vm360, 1, 0
      %v363 = vsel %vm361, 1, 0
      %v364 = vcvt.s32.f32 %v362
      %v365 = vcvt.s32.f32 %v363
      %v366 = vsel %vm330, 1, 0
      %v367 = vsel %vm331, 1, 0
      %v368 = vcvt.s32.f32 %v366
      %v369 = vcvt.s32.f32 %v367
      %vm370 = vmand %vm330, %vm334
      %vm371 = vmand %vm331, %vm335
      %v372 = vsel %vm370, 1, 0
      %v373 = vsel %vm371, 1, 0
      %v374 = vcvt.s32.f32 %v372
      %v375 = vcvt.s32.f32 %v373
      %v376 = vld [vmem:[%s2] sm:$0xff]
      %378 = vset.pattern.permute.xlu0 0
      %379 = vperm.xlu0 %378, %v376
      %v380 = vpop.permute.xlu0 %379
      %v382 = vmul.f32 %v318, %v380
      %v383 = vmul.f32 %v319, %v380
      %384 = vset.pattern.permute.xlu0 1
      %385 = vperm.xlu0 %384, %v376
      %v386 = vpop.permute.xlu0 %385
      %v388 = vadd.f32 %v382, %v386
      %v389 = vadd.f32 %v383, %v386
      %v390 = vmax.f32 %v388, 0.0
      %v391 = vmax.f32 %v389, 0.0
      %392 = vrot.lane.b32.xlu0 %v390, 17
      %v393 = vpop.permute.xlu0 %392
      %394 = vrot.lane.b32.xlu0 %v391, 17
      %v395 = vpop.permute.xlu0 %394
      %vm396 = vcmp.lt.s32.totalorder %v324, 17
      %v397 = vsel %vm396, %v393, %v395
      %v398 = vsel %vm396, %v395, %v393
      %v399 = vmul.f32 %v398, %v340
      %v400 = vmul.f32 %v397, %v341
      %401 = vrot.lane.b32.xlu0 %v390, 16
      %v402 = vpop.permute.xlu0 %401
      %403 = vrot.lane.b32.xlu0 %v391, 16
      %v404 = vpop.permute.xlu0 %403
      %vm405 = vcmp.lt.s32.totalorder %v324, 16
      %v406 = vsel %vm405, %v402, %v404
      %v407 = vsel %vm405, %v404, %v402
      %v408 = vmul.f32 %v407, %v344
      %v409 = vmul.f32 %v406, %v345
      %410 = vrot.lane.b32.xlu0 %v390, 15
      %v411 = vpop.permute.xlu0 %410
      %412 = vrot.lane.b32.xlu0 %v391, 15
      %v413 = vpop.permute.xlu0 %412
      %vm414 = vcmp.lt.s32.totalorder %v324, 15
      %v415 = vsel %vm414, %v411, %v413
      %v416 = vsel %vm414, %v413, %v411
      %v417 = vmul.f32 %v416, %v350
      %v418 = vmul.f32 %v415, %v351
      %v419 = vpack.c.bf16 %v408, %v399
      %v420 = vpack.c.bf16 %v409, %v400
      %v421 = vpack.c.bf16 %v417, %v417
      %v422 = vpack.c.bf16 %v418, %v418
      %v423 = vld [vmem:[%s4] sm:$0xf]
      %424 = vrot.lane.b32.xlu0 %v390, 1
      %v425 = vpop.permute.xlu0 %424
      %426 = vrot.lane.b32.xlu0 %v391, 1
      %v427 = vpop.permute.xlu0 %426
      %vm428 = vcmp.lt.s32.totalorder %v324, 1
      %v429 = vsel %vm428, %v425, %v427
      %v430 = vsel %vm428, %v427, %v425
      %v431 = vmul.f32 %v430, %v354
      %v432 = vmul.f32 %v429, %v355
      %433 = vrot.lane.b32.xlu0 %v390, 127
      %v434 = vpop.permute.xlu0 %433
      %435 = vrot.lane.b32.xlu0 %v391, 127
      %v436 = vpop.permute.xlu0 %435
      %vm437 = vcmp.lt.s32.totalorder %v324, 127
      %v438 = vsel %vm437, %v434, %v436
      %v439 = vsel %vm437, %v436, %v434
      %v440 = vmul.f32 %v438, %v358
      %v441 = vmul.f32 %v439, %v359
      %v442 = vpack.c.bf16 %v390, %v431
      %v443 = vpack.c.bf16 %v391, %v432
      %v444 = vpack.c.bf16 %v440, %v440
      %v445 = vpack.c.bf16 %v441, %v441
      %s446 = scalar_lea.vmem %s4, 4
      %v447 = vld [vmem:[%s446] sm:$0xf]
      %vm448 = vcmask 195584
      %v450 = vsel %vm448, %v447, 0
      %vm452 = vcmask 1043456
      %v454 = vsel %vm452, %v444, 0
      %v457 = vsel %vm452, %v445, 0
      %459 = vmatprep.subr.bf16.mxu0 %v443
      %460 = vmatpush1.bf16.msra.mxu0 %v442
      %461 = vmatprep.subr.bf16.mxu0 %v457
      %462 = vmatpush1.bf16.msra.mxu0 %v454
      %463 = vmatprep.subr.bf16.mxu0 0
      %464 = vmatpush1.bf16.msra.mxu0 0
      %465 = vmatprep.subr.bf16.mxu0 0
      %466 = vmatpush1.bf16.msra.mxu0 0
      %467 = vmatprep.subr.bf16.mxu0 0
      %468 = vmatpush1.bf16.msra.mxu0 0
      %469 = vmatprep.subr.bf16.mxu0 0
      %470 = vmatpush1.bf16.msra.mxu0 0
      %471 = vmatprep.subr.bf16.mxu0 0
      %472 = vmatpush1.bf16.msra.mxu0 0
      %473 = vmatprep.subr.bf16.mxu0 0
      %474 = vmatpush1.bf16.msra.mxu0 0
      %475 = vmatprep.subr.bf16.mxu0 0
      %476 = vmatpush1.bf16.msra.mxu0 0
      %477 = vmatprep.subr.bf16.mxu0 0
      %478 = vmatpush1.bf16.msra.mxu0 0
      %479 = vmatprep.subr.bf16.mxu0 0
      %480 = vmatpush1.bf16.msra.mxu0 0
      %481 = vmatprep.subr.bf16.mxu0 0
      %482 = vmatpush1.bf16.msra.mxu0 0
      %483 = vmatprep.subr.bf16.mxu0 0
      %484 = vmatpush1.bf16.msra.mxu0 0
      %485 = vmatprep.subr.bf16.mxu0 0
      %486 = vmatpush1.bf16.msra.mxu0 0
      %487 = vmatprep.subr.bf16.mxu0 0
      %488 = vmatpush1.bf16.msra.mxu0 0
      %489 = vmatprep.subr.bf16.mxu0 0
      %490 = vmatpush1.bf16.msra.mxu0 0
      %491 = vmatprep.mubr.bf16.mxu0 0
      %492 = vmatmul.mubr.bf16.gmra.mrb[0].mxu0 %v450
      %v493 = vpop.f32.mrb[0].mxu0
      %v494 = vadd.f32 0.0, %v493
      %v495 = vpop.f32.mrb[0].mxu0
      %v496 = vadd.f32 0.0, %v495
      %v497 = vpop.f32.mrb[0].mxu0
      %v498 = vpop.f32.mrb[0].mxu0
      %499 = vdwg.mxu0
      %v501 = vsel %vm448, %v423, 0
      %v504 = vsel %vm452, %v421, 0
      %v507 = vsel %vm452, %v422, 0
      %509 = vmatprep.subr.bf16.mxu0 %v420
      %510 = vmatpush1.bf16.msra.mxu0 %v419
      %511 = vmatprep.subr.bf16.mxu0 %v507
      %512 = vmatpush1.bf16.msra.mxu0 %v504
      %513 = vmatprep.subr.bf16.mxu0 0
      %514 = vmatpush1.bf16.msra.mxu0 0
      %515 = vmatprep.subr.bf16.mxu0 0
      %516 = vmatpush1.bf16.msra.mxu0 0
      %517 = vmatprep.subr.bf16.mxu0 0
      %518 = vmatpush1.bf16.msra.mxu0 0
      %519 = vmatprep.subr.bf16.mxu0 0
      %520 = vmatpush1.bf16.msra.mxu0 0
      %521 = vmatprep.subr.bf16.mxu0 0
      %522 = vmatpush1.bf16.msra.mxu0 0
      %523 = vmatprep.subr.bf16.mxu0 0
      %524 = vmatpush1.bf16.msra.mxu0 0
      %525 = vmatprep.subr.bf16.mxu0 0
      %526 = vmatpush1.bf16.msra.mxu0 0
      %527 = vmatprep.subr.bf16.mxu0 0
      %528 = vmatpush1.bf16.msra.mxu0 0
      %529 = vmatprep.subr.bf16.mxu0 0
      %530 = vmatpush1.bf16.msra.mxu0 0
      %531 = vmatprep.subr.bf16.mxu0 0
      %532 = vmatpush1.bf16.msra.mxu0 0
      %533 = vmatprep.subr.bf16.mxu0 0
      %534 = vmatpush1.bf16.msra.mxu0 0
      %535 = vmatprep.subr.bf16.mxu0 0
      %536 = vmatpush1.bf16.msra.mxu0 0
      %537 = vmatprep.subr.bf16.mxu0 0
      %538 = vmatpush1.bf16.msra.mxu0 0
      %539 = vmatprep.subr.bf16.mxu0 0
      %540 = vmatpush1.bf16.msra.mxu0 0
      %541 = vmatprep.mubr.bf16.mxu0 0
      %542 = vmatmul.mubr.bf16.gmra.mrb[0].mxu0 %v501
      %v543 = vpop.f32.mrb[0].mxu0
      %v544 = vadd.f32 %v494, %v543
      %v545 = vpop.f32.mrb[0].mxu0
      %v546 = vadd.f32 %v496, %v545
      %v547 = vpop.f32.mrb[0].mxu0
      %v548 = vpop.f32.mrb[0].mxu0
      %549 = vdwg.mxu0
      %550 = vrot.lane.b32.xlu0 %v390, 113
      %v551 = vpop.permute.xlu0 %550
      %552 = vrot.lane.b32.xlu0 %v391, 113
      %v553 = vpop.permute.xlu0 %552
      %vm554 = vcmp.lt.s32.totalorder %v324, 113
      %v555 = vsel %vm554, %v551, %v553
      %v556 = vsel %vm554, %v553, %v551
      %v557 = vmul.f32 %v555, %v364
      %v558 = vmul.f32 %v556, %v365
      %559 = vrot.lane.b32.xlu0 %v390, 112
      %v560 = vpop.permute.xlu0 %559
      %561 = vrot.lane.b32.xlu0 %v391, 112
      %v562 = vpop.permute.xlu0 %561
      %vm563 = vcmp.lt.s32.totalorder %v324, 112
      %v564 = vsel %vm563, %v560, %v562
      %v565 = vsel %vm563, %v562, %v560
      %v566 = vmul.f32 %v564, %v368
      %v567 = vmul.f32 %v565, %v369
      %568 = vrot.lane.b32.xlu0 %v390, 111
      %v569 = vpop.permute.xlu0 %568
      %570 = vrot.lane.b32.xlu0 %v391, 111
      %v571 = vpop.permute.xlu0 %570
      %vm572 = vcmp.lt.s32.totalorder %v324, 111
      %v573 = vsel %vm572, %v569, %v571
      %v574 = vsel %vm572, %v571, %v569
      %v575 = vmul.f32 %v573, %v374
      %v576 = vmul.f32 %v574, %v375
      %v577 = vpack.c.bf16 %v566, %v557
      %v578 = vpack.c.bf16 %v567, %v558
      %v579 = vpack.c.bf16 %v575, %v575
      %v580 = vpack.c.bf16 %v576, %v576
      %s581 = scalar_lea.vmem %s4, 8
      %v582 = vld [vmem:[%s581] sm:$0xf]
      %v584 = vsel %vm448, %v582, 0
      %v587 = vsel %vm452, %v579, 0
      %v590 = vsel %vm452, %v580, 0
      %592 = vmatprep.subr.bf16.mxu0 %v578
      %593 = vmatpush1.bf16.msra.mxu0 %v577
      %594 = vmatprep.subr.bf16.mxu0 %v590
      %595 = vmatpush1.bf16.msra.mxu0 %v587
      %596 = vmatprep.subr.bf16.mxu0 0
      %597 = vmatpush1.bf16.msra.mxu0 0
      %598 = vmatprep.subr.bf16.mxu0 0
      %599 = vmatpush1.bf16.msra.mxu0 0
      %600 = vmatprep.subr.bf16.mxu0 0
      %601 = vmatpush1.bf16.msra.mxu0 0
      %602 = vmatprep.subr.bf16.mxu0 0
      %603 = vmatpush1.bf16.msra.mxu0 0
      %604 = vmatprep.subr.bf16.mxu0 0
      %605 = vmatpush1.bf16.msra.mxu0 0
      %606 = vmatprep.subr.bf16.mxu0 0
      %607 = vmatpush1.bf16.msra.mxu0 0
      %608 = vmatprep.subr.bf16.mxu0 0
      %609 = vmatpush1.bf16.msra.mxu0 0
      %610 = vmatprep.subr.bf16.mxu0 0
      %611 = vmatpush1.bf16.msra.mxu0 0
      %612 = vmatprep.subr.bf16.mxu0 0
      %613 = vmatpush1.bf16.msra.mxu0 0
      %614 = vmatprep.subr.bf16.mxu0 0
      %615 = vmatpush1.bf16.msra.mxu0 0
      %616 = vmatprep.subr.bf16.mxu0 0
      %617 = vmatpush1.bf16.msra.mxu0 0
      %618 = vmatprep.subr.bf16.mxu0 0
      %619 = vmatpush1.bf16.msra.mxu0 0
      %620 = vmatprep.subr.bf16.mxu0 0
      %621 = vmatpush1.bf16.msra.mxu0 0
      %622 = vmatprep.subr.bf16.mxu0 0
      %623 = vmatpush1.bf16.msra.mxu0 0
      %624 = vmatprep.mubr.bf16.mxu0 0
      %625 = vmatmul.mubr.bf16.gmra.mrb[0].mxu0 %v584
      %v626 = vpop.f32.mrb[0].mxu0
      %v627 = vadd.f32 0.0, %v626
      %v628 = vpop.f32.mrb[0].mxu0
      %v629 = vadd.f32 0.0, %v628
      %v630 = vpop.f32.mrb[0].mxu0
      %v631 = vpop.f32.mrb[0].mxu0
      %632 = vdwg.mxu0
      %v633 = vadd.f32 %v544, %v627
      %v634 = vadd.f32 %v546, %v629
      %635 = vset.pattern.permute.xlu0 2
      %636 = vperm.xlu0 %635, %v376
      %v637 = vpop.permute.xlu0 %636
      %v639 = vadd.f32 %v633, %v637
      %v640 = vadd.f32 %v634, %v637
      %v641 = vadd.f32 %v639, %v321
      %v642 = vadd.f32 %v640, %v322
      %643 = vset.pattern.permute.xlu0 3
      %644 = vperm.xlu0 %643, %v376
      %v645 = vpop.permute.xlu0 %644
      %v647 = vmul.f32 %v318, %v645
      %v648 = vmul.f32 %v319, %v645
      %649 = vset.pattern.permute.xlu0 4
      %650 = vperm.xlu0 %649, %v376
      %v651 = vpop.permute.xlu0 %650
      %v653 = vadd.f32 %v647, %v651
      %v654 = vadd.f32 %v648, %v651
      %v655 = vpack.c.bf16 %v653, %v653
      %v656 = vpack.c.bf16 %v654, %v654
      %v657 = vld [vmem:[%s5] sm:$0xf]
      %658 = vset.pattern.permute.xlu0 5
      %659 = vperm.xlu0 %658, %v376
      %v660 = vpop.permute.xlu0 %659
      %vm662 = vcmask 64512
      %v664 = vsel %vm662, %v657, 0
      %v667 = vsel %vm452, %v655, 0
      %v670 = vsel %vm452, %v656, 0
      %672 = vmatprep.subr.bf16.mxu0 %v670
      %673 = vmatpush1.bf16.msra.mxu0 %v667
      %674 = vmatprep.subr.bf16.mxu0 0
      %675 = vmatpush1.bf16.msra.mxu0 0
      %676 = vmatprep.subr.bf16.mxu0 0
      %677 = vmatpush1.bf16.msra.mxu0 0
      %678 = vmatprep.subr.bf16.mxu0 0
      %679 = vmatpush1.bf16.msra.mxu0 0
      %680 = vmatprep.subr.bf16.mxu0 0
      %681 = vmatpush1.bf16.msra.mxu0 0
      %682 = vmatprep.subr.bf16.mxu0 0
      %683 = vmatpush1.bf16.msra.mxu0 0
      %684 = vmatprep.subr.bf16.mxu0 0
      %685 = vmatpush1.bf16.msra.mxu0 0
      %686 = vmatprep.subr.bf16.mxu0 0
      %687 = vmatpush1.bf16.msra.mxu0 0
      %688 = vmatprep.subr.bf16.mxu0 0
      %689 = vmatpush1.bf16.msra.mxu0 0
      %690 = vmatprep.subr.bf16.mxu0 0
      %691 = vmatpush1.bf16.msra.mxu0 0
      %692 = vmatprep.subr.bf16.mxu0 0
      %693 = vmatpush1.bf16.msra.mxu0 0
      %694 = vmatprep.subr.bf16.mxu0 0
      %695 = vmatpush1.bf16.msra.mxu0 0
      %696 = vmatprep.subr.bf16.mxu0 0
      %697 = vmatpush1.bf16.msra.mxu0 0
      %698 = vmatprep.subr.bf16.mxu0 0
      %699 = vmatpush1.bf16.msra.mxu0 0
      %700 = vmatprep.subr.bf16.mxu0 0
      %701 = vmatpush1.bf16.msra.mxu0 0
      %702 = vmatprep.subr.bf16.mxu0 0
      %703 = vmatpush1.bf16.msra.mxu0 0
      %704 = vmatprep.mubr.bf16.mxu0 0
      %705 = vmatmul.mubr.bf16.gmra.mrb[0].mxu0 %v664
      %v706 = vpop.f32.mrb[0].mxu0
      %v707 = vadd.f32 %v660, %v706
      %v708 = vpop.f32.mrb[0].mxu0
      %v709 = vadd.f32 %v660, %v708
      %v710 = vpop.f32.mrb[0].mxu0
      %v711 = vpop.f32.mrb[0].mxu0
      %712 = vdwg.mxu0
      %v713 = vld [vmem:[%s310] sm:$0xff]
      %714 = vset.pattern.permute.xlu0 6
      %715 = vperm.xlu0 %714, %v376
      %v716 = vpop.permute.xlu0 %715
      %v718 = vmul.f32 %v641, %v716
      %v719 = vmul.f32 %v642, %v716
      %721 = vset.pattern.permute.xlu0 0
      %722 = vperm.xlu0 %721, %v713
      %v723 = vpop.permute.xlu0 %722
      %v725 = vadd.f32 %v718, %v723
      %v726 = vadd.f32 %v719, %v723
      %v727 = vmax.f32 %v725, 0.0
      %v728 = vmax.f32 %v726, 0.0
      %729 = vrot.lane.b32.xlu0 %v727, 17
      %v730 = vpop.permute.xlu0 %729
      %731 = vrot.lane.b32.xlu0 %v728, 17
      %v732 = vpop.permute.xlu0 %731
      %v733 = vsel %vm396, %v730, %v732
      %v734 = vsel %vm396, %v732, %v730
      %v735 = vmul.f32 %v734, %v340
      %v736 = vmul.f32 %v733, %v341
      %737 = vrot.lane.b32.xlu0 %v727, 16
      %v738 = vpop.permute.xlu0 %737
      %739 = vrot.lane.b32.xlu0 %v728, 16
      %v740 = vpop.permute.xlu0 %739
      %v741 = vsel %vm405, %v738, %v740
      %v742 = vsel %vm405, %v740, %v738
      %v743 = vmul.f32 %v742, %v344
      %v744 = vmul.f32 %v741, %v345
      %745 = vrot.lane.b32.xlu0 %v727, 15
      %v746 = vpop.permute.xlu0 %745
      %747 = vrot.lane.b32.xlu0 %v728, 15
      %v748 = vpop.permute.xlu0 %747
      %v749 = vsel %vm414, %v746, %v748
      %v750 = vsel %vm414, %v748, %v746
      %v751 = vmul.f32 %v750, %v350
      %v752 = vmul.f32 %v749, %v351
      %v753 = vpack.c.bf16 %v743, %v735
      %v754 = vpack.c.bf16 %v744, %v736
      %v755 = vpack.c.bf16 %v751, %v751
      %v756 = vpack.c.bf16 %v752, %v752
      %v757 = vld [vmem:[%s6] sm:$0xf]
      %758 = vrot.lane.b32.xlu0 %v727, 1
      %v759 = vpop.permute.xlu0 %758
      %760 = vrot.lane.b32.xlu0 %v728, 1
      %v761 = vpop.permute.xlu0 %760
      %v762 = vsel %vm428, %v759, %v761
      %v763 = vsel %vm428, %v761, %v759
      %v764 = vmul.f32 %v763, %v354
      %v765 = vmul.f32 %v762, %v355
      %766 = vrot.lane.b32.xlu0 %v727, 127
      %v767 = vpop.permute.xlu0 %766
      %768 = vrot.lane.b32.xlu0 %v728, 127
      %v769 = vpop.permute.xlu0 %768
      %v770 = vsel %vm437, %v767, %v769
      %v771 = vsel %vm437, %v769, %v767
      %v772 = vmul.f32 %v770, %v358
      %v773 = vmul.f32 %v771, %v359
      %v774 = vpack.c.bf16 %v727, %v764
      %v775 = vpack.c.bf16 %v728, %v765
      %v776 = vpack.c.bf16 %v772, %v772
      %v777 = vpack.c.bf16 %v773, %v773
      %s778 = scalar_lea.vmem %s6, 4
      %v779 = vld [vmem:[%s778] sm:$0xf]
      %v781 = vsel %vm448, %v779, 0
      %v784 = vsel %vm452, %v776, 0
      %v787 = vsel %vm452, %v777, 0
      %789 = vmatprep.subr.bf16.mxu0 %v775
      %790 = vmatpush1.bf16.msra.mxu0 %v774
      %791 = vmatprep.subr.bf16.mxu0 %v787
      %792 = vmatpush1.bf16.msra.mxu0 %v784
      %793 = vmatprep.subr.bf16.mxu0 0
      %794 = vmatpush1.bf16.msra.mxu0 0
      %795 = vmatprep.subr.bf16.mxu0 0
      %796 = vmatpush1.bf16.msra.mxu0 0
      %797 = vmatprep.subr.bf16.mxu0 0
      %798 = vmatpush1.bf16.msra.mxu0 0
      %799 = vmatprep.subr.bf16.mxu0 0
      %800 = vmatpush1.bf16.msra.mxu0 0
      %801 = vmatprep.subr.bf16.mxu0 0
      %802 = vmatpush1.bf16.msra.mxu0 0
      %803 = vmatprep.subr.bf16.mxu0 0
      %804 = vmatpush1.bf16.msra.mxu0 0
      %805 = vmatprep.subr.bf16.mxu0 0
      %806 = vmatpush1.bf16.msra.mxu0 0
      %807 = vmatprep.subr.bf16.mxu0 0
      %808 = vmatpush1.bf16.msra.mxu0 0
      %809 = vmatprep.subr.bf16.mxu0 0
      %810 = vmatpush1.bf16.msra.mxu0 0
      %811 = vmatprep.subr.bf16.mxu0 0
      %812 = vmatpush1.bf16.msra.mxu0 0
      %813 = vmatprep.subr.bf16.mxu0 0
      %814 = vmatpush1.bf16.msra.mxu0 0
      %815 = vmatprep.subr.bf16.mxu0 0
      %816 = vmatpush1.bf16.msra.mxu0 0
      %817 = vmatprep.subr.bf16.mxu0 0
      %818 = vmatpush1.bf16.msra.mxu0 0
      %819 = vmatprep.subr.bf16.mxu0 0
      %820 = vmatpush1.bf16.msra.mxu0 0
      %821 = vmatprep.mubr.bf16.mxu0 0
      %822 = vmatmul.mubr.bf16.gmra.mrb[0].mxu0 %v781
      %v823 = vpop.f32.mrb[0].mxu0
      %v824 = vadd.f32 0.0, %v823
      %v825 = vpop.f32.mrb[0].mxu0
      %v826 = vadd.f32 0.0, %v825
      %v827 = vpop.f32.mrb[0].mxu0
      %v828 = vpop.f32.mrb[0].mxu0
      %829 = vdwg.mxu0
      %v831 = vsel %vm448, %v757, 0
      %v834 = vsel %vm452, %v755, 0
      %v837 = vsel %vm452, %v756, 0
      %839 = vmatprep.subr.bf16.mxu0 %v754
      %840 = vmatpush1.bf16.msra.mxu0 %v753
      %841 = vmatprep.subr.bf16.mxu0 %v837
      %842 = vmatpush1.bf16.msra.mxu0 %v834
      %843 = vmatprep.subr.bf16.mxu0 0
      %844 = vmatpush1.bf16.msra.mxu0 0
      %845 = vmatprep.subr.bf16.mxu0 0
      %846 = vmatpush1.bf16.msra.mxu0 0
      %847 = vmatprep.subr.bf16.mxu0 0
      %848 = vmatpush1.bf16.msra.mxu0 0
      %849 = vmatprep.subr.bf16.mxu0 0
      %850 = vmatpush1.bf16.msra.mxu0 0
      %851 = vmatprep.subr.bf16.mxu0 0
      %852 = vmatpush1.bf16.msra.mxu0 0
      %853 = vmatprep.subr.bf16.mxu0 0
      %854 = vmatpush1.bf16.msra.mxu0 0
      %855 = vmatprep.subr.bf16.mxu0 0
      %856 = vmatpush1.bf16.msra.mxu0 0
      %857 = vmatprep.subr.bf16.mxu0 0
      %858 = vmatpush1.bf16.msra.mxu0 0
      %859 = vmatprep.subr.bf16.mxu0 0
      %860 = vmatpush1.bf16.msra.mxu0 0
      %861 = vmatprep.subr.bf16.mxu0 0
      %862 = vmatpush1.bf16.msra.mxu0 0
      %863 = vmatprep.subr.bf16.mxu0 0
      %864 = vmatpush1.bf16.msra.mxu0 0
      %865 = vmatprep.subr.bf16.mxu0 0
      %866 = vmatpush1.bf16.msra.mxu0 0
      %867 = vmatprep.subr.bf16.mxu0 0
      %868 = vmatpush1.bf16.msra.mxu0 0
      %869 = vmatprep.subr.bf16.mxu0 0
      %870 = vmatpush1.bf16.msra.mxu0 0
      %871 = vmatprep.mubr.bf16.mxu0 0
      %872 = vmatmul.mubr.bf16.gmra.mrb[0].mxu0 %v831
      %v873 = vpop.f32.mrb[0].mxu0
      %v874 = vadd.f32 %v824, %v873
      %v875 = vpop.f32.mrb[0].mxu0
      %v876 = vadd.f32 %v826, %v875
      %v877 = vpop.f32.mrb[0].mxu0
      %v878 = vpop.f32.mrb[0].mxu0
      %879 = vdwg.mxu0
      %880 = vrot.lane.b32.xlu0 %v727, 113
      %v881 = vpop.permute.xlu0 %880
      %882 = vrot.lane.b32.xlu0 %v728, 113
      %v883 = vpop.permute.xlu0 %882
      %v884 = vsel %vm554, %v881, %v883
      %v885 = vsel %vm554, %v883, %v881
      %v886 = vmul.f32 %v884, %v364
      %v887 = vmul.f32 %v885, %v365
      %888 = vrot.lane.b32.xlu0 %v727, 112
      %v889 = vpop.permute.xlu0 %888
      %890 = vrot.lane.b32.xlu0 %v728, 112
      %v891 = vpop.permute.xlu0 %890
      %v892 = vsel %vm563, %v889, %v891
      %v893 = vsel %vm563, %v891, %v889
      %v894 = vmul.f32 %v892, %v368
      %v895 = vmul.f32 %v893, %v369
      %896 = vrot.lane.b32.xlu0 %v727, 111
      %v897 = vpop.permute.xlu0 %896
      %898 = vrot.lane.b32.xlu0 %v728, 111
      %v899 = vpop.permute.xlu0 %898
      %v900 = vsel %vm572, %v897, %v899
      %v901 = vsel %vm572, %v899, %v897
      %v902 = vmul.f32 %v900, %v374
      %v903 = vmul.f32 %v901, %v375
      %v904 = vpack.c.bf16 %v894, %v886
      %v905 = vpack.c.bf16 %v895, %v887
      %v906 = vpack.c.bf16 %v902, %v902
      %v907 = vpack.c.bf16 %v903, %v903
      %s908 = scalar_lea.vmem %s6, 8
      %v909 = vld [vmem:[%s908] sm:$0xf]
      %v911 = vsel %vm448, %v909, 0
      %v914 = vsel %vm452, %v906, 0
      %v917 = vsel %vm452, %v907, 0
      %919 = vmatprep.subr.bf16.mxu0 %v905
      %920 = vmatpush1.bf16.msra.mxu0 %v904
      %921 = vmatprep.subr.bf16.mxu0 %v917
      %922 = vmatpush1.bf16.msra.mxu0 %v914
      %923 = vmatprep.subr.bf16.mxu0 0
      %924 = vmatpush1.bf16.msra.mxu0 0
      %925 = vmatprep.subr.bf16.mxu0 0
      %926 = vmatpush1.bf16.msra.mxu0 0
      %927 = vmatprep.subr.bf16.mxu0 0
      %928 = vmatpush1.bf16.msra.mxu0 0
      %929 = vmatprep.subr.bf16.mxu0 0
      %930 = vmatpush1.bf16.msra.mxu0 0
      %931 = vmatprep.subr.bf16.mxu0 0
      %932 = vmatpush1.bf16.msra.mxu0 0
      %933 = vmatprep.subr.bf16.mxu0 0
      %934 = vmatpush1.bf16.msra.mxu0 0
      %935 = vmatprep.subr.bf16.mxu0 0
      %936 = vmatpush1.bf16.msra.mxu0 0
      %937 = vmatprep.subr.bf16.mxu0 0
      %938 = vmatpush1.bf16.msra.mxu0 0
      %939 = vmatprep.subr.bf16.mxu0 0
      %940 = vmatpush1.bf16.msra.mxu0 0
      %941 = vmatprep.subr.bf16.mxu0 0
      %942 = vmatpush1.bf16.msra.mxu0 0
      %943 = vmatprep.subr.bf16.mxu0 0
      %944 = vmatpush1.bf16.msra.mxu0 0
      %945 = vmatprep.subr.bf16.mxu0 0
      %946 = vmatpush1.bf16.msra.mxu0 0
      %947 = vmatprep.subr.bf16.mxu0 0
      %948 = vmatpush1.bf16.msra.mxu0 0
      %949 = vmatprep.subr.bf16.mxu0 0
      %950 = vmatpush1.bf16.msra.mxu0 0
      %951 = vmatprep.mubr.bf16.mxu0 0
      %952 = vmatmul.mubr.bf16.gmra.mrb[0].mxu0 %v911
      %v953 = vpop.f32.mrb[0].mxu0
      %v954 = vadd.f32 0.0, %v953
      %v955 = vpop.f32.mrb[0].mxu0
      %v956 = vadd.f32 0.0, %v955
      %v957 = vpop.f32.mrb[0].mxu0
      %v958 = vpop.f32.mrb[0].mxu0
      %959 = vdwg.mxu0
      %v960 = vadd.f32 %v874, %v954
      %v961 = vadd.f32 %v876, %v956
      %962 = vset.pattern.permute.xlu0 7
      %963 = vperm.xlu0 %962, %v376
      %v964 = vpop.permute.xlu0 %963
      %v966 = vadd.f32 %v960, %v964
      %v967 = vadd.f32 %v961, %v964
      %v968 = vadd.f32 %v707, %v966
      %v969 = vadd.f32 %v709, %v967
      %970 = vset.pattern.permute.xlu0 8
      %971 = vperm.xlu0 %970, %v376
      %v972 = vpop.permute.xlu0 %971
      %v974 = vmul.f32 %v968, %v972
      %v975 = vmul.f32 %v969, %v972
      %976 = vset.pattern.permute.xlu0 1
      %977 = vperm.xlu0 %976, %v713
      %v978 = vpop.permute.xlu0 %977
      %v980 = vadd.f32 %v974, %v978
      %v981 = vadd.f32 %v975, %v978
      %v982 = vmax.f32 %v980, 0.0
      %v983 = vmax.f32 %v981, 0.0
      %984 = vrot.lane.b32.xlu0 %v982, 17
      %v985 = vpop.permute.xlu0 %984
      %986 = vrot.lane.b32.xlu0 %v983, 17
      %v987 = vpop.permute.xlu0 %986
      %v988 = vsel %vm396, %v985, %v987
      %v989 = vsel %vm396, %v987, %v985
      %v990 = vmul.f32 %v989, %v340
      %v991 = vmul.f32 %v988, %v341
      %992 = vrot.lane.b32.xlu0 %v982, 16
      %v993 = vpop.permute.xlu0 %992
      %994 = vrot.lane.b32.xlu0 %v983, 16
      %v995 = vpop.permute.xlu0 %994
      %v996 = vsel %vm405, %v993, %v995
      %v997 = vsel %vm405, %v995, %v993
      %v998 = vmul.f32 %v997, %v344
      %v999 = vmul.f32 %v996, %v345
      %1000 = vrot.lane.b32.xlu0 %v982, 15
      %v1001 = vpop.permute.xlu0 %1000
      %1002 = vrot.lane.b32.xlu0 %v983, 15
      %v1003 = vpop.permute.xlu0 %1002
      %v1004 = vsel %vm414, %v1001, %v1003
      %v1005 = vsel %vm414, %v1003, %v1001
      %v1006 = vmul.f32 %v1005, %v350
      %v1007 = vmul.f32 %v1004, %v351
      %v1008 = vpack.c.bf16 %v998, %v990
      %v1009 = vpack.c.bf16 %v999, %v991
      %v1010 = vpack.c.bf16 %v1006, %v1006
      %v1011 = vpack.c.bf16 %v1007, %v1007
      %s1012 = scalar_lea.vmem %s6, 12
      %v1013 = vld [vmem:[%s1012] sm:$0xf]
      %1014 = vrot.lane.b32.xlu0 %v982, 1
      %v1015 = vpop.permute.xlu0 %1014
      %1016 = vrot.lane.b32.xlu0 %v983, 1
      %v1017 = vpop.permute.xlu0 %1016
      %v1018 = vsel %vm428, %v1015, %v1017
      %v1019 = vsel %vm428, %v1017, %v1015
      %v1020 = vmul.f32 %v1019, %v354
      %v1021 = vmul.f32 %v1018, %v355
      %1022 = vrot.lane.b32.xlu0 %v982, 127
      %v1023 = vpop.permute.xlu0 %1022
      %1024 = vrot.lane.b32.xlu0 %v983, 127
      %v1025 = vpop.permute.xlu0 %1024
      %v1026 = vsel %vm437, %v1023, %v1025
      %v1027 = vsel %vm437, %v1025, %v1023
      %v1028 = vmul.f32 %v1026, %v358
      %v1029 = vmul.f32 %v1027, %v359
      %v1030 = vpack.c.bf16 %v982, %v1020
      %v1031 = vpack.c.bf16 %v983, %v1021
      %v1032 = vpack.c.bf16 %v1028, %v1028
      %v1033 = vpack.c.bf16 %v1029, %v1029
      %s1034 = scalar_lea.vmem %s6, 16
      %v1035 = vld [vmem:[%s1034] sm:$0xf]
      %v1037 = vsel %vm448, %v1035, 0
      %v1040 = vsel %vm452, %v1032, 0
      %v1043 = vsel %vm452, %v1033, 0
      %1045 = vmatprep.subr.bf16.mxu0 %v1031
      %1046 = vmatpush1.bf16.msra.mxu0 %v1030
      %1047 = vmatprep.subr.bf16.mxu0 %v1043
      %1048 = vmatpush1.bf16.msra.mxu0 %v1040
      %1049 = vmatprep.subr.bf16.mxu0 0
      %1050 = vmatpush1.bf16.msra.mxu0 0
      %1051 = vmatprep.subr.bf16.mxu0 0
      %1052 = vmatpush1.bf16.msra.mxu0 0
      %1053 = vmatprep.subr.bf16.mxu0 0
      %1054 = vmatpush1.bf16.msra.mxu0 0
      %1055 = vmatprep.subr.bf16.mxu0 0
      %1056 = vmatpush1.bf16.msra.mxu0 0
      %1057 = vmatprep.subr.bf16.mxu0 0
      %1058 = vmatpush1.bf16.msra.mxu0 0
      %1059 = vmatprep.subr.bf16.mxu0 0
      %1060 = vmatpush1.bf16.msra.mxu0 0
      %1061 = vmatprep.subr.bf16.mxu0 0
      %1062 = vmatpush1.bf16.msra.mxu0 0
      %1063 = vmatprep.subr.bf16.mxu0 0
      %1064 = vmatpush1.bf16.msra.mxu0 0
      %1065 = vmatprep.subr.bf16.mxu0 0
      %1066 = vmatpush1.bf16.msra.mxu0 0
      %1067 = vmatprep.subr.bf16.mxu0 0
      %1068 = vmatpush1.bf16.msra.mxu0 0
      %1069 = vmatprep.subr.bf16.mxu0 0
      %1070 = vmatpush1.bf16.msra.mxu0 0
      %1071 = vmatprep.subr.bf16.mxu0 0
      %1072 = vmatpush1.bf16.msra.mxu0 0
      %1073 = vmatprep.subr.bf16.mxu0 0
      %1074 = vmatpush1.bf16.msra.mxu0 0
      %1075 = vmatprep.subr.bf16.mxu0 0
      %1076 = vmatpush1.bf16.msra.mxu0 0
      %1077 = vmatprep.mubr.bf16.mxu0 0
      %1078 = vmatmul.mubr.bf16.gmra.mrb[0].mxu0 %v1037
      %v1079 = vpop.f32.mrb[0].mxu0
      %v1080 = vadd.f32 0.0, %v1079
      %v1081 = vpop.f32.mrb[0].mxu0
      %v1082 = vadd.f32 0.0, %v1081
      %v1083 = vpop.f32.mrb[0].mxu0
      %v1084 = vpop.f32.mrb[0].mxu0
      %1085 = vdwg.mxu0
      %v1087 = vsel %vm448, %v1013, 0
      %v1090 = vsel %vm452, %v1010, 0
      %v1093 = vsel %vm452, %v1011, 0
      %1095 = vmatprep.subr.bf16.mxu0 %v1009
      %1096 = vmatpush1.bf16.msra.mxu0 %v1008
      %1097 = vmatprep.subr.bf16.mxu0 %v1093
      %1098 = vmatpush1.bf16.msra.mxu0 %v1090
      %1099 = vmatprep.subr.bf16.mxu0 0
      %1100 = vmatpush1.bf16.msra.mxu0 0
      %1101 = vmatprep.subr.bf16.mxu0 0
      %1102 = vmatpush1.bf16.msra.mxu0 0
      %1103 = vmatprep.subr.bf16.mxu0 0
      %1104 = vmatpush1.bf16.msra.mxu0 0
      %1105 = vmatprep.subr.bf16.mxu0 0
      %1106 = vmatpush1.bf16.msra.mxu0 0
      %1107 = vmatprep.subr.bf16.mxu0 0
      %1108 = vmatpush1.bf16.msra.mxu0 0
      %1109 = vmatprep.subr.bf16.mxu0 0
      %1110 = vmatpush1.bf16.msra.mxu0 0
      %1111 = vmatprep.subr.bf16.mxu0 0
      %1112 = vmatpush1.bf16.msra.mxu0 0
      %1113 = vmatprep.subr.bf16.mxu0 0
      %1114 = vmatpush1.bf16.msra.mxu0 0
      %1115 = vmatprep.subr.bf16.mxu0 0
      %1116 = vmatpush1.bf16.msra.mxu0 0
      %1117 = vmatprep.subr.bf16.mxu0 0
      %1118 = vmatpush1.bf16.msra.mxu0 0
      %1119 = vmatprep.subr.bf16.mxu0 0
      %1120 = vmatpush1.bf16.msra.mxu0 0
      %1121 = vmatprep.subr.bf16.mxu0 0
      %1122 = vmatpush1.bf16.msra.mxu0 0
      %1123 = vmatprep.subr.bf16.mxu0 0
      %1124 = vmatpush1.bf16.msra.mxu0 0
      %1125 = vmatprep.subr.bf16.mxu0 0
      %1126 = vmatpush1.bf16.msra.mxu0 0
      %1127 = vmatprep.mubr.bf16.mxu0 0
      %1128 = vmatmul.mubr.bf16.gmra.mrb[0].mxu0 %v1087
      %v1129 = vpop.f32.mrb[0].mxu0
      %v1130 = vadd.f32 %v1080, %v1129
      %v1131 = vpop.f32.mrb[0].mxu0
      %v1132 = vadd.f32 %v1082, %v1131
      %v1133 = vpop.f32.mrb[0].mxu0
      %v1134 = vpop.f32.mrb[0].mxu0
      %1135 = vdwg.mxu0
      %1136 = vrot.lane.b32.xlu0 %v982, 113
      %v1137 = vpop.permute.xlu0 %1136
      %1138 = vrot.lane.b32.xlu0 %v983, 113
      %v1139 = vpop.permute.xlu0 %1138
      %v1140 = vsel %vm554, %v1137, %v1139
      %v1141 = vsel %vm554, %v1139, %v1137
      %v1142 = vmul.f32 %v1140, %v364
      %v1143 = vmul.f32 %v1141, %v365
      %1144 = vrot.lane.b32.xlu0 %v982, 112
      %v1145 = vpop.permute.xlu0 %1144
      %1146 = vrot.lane.b32.xlu0 %v983, 112
      %v1147 = vpop.permute.xlu0 %1146
      %v1148 = vsel %vm563, %v1145, %v1147
      %v1149 = vsel %vm563, %v1147, %v1145
      %v1150 = vmul.f32 %v1148, %v368
      %v1151 = vmul.f32 %v1149, %v369
      %1152 = vrot.lane.b32.xlu0 %v982, 111
      %v1153 = vpop.permute.xlu0 %1152
      %1154 = vrot.lane.b32.xlu0 %v983, 111
      %v1155 = vpop.permute.xlu0 %1154
      %v1156 = vsel %vm572, %v1153, %v1155
      %v1157 = vsel %vm572, %v1155, %v1153
      %v1158 = vmul.f32 %v1156, %v374
      %v1159 = vmul.f32 %v1157, %v375
      %v1160 = vpack.c.bf16 %v1150, %v1142
      %v1161 = vpack.c.bf16 %v1151, %v1143
      %v1162 = vpack.c.bf16 %v1158, %v1158
      %v1163 = vpack.c.bf16 %v1159, %v1159
      %s1164 = scalar_lea.vmem %s6, 20
      %v1165 = vld [vmem:[%s1164] sm:$0xf]
      %v1167 = vsel %vm448, %v1165, 0
      %v1170 = vsel %vm452, %v1162, 0
      %v1173 = vsel %vm452, %v1163, 0
      %1175 = vmatprep.subr.bf16.mxu0 %v1161
      %1176 = vmatpush1.bf16.msra.mxu0 %v1160
      %1177 = vmatprep.subr.bf16.mxu0 %v1173
      %1178 = vmatpush1.bf16.msra.mxu0 %v1170
      %1179 = vmatprep.subr.bf16.mxu0 0
      %1180 = vmatpush1.bf16.msra.mxu0 0
      %1181 = vmatprep.subr.bf16.mxu0 0
      %1182 = vmatpush1.bf16.msra.mxu0 0
      %1183 = vmatprep.subr.bf16.mxu0 0
      %1184 = vmatpush1.bf16.msra.mxu0 0
      %1185 = vmatprep.subr.bf16.mxu0 0
      %1186 = vmatpush1.bf16.msra.mxu0 0
      %1187 = vmatprep.subr.bf16.mxu0 0
      %1188 = vmatpush1.bf16.msra.mxu0 0
      %1189 = vmatprep.subr.bf16.mxu0 0
      %1190 = vmatpush1.bf16.msra.mxu0 0
      %1191 = vmatprep.subr.bf16.mxu0 0
      %1192 = vmatpush1.bf16.msra.mxu0 0
      %1193 = vmatprep.subr.bf16.mxu0 0
      %1194 = vmatpush1.bf16.msra.mxu0 0
      %1195 = vmatprep.subr.bf16.mxu0 0
      %1196 = vmatpush1.bf16.msra.mxu0 0
      %1197 = vmatprep.subr.bf16.mxu0 0
      %1198 = vmatpush1.bf16.msra.mxu0 0
      %1199 = vmatprep.subr.bf16.mxu0 0
      %1200 = vmatpush1.bf16.msra.mxu0 0
      %1201 = vmatprep.subr.bf16.mxu0 0
      %1202 = vmatpush1.bf16.msra.mxu0 0
      %1203 = vmatprep.subr.bf16.mxu0 0
      %1204 = vmatpush1.bf16.msra.mxu0 0
      %1205 = vmatprep.subr.bf16.mxu0 0
      %1206 = vmatpush1.bf16.msra.mxu0 0
      %1207 = vmatprep.mubr.bf16.mxu0 0
      %1208 = vmatmul.mubr.bf16.gmra.mrb[0].mxu0 %v1167
      %v1209 = vpop.f32.mrb[0].mxu0
      %v1210 = vadd.f32 0.0, %v1209
      %v1211 = vpop.f32.mrb[0].mxu0
      %v1212 = vadd.f32 0.0, %v1211
      %v1213 = vpop.f32.mrb[0].mxu0
      %v1214 = vpop.f32.mrb[0].mxu0
      %1215 = vdwg.mxu0
      %v1216 = vadd.f32 %v1130, %v1210
      %v1217 = vadd.f32 %v1132, %v1212
      %1218 = vset.pattern.permute.xlu0 9
      %1219 = vperm.xlu0 %1218, %v376
      %v1220 = vpop.permute.xlu0 %1219
      %v1222 = vadd.f32 %v1216, %v1220
      %v1223 = vadd.f32 %v1217, %v1220
      %1224 = vset.pattern.permute.xlu0 10
      %1225 = vperm.xlu0 %1224, %v376
      %v1226 = vpop.permute.xlu0 %1225
      %v1228 = vmul.f32 %v1222, %v1226
      %v1229 = vmul.f32 %v1223, %v1226
      %1230 = vset.pattern.permute.xlu0 2
      %1231 = vperm.xlu0 %1230, %v713
      %v1232 = vpop.permute.xlu0 %1231
      %v1234 = vadd.f32 %v1228, %v1232
      %v1235 = vadd.f32 %v1229, %v1232
      %v1236 = vmax.f32 %v1234, 0.0
      %v1237 = vmax.f32 %v1235, 0.0
      %1238 = vrot.lane.b32.xlu0 %v1236, 17
      %v1239 = vpop.permute.xlu0 %1238
      %1240 = vrot.lane.b32.xlu0 %v1237, 17
      %v1241 = vpop.permute.xlu0 %1240
      %v1242 = vsel %vm396, %v1239, %v1241
      %v1243 = vsel %vm396, %v1241, %v1239
      %v1244 = vmul.f32 %v1243, %v340
      %v1245 = vmul.f32 %v1242, %v341
      %1246 = vrot.lane.b32.xlu0 %v1236, 16
      %v1247 = vpop.permute.xlu0 %1246
      %1248 = vrot.lane.b32.xlu0 %v1237, 16
      %v1249 = vpop.permute.xlu0 %1248
      %v1250 = vsel %vm405, %v1247, %v1249
      %v1251 = vsel %vm405, %v1249, %v1247
      %v1252 = vmul.f32 %v1251, %v344
      %v1253 = vmul.f32 %v1250, %v345
      %1254 = vrot.lane.b32.xlu0 %v1236, 15
      %v1255 = vpop.permute.xlu0 %1254
      %1256 = vrot.lane.b32.xlu0 %v1237, 15
      %v1257 = vpop.permute.xlu0 %1256
      %v1258 = vsel %vm414, %v1255, %v1257
      %v1259 = vsel %vm414, %v1257, %v1255
      %v1260 = vmul.f32 %v1259, %v350
      %v1261 = vmul.f32 %v1258, %v351
      %v1262 = vpack.c.bf16 %v1252, %v1244
      %v1263 = vpack.c.bf16 %v1253, %v1245
      %v1264 = vpack.c.bf16 %v1260, %v1260
      %v1265 = vpack.c.bf16 %v1261, %v1261
      %s1266 = scalar_lea.vmem %s6, 24
      %v1267 = vld [vmem:[%s1266] sm:$0xf]
      %1268 = vrot.lane.b32.xlu0 %v1236, 1
      %v1269 = vpop.permute.xlu0 %1268
      %1270 = vrot.lane.b32.xlu0 %v1237, 1
      %v1271 = vpop.permute.xlu0 %1270
      %v1272 = vsel %vm428, %v1269, %v1271
      %v1273 = vsel %vm428, %v1271, %v1269
      %v1274 = vmul.f32 %v1273, %v354
      %v1275 = vmul.f32 %v1272, %v355
      %1276 = vrot.lane.b32.xlu0 %v1236, 127
      %v1277 = vpop.permute.xlu0 %1276
      %1278 = vrot.lane.b32.xlu0 %v1237, 127
      %v1279 = vpop.permute.xlu0 %1278
      %v1280 = vsel %vm437, %v1277, %v1279
      %v1281 = vsel %vm437, %v1279, %v1277
      %v1282 = vmul.f32 %v1280, %v358
      %v1283 = vmul.f32 %v1281, %v359
      %v1284 = vpack.c.bf16 %v1236, %v1274
      %v1285 = vpack.c.bf16 %v1237, %v1275
      %v1286 = vpack.c.bf16 %v1282, %v1282
      %v1287 = vpack.c.bf16 %v1283, %v1283
      %s1288 = scalar_lea.vmem %s6, 28
      %v1289 = vld [vmem:[%s1288] sm:$0xf]
      %v1291 = vsel %vm448, %v1289, 0
      %v1294 = vsel %vm452, %v1286, 0
      %v1297 = vsel %vm452, %v1287, 0
      %1299 = vmatprep.subr.bf16.mxu0 %v1285
      %1300 = vmatpush1.bf16.msra.mxu0 %v1284
      %1301 = vmatprep.subr.bf16.mxu0 %v1297
      %1302 = vmatpush1.bf16.msra.mxu0 %v1294
      %1303 = vmatprep.subr.bf16.mxu0 0
      %1304 = vmatpush1.bf16.msra.mxu0 0
      %1305 = vmatprep.subr.bf16.mxu0 0
      %1306 = vmatpush1.bf16.msra.mxu0 0
      %1307 = vmatprep.subr.bf16.mxu0 0
      %1308 = vmatpush1.bf16.msra.mxu0 0
      %1309 = vmatprep.subr.bf16.mxu0 0
      %1310 = vmatpush1.bf16.msra.mxu0 0
      %1311 = vmatprep.subr.bf16.mxu0 0
      %1312 = vmatpush1.bf16.msra.mxu0 0
      %1313 = vmatprep.subr.bf16.mxu0 0
      %1314 = vmatpush1.bf16.msra.mxu0 0
      %1315 = vmatprep.subr.bf16.mxu0 0
      %1316 = vmatpush1.bf16.msra.mxu0 0
      %1317 = vmatprep.subr.bf16.mxu0 0
      %1318 = vmatpush1.bf16.msra.mxu0 0
      %1319 = vmatprep.subr.bf16.mxu0 0
      %1320 = vmatpush1.bf16.msra.mxu0 0
      %1321 = vmatprep.subr.bf16.mxu0 0
      %1322 = vmatpush1.bf16.msra.mxu0 0
      %1323 = vmatprep.subr.bf16.mxu0 0
      %1324 = vmatpush1.bf16.msra.mxu0 0
      %1325 = vmatprep.subr.bf16.mxu0 0
      %1326 = vmatpush1.bf16.msra.mxu0 0
      %1327 = vmatprep.subr.bf16.mxu0 0
      %1328 = vmatpush1.bf16.msra.mxu0 0
      %1329 = vmatprep.subr.bf16.mxu0 0
      %1330 = vmatpush1.bf16.msra.mxu0 0
      %1331 = vmatprep.mubr.bf16.mxu0 0
      %1332 = vmatmul.mubr.bf16.gmra.mrb[0].mxu0 %v1291
      %v1333 = vpop.f32.mrb[0].mxu0
      %v1334 = vadd.f32 0.0, %v1333
      %v1335 = vpop.f32.mrb[0].mxu0
      %v1336 = vadd.f32 0.0, %v1335
      %v1337 = vpop.f32.mrb[0].mxu0
      %v1338 = vpop.f32.mrb[0].mxu0
      %1339 = vdwg.mxu0
      %v1341 = vsel %vm448, %v1267, 0
      %v1344 = vsel %vm452, %v1264, 0
      %v1347 = vsel %vm452, %v1265, 0
      %1349 = vmatprep.subr.bf16.mxu0 %v1263
      %1350 = vmatpush1.bf16.msra.mxu0 %v1262
      %1351 = vmatprep.subr.bf16.mxu0 %v1347
      %1352 = vmatpush1.bf16.msra.mxu0 %v1344
      %1353 = vmatprep.subr.bf16.mxu0 0
      %1354 = vmatpush1.bf16.msra.mxu0 0
      %1355 = vmatprep.subr.bf16.mxu0 0
      %1356 = vmatpush1.bf16.msra.mxu0 0
      %1357 = vmatprep.subr.bf16.mxu0 0
      %1358 = vmatpush1.bf16.msra.mxu0 0
      %1359 = vmatprep.subr.bf16.mxu0 0
      %1360 = vmatpush1.bf16.msra.mxu0 0
      %1361 = vmatprep.subr.bf16.mxu0 0
      %1362 = vmatpush1.bf16.msra.mxu0 0
      %1363 = vmatprep.subr.bf16.mxu0 0
      %1364 = vmatpush1.bf16.msra.mxu0 0
      %1365 = vmatprep.subr.bf16.mxu0 0
      %1366 = vmatpush1.bf16.msra.mxu0 0
      %1367 = vmatprep.subr.bf16.mxu0 0
      %1368 = vmatpush1.bf16.msra.mxu0 0
      %1369 = vmatprep.subr.bf16.mxu0 0
      %1370 = vmatpush1.bf16.msra.mxu0 0
      %1371 = vmatprep.subr.bf16.mxu0 0
      %1372 = vmatpush1.bf16.msra.mxu0 0
      %1373 = vmatprep.subr.bf16.mxu0 0
      %1374 = vmatpush1.bf16.msra.mxu0 0
      %1375 = vmatprep.subr.bf16.mxu0 0
      %1376 = vmatpush1.bf16.msra.mxu0 0
      %1377 = vmatprep.subr.bf16.mxu0 0
      %1378 = vmatpush1.bf16.msra.mxu0 0
      %1379 = vmatprep.subr.bf16.mxu0 0
      %1380 = vmatpush1.bf16.msra.mxu0 0
      %1381 = vmatprep.mubr.bf16.mxu0 0
      %1382 = vmatmul.mubr.bf16.gmra.mrb[0].mxu0 %v1341
      %v1383 = vpop.f32.mrb[0].mxu0
      %v1384 = vadd.f32 %v1334, %v1383
      %v1385 = vpop.f32.mrb[0].mxu0
      %v1386 = vadd.f32 %v1336, %v1385
      %v1387 = vpop.f32.mrb[0].mxu0
      %v1388 = vpop.f32.mrb[0].mxu0
      %1389 = vdwg.mxu0
      %1390 = vrot.lane.b32.xlu0 %v1236, 113
      %v1391 = vpop.permute.xlu0 %1390
      %1392 = vrot.lane.b32.xlu0 %v1237, 113
      %v1393 = vpop.permute.xlu0 %1392
      %v1394 = vsel %vm554, %v1391, %v1393
      %v1395 = vsel %vm554, %v1393, %v1391
      %v1396 = vmul.f32 %v1394, %v364
      %v1397 = vmul.f32 %v1395, %v365
      %1398 = vrot.lane.b32.xlu0 %v1236, 112
      %v1399 = vpop.permute.xlu0 %1398
      %1400 = vrot.lane.b32.xlu0 %v1237, 112
      %v1401 = vpop.permute.xlu0 %1400
      %v1402 = vsel %vm563, %v1399, %v1401
      %v1403 = vsel %vm563, %v1401, %v1399
      %v1404 = vmul.f32 %v1402, %v368
      %v1405 = vmul.f32 %v1403, %v369
      %1406 = vrot.lane.b32.xlu0 %v1236, 111
      %v1407 = vpop.permute.xlu0 %1406
      %1408 = vrot.lane.b32.xlu0 %v1237, 111
      %v1409 = vpop.permute.xlu0 %1408
      %v1410 = vsel %vm572, %v1407, %v1409
      %v1411 = vsel %vm572, %v1409, %v1407
      %v1412 = vmul.f32 %v1410, %v374
      %v1413 = vmul.f32 %v1411, %v375
      %v1414 = vpack.c.bf16 %v1404, %v1396
      %v1415 = vpack.c.bf16 %v1405, %v1397
      %v1416 = vpack.c.bf16 %v1412, %v1412
      %v1417 = vpack.c.bf16 %v1413, %v1413
      %s1418 = scalar_lea.vmem %s6, 32
      %v1419 = vld [vmem:[%s1418] sm:$0xf]
      %v1421 = vsel %vm448, %v1419, 0
      %v1424 = vsel %vm452, %v1416, 0
      %v1427 = vsel %vm452, %v1417, 0
      %1429 = vmatprep.subr.bf16.mxu0 %v1415
      %1430 = vmatpush1.bf16.msra.mxu0 %v1414
      %1431 = vmatprep.subr.bf16.mxu0 %v1427
      %1432 = vmatpush1.bf16.msra.mxu0 %v1424
      %1433 = vmatprep.subr.bf16.mxu0 0
      %1434 = vmatpush1.bf16.msra.mxu0 0
      %1435 = vmatprep.subr.bf16.mxu0 0
      %1436 = vmatpush1.bf16.msra.mxu0 0
      %1437 = vmatprep.subr.bf16.mxu0 0
      %1438 = vmatpush1.bf16.msra.mxu0 0
      %1439 = vmatprep.subr.bf16.mxu0 0
      %1440 = vmatpush1.bf16.msra.mxu0 0
      %1441 = vmatprep.subr.bf16.mxu0 0
      %1442 = vmatpush1.bf16.msra.mxu0 0
      %1443 = vmatprep.subr.bf16.mxu0 0
      %1444 = vmatpush1.bf16.msra.mxu0 0
      %1445 = vmatprep.subr.bf16.mxu0 0
      %1446 = vmatpush1.bf16.msra.mxu0 0
      %1447 = vmatprep.subr.bf16.mxu0 0
      %1448 = vmatpush1.bf16.msra.mxu0 0
      %1449 = vmatprep.subr.bf16.mxu0 0
      %1450 = vmatpush1.bf16.msra.mxu0 0
      %1451 = vmatprep.subr.bf16.mxu0 0
      %1452 = vmatpush1.bf16.msra.mxu0 0
      %1453 = vmatprep.subr.bf16.mxu0 0
      %1454 = vmatpush1.bf16.msra.mxu0 0
      %1455 = vmatprep.subr.bf16.mxu0 0
      %1456 = vmatpush1.bf16.msra.mxu0 0
      %1457 = vmatprep.subr.bf16.mxu0 0
      %1458 = vmatpush1.bf16.msra.mxu0 0
      %1459 = vmatprep.subr.bf16.mxu0 0
      %1460 = vmatpush1.bf16.msra.mxu0 0
      %1461 = vmatprep.mubr.bf16.mxu0 0
      %1462 = vmatmul.mubr.bf16.gmra.mrb[0].mxu0 %v1421
      %v1463 = vpop.f32.mrb[0].mxu0
      %v1464 = vadd.f32 0.0, %v1463
      %v1465 = vpop.f32.mrb[0].mxu0
      %v1466 = vadd.f32 0.0, %v1465
      %v1467 = vpop.f32.mrb[0].mxu0
      %v1468 = vpop.f32.mrb[0].mxu0
      %1469 = vdwg.mxu0
      %v1470 = vadd.f32 %v1384, %v1464
      %v1471 = vadd.f32 %v1386, %v1466
      %1472 = vset.pattern.permute.xlu0 11
      %1473 = vperm.xlu0 %1472, %v376
      %v1474 = vpop.permute.xlu0 %1473
      %v1476 = vadd.f32 %v1470, %v1474
      %v1477 = vadd.f32 %v1471, %v1474
      %v1478 = vadd.f32 %v968, %v1476
      %v1479 = vadd.f32 %v969, %v1477
      %v1480 = vpack.c.bf16 %v1478, %v1478
      %v1481 = vpack.c.bf16 %v1479, %v1479
      %v1484 = vunpack.c.l.b16 %v1480
      %v1485 = vunpack.c.l.b16 %v1481
      %v1486 = vpack.c.b16 %v1485, %v1484
      %1488 = vst [vmem:[%s315] sm:$0xff] %v1486
      %p1489 = scmp.lt.s32.totalorder %s18, 1
      %s1490 = scalar_select %p1489, %s18, 1
      %s1491 = smul.addr %s1490, 2
      %s1492 = smul.addr %s1491, 4
      %s1493 = scalar_lea.vmem %s7, %s1492
      // Predicated region
      $region49: #{upsample_forward.2} parent=47 // pred_check
        %p1494 = pneg %p198
      $region50: #{upsample_forward.2} parent=47 // pred_check_branch
        %1496 = sbr.rel (%p1494) target = $region52
      $region51: #{upsample_forward.2} parent=47 // pred_region
        _
      $region52: #{upsample_forward.2} parent=47 // pred_fallthru
        _
    $region48: #{upsample_forward.2} parent=5 // pred_fallthru
      _
    %p1497 = scmp.le.s32.totalorder 2, %s13
    // Predicated region
    $region53: #{upsample_forward.2} parent=5 // pred_check
      %p1498 = pneg %p1497
    $region54: #{upsample_forward.2} parent=5 // pred_check_branch
      %1500 = sbr.rel (%p1498) target = $region56
    $region55: #{upsample_forward.2} parent=5 // pred_region
      %s1501 = ssub.s32 %s13, 2
      // Predicated region
      $region57: #{upsample_forward.2} parent=55 // pred_check
        %p1502 = pneg %p204
      $region58: #{upsample_forward.2} parent=55 // pred_check_branch
        %1504 = sbr.rel (%p1502) target = $region60
      $region59: #{upsample_forward.2} parent=55 // pred_region
        %p1505 = scmp.lt.s32.totalorder %s19, 1
        %s1506 = scalar_select %p1505, %s19, 1
        %s1507 = smul.addr %s1506, 2
        %s1508 = smul.addr %s1507, 4
        %s1509 = scalar_lea.vmem %s7, %s1508
      $region60: #{upsample_forward.2} parent=55 // pred_fallthru
        _
    $region56: #{upsample_forward.2} parent=5 // pred_fallthru
      _
  $region6: #{upsample_forward.2} parent=0 // loop_footer
    %s17 = sadd.s32 1, %s13
  $region7: #{upsample_forward.2} parent=0 // loop_footer_branch
    %12 = sbr.rel target = $region3
  $region8: #{upsample_forward.2} parent=0 // loop_exit
    _

// kernel: upsample_forward.3
$region0: #{upsample_forward.3}
  #allocation0 [shape = 'u32[]', space=smem, size = 0x4, offset = 0x4, fixed_abs, tag = 'smem constant byte address 0x4 - core index']
  #allocation1 [shape = 'u32[144,128]{1,0:T(1,128)}', space=vmem, size = 0x12000, scoped, tag = 'internal scratch']
  %s0 = inlined_call_operand.vmem [shape: bf16[2,8,256], index: 0, kind: input, shape index: {}]
  %s1 = inlined_call_operand.vmem [shape: bf16[2,8,1024], index: 1, kind: input, shape index: {}]
  %s2 = inlined_call_operand.vmem [shape: bf16[256,1024], index: 2, kind: input, shape index: {}]
  %s3 = inlined_call_operand.vmem [shape: f32[8,12], index: 3, kind: input, shape index: {}]
  %s4 = inlined_call_operand.vmem [shape: f32[2,8,3], index: 4, kind: input, shape index: {}]
  %s5 = inlined_call_operand.vmem [shape: bf16[3,8,24], index: 5, kind: input, shape index: {}]
  %s6 = inlined_call_operand.vmem [shape: bf16[8,8], index: 6, kind: input, shape index: {}]
  %s7 = inlined_call_operand.vmem [shape: bf16[9,8,24], index: 7, kind: input, shape index: {}]
  %s8 = inlined_call_operand.vmem [shape: bf16[2,8,1024], index: 8, kind: output, shape index: {}]
  %s9 = sld [smem:[#allocation0]]
  $region65: #{upsample_forward.3} parent=0
    _
  %s11 = ssub.s32 1, %s9
  %s12 = scalar_select 0, %s11, %s9
  loop: start=0, step=1, limit=4
  $region2: #{upsample_forward.3} parent=0 // loop_pre_header
    _
  $region3: #{upsample_forward.3} parent=0 // loop_header
    %s14 = sphi 0, %s18
    %p15 = scmp.ge.s32.totalorder %s14, 4
    %s24 = sphi 0, %s26
    %s27 = sphi 0, %s24
    %s28 = sphi 0, %s27
    %s44 = sphi 0, %s28
    %s50 = sphi 0, %s52
    %s53 = sphi 0, %s50
    %s54 = sphi 0, %s53
    %s70 = sphi 0, %s54
    %s74 = sphi 0, %s74
    %s76 = sphi 0, %s74
    %s77 = sphi 0, %s76
    %s91 = sphi 0, %s77
    %s95 = sphi 0, %s95
    %s97 = sphi 0, %s95
    %s98 = sphi 0, %s97
    %s112 = sphi 0, %s98
    %s118 = sphi 0, %s120
    %s121 = sphi 0, %s118
    %s122 = sphi 0, %s121
    %s138 = sphi 0, %s122
    %s142 = sphi 0, %s142
    %s144 = sphi 0, %s142
    %s145 = sphi 0, %s144
    %s159 = sphi 0, %s145
    %s163 = sphi 0, %s163
    %s165 = sphi 0, %s163
    %s166 = sphi 0, %s165
    %s180 = sphi 0, %s166
    %s184 = sphi 0, %s184
    %s186 = sphi 0, %s184
    %s187 = sphi 0, %s186
    %s201 = sphi 0, %s187
    %s207 = sphi 0, %s209
    %s210 = sphi 0, %s207
    %s211 = sphi 0, %s210
    %s227 = sphi 0, %s211
  $region4: #{upsample_forward.3} parent=0 // loop_header_branch
    %17 = sbr.rel (%p15) target = $region8
  $region5: #{upsample_forward.3} parent=0 // loop_body
    %s19 = ssub.s32 %s14, 1
    %s20 = ssub.s32 %s14, 2
    %s21 = sadd.s32 %s14, 1
    %s22 = ssub.s32 %s14, %s21
    %p23 = scmp.eq.s32.totalorder %s22, 0
    %s25 = sadd.s32 %s24, 1
    %s26 = scalar_select %p23, %s24, %s25
    %p29 = pneg %p23
    %p30 = scmp.eq.s32.totalorder %s14, 1
    %p31 = por %p29, %p30
    %p32 = scmp.ne.s32.totalorder %s24, %s27
    %p33 = scmp.eq.s32.totalorder %s14, 0
    %p34 = por %p32, %p33
    %p35 = scmp.ne.s32.totalorder %s24, %s27
    %p36 = scmp.eq.s32.totalorder %s19, 1
    %p37 = por %p35, %p36
    %p38 = scmp.ne.s32.totalorder %s27, %s28
    %p39 = scmp.eq.s32.totalorder %s19, 0
    %p40 = por %p38, %p39
    %p41 = scmp.ne.s32.totalorder %s27, %s28
    %p42 = scmp.eq.s32.totalorder %s20, 1
    %p43 = por %p41, %p42
    %p45 = scmp.ne.s32.totalorder %s28, %s44
    %p46 = scmp.eq.s32.totalorder %s20, 0
    %p47 = por %p45, %p46
    %s48 = ssub.s32 %s14, %s21
    %p49 = scmp.eq.s32.totalorder %s48, 0
    %s51 = sadd.s32 %s50, 1
    %s52 = scalar_select %p49, %s50, %s51
    %p55 = pneg %p49
    %p56 = scmp.eq.s32.totalorder %s14, 1
    %p57 = por %p55, %p56
    %p58 = scmp.ne.s32.totalorder %s50, %s53
    %p59 = scmp.eq.s32.totalorder %s14, 0
    %p60 = por %p58, %p59
    %p61 = scmp.ne.s32.totalorder %s50, %s53
    %p62 = scmp.eq.s32.totalorder %s19, 1
    %p63 = por %p61, %p62
    %p64 = scmp.ne.s32.totalorder %s53, %s54
    %p65 = scmp.eq.s32.totalorder %s19, 0
    %p66 = por %p64, %p65
    %p67 = scmp.ne.s32.totalorder %s53, %s54
    %p68 = scmp.eq.s32.totalorder %s20, 1
    %p69 = por %p67, %p68
    %p71 = scmp.ne.s32.totalorder %s54, %s70
    %p72 = scmp.eq.s32.totalorder %s20, 0
    %p73 = por %p71, %p72
    %s75 = sadd.s32 %s74, 1
    %p78 = scmp.eq.s32.totalorder %s14, 1
    %p79 = scmp.ne.s32.totalorder %s74, %s76
    %p80 = scmp.eq.s32.totalorder %s14, 0
    %p81 = por %p79, %p80
    %p82 = scmp.ne.s32.totalorder %s74, %s76
    %p83 = scmp.eq.s32.totalorder %s19, 1
    %p84 = por %p82, %p83
    %p85 = scmp.ne.s32.totalorder %s76, %s77
    %p86 = scmp.eq.s32.totalorder %s19, 0
    %p87 = por %p85, %p86
    %p88 = scmp.ne.s32.totalorder %s76, %s77
    %p89 = scmp.eq.s32.totalorder %s20, 1
    %p90 = por %p88, %p89
    %p92 = scmp.ne.s32.totalorder %s77, %s91
    %p93 = scmp.eq.s32.totalorder %s20, 0
    %p94 = por %p92, %p93
    %s96 = sadd.s32 %s95, 1
    %p99 = scmp.eq.s32.totalorder %s14, 1
    %p100 = scmp.ne.s32.totalorder %s95, %s97
    %p101 = scmp.eq.s32.totalorder %s14, 0
    %p102 = por %p100, %p101
    %p103 = scmp.ne.s32.totalorder %s95, %s97
    %p104 = scmp.eq.s32.totalorder %s19, 1
    %p105 = por %p103, %p104
    %p106 = scmp.ne.s32.totalorder %s97, %s98
    %p107 = scmp.eq.s32.totalorder %s19, 0
    %p108 = por %p106, %p107
    %p109 = scmp.ne.s32.totalorder %s97, %s98
    %p110 = scmp.eq.s32.totalorder %s20, 1
    %p111 = por %p109, %p110
    %p113 = scmp.ne.s32.totalorder %s98, %s112
    %p114 = scmp.eq.s32.totalorder %s20, 0
    %p115 = por %p113, %p114
    %s116 = ssub.s32 %s14, %s21
    %p117 = scmp.eq.s32.totalorder %s116, 0
    %s119 = sadd.s32 %s118, 1
    %s120 = scalar_select %p117, %s118, %s119
    %p123 = pneg %p117
    %p124 = scmp.eq.s32.totalorder %s14, 1
    %p125 = por %p123, %p124
    %p126 = scmp.ne.s32.totalorder %s118, %s121
    %p127 = scmp.eq.s32.totalorder %s14, 0
    %p128 = por %p126, %p127
    %p129 = scmp.ne.s32.totalorder %s118, %s121
    %p130 = scmp.eq.s32.totalorder %s19, 1
    %p131 = por %p129, %p130
    %p132 = scmp.ne.s32.totalorder %s121, %s122
    %p133 = scmp.eq.s32.totalorder %s19, 0
    %p134 = por %p132, %p133
    %p135 = scmp.ne.s32.totalorder %s121, %s122
    %p136 = scmp.eq.s32.totalorder %s20, 1
    %p137 = por %p135, %p136
    %p139 = scmp.ne.s32.totalorder %s122, %s138
    %p140 = scmp.eq.s32.totalorder %s20, 0
    %p141 = por %p139, %p140
    %s143 = sadd.s32 %s142, 1
    %p146 = scmp.eq.s32.totalorder %s14, 1
    %p147 = scmp.ne.s32.totalorder %s142, %s144
    %p148 = scmp.eq.s32.totalorder %s14, 0
    %p149 = por %p147, %p148
    %p150 = scmp.ne.s32.totalorder %s142, %s144
    %p151 = scmp.eq.s32.totalorder %s19, 1
    %p152 = por %p150, %p151
    %p153 = scmp.ne.s32.totalorder %s144, %s145
    %p154 = scmp.eq.s32.totalorder %s19, 0
    %p155 = por %p153, %p154
    %p156 = scmp.ne.s32.totalorder %s144, %s145
    %p157 = scmp.eq.s32.totalorder %s20, 1
    %p158 = por %p156, %p157
    %p160 = scmp.ne.s32.totalorder %s145, %s159
    %p161 = scmp.eq.s32.totalorder %s20, 0
    %p162 = por %p160, %p161
    %s164 = sadd.s32 %s163, 1
    %p167 = scmp.eq.s32.totalorder %s14, 1
    %p168 = scmp.ne.s32.totalorder %s163, %s165
    %p169 = scmp.eq.s32.totalorder %s14, 0
    %p170 = por %p168, %p169
    %p171 = scmp.ne.s32.totalorder %s163, %s165
    %p172 = scmp.eq.s32.totalorder %s19, 1
    %p173 = por %p171, %p172
    %p174 = scmp.ne.s32.totalorder %s165, %s166
    %p175 = scmp.eq.s32.totalorder %s19, 0
    %p176 = por %p174, %p175
    %p177 = scmp.ne.s32.totalorder %s165, %s166
    %p178 = scmp.eq.s32.totalorder %s20, 1
    %p179 = por %p177, %p178
    %p181 = scmp.ne.s32.totalorder %s166, %s180
    %p182 = scmp.eq.s32.totalorder %s20, 0
    %p183 = por %p181, %p182
    %s185 = sadd.s32 %s184, 1
    %p188 = scmp.eq.s32.totalorder %s14, 1
    %p189 = scmp.ne.s32.totalorder %s184, %s186
    %p190 = scmp.eq.s32.totalorder %s14, 0
    %p191 = por %p189, %p190
    %p192 = scmp.ne.s32.totalorder %s184, %s186
    %p193 = scmp.eq.s32.totalorder %s19, 1
    %p194 = por %p192, %p193
    %p195 = scmp.ne.s32.totalorder %s186, %s187
    %p196 = scmp.eq.s32.totalorder %s19, 0
    %p197 = por %p195, %p196
    %p198 = scmp.ne.s32.totalorder %s186, %s187
    %p199 = scmp.eq.s32.totalorder %s20, 1
    %p200 = por %p198, %p199
    %p202 = scmp.ne.s32.totalorder %s187, %s201
    %p203 = scmp.eq.s32.totalorder %s20, 0
    %p204 = por %p202, %p203
    %s205 = ssub.s32 %s14, %s21
    %p206 = scmp.eq.s32.totalorder %s205, 0
    %s208 = sadd.s32 %s207, 1
    %s209 = scalar_select %p206, %s207, %s208
    %p212 = pneg %p206
    %p213 = scmp.eq.s32.totalorder %s14, 1
    %p214 = por %p212, %p213
    %p215 = scmp.ne.s32.totalorder %s207, %s210
    %p216 = scmp.eq.s32.totalorder %s14, 0
    %p217 = por %p215, %p216
    %p218 = scmp.ne.s32.totalorder %s207, %s210
    %p219 = scmp.eq.s32.totalorder %s19, 1
    %p220 = por %p218, %p219
    %p221 = scmp.ne.s32.totalorder %s210, %s211
    %p222 = scmp.eq.s32.totalorder %s19, 0
    %p223 = por %p221, %p222
    %p224 = scmp.ne.s32.totalorder %s210, %s211
    %p225 = scmp.eq.s32.totalorder %s20, 1
    %p226 = por %p224, %p225
    %p228 = scmp.ne.s32.totalorder %s211, %s227
    %p229 = scmp.eq.s32.totalorder %s20, 0
    %p230 = por %p228, %p229
    %p231 = scmp.le.s32.totalorder 1, %s14
    %p232 = scmp.lt.s32.totalorder %s14, 3
    %p233 = pnand %p231, %p232
    %p234 = pneg %p233
    // Predicated region
    $region9: #{upsample_forward.3} parent=5 // pred_check
      _
    $region10: #{upsample_forward.3} parent=5 // pred_check_branch
      %236 = sbr.rel (%p233) target = $region12
    $region11: #{upsample_forward.3} parent=5 // pred_region
      %s237 = ssub.s32 %s14, 1
      // Predicated region
      $region13: #{upsample_forward.3} parent=11 // pred_check
        %p238 = pneg %p87
      $region14: #{upsample_forward.3} parent=11 // pred_check_branch
        %240 = sbr.rel (%p238) target = $region16
      $region15: #{upsample_forward.3} parent=11 // pred_region
        _
      $region16: #{upsample_forward.3} parent=11 // pred_fallthru
        _
      // Predicated region
      $region17: #{upsample_forward.3} parent=11 // pred_check
        %p241 = pneg %p108
      $region18: #{upsample_forward.3} parent=11 // pred_check_branch
        %243 = sbr.rel (%p241) target = $region20
      $region19: #{upsample_forward.3} parent=11 // pred_region
        _
      $region20: #{upsample_forward.3} parent=11 // pred_fallthru
        _
      // Predicated region
      $region21: #{upsample_forward.3} parent=11 // pred_check
        %p244 = pneg %p155
      $region22: #{upsample_forward.3} parent=11 // pred_check_branch
        %246 = sbr.rel (%p244) target = $region24
      $region23: #{upsample_forward.3} parent=11 // pred_region
        _
      $region24: #{upsample_forward.3} parent=11 // pred_fallthru
        _
      // Predicated region
      $region25: #{upsample_forward.3} parent=11 // pred_check
        %p247 = pneg %p176
      $region26: #{upsample_forward.3} parent=11 // pred_check_branch
        %249 = sbr.rel (%p247) target = $region28
      $region27: #{upsample_forward.3} parent=11 // pred_region
        _
      $region28: #{upsample_forward.3} parent=11 // pred_fallthru
        _
      // Predicated region
      $region29: #{upsample_forward.3} parent=11 // pred_check
        %p250 = pneg %p197
      $region30: #{upsample_forward.3} parent=11 // pred_check_branch
        %252 = sbr.rel (%p250) target = $region32
      $region31: #{upsample_forward.3} parent=11 // pred_region
        _
      $region32: #{upsample_forward.3} parent=11 // pred_fallthru
        _
    $region12: #{upsample_forward.3} parent=5 // pred_fallthru
      _
    %p253 = scmp.lt.s32.totalorder %s14, 2
    // Predicated region
    $region33: #{upsample_forward.3} parent=5 // pred_check
      %p254 = pneg %p253
    $region34: #{upsample_forward.3} parent=5 // pred_check_branch
      %256 = sbr.rel (%p254) target = $region36
    $region35: #{upsample_forward.3} parent=5 // pred_region
      // Predicated region
      $region37: #{upsample_forward.3} parent=35 // pred_check
        %p257 = pneg %p34
      $region38: #{upsample_forward.3} parent=35 // pred_check_branch
        %259 = sbr.rel (%p257) target = $region40
      $region39: #{upsample_forward.3} parent=35 // pred_region
        %p260 = scmp.lt.s32.totalorder %s14, 1
        %s261 = scalar_select %p260, %s14, 1
        %s262 = smul.addr %s261, 2
        %s263 = smul.addr %s262, 4
        %s264 = scalar_lea.vmem %s0, %s263
      $region40: #{upsample_forward.3} parent=35 // pred_fallthru
        _
      // Predicated region
      $region41: #{upsample_forward.3} parent=35 // pred_check
        %p265 = pneg %p60
      $region42: #{upsample_forward.3} parent=35 // pred_check_branch
        %267 = sbr.rel (%p265) target = $region44
      $region43: #{upsample_forward.3} parent=35 // pred_region
        %p268 = scmp.lt.s32.totalorder %s14, 1
        %s269 = scalar_select %p268, %s14, 1
        %s270 = smul.addr %s269, 8
        %s271 = smul.addr %s270, 4
        %s272 = scalar_lea.vmem %s1, %s271
      $region44: #{upsample_forward.3} parent=35 // pred_fallthru
        _
      // Predicated region
      $region45: #{upsample_forward.3} parent=35 // pred_check
        %p273 = pneg %p128
      $region46: #{upsample_forward.3} parent=35 // pred_check_branch
        %275 = sbr.rel (%p273) target = $region48
      $region47: #{upsample_forward.3} parent=35 // pred_region
        %p276 = scmp.lt.s32.totalorder %s14, 1
        %s277 = scalar_select %p276, %s14, 1
        %s278 = smul.addr %s277, 8
        %s279 = scalar_lea.vmem %s4, %s278
      $region48: #{upsample_forward.3} parent=35 // pred_fallthru
        _
    $region36: #{upsample_forward.3} parent=5 // pred_fallthru
      _
    %p280 = scmp.le.s32.totalorder 1, %s14
    %p281 = scmp.lt.s32.totalorder %s14, 3
    %p282 = pnand %p280, %p281
    %p283 = pneg %p282
    // Predicated region
    $region49: #{upsample_forward.3} parent=5 // pred_check
      _
    $region50: #{upsample_forward.3} parent=5 // pred_check_branch
      %285 = sbr.rel (%p282) target = $region52
    $region51: #{upsample_forward.3} parent=5 // pred_region
      %s286 = ssub.s32 %s14, 1
      %p287 = scmp.lt.s32.totalorder %s19, 1
      %s288 = scalar_select %p287, %s19, 1
      %s289 = smul.addr %s288, 2
      %s290 = smul.addr %s289, 4
      %s291 = scalar_lea.vmem %s0, %s290
      %p292 = pneg %p40
      %p293 = pneg %p37
      %p294 = scmp.lt.s32.totalorder %s19, 1
      %s295 = scalar_select %p294, %s19, 1
      %s296 = smul.addr %s295, 8
      %s297 = smul.addr %s296, 4
      %s298 = scalar_lea.vmem %s1, %s297
      %p299 = pneg %p66
      %p300 = pneg %p63
      %p301 = pneg %p87
      %p302 = pneg %p84
      %p303 = pneg %p108
      %p304 = pneg %p105
      %p305 = scmp.lt.s32.totalorder %s19, 1
      %s306 = scalar_select %p305, %s19, 1
      %s307 = smul.addr %s306, 8
      %s308 = scalar_lea.vmem %s4, %s307
      %p309 = pneg %p134
      %p310 = pneg %p131
      %p311 = pneg %p155
      %p312 = pneg %p152
      %p313 = pneg %p176
      %p314 = pneg %p173
      %p315 = pneg %p197
      %p316 = pneg %p194
      %p317 = pneg %p223
      %p318 = pneg %p220
      %p319 = scmp.lt.s32.totalorder %s19, 1
      %s320 = scalar_select %p319, %s19, 1
      %s321 = smul.addr %s320, 8
      %s322 = smul.addr %s321, 4
      %s323 = scalar_lea.vmem %s8, %s322
      %p324 = scmp.lt.s32.totalorder %s19, 1
      %s325 = scalar_select %p324, %s19, 1
      %s326 = smul.addr %s325, 2
      %s327 = smul.addr %s326, 4
      %s328 = scalar_lea.vmem %s0, %s327
      %p329 = scmp.lt.s32.totalorder %s19, 1
      %s330 = scalar_select %p329, %s19, 1
      %s331 = smul.addr %s330, 8
      %s332 = smul.addr %s331, 4
      %s333 = scalar_lea.vmem %s1, %s332
      %p334 = scmp.lt.s32.totalorder %s19, 1
      %s335 = scalar_select %p334, %s19, 1
      %s336 = smul.addr %s335, 8
      %s337 = scalar_lea.vmem %s4, %s336
      %p338 = scmp.lt.s32.totalorder %s19, 1
      %s339 = scalar_select %p338, %s19, 1
      %s340 = smul.addr %s339, 8
      %s341 = smul.addr %s340, 4
      %s342 = scalar_lea.vmem %s8, %s341
      %v344 = vld [vmem:[%s328] sm:$0xff]
      %v345 = vld [vmem:[%s2] sm:$0xff]
      %v346 = vld [vmem:[%s2 + $0x8] sm:$0xff]
      %v347 = vld [vmem:[%s2 + $0x10] sm:$0xff]
      %v348 = vld [vmem:[%s2 + $0x18] sm:$0xff]
      %v349 = vld [vmem:[%s2 + $0x20] sm:$0xff]
      %v350 = vld [vmem:[%s2 + $0x28] sm:$0xff]
      %v351 = vld [vmem:[%s2 + $0x30] sm:$0xff]
      %v352 = vld [vmem:[%s2 + $0x38] sm:$0xff]
      %v353 = vld [vmem:[%s2 + $0x40] sm:$0xff]
      %v354 = vld [vmem:[%s2 + $0x48] sm:$0xff]
      %v355 = vld [vmem:[%s2 + $0x50] sm:$0xff]
      %v356 = vld [vmem:[%s2 + $0x58] sm:$0xff]
      %v357 = vld [vmem:[%s2 + $0x60] sm:$0xff]
      %v358 = vld [vmem:[%s2 + $0x68] sm:$0xff]
      %v359 = vld [vmem:[%s2 + $0x70] sm:$0xff]
      %v360 = vld [vmem:[%s2 + $0x78] sm:$0xff]
      %v361 = vld [vmem:[%s2 + $0x80] sm:$0xff]
      %v362 = vld [vmem:[%s2 + $0x88] sm:$0xff]
      %v363 = vld [vmem:[%s2 + $0x90] sm:$0xff]
      %v364 = vld [vmem:[%s2 + $0x98] sm:$0xff]
      %v365 = vld [vmem:[%s2 + $0xa0] sm:$0xff]
      %v366 = vld [vmem:[%s2 + $0xa8] sm:$0xff]
      %v367 = vld [vmem:[%s2 + $0xb0] sm:$0xff]
      %v368 = vld [vmem:[%s2 + $0xb8] sm:$0xff]
      %v369 = vld [vmem:[%s2 + $0xc0] sm:$0xff]
      %v370 = vld [vmem:[%s2 + $0xc8] sm:$0xff]
      %v371 = vld [vmem:[%s2 + $0xd0] sm:$0xff]
      %v372 = vld [vmem:[%s2 + $0xd8] sm:$0xff]
      %v373 = vld [vmem:[%s2 + $0xe0] sm:$0xff]
      %v374 = vld [vmem:[%s2 + $0xe8] sm:$0xff]
      %v375 = vld [vmem:[%s2 + $0xf0] sm:$0xff]
      %v376 = vld [vmem:[%s2 + $0xf8] sm:$0xff]
      %v377 = vld [vmem:[%s2 + $0x100] sm:$0xff]
      %v378 = vld [vmem:[%s2 + $0x108] sm:$0xff]
      %v379 = vld [vmem:[%s2 + $0x110] sm:$0xff]
      %v380 = vld [vmem:[%s2 + $0x118] sm:$0xff]
      %v381 = vld [vmem:[%s2 + $0x120] sm:$0xff]
      %v382 = vld [vmem:[%s2 + $0x128] sm:$0xff]
      %v383 = vld [vmem:[%s2 + $0x130] sm:$0xff]
      %v384 = vld [vmem:[%s2 + $0x138] sm:$0xff]
      %v385 = vld [vmem:[%s2 + $0x140] sm:$0xff]
      %v386 = vld [vmem:[%s2 + $0x148] sm:$0xff]
      %v387 = vld [vmem:[%s2 + $0x150] sm:$0xff]
      %v388 = vld [vmem:[%s2 + $0x158] sm:$0xff]
      %v389 = vld [vmem:[%s2 + $0x160] sm:$0xff]
      %v390 = vld [vmem:[%s2 + $0x168] sm:$0xff]
      %v391 = vld [vmem:[%s2 + $0x170] sm:$0xff]
      %v392 = vld [vmem:[%s2 + $0x178] sm:$0xff]
      %v393 = vld [vmem:[%s2 + $0x180] sm:$0xff]
      %v394 = vld [vmem:[%s2 + $0x188] sm:$0xff]
      %v395 = vld [vmem:[%s2 + $0x190] sm:$0xff]
      %v396 = vld [vmem:[%s2 + $0x198] sm:$0xff]
      %v397 = vld [vmem:[%s2 + $0x1a0] sm:$0xff]
      %v398 = vld [vmem:[%s2 + $0x1a8] sm:$0xff]
      %v399 = vld [vmem:[%s2 + $0x1b0] sm:$0xff]
      %v400 = vld [vmem:[%s2 + $0x1b8] sm:$0xff]
      %v401 = vld [vmem:[%s2 + $0x1c0] sm:$0xff]
      %v402 = vld [vmem:[%s2 + $0x1c8] sm:$0xff]
      %v403 = vld [vmem:[%s2 + $0x1d0] sm:$0xff]
      %v404 = vld [vmem:[%s2 + $0x1d8] sm:$0xff]
      %v405 = vld [vmem:[%s2 + $0x1e0] sm:$0xff]
      %v406 = vld [vmem:[%s2 + $0x1e8] sm:$0xff]
      %v407 = vld [vmem:[%s2 + $0x1f0] sm:$0xff]
      %v408 = vld [vmem:[%s2 + $0x1f8] sm:$0xff]
      %v409 = vld [vmem:[%s2 + $0x200] sm:$0xff]
      %v410 = vld [vmem:[%s2 + $0x208] sm:$0xff]
      %v411 = vld [vmem:[%s2 + $0x210] sm:$0xff]
      %v412 = vld [vmem:[%s2 + $0x218] sm:$0xff]
      %v413 = vld [vmem:[%s2 + $0x220] sm:$0xff]
      %v414 = vld [vmem:[%s2 + $0x228] sm:$0xff]
      %v415 = vld [vmem:[%s2 + $0x230] sm:$0xff]
      %v416 = vld [vmem:[%s2 + $0x238] sm:$0xff]
      %v417 = vld [vmem:[%s2 + $0x240] sm:$0xff]
      %v418 = vld [vmem:[%s2 + $0x248] sm:$0xff]
      %v419 = vld [vmem:[%s2 + $0x250] sm:$0xff]
      %v420 = vld [vmem:[%s2 + $0x258] sm:$0xff]
      %v421 = vld [vmem:[%s2 + $0x260] sm:$0xff]
      %v422 = vld [vmem:[%s2 + $0x268] sm:$0xff]
      %v423 = vld [vmem:[%s2 + $0x270] sm:$0xff]
      %v424 = vld [vmem:[%s2 + $0x278] sm:$0xff]
      %v425 = vld [vmem:[%s2 + $0x280] sm:$0xff]
      %v426 = vld [vmem:[%s2 + $0x288] sm:$0xff]
      %v427 = vld [vmem:[%s2 + $0x290] sm:$0xff]
      %v428 = vld [vmem:[%s2 + $0x298] sm:$0xff]
      %v429 = vld [vmem:[%s2 + $0x2a0] sm:$0xff]
      %v430 = vld [vmem:[%s2 + $0x2a8] sm:$0xff]
      %v431 = vld [vmem:[%s2 + $0x2b0] sm:$0xff]
      %v432 = vld [vmem:[%s2 + $0x2b8] sm:$0xff]
      %v433 = vld [vmem:[%s2 + $0x2c0] sm:$0xff]
      %v434 = vld [vmem:[%s2 + $0x2c8] sm:$0xff]
      %v435 = vld [vmem:[%s2 + $0x2d0] sm:$0xff]
      %v436 = vld [vmem:[%s2 + $0x2d8] sm:$0xff]
      %v437 = vld [vmem:[%s2 + $0x2e0] sm:$0xff]
      %v438 = vld [vmem:[%s2 + $0x2e8] sm:$0xff]
      %v439 = vld [vmem:[%s2 + $0x2f0] sm:$0xff]
      %v440 = vld [vmem:[%s2 + $0x2f8] sm:$0xff]
      %v441 = vld [vmem:[%s2 + $0x300] sm:$0xff]
      %v442 = vld [vmem:[%s2 + $0x308] sm:$0xff]
      %v443 = vld [vmem:[%s2 + $0x310] sm:$0xff]
      %v444 = vld [vmem:[%s2 + $0x318] sm:$0xff]
      %v445 = vld [vmem:[%s2 + $0x320] sm:$0xff]
      %v446 = vld [vmem:[%s2 + $0x328] sm:$0xff]
      %v447 = vld [vmem:[%s2 + $0x330] sm:$0xff]
      %v448 = vld [vmem:[%s2 + $0x338] sm:$0xff]
      %v449 = vld [vmem:[%s2 + $0x340] sm:$0xff]
      %v450 = vld [vmem:[%s2 + $0x348] sm:$0xff]
      %v451 = vld [vmem:[%s2 + $0x350] sm:$0xff]
      %v452 = vld [vmem:[%s2 + $0x358] sm:$0xff]
      %v453 = vld [vmem:[%s2 + $0x360] sm:$0xff]
      %v454 = vld [vmem:[%s2 + $0x368] sm:$0xff]
      %v455 = vld [vmem:[%s2 + $0x370] sm:$0xff]
      %v456 = vld [vmem:[%s2 + $0x378] sm:$0xff]
      %v457 = vld [vmem:[%s2 + $0x380] sm:$0xff]
      %v458 = vld [vmem:[%s2 + $0x388] sm:$0xff]
      %v459 = vld [vmem:[%s2 + $0x390] sm:$0xff]
      %v460 = vld [vmem:[%s2 + $0x398] sm:$0xff]
      %v461 = vld [vmem:[%s2 + $0x3a0] sm:$0xff]
      %v462 = vld [vmem:[%s2 + $0x3a8] sm:$0xff]
      %v463 = vld [vmem:[%s2 + $0x3b0] sm:$0xff]
      %v464 = vld [vmem:[%s2 + $0x3b8] sm:$0xff]
      %v465 = vld [vmem:[%s2 + $0x3c0] sm:$0xff]
      %v466 = vld [vmem:[%s2 + $0x3c8] sm:$0xff]
      %v467 = vld [vmem:[%s2 + $0x3d0] sm:$0xff]
      %v468 = vld [vmem:[%s2 + $0x3d8] sm:$0xff]
      %v469 = vld [vmem:[%s2 + $0x3e0] sm:$0xff]
      %v470 = vld [vmem:[%s2 + $0x3e8] sm:$0xff]
      %v471 = vld [vmem:[%s2 + $0x3f0] sm:$0xff]
      %v472 = vld [vmem:[%s2 + $0x3f8] sm:$0xff]
      %v474 = vunpack.c.l.b16 %v344
      %v475 = vunpack.c.h.b16 %v344
      %v476 = vpack.c.b16 %v474, %v474
      %v477 = vpack.c.b16 %v475, %v475
      %v608 = vunpack.c.l.b16 %v345
      %v609 = vunpack.c.h.b16 %v345
      %v610 = vunpack.c.l.b16 %v346
      %v611 = vunpack.c.h.b16 %v346
      %v612 = vunpack.c.l.b16 %v347
      %v613 = vunpack.c.h.b16 %v347
      %v614 = vunpack.c.l.b16 %v348
      %v615 = vunpack.c.h.b16 %v348
      %v616 = vunpack.c.l.b16 %v349
      %v617 = vunpack.c.h.b16 %v349
      %v618 = vunpack.c.l.b16 %v350
      %v619 = vunpack.c.h.b16 %v350
      %v620 = vunpack.c.l.b16 %v351
      %v621 = vunpack.c.h.b16 %v351
      %v622 = vunpack.c.l.b16 %v352
      %v623 = vunpack.c.h.b16 %v352
      %v624 = vunpack.c.l.b16 %v353
      %v625 = vunpack.c.h.b16 %v353
      %v626 = vunpack.c.l.b16 %v354
      %v627 = vunpack.c.h.b16 %v354
      %v628 = vunpack.c.l.b16 %v355
      %v629 = vunpack.c.h.b16 %v355
      %v630 = vunpack.c.l.b16 %v356
      %v631 = vunpack.c.h.b16 %v356
      %v632 = vunpack.c.l.b16 %v357
      %v633 = vunpack.c.h.b16 %v357
      %v634 = vunpack.c.l.b16 %v358
      %v635 = vunpack.c.h.b16 %v358
      %v636 = vunpack.c.l.b16 %v359
      %v637 = vunpack.c.h.b16 %v359
      %v638 = vunpack.c.l.b16 %v360
      %v639 = vunpack.c.h.b16 %v360
      %v640 = vunpack.c.l.b16 %v361
      %v641 = vunpack.c.h.b16 %v361
      %v642 = vunpack.c.l.b16 %v362
      %v643 = vunpack.c.h.b16 %v362
      %v644 = vunpack.c.l.b16 %v363
      %v645 = vunpack.c.h.b16 %v363
      %v646 = vunpack.c.l.b16 %v364
      %v647 = vunpack.c.h.b16 %v364
      %v648 = vunpack.c.l.b16 %v365
      %v649 = vunpack.c.h.b16 %v365
      %v650 = vunpack.c.l.b16 %v366
      %v651 = vunpack.c.h.b16 %v366
      %v652 = vunpack.c.l.b16 %v367
      %v653 = vunpack.c.h.b16 %v367
      %v654 = vunpack.c.l.b16 %v368
      %v655 = vunpack.c.h.b16 %v368
      %v656 = vunpack.c.l.b16 %v369
      %v657 = vunpack.c.h.b16 %v369
      %v658 = vunpack.c.l.b16 %v370
      %v659 = vunpack.c.h.b16 %v370
      %v660 = vunpack.c.l.b16 %v371
      %v661 = vunpack.c.h.b16 %v371
      %v662 = vunpack.c.l.b16 %v372
      %v663 = vunpack.c.h.b16 %v372
      %v664 = vunpack.c.l.b16 %v373
      %v665 = vunpack.c.h.b16 %v373
      %v666 = vunpack.c.l.b16 %v374
      %v667 = vunpack.c.h.b16 %v374
      %v668 = vunpack.c.l.b16 %v375
      %v669 = vunpack.c.h.b16 %v375
      %v670 = vunpack.c.l.b16 %v376
      %v671 = vunpack.c.h.b16 %v376
      %v672 = vunpack.c.l.b16 %v377
      %v673 = vunpack.c.h.b16 %v377
      %v674 = vunpack.c.l.b16 %v378
      %v675 = vunpack.c.h.b16 %v378
      %v676 = vunpack.c.l.b16 %v379
      %v677 = vunpack.c.h.b16 %v379
      %v678 = vunpack.c.l.b16 %v380
      %v679 = vunpack.c.h.b16 %v380
      %v680 = vunpack.c.l.b16 %v381
      %v681 = vunpack.c.h.b16 %v381
      %v682 = vunpack.c.l.b16 %v382
      %v683 = vunpack.c.h.b16 %v382
      %v684 = vunpack.c.l.b16 %v383
      %v685 = vunpack.c.h.b16 %v383
      %v686 = vunpack.c.l.b16 %v384
      %v687 = vunpack.c.h.b16 %v384
      %v688 = vunpack.c.l.b16 %v385
      %v689 = vunpack.c.h.b16 %v385
      %v690 = vunpack.c.l.b16 %v386
      %v691 = vunpack.c.h.b16 %v386
      %v692 = vunpack.c.l.b16 %v387
      %v693 = vunpack.c.h.b16 %v387
      %v694 = vunpack.c.l.b16 %v388
      %v695 = vunpack.c.h.b16 %v388
      %v696 = vunpack.c.l.b16 %v389
      %v697 = vunpack.c.h.b16 %v389
      %v698 = vunpack.c.l.b16 %v390
      %v699 = vunpack.c.h.b16 %v390
      %v700 = vunpack.c.l.b16 %v391
      %v701 = vunpack.c.h.b16 %v391
      %v702 = vunpack.c.l.b16 %v392
      %v703 = vunpack.c.h.b16 %v392
      %v704 = vunpack.c.l.b16 %v393
      %v705 = vunpack.c.h.b16 %v393
      %v706 = vunpack.c.l.b16 %v394
      %v707 = vunpack.c.h.b16 %v394
      %v708 = vunpack.c.l.b16 %v395
      %v709 = vunpack.c.h.b16 %v395
      %v710 = vunpack.c.l.b16 %v396
      %v711 = vunpack.c.h.b16 %v396
      %v712 = vunpack.c.l.b16 %v397
      %v713 = vunpack.c.h.b16 %v397
      %v714 = vunpack.c.l.b16 %v398
      %v715 = vunpack.c.h.b16 %v398
      %v716 = vunpack.c.l.b16 %v399
      %v717 = vunpack.c.h.b16 %v399
      %v718 = vunpack.c.l.b16 %v400
      %v719 = vunpack.c.h.b16 %v400
      %v720 = vunpack.c.l.b16 %v401
      %v721 = vunpack.c.h.b16 %v401
      %v722 = vunpack.c.l.b16 %v402
      %v723 = vunpack.c.h.b16 %v402
      %v724 = vunpack.c.l.b16 %v403
      %v725 = vunpack.c.h.b16 %v403
      %v726 = vunpack.c.l.b16 %v404
      %v727 = vunpack.c.h.b16 %v404
      %v728 = vunpack.c.l.b16 %v405
      %v729 = vunpack.c.h.b16 %v405
      %v730 = vunpack.c.l.b16 %v406
      %v731 = vunpack.c.h.b16 %v406
      %v732 = vunpack.c.l.b16 %v407
      %v733 = vunpack.c.h.b16 %v407
      %v734 = vunpack.c.l.b16 %v408
      %v735 = vunpack.c.h.b16 %v408
      %v736 = vunpack.c.l.b16 %v409
      %v737 = vunpack.c.h.b16 %v409
      %v738 = vunpack.c.l.b16 %v410
      %v739 = vunpack.c.h.b16 %v410
      %v740 = vunpack.c.l.b16 %v411
      %v741 = vunpack.c.h.b16 %v411
      %v742 = vunpack.c.l.b16 %v412
      %v743 = vunpack.c.h.b16 %v412
      %v744 = vunpack.c.l.b16 %v413
      %v745 = vunpack.c.h.b16 %v413
      %v746 = vunpack.c.l.b16 %v414
      %v747 = vunpack.c.h.b16 %v414
      %v748 = vunpack.c.l.b16 %v415
      %v749 = vunpack.c.h.b16 %v415
      %v750 = vunpack.c.l.b16 %v416
      %v751 = vunpack.c.h.b16 %v416
      %v752 = vunpack.c.l.b16 %v417
      %v753 = vunpack.c.h.b16 %v417
      %v754 = vunpack.c.l.b16 %v418
      %v755 = vunpack.c.h.b16 %v418
      %v756 = vunpack.c.l.b16 %v419
      %v757 = vunpack.c.h.b16 %v419
      %v758 = vunpack.c.l.b16 %v420
      %v759 = vunpack.c.h.b16 %v420
      %v760 = vunpack.c.l.b16 %v421
      %v761 = vunpack.c.h.b16 %v421
      %v762 = vunpack.c.l.b16 %v422
      %v763 = vunpack.c.h.b16 %v422
      %v764 = vunpack.c.l.b16 %v423
      %v765 = vunpack.c.h.b16 %v423
      %v766 = vunpack.c.l.b16 %v424
      %v767 = vunpack.c.h.b16 %v424
      %v768 = vunpack.c.l.b16 %v425
      %v769 = vunpack.c.h.b16 %v425
      %v770 = vunpack.c.l.b16 %v426
      %v771 = vunpack.c.h.b16 %v426
      %v772 = vunpack.c.l.b16 %v427
      %v773 = vunpack.c.h.b16 %v427
      %v774 = vunpack.c.l.b16 %v428
      %v775 = vunpack.c.h.b16 %v428
      %v776 = vunpack.c.l.b16 %v429
      %v777 = vunpack.c.h.b16 %v429
      %v778 = vunpack.c.l.b16 %v430
      %v779 = vunpack.c.h.b16 %v430
      %v780 = vunpack.c.l.b16 %v431
      %v781 = vunpack.c.h.b16 %v431
      %v782 = vunpack.c.l.b16 %v432
      %v783 = vunpack.c.h.b16 %v432
      %v784 = vunpack.c.l.b16 %v433
      %v785 = vunpack.c.h.b16 %v433
      %v786 = vunpack.c.l.b16 %v434
      %v787 = vunpack.c.h.b16 %v434
      %v788 = vunpack.c.l.b16 %v435
      %v789 = vunpack.c.h.b16 %v435
      %v790 = vunpack.c.l.b16 %v436
      %v791 = vunpack.c.h.b16 %v436
      %v792 = vunpack.c.l.b16 %v437
      %v793 = vunpack.c.h.b16 %v437
      %v794 = vunpack.c.l.b16 %v438
      %v795 = vunpack.c.h.b16 %v438
      %v796 = vunpack.c.l.b16 %v439
      %v797 = vunpack.c.h.b16 %v439
      %v798 = vunpack.c.l.b16 %v440
      %v799 = vunpack.c.h.b16 %v440
      %v800 = vunpack.c.l.b16 %v441
      %v801 = vunpack.c.h.b16 %v441
      %v802 = vunpack.c.l.b16 %v442
      %v803 = vunpack.c.h.b16 %v442
      %v804 = vunpack.c.l.b16 %v443
      %v805 = vunpack.c.h.b16 %v443
      %v806 = vunpack.c.l.b16 %v444
      %v807 = vunpack.c.h.b16 %v444
      %v808 = vunpack.c.l.b16 %v445
      %v809 = vunpack.c.h.b16 %v445
      %v810 = vunpack.c.l.b16 %v446
      %v811 = vunpack.c.h.b16 %v446
      %v812 = vunpack.c.l.b16 %v447
      %v813 = vunpack.c.h.b16 %v447
      %v814 = vunpack.c.l.b16 %v448
      %v815 = vunpack.c.h.b16 %v448
      %v816 = vunpack.c.l.b16 %v449
      %v817 = vunpack.c.h.b16 %v449
      %v818 = vunpack.c.l.b16 %v450
      %v819 = vunpack.c.h.b16 %v450
      %v820 = vunpack.c.l.b16 %v451
      %v821 = vunpack.c.h.b16 %v451
      %v822 = vunpack.c.l.b16 %v452
      %v823 = vunpack.c.h.b16 %v452
      %v824 = vunpack.c.l.b16 %v453
      %v825 = vunpack.c.h.b16 %v453
      %v826 = vunpack.c.l.b16 %v454
      %v827 = vunpack.c.h.b16 %v454
      %v828 = vunpack.c.l.b16 %v455
      %v829 = vunpack.c.h.b16 %v455
      %v830 = vunpack.c.l.b16 %v456
      %v831 = vunpack.c.h.b16 %v456
      %v832 = vunpack.c.l.b16 %v457
      %v833 = vunpack.c.h.b16 %v457
      %v834 = vunpack.c.l.b16 %v458
      %v835 = vunpack.c.h.b16 %v458
      %v836 = vunpack.c.l.b16 %v459
      %v837 = vunpack.c.h.b16 %v459
      %v838 = vunpack.c.l.b16 %v460
      %v839 = vunpack.c.h.b16 %v460
      %v840 = vunpack.c.l.b16 %v461
      %v841 = vunpack.c.h.b16 %v461
      %v842 = vunpack.c.l.b16 %v462
      %v843 = vunpack.c.h.b16 %v462
      %v844 = vunpack.c.l.b16 %v463
      %v845 = vunpack.c.h.b16 %v463
      %v846 = vunpack.c.l.b16 %v464
      %v847 = vunpack.c.h.b16 %v464
      %v848 = vunpack.c.l.b16 %v465
      %v849 = vunpack.c.h.b16 %v465
      %v850 = vunpack.c.l.b16 %v466
      %v851 = vunpack.c.h.b16 %v466
      %v852 = vunpack.c.l.b16 %v467
      %v853 = vunpack.c.h.b16 %v467
      %v854 = vunpack.c.l.b16 %v468
      %v855 = vunpack.c.h.b16 %v468
      %v856 = vunpack.c.l.b16 %v469
      %v857 = vunpack.c.h.b16 %v469
      %v858 = vunpack.c.l.b16 %v470
      %v859 = vunpack.c.h.b16 %v470
      %v860 = vunpack.c.l.b16 %v471
      %v861 = vunpack.c.h.b16 %v471
      %v862 = vunpack.c.l.b16 %v472
      %v863 = vunpack.c.h.b16 %v472
      %v864 = vpack.c.b16 %v616, %v608
      %v865 = vpack.c.b16 %v617, %v609
      %v866 = vpack.c.b16 %v618, %v610
      %v867 = vpack.c.b16 %v619, %v611
      %v868 = vpack.c.b16 %v620, %v612
      %v869 = vpack.c.b16 %v621, %v613
      %v870 = vpack.c.b16 %v622, %v614
      %v871 = vpack.c.b16 %v623, %v615
      %v872 = vpack.c.b16 %v632, %v624
      %v873 = vpack.c.b16 %v633, %v625
      %v874 = vpack.c.b16 %v634, %v626
      %v875 = vpack.c.b16 %v635, %v627
      %v876 = vpack.c.b16 %v636, %v628
      %v877 = vpack.c.b16 %v637, %v629
      %v878 = vpack.c.b16 %v638, %v630
      %v879 = vpack.c.b16 %v639, %v631
      %v880 = vpack.c.b16 %v648, %v640
      %v881 = vpack.c.b16 %v649, %v641
      %v882 = vpack.c.b16 %v650, %v642
      %v883 = vpack.c.b16 %v651, %v643
      %v884 = vpack.c.b16 %v652, %v644
      %v885 = vpack.c.b16 %v653, %v645
      %v886 = vpack.c.b16 %v654, %v646
      %v887 = vpack.c.b16 %v655, %v647
      %v888 = vpack.c.b16 %v664, %v656
      %v889 = vpack.c.b16 %v665, %v657
      %v890 = vpack.c.b16 %v666, %v658
      %v891 = vpack.c.b16 %v667, %v659
      %v892 = vpack.c.b16 %v668, %v660
      %v893 = vpack.c.b16 %v669, %v661
      %v894 = vpack.c.b16 %v670, %v662
      %v895 = vpack.c.b16 %v671, %v663
      %v896 = vpack.c.b16 %v680, %v672
      %v897 = vpack.c.b16 %v681, %v673
      %v898 = vpack.c.b16 %v682, %v674
      %v899 = vpack.c.b16 %v683, %v675
      %v900 = vpack.c.b16 %v684, %v676
      %v901 = vpack.c.b16 %v685, %v677
      %v902 = vpack.c.b16 %v686, %v678
      %v903 = vpack.c.b16 %v687, %v679
      %v904 = vpack.c.b16 %v696, %v688
      %v905 = vpack.c.b16 %v697, %v689
      %v906 = vpack.c.b16 %v698, %v690
      %v907 = vpack.c.b16 %v699, %v691
      %v908 = vpack.c.b16 %v700, %v692
      %v909 = vpack.c.b16 %v701, %v693
      %v910 = vpack.c.b16 %v702, %v694
      %v911 = vpack.c.b16 %v703, %v695
      %v912 = vpack.c.b16 %v712, %v704
      %v913 = vpack.c.b16 %v713, %v705
      %v914 = vpack.c.b16 %v714, %v706
      %v915 = vpack.c.b16 %v715, %v707
      %v916 = vpack.c.b16 %v716, %v708
      %v917 = vpack.c.b16 %v717, %v709
      %v918 = vpack.c.b16 %v718, %v710
      %v919 = vpack.c.b16 %v719, %v711
      %v920 = vpack.c.b16 %v728, %v720
      %v921 = vpack.c.b16 %v729, %v721
      %v922 = vpack.c.b16 %v730, %v722
      %v923 = vpack.c.b16 %v731, %v723
      %v924 = vpack.c.b16 %v732, %v724
      %v925 = vpack.c.b16 %v733, %v725
      %v926 = vpack.c.b16 %v734, %v726
      %v927 = vpack.c.b16 %v735, %v727
      %v928 = vpack.c.b16 %v744, %v736
      %v929 = vpack.c.b16 %v745, %v737
      %v930 = vpack.c.b16 %v746, %v738
      %v931 = vpack.c.b16 %v747, %v739
      %v932 = vpack.c.b16 %v748, %v740
      %v933 = vpack.c.b16 %v749, %v741
      %v934 = vpack.c.b16 %v750, %v742
      %v935 = vpack.c.b16 %v751, %v743
      %v936 = vpack.c.b16 %v760, %v752
      %v937 = vpack.c.b16 %v761, %v753
      %v938 = vpack.c.b16 %v762, %v754
      %v939 = vpack.c.b16 %v763, %v755
      %v940 = vpack.c.b16 %v764, %v756
      %v941 = vpack.c.b16 %v765, %v757
      %v942 = vpack.c.b16 %v766, %v758
      %v943 = vpack.c.b16 %v767, %v759
      %v944 = vpack.c.b16 %v776, %v768
      %v945 = vpack.c.b16 %v777, %v769
      %v946 = vpack.c.b16 %v778, %v770
      %v947 = vpack.c.b16 %v779, %v771
      %v948 = vpack.c.b16 %v780, %v772
      %v949 = vpack.c.b16 %v781, %v773
      %v950 = vpack.c.b16 %v782, %v774
      %v951 = vpack.c.b16 %v783, %v775
      %v952 = vpack.c.b16 %v792, %v784
      %v953 = vpack.c.b16 %v793, %v785
      %v954 = vpack.c.b16 %v794, %v786
      %v955 = vpack.c.b16 %v795, %v787
      %v956 = vpack.c.b16 %v796, %v788
      %v957 = vpack.c.b16 %v797, %v789
      %v958 = vpack.c.b16 %v798, %v790
      %v959 = vpack.c.b16 %v799, %v791
      %v960 = vpack.c.b16 %v808, %v800
      %v961 = vpack.c.b16 %v809, %v801
      %v962 = vpack.c.b16 %v810, %v802
      %v963 = vpack.c.b16 %v811, %v803
      %v964 = vpack.c.b16 %v812, %v804
      %v965 = vpack.c.b16 %v813, %v805
      %v966 = vpack.c.b16 %v814, %v806
      %v967 = vpack.c.b16 %v815, %v807
      %v968 = vpack.c.b16 %v824, %v816
      %v969 = vpack.c.b16 %v825, %v817
      %v970 = vpack.c.b16 %v826, %v818
      %v971 = vpack.c.b16 %v827, %v819
      %v972 = vpack.c.b16 %v828, %v820
      %v973 = vpack.c.b16 %v829, %v821
      %v974 = vpack.c.b16 %v830, %v822
      %v975 = vpack.c.b16 %v831, %v823
      %v976 = vpack.c.b16 %v840, %v832
      %v977 = vpack.c.b16 %v841, %v833
      %v978 = vpack.c.b16 %v842, %v834
      %v979 = vpack.c.b16 %v843, %v835
      %v980 = vpack.c.b16 %v844, %v836
      %v981 = vpack.c.b16 %v845, %v837
      %v982 = vpack.c.b16 %v846, %v838
      %v983 = vpack.c.b16 %v847, %v839
      %v984 = vpack.c.b16 %v856, %v848
      %v985 = vpack.c.b16 %v857, %v849
      %v986 = vpack.c.b16 %v858, %v850
      %v987 = vpack.c.b16 %v859, %v851
      %v988 = vpack.c.b16 %v860, %v852
      %v989 = vpack.c.b16 %v861, %v853
      %v990 = vpack.c.b16 %v862, %v854
      %v991 = vpack.c.b16 %v863, %v855
      %1120 = vmatprep.subr.bf16.mxu0 %v865
      %1121 = vmatpush1.bf16.msra.mxu0 %v864
      %1122 = vmatprep.subr.bf16.mxu0 %v873
      %1123 = vmatpush1.bf16.msra.mxu0 %v872
      %1124 = vmatprep.subr.bf16.mxu0 %v881
      %1125 = vmatpush1.bf16.msra.mxu0 %v880
      %1126 = vmatprep.subr.bf16.mxu0 %v889
      %1127 = vmatpush1.bf16.msra.mxu0 %v888
      %1128 = vmatprep.subr.bf16.mxu0 %v897
      %1129 = vmatpush1.bf16.msra.mxu0 %v896
      %1130 = vmatprep.subr.bf16.mxu0 %v905
      %1131 = vmatpush1.bf16.msra.mxu0 %v904
      %1132 = vmatprep.subr.bf16.mxu0 %v913
      %1133 = vmatpush1.bf16.msra.mxu0 %v912
      %1134 = vmatprep.subr.bf16.mxu0 %v921
      %1135 = vmatpush1.bf16.msra.mxu0 %v920
      %1136 = vmatprep.subr.bf16.mxu0 %v929
      %1137 = vmatpush1.bf16.msra.mxu0 %v928
      %1138 = vmatprep.subr.bf16.mxu0 %v937
      %1139 = vmatpush1.bf16.msra.mxu0 %v936
      %1140 = vmatprep.subr.bf16.mxu0 %v945
      %1141 = vmatpush1.bf16.msra.mxu0 %v944
      %1142 = vmatprep.subr.bf16.mxu0 %v953
      %1143 = vmatpush1.bf16.msra.mxu0 %v952
      %1144 = vmatprep.subr.bf16.mxu0 %v961
      %1145 = vmatpush1.bf16.msra.mxu0 %v960
      %1146 = vmatprep.subr.bf16.mxu0 %v969
      %1147 = vmatpush1.bf16.msra.mxu0 %v968
      %1148 = vmatprep.subr.bf16.mxu0 %v977
      %1149 = vmatpush1.bf16.msra.mxu0 %v976
      %1150 = vmatprep.subr.bf16.mxu0 %v985
      %1151 = vmatpush1.bf16.msra.mxu0 %v984
      %1152 = vmatprep.mubr.bf16.mxu0 %v477
      %1153 = vmatmul.mubr.bf16.gmra.mrb[0].mxu0 %v476
      %v1154 = vpop.f32.mrb[0].mxu0
      %v1155 = vadd.f32 0.0, %v1154
      %v1156 = vpop.f32.mrb[0].mxu0
      %v1157 = vadd.f32 0.0, %v1156
      %v1158 = vpop.f32.mrb[0].mxu0
      %v1159 = vpop.f32.mrb[0].mxu0
      %1160 = vdwg.mxu0
      %1161 = vmatprep.subr.bf16.mxu0 %v867
      %1162 = vmatpush1.bf16.msra.mxu0 %v866
      %1163 = vmatprep.subr.bf16.mxu0 %v875
      %1164 = vmatpush1.bf16.msra.mxu0 %v874
      %1165 = vmatprep.subr.bf16.mxu0 %v883
      %1166 = vmatpush1.bf16.msra.mxu0 %v882
      %1167 = vmatprep.subr.bf16.mxu0 %v891
      %1168 = vmatpush1.bf16.msra.mxu0 %v890
      %1169 = vmatprep.subr.bf16.mxu0 %v899
      %1170 = vmatpush1.bf16.msra.mxu0 %v898
      %1171 = vmatprep.subr.bf16.mxu0 %v907
      %1172 = vmatpush1.bf16.msra.mxu0 %v906
      %1173 = vmatprep.subr.bf16.mxu0 %v915
      %1174 = vmatpush1.bf16.msra.mxu0 %v914
      %1175 = vmatprep.subr.bf16.mxu0 %v923
      %1176 = vmatpush1.bf16.msra.mxu0 %v922
      %1177 = vmatprep.subr.bf16.mxu0 %v931
      %1178 = vmatpush1.bf16.msra.mxu0 %v930
      %1179 = vmatprep.subr.bf16.mxu0 %v939
      %1180 = vmatpush1.bf16.msra.mxu0 %v938
      %1181 = vmatprep.subr.bf16.mxu0 %v947
      %1182 = vmatpush1.bf16.msra.mxu0 %v946
      %1183 = vmatprep.subr.bf16.mxu0 %v955
      %1184 = vmatpush1.bf16.msra.mxu0 %v954
      %1185 = vmatprep.subr.bf16.mxu0 %v963
      %1186 = vmatpush1.bf16.msra.mxu0 %v962
      %1187 = vmatprep.subr.bf16.mxu0 %v971
      %1188 = vmatpush1.bf16.msra.mxu0 %v970
      %1189 = vmatprep.subr.bf16.mxu0 %v979
      %1190 = vmatpush1.bf16.msra.mxu0 %v978
      %1191 = vmatprep.subr.bf16.mxu0 %v987
      %1192 = vmatpush1.bf16.msra.mxu0 %v986
      %1193 = vmatprep.mubr.bf16.mxu0 %v477
      %1194 = vmatmul.mubr.bf16.gmra.mrb[0].mxu0 %v476
      %v1195 = vpop.f32.mrb[0].mxu0
      %v1196 = vadd.f32 0.0, %v1195
      %v1197 = vpop.f32.mrb[0].mxu0
      %v1198 = vadd.f32 0.0, %v1197
      %v1199 = vpop.f32.mrb[0].mxu0
      %v1200 = vpop.f32.mrb[0].mxu0
      %1201 = vdwg.mxu0
      %1202 = vmatprep.subr.bf16.mxu0 %v869
      %1203 = vmatpush1.bf16.msra.mxu0 %v868
      %1204 = vmatprep.subr.bf16.mxu0 %v877
      %1205 = vmatpush1.bf16.msra.mxu0 %v876
      %1206 = vmatprep.subr.bf16.mxu0 %v885
      %1207 = vmatpush1.bf16.msra.mxu0 %v884
      %1208 = vmatprep.subr.bf16.mxu0 %v893
      %1209 = vmatpush1.bf16.msra.mxu0 %v892
      %1210 = vmatprep.subr.bf16.mxu0 %v901
      %1211 = vmatpush1.bf16.msra.mxu0 %v900
      %1212 = vmatprep.subr.bf16.mxu0 %v909
      %1213 = vmatpush1.bf16.msra.mxu0 %v908
      %1214 = vmatprep.subr.bf16.mxu0 %v917
      %1215 = vmatpush1.bf16.msra.mxu0 %v916
      %1216 = vmatprep.subr.bf16.mxu0 %v925
      %1217 = vmatpush1.bf16.msra.mxu0 %v924
      %1218 = vmatprep.subr.bf16.mxu0 %v933
      %1219 = vmatpush1.bf16.msra.mxu0 %v932
      %1220 = vmatprep.subr.bf16.mxu0 %v941
      %1221 = vmatpush1.bf16.msra.mxu0 %v940
      %1222 = vmatprep.subr.bf16.mxu0 %v949
      %1223 = vmatpush1.bf16.msra.mxu0 %v948
      %1224 = vmatprep.subr.bf16.mxu0 %v957
      %1225 = vmatpush1.bf16.msra.mxu0 %v956
      %1226 = vmatprep.subr.bf16.mxu0 %v965
      %1227 = vmatpush1.bf16.msra.mxu0 %v964
      %1228 = vmatprep.subr.bf16.mxu0 %v973
      %1229 = vmatpush1.bf16.msra.mxu0 %v972
      %1230 = vmatprep.subr.bf16.mxu0 %v981
      %1231 = vmatpush1.bf16.msra.mxu0 %v980
      %1232 = vmatprep.subr.bf16.mxu0 %v989
      %1233 = vmatpush1.bf16.msra.mxu0 %v988
      %1234 = vmatprep.mubr.bf16.mxu0 %v477
      %1235 = vmatmul.mubr.bf16.gmra.mrb[0].mxu0 %v476
      %v1236 = vpop.f32.mrb[0].mxu0
      %v1237 = vadd.f32 0.0, %v1236
      %v1238 = vpop.f32.mrb[0].mxu0
      %v1239 = vadd.f32 0.0, %v1238
      %v1240 = vpop.f32.mrb[0].mxu0
      %v1241 = vpop.f32.mrb[0].mxu0
      %1242 = vdwg.mxu0
      %1243 = vmatprep.subr.bf16.mxu0 %v871
      %1244 = vmatpush1.bf16.msra.mxu0 %v870
      %1245 = vmatprep.subr.bf16.mxu0 %v879
      %1246 = vmatpush1.bf16.msra.mxu0 %v878
      %1247 = vmatprep.subr.bf16.mxu0 %v887
      %1248 = vmatpush1.bf16.msra.mxu0 %v886
      %1249 = vmatprep.subr.bf16.mxu0 %v895
      %1250 = vmatpush1.bf16.msra.mxu0 %v894
      %1251 = vmatprep.subr.bf16.mxu0 %v903
      %1252 = vmatpush1.bf16.msra.mxu0 %v902
      %1253 = vmatprep.subr.bf16.mxu0 %v911
      %1254 = vmatpush1.bf16.msra.mxu0 %v910
      %1255 = vmatprep.subr.bf16.mxu0 %v919
      %1256 = vmatpush1.bf16.msra.mxu0 %v918
      %1257 = vmatprep.subr.bf16.mxu0 %v927
      %1258 = vmatpush1.bf16.msra.mxu0 %v926
      %1259 = vmatprep.subr.bf16.mxu0 %v935
      %1260 = vmatpush1.bf16.msra.mxu0 %v934
      %1261 = vmatprep.subr.bf16.mxu0 %v943
      %1262 = vmatpush1.bf16.msra.mxu0 %v942
      %1263 = vmatprep.subr.bf16.mxu0 %v951
      %1264 = vmatpush1.bf16.msra.mxu0 %v950
      %1265 = vmatprep.subr.bf16.mxu0 %v959
      %1266 = vmatpush1.bf16.msra.mxu0 %v958
      %1267 = vmatprep.subr.bf16.mxu0 %v967
      %1268 = vmatpush1.bf16.msra.mxu0 %v966
      %1269 = vmatprep.subr.bf16.mxu0 %v975
      %1270 = vmatpush1.bf16.msra.mxu0 %v974
      %1271 = vmatprep.subr.bf16.mxu0 %v983
      %1272 = vmatpush1.bf16.msra.mxu0 %v982
      %1273 = vmatprep.subr.bf16.mxu0 %v991
      %1274 = vmatpush1.bf16.msra.mxu0 %v990
      %1275 = vmatprep.mubr.bf16.mxu0 %v477
      %1276 = vmatmul.mubr.bf16.gmra.mrb[0].mxu0 %v476
      %v1277 = vpop.f32.mrb[0].mxu0
      %v1278 = vadd.f32 0.0, %v1277
      %v1279 = vpop.f32.mrb[0].mxu0
      %v1280 = vadd.f32 0.0, %v1279
      %v1281 = vpop.f32.mrb[0].mxu0
      %v1282 = vpop.f32.mrb[0].mxu0
      %1283 = vdwg.mxu0
      %v1284 = vld [vmem:[%s333] sm:$0xff]
      %v1285 = vld [vmem:[%s333 + $0x8] sm:$0xff]
      %v1286 = vld [vmem:[%s333 + $0x10] sm:$0xff]
      %v1287 = vld [vmem:[%s333 + $0x18] sm:$0xff]
      %v1288 = vunpack.c.l.bf16 %v1284
      %v1289 = vunpack.c.h.bf16 %v1284
      %v1290 = vunpack.c.l.bf16 %v1285
      %v1291 = vunpack.c.h.bf16 %v1285
      %v1292 = vunpack.c.l.bf16 %v1286
      %v1293 = vunpack.c.h.bf16 %v1286
      %v1294 = vunpack.c.l.bf16 %v1287
      %v1295 = vunpack.c.h.bf16 %v1287
      %v1296 = vlaneseq
      %v1297 = vand.u32 %v1296, 127
      %v1298 = vadd.s32 %v1297, 128
      %v1299 = vadd.s32 %v1297, 256
      %v1300 = vadd.s32 %v1297, 384
      %v1301 = vadd.s32 %v1297, 512
      %v1302 = vadd.s32 %v1297, 640
      %v1303 = vadd.s32 %v1297, 768
      %v1304 = vadd.s32 %v1297, 896
      %v1305 = vand.u32 %v1297, 31
      %v1306 = vand.u32 %v1298, 31
      %v1307 = vand.u32 %v1299, 31
      %v1308 = vand.u32 %v1300, 31
      %v1309 = vand.u32 %v1301, 31
      %v1310 = vand.u32 %v1302, 31
      %v1311 = vand.u32 %v1303, 31
      %v1312 = vand.u32 %v1304, 31
      %vm1313 = vcmp.ge.s32.totalorder %v1297, 32
      %vm1314 = vcmp.ge.s32.totalorder %v1298, 32
      %vm1315 = vcmp.ge.s32.totalorder %v1299, 32
      %vm1316 = vcmp.ge.s32.totalorder %v1300, 32
      %vm1317 = vcmp.ge.s32.totalorder %v1301, 32
      %vm1318 = vcmp.ge.s32.totalorder %v1302, 32
      %vm1319 = vcmp.ge.s32.totalorder %v1303, 32
      %vm1320 = vcmp.ge.s32.totalorder %v1304, 32
      %vm1321 = vcmp.lt.s32.totalorder %v1297, 992
      %vm1322 = vcmp.lt.s32.totalorder %v1298, 992
      %vm1323 = vcmp.lt.s32.totalorder %v1299, 992
      %vm1324 = vcmp.lt.s32.totalorder %v1300, 992
      %vm1325 = vcmp.lt.s32.totalorder %v1301, 992
      %vm1326 = vcmp.lt.s32.totalorder %v1302, 992
      %vm1327 = vcmp.lt.s32.totalorder %v1303, 992
      %vm1328 = vcmp.lt.s32.totalorder %v1304, 992
      %vm1329 = vcmp.ge.s32.totalorder %v1305, 1
      %vm1330 = vcmp.ge.s32.totalorder %v1306, 1
      %vm1331 = vcmp.ge.s32.totalorder %v1307, 1
      %vm1332 = vcmp.ge.s32.totalorder %v1308, 1
      %vm1333 = vcmp.ge.s32.totalorder %v1309, 1
      %vm1334 = vcmp.ge.s32.totalorder %v1310, 1
      %vm1335 = vcmp.ge.s32.totalorder %v1311, 1
      %vm1336 = vcmp.ge.s32.totalorder %v1312, 1
      %vm1337 = vcmp.le.s32.totalorder %v1305, 30
      %vm1338 = vcmp.le.s32.totalorder %v1306, 30
      %vm1339 = vcmp.le.s32.totalorder %v1307, 30
      %vm1340 = vcmp.le.s32.totalorder %v1308, 30
      %vm1341 = vcmp.le.s32.totalorder %v1309, 30
      %vm1342 = vcmp.le.s32.totalorder %v1310, 30
      %vm1343 = vcmp.le.s32.totalorder %v1311, 30
      %vm1344 = vcmp.le.s32.totalorder %v1312, 30
      %vm1345 = vmand %vm1313, %vm1329
      %vm1346 = vmand %vm1314, %vm1330
      %vm1347 = vmand %vm1315, %vm1331
      %vm1348 = vmand %vm1316, %vm1332
      %vm1349 = vmand %vm1317, %vm1333
      %vm1350 = vmand %vm1318, %vm1334
      %vm1351 = vmand %vm1319, %vm1335
      %vm1352 = vmand %vm1320, %vm1336
      %v1353 = vsel %vm1345, 1, 0
      %v1354 = vsel %vm1346, 1, 0
      %v1355 = vsel %vm1347, 1, 0
      %v1356 = vsel %vm1348, 1, 0
      %v1357 = vsel %vm1349, 1, 0
      %v1358 = vsel %vm1350, 1, 0
      %v1359 = vsel %vm1351, 1, 0
      %v1360 = vsel %vm1352, 1, 0
      %v1361 = vcvt.s32.f32 %v1353
      %v1362 = vcvt.s32.f32 %v1354
      %v1363 = vcvt.s32.f32 %v1355
      %v1364 = vcvt.s32.f32 %v1356
      %v1365 = vcvt.s32.f32 %v1357
      %v1366 = vcvt.s32.f32 %v1358
      %v1367 = vcvt.s32.f32 %v1359
      %v1368 = vcvt.s32.f32 %v1360
      %v1369 = vsel %vm1313, 1, 0
      %v1370 = vsel %vm1314, 1, 0
      %v1371 = vsel %vm1315, 1, 0
      %v1372 = vsel %vm1316, 1, 0
      %v1373 = vsel %vm1317, 1, 0
      %v1374 = vsel %vm1318, 1, 0
      %v1375 = vsel %vm1319, 1, 0
      %v1376 = vsel %vm1320, 1, 0
      %v1377 = vcvt.s32.f32 %v1369
      %v1378 = vcvt.s32.f32 %v1370
      %v1379 = vcvt.s32.f32 %v1371
      %v1380 = vcvt.s32.f32 %v1372
      %v1381 = vcvt.s32.f32 %v1373
      %v1382 = vcvt.s32.f32 %v1374
      %v1383 = vcvt.s32.f32 %v1375
      %v1384 = vcvt.s32.f32 %v1376
      %vm1385 = vmand %vm1313, %vm1337
      %vm1386 = vmand %vm1314, %vm1338
      %vm1387 = vmand %vm1315, %vm1339
      %vm1388 = vmand %vm1316, %vm1340
      %vm1389 = vmand %vm1317, %vm1341
      %vm1390 = vmand %vm1318, %vm1342
      %vm1391 = vmand %vm1319, %vm1343
      %vm1392 = vmand %vm1320, %vm1344
      %v1393 = vsel %vm1385, 1, 0
      %v1394 = vsel %vm1386, 1, 0
      %v1395 = vsel %vm1387, 1, 0
      %v1396 = vsel %vm1388, 1, 0
      %v1397 = vsel %vm1389, 1, 0
      %v1398 = vsel %vm1390, 1, 0
      %v1399 = vsel %vm1391, 1, 0
      %v1400 = vsel %vm1392, 1, 0
      %v1401 = vcvt.s32.f32 %v1393
      %v1402 = vcvt.s32.f32 %v1394
      %v1403 = vcvt.s32.f32 %v1395
      %v1404 = vcvt.s32.f32 %v1396
      %v1405 = vcvt.s32.f32 %v1397
      %v1406 = vcvt.s32.f32 %v1398
      %v1407 = vcvt.s32.f32 %v1399
      %v1408 = vcvt.s32.f32 %v1400
      %v1409 = vsel %vm1329, 1, 0
      %v1410 = vsel %vm1330, 1, 0
      %v1411 = vsel %vm1331, 1, 0
      %v1412 = vsel %vm1332, 1, 0
      %v1413 = vsel %vm1333, 1, 0
      %v1414 = vsel %vm1334, 1, 0
      %v1415 = vsel %vm1335, 1, 0
      %v1416 = vsel %vm1336, 1, 0
      %v1417 = vcvt.s32.f32 %v1409
      %v1418 = vcvt.s32.f32 %v1410
      %v1419 = vcvt.s32.f32 %v1411
      %v1420 = vcvt.s32.f32 %v1412
      %v1421 = vcvt.s32.f32 %v1413
      %v1422 = vcvt.s32.f32 %v1414
      %v1423 = vcvt.s32.f32 %v1415
      %v1424 = vcvt.s32.f32 %v1416
      %v1425 = vsel %vm1337, 1, 0
      %v1426 = vsel %vm1338, 1, 0
      %v1427 = vsel %vm1339, 1, 0
      %v1428 = vsel %vm1340, 1, 0
      %v1429 = vsel %vm1341, 1, 0
      %v1430 = vsel %vm1342, 1, 0
      %v1431 = vsel %vm1343, 1, 0
      %v1432 = vsel %vm1344, 1, 0
      %v1433 = vcvt.s32.f32 %v1425
      %v1434 = vcvt.s32.f32 %v1426
      %v1435 = vcvt.s32.f32 %v1427
      %v1436 = vcvt.s32.f32 %v1428
      %v1437 = vcvt.s32.f32 %v1429
      %v1438 = vcvt.s32.f32 %v1430
      %v1439 = vcvt.s32.f32 %v1431
      %v1440 = vcvt.s32.f32 %v1432
      %vm1441 = vmand %vm1321, %vm1329
      %vm1442 = vmand %vm1322, %vm1330
      %vm1443 = vmand %vm1323, %vm1331
      %vm1444 = vmand %vm1324, %vm1332
      %vm1445 = vmand %vm1325, %vm1333
      %vm1446 = vmand %vm1326, %vm1334
      %vm1447 = vmand %vm1327, %vm1335
      %vm1448 = vmand %vm1328, %vm1336
      %v1449 = vsel %vm1441, 1, 0
      %v1450 = vsel %vm1442, 1, 0
      %v1451 = vsel %vm1443, 1, 0
      %v1452 = vsel %vm1444, 1, 0
      %v1453 = vsel %vm1445, 1, 0
      %v1454 = vsel %vm1446, 1, 0
      %v1455 = vsel %vm1447, 1, 0
      %v1456 = vsel %vm1448, 1, 0
      %v1457 = vcvt.s32.f32 %v1449
      %v1458 = vcvt.s32.f32 %v1450
      %v1459 = vcvt.s32.f32 %v1451
      %v1460 = vcvt.s32.f32 %v1452
      %v1461 = vcvt.s32.f32 %v1453
      %v1462 = vcvt.s32.f32 %v1454
      %v1463 = vcvt.s32.f32 %v1455
      %v1464 = vcvt.s32.f32 %v1456
      %v1465 = vsel %vm1321, 1, 0
      %v1466 = vsel %vm1322, 1, 0
      %v1467 = vsel %vm1323, 1, 0
      %v1468 = vsel %vm1324, 1, 0
      %v1469 = vsel %vm1325, 1, 0
      %v1470 = vsel %vm1326, 1, 0
      %v1471 = vsel %vm1327, 1, 0
      %v1472 = vsel %vm1328, 1, 0
      %v1473 = vcvt.s32.f32 %v1465
      %v1474 = vcvt.s32.f32 %v1466
      %v1475 = vcvt.s32.f32 %v1467
      %v1476 = vcvt.s32.f32 %v1468
      %v1477 = vcvt.s32.f32 %v1469
      %v1478 = vcvt.s32.f32 %v1470
      %v1479 = vcvt.s32.f32 %v1471
      %v1480 = vcvt.s32.f32 %v1472
      %vm1481 = vmand %vm1321, %vm1337
      %vm1482 = vmand %vm1322, %vm1338
      %vm1483 = vmand %vm1323, %vm1339
      %vm1484 = vmand %vm1324, %vm1340
      %vm1485 = vmand %vm1325, %vm1341
      %vm1486 = vmand %vm1326, %vm1342
      %vm1487 = vmand %vm1327, %vm1343
      %vm1488 = vmand %vm1328, %vm1344
      %v1489 = vsel %vm1481, 1, 0
      %v1490 = vsel %vm1482, 1, 0
      %v1491 = vsel %vm1483, 1, 0
      %v1492 = vsel %vm1484, 1, 0
      %v1493 = vsel %vm1485, 1, 0
      %v1494 = vsel %vm1486, 1, 0
      %v1495 = vsel %vm1487, 1, 0
      %v1496 = vsel %vm1488, 1, 0
      %v1497 = vcvt.s32.f32 %v1489
      %v1498 = vcvt.s32.f32 %v1490
      %v1499 = vcvt.s32.f32 %v1491
      %v1500 = vcvt.s32.f32 %v1492
      %v1501 = vcvt.s32.f32 %v1493
      %v1502 = vcvt.s32.f32 %v1494
      %v1503 = vcvt.s32.f32 %v1495
      %v1504 = vcvt.s32.f32 %v1496
      %v1505 = vld [vmem:[%s3] sm:$0xff]
      %1507 = vset.pattern.permute.xlu0 0
      %1508 = vperm.xlu0 %1507, %v1505
      %v1509 = vpop.permute.xlu0 %1508
      %v1511 = vmul.f32 %v1155, %v1509
      %v1512 = vmul.f32 %v1157, %v1509
      %v1513 = vmul.f32 %v1196, %v1509
      %v1514 = vmul.f32 %v1198, %v1509
      %v1515 = vmul.f32 %v1237, %v1509
      %v1516 = vmul.f32 %v1239, %v1509
      %v1517 = vmul.f32 %v1278, %v1509
      %v1518 = vmul.f32 %v1280, %v1509
      %1519 = vset.pattern.permute.xlu0 1
      %1520 = vperm.xlu0 %1519, %v1505
      %v1521 = vpop.permute.xlu0 %1520
      %v1523 = vadd.f32 %v1511, %v1521
      %v1524 = vadd.f32 %v1512, %v1521
      %v1525 = vadd.f32 %v1513, %v1521
      %v1526 = vadd.f32 %v1514, %v1521
      %v1527 = vadd.f32 %v1515, %v1521
      %v1528 = vadd.f32 %v1516, %v1521
      %v1529 = vadd.f32 %v1517, %v1521
      %v1530 = vadd.f32 %v1518, %v1521
      %v1531 = vmax.f32 %v1523, 0.0
      %v1532 = vmax.f32 %v1524, 0.0
      %v1533 = vmax.f32 %v1525, 0.0
      %v1534 = vmax.f32 %v1526, 0.0
      %v1535 = vmax.f32 %v1527, 0.0
      %v1536 = vmax.f32 %v1528, 0.0
      %v1537 = vmax.f32 %v1529, 0.0
      %v1538 = vmax.f32 %v1530, 0.0
      %1539 = vrot.lane.b32.xlu0 %v1531, 33
      %v1540 = vpop.permute.xlu0 %1539
      %1541 = vrot.lane.b32.xlu0 %v1532, 33
      %v1542 = vpop.permute.xlu0 %1541
      %1543 = vrot.lane.b32.xlu0 %v1533, 33
      %v1544 = vpop.permute.xlu0 %1543
      %1545 = vrot.lane.b32.xlu0 %v1534, 33
      %v1546 = vpop.permute.xlu0 %1545
      %1547 = vrot.lane.b32.xlu0 %v1535, 33
      %v1548 = vpop.permute.xlu0 %1547
      %1549 = vrot.lane.b32.xlu0 %v1536, 33
      %v1550 = vpop.permute.xlu0 %1549
      %1551 = vrot.lane.b32.xlu0 %v1537, 33
      %v1552 = vpop.permute.xlu0 %1551
      %1553 = vrot.lane.b32.xlu0 %v1538, 33
      %v1554 = vpop.permute.xlu0 %1553
      %vm1555 = vcmp.lt.s32.totalorder %v1297, 33
      %v1556 = vsel %vm1555, %v1552, %v1554
      %v1557 = vsel %vm1555, %v1550, %v1552
      %v1558 = vsel %vm1555, %v1548, %v1550
      %v1559 = vsel %vm1555, %v1546, %v1548
      %v1560 = vsel %vm1555, %v1544, %v1546
      %v1561 = vsel %vm1555, %v1542, %v1544
      %v1562 = vsel %vm1555, %v1540, %v1542
      %v1563 = vsel %vm1555, %v1554, %v1540
      %v1564 = vmul.f32 %v1563, %v1361
      %v1565 = vmul.f32 %v1562, %v1362
      %v1566 = vmul.f32 %v1561, %v1363
      %v1567 = vmul.f32 %v1560, %v1364
      %v1568 = vmul.f32 %v1559, %v1365
      %v1569 = vmul.f32 %v1558, %v1366
      %v1570 = vmul.f32 %v1557, %v1367
      %v1571 = vmul.f32 %v1556, %v1368
      %1572 = vrot.lane.b32.xlu0 %v1531, 32
      %v1573 = vpop.permute.xlu0 %1572
      %1574 = vrot.lane.b32.xlu0 %v1532, 32
      %v1575 = vpop.permute.xlu0 %1574
      %1576 = vrot.lane.b32.xlu0 %v1533, 32
      %v1577 = vpop.permute.xlu0 %1576
      %1578 = vrot.lane.b32.xlu0 %v1534, 32
      %v1579 = vpop.permute.xlu0 %1578
      %1580 = vrot.lane.b32.xlu0 %v1535, 32
      %v1581 = vpop.permute.xlu0 %1580
      %1582 = vrot.lane.b32.xlu0 %v1536, 32
      %v1583 = vpop.permute.xlu0 %1582
      %1584 = vrot.lane.b32.xlu0 %v1537, 32
      %v1585 = vpop.permute.xlu0 %1584
      %1586 = vrot.lane.b32.xlu0 %v1538, 32
      %v1587 = vpop.permute.xlu0 %1586
      %vm1588 = vcmp.lt.s32.totalorder %v1297, 32
      %v1589 = vsel %vm1588, %v1585, %v1587
      %v1590 = vsel %vm1588, %v1583, %v1585
      %v1591 = vsel %vm1588, %v1581, %v1583
      %v1592 = vsel %vm1588, %v1579, %v1581
      %v1593 = vsel %vm1588, %v1577, %v1579
      %v1594 = vsel %vm1588, %v1575, %v1577
      %v1595 = vsel %vm1588, %v1573, %v1575
      %v1596 = vsel %vm1588, %v1587, %v1573
      %v1597 = vmul.f32 %v1596, %v1377
      %v1598 = vmul.f32 %v1595, %v1378
      %v1599 = vmul.f32 %v1594, %v1379
      %v1600 = vmul.f32 %v1593, %v1380
      %v1601 = vmul.f32 %v1592, %v1381
      %v1602 = vmul.f32 %v1591, %v1382
      %v1603 = vmul.f32 %v1590, %v1383
      %v1604 = vmul.f32 %v1589, %v1384
      %1605 = vrot.lane.b32.xlu0 %v1531, 31
      %v1606 = vpop.permute.xlu0 %1605
      %1607 = vrot.lane.b32.xlu0 %v1532, 31
      %v1608 = vpop.permute.xlu0 %1607
      %1609 = vrot.lane.b32.xlu0 %v1533, 31
      %v1610 = vpop.permute.xlu0 %1609
      %1611 = vrot.lane.b32.xlu0 %v1534, 31
      %v1612 = vpop.permute.xlu0 %1611
      %1613 = vrot.lane.b32.xlu0 %v1535, 31
      %v1614 = vpop.permute.xlu0 %1613
      %1615 = vrot.lane.b32.xlu0 %v1536, 31
      %v1616 = vpop.permute.xlu0 %1615
      %1617 = vrot.lane.b32.xlu0 %v1537, 31
      %v1618 = vpop.permute.xlu0 %1617
      %1619 = vrot.lane.b32.xlu0 %v1538, 31
      %v1620 = vpop.permute.xlu0 %1619
      %vm1621 = vcmp.lt.s32.totalorder %v1297, 31
      %v1622 = vsel %vm1621, %v1618, %v1620
      %v1623 = vsel %vm1621, %v1616, %v1618
      %v1624 = vsel %vm1621, %v1614, %v1616
      %v1625 = vsel %vm1621, %v1612, %v1614
      %v1626 = vsel %vm1621, %v1610, %v1612
      %v1627 = vsel %vm1621, %v1608, %v1610
      %v1628 = vsel %vm1621, %v1606, %v1608
      %v1629 = vsel %vm1621, %v1620, %v1606
      %v1630 = vmul.f32 %v1629, %v1401
      %v1631 = vmul.f32 %v1628, %v1402
      %v1632 = vmul.f32 %v1627, %v1403
      %v1633 = vmul.f32 %v1626, %v1404
      %v1634 = vmul.f32 %v1625, %v1405
      %v1635 = vmul.f32 %v1624, %v1406
      %v1636 = vmul.f32 %v1623, %v1407
      %v1637 = vmul.f32 %v1622, %v1408
      %v1638 = vpack.c.bf16 %v1597, %v1564
      %v1639 = vpack.c.bf16 %v1598, %v1565
      %v1640 = vpack.c.bf16 %v1599, %v1566
      %v1641 = vpack.c.bf16 %v1600, %v1567
      %v1642 = vpack.c.bf16 %v1601, %v1568
      %v1643 = vpack.c.bf16 %v1602, %v1569
      %v1644 = vpack.c.bf16 %v1603, %v1570
      %v1645 = vpack.c.bf16 %v1604, %v1571
      %v1646 = vpack.c.bf16 %v1630, %v1630
      %v1647 = vpack.c.bf16 %v1631, %v1631
      %v1648 = vpack.c.bf16 %v1632, %v1632
      %v1649 = vpack.c.bf16 %v1633, %v1633
      %v1650 = vpack.c.bf16 %v1634, %v1634
      %v1651 = vpack.c.bf16 %v1635, %v1635
      %v1652 = vpack.c.bf16 %v1636, %v1636
      %v1653 = vpack.c.bf16 %v1637, %v1637
      %v1654 = vld [vmem:[%s5] sm:$0xf]
      %1655 = vrot.lane.b32.xlu0 %v1531, 1
      %v1656 = vpop.permute.xlu0 %1655
      %1657 = vrot.lane.b32.xlu0 %v1532, 1
      %v1658 = vpop.permute.xlu0 %1657
      %1659 = vrot.lane.b32.xlu0 %v1533, 1
      %v1660 = vpop.permute.xlu0 %1659
      %1661 = vrot.lane.b32.xlu0 %v1534, 1
      %v1662 = vpop.permute.xlu0 %1661
      %1663 = vrot.lane.b32.xlu0 %v1535, 1
      %v1664 = vpop.permute.xlu0 %1663
      %1665 = vrot.lane.b32.xlu0 %v1536, 1
      %v1666 = vpop.permute.xlu0 %1665
      %1667 = vrot.lane.b32.xlu0 %v1537, 1
      %v1668 = vpop.permute.xlu0 %1667
      %1669 = vrot.lane.b32.xlu0 %v1538, 1
      %v1670 = vpop.permute.xlu0 %1669
      %vm1671 = vcmp.lt.s32.totalorder %v1297, 1
      %v1672 = vsel %vm1671, %v1668, %v1670
      %v1673 = vsel %vm1671, %v1666, %v1668
      %v1674 = vsel %vm1671, %v1664, %v1666
      %v1675 = vsel %vm1671, %v1662, %v1664
      %v1676 = vsel %vm1671, %v1660, %v1662
      %v1677 = vsel %vm1671, %v1658, %v1660
      %v1678 = vsel %vm1671, %v1656, %v1658
      %v1679 = vsel %vm1671, %v1670, %v1656
      %v1680 = vmul.f32 %v1679, %v1417
      %v1681 = vmul.f32 %v1678, %v1418
      %v1682 = vmul.f32 %v1677, %v1419
      %v1683 = vmul.f32 %v1676, %v1420
      %v1684 = vmul.f32 %v1675, %v1421
      %v1685 = vmul.f32 %v1674, %v1422
      %v1686 = vmul.f32 %v1673, %v1423
      %v1687 = vmul.f32 %v1672, %v1424
      %1688 = vrot.lane.b32.xlu0 %v1531, 127
      %v1689 = vpop.permute.xlu0 %1688
      %1690 = vrot.lane.b32.xlu0 %v1532, 127
      %v1691 = vpop.permute.xlu0 %1690
      %1692 = vrot.lane.b32.xlu0 %v1533, 127
      %v1693 = vpop.permute.xlu0 %1692
      %1694 = vrot.lane.b32.xlu0 %v1534, 127
      %v1695 = vpop.permute.xlu0 %1694
      %1696 = vrot.lane.b32.xlu0 %v1535, 127
      %v1697 = vpop.permute.xlu0 %1696
      %1698 = vrot.lane.b32.xlu0 %v1536, 127
      %v1699 = vpop.permute.xlu0 %1698
      %1700 = vrot.lane.b32.xlu0 %v1537, 127
      %v1701 = vpop.permute.xlu0 %1700
      %1702 = vrot.lane.b32.xlu0 %v1538, 127
      %v1703 = vpop.permute.xlu0 %1702
      %vm1704 = vcmp.lt.s32.totalorder %v1297, 127
      %v1705 = vsel %vm1704, %v1701, %v1703
      %v1706 = vsel %vm1704, %v1699, %v1701
      %v1707 = vsel %vm1704, %v1697, %v1699
      %v1708 = vsel %vm1704, %v1695, %v1697
      %v1709 = vsel %vm1704, %v1693, %v1695
      %v1710 = vsel %vm1704, %v1691, %v1693
      %v1711 = vsel %vm1704, %v1689, %v1691
      %v1712 = vsel %vm1704, %v1703, %v1689
      %v1713 = vmul.f32 %v1711, %v1433
      %v1714 = vmul.f32 %v1710, %v1434
      %v1715 = vmul.f32 %v1709, %v1435
      %v1716 = vmul.f32 %v1708, %v1436
      %v1717 = vmul.f32 %v1707, %v1437
      %v1718 = vmul.f32 %v1706, %v1438
      %v1719 = vmul.f32 %v1705, %v1439
      %v1720 = vmul.f32 %v1712, %v1440
      %v1721 = vpack.c.bf16 %v1531, %v1680
      %v1722 = vpack.c.bf16 %v1532, %v1681
      %v1723 = vpack.c.bf16 %v1533, %v1682
      %v1724 = vpack.c.bf16 %v1534, %v1683
      %v1725 = vpack.c.bf16 %v1535, %v1684
      %v1726 = vpack.c.bf16 %v1536, %v1685
      %v1727 = vpack.c.bf16 %v1537, %v1686
      %v1728 = vpack.c.bf16 %v1538, %v1687
      %v1729 = vpack.c.bf16 %v1713, %v1713
      %v1730 = vpack.c.bf16 %v1714, %v1714
      %v1731 = vpack.c.bf16 %v1715, %v1715
      %v1732 = vpack.c.bf16 %v1716, %v1716
      %v1733 = vpack.c.bf16 %v1717, %v1717
      %v1734 = vpack.c.bf16 %v1718, %v1718
      %v1735 = vpack.c.bf16 %v1719, %v1719
      %v1736 = vpack.c.bf16 %v1720, %v1720
      %s1737 = scalar_lea.vmem %s5, 4
      %v1738 = vld [vmem:[%s1737] sm:$0xf]
      %vm1739 = vcmask 195584
      %v1741 = vsel %vm1739, %v1738, 0
      %vm1743 = vcmask 1043456
      %v1745 = vsel %vm1743, %v1729, 0
      %v1748 = vsel %vm1743, %v1730, 0
      %v1751 = vsel %vm1743, %v1731, 0
      %v1754 = vsel %vm1743, %v1732, 0
      %v1757 = vsel %vm1743, %v1733, 0
      %v1760 = vsel %vm1743, %v1734, 0
      %v1763 = vsel %vm1743, %v1735, 0
      %v1766 = vsel %vm1743, %v1736, 0
      %1768 = vmatprep.subr.bf16.mxu0 %v1722
      %1769 = vmatpush1.bf16.msra.mxu0 %v1721
      %1770 = vmatprep.subr.bf16.mxu0 %v1748
      %1771 = vmatpush1.bf16.msra.mxu0 %v1745
      %1772 = vmatprep.subr.bf16.mxu0 0
      %1773 = vmatpush1.bf16.msra.mxu0 0
      %1774 = vmatprep.subr.bf16.mxu0 0
      %1775 = vmatpush1.bf16.msra.mxu0 0
      %1776 = vmatprep.subr.bf16.mxu0 0
      %1777 = vmatpush1.bf16.msra.mxu0 0
      %1778 = vmatprep.subr.bf16.mxu0 0
      %1779 = vmatpush1.bf16.msra.mxu0 0
      %1780 = vmatprep.subr.bf16.mxu0 0
      %1781 = vmatpush1.bf16.msra.mxu0 0
      %1782 = vmatprep.subr.bf16.mxu0 0
      %1783 = vmatpush1.bf16.msra.mxu0 0
      %1784 = vmatprep.subr.bf16.mxu0 0
      %1785 = vmatpush1.bf16.msra.mxu0 0
      %1786 = vmatprep.subr.bf16.mxu0 0
      %1787 = vmatpush1.bf16.msra.mxu0 0
      %1788 = vmatprep.subr.bf16.mxu0 0
      %1789 = vmatpush1.bf16.msra.mxu0 0
      %1790 = vmatprep.subr.bf16.mxu0 0
      %1791 = vmatpush1.bf16.msra.mxu0 0
      %1792 = vmatprep.subr.bf16.mxu0 0
      %1793 = vmatpush1.bf16.msra.mxu0 0
      %1794 = vmatprep.subr.bf16.mxu0 0
      %1795 = vmatpush1.bf16.msra.mxu0 0
      %1796 = vmatprep.subr.bf16.mxu0 0
      %1797 = vmatpush1.bf16.msra.mxu0 0
      %1798 = vmatprep.subr.bf16.mxu0 0
      %1799 = vmatpush1.bf16.msra.mxu0 0
      %1800 = vmatprep.mubr.bf16.mxu0 0
      %1801 = vmatmul.mubr.bf16.gmra.mrb[0].mxu0 %v1741
      %v1802 = vpop.f32.mrb[0].mxu0
      %v1803 = vadd.f32 0.0, %v1802
      %v1804 = vpop.f32.mrb[0].mxu0
      %v1805 = vadd.f32 0.0, %v1804
      %v1806 = vpop.f32.mrb[0].mxu0
      %v1807 = vpop.f32.mrb[0].mxu0
      %1808 = vdwg.mxu0
      %1809 = vmatprep.subr.bf16.mxu0 %v1724
      %1810 = vmatpush1.bf16.msra.mxu0 %v1723
      %1811 = vmatprep.subr.bf16.mxu0 %v1754
      %1812 = vmatpush1.bf16.msra.mxu0 %v1751
      %1813 = vmatprep.subr.bf16.mxu0 0
      %1814 = vmatpush1.bf16.msra.mxu0 0
      %1815 = vmatprep.subr.bf16.mxu0 0
      %1816 = vmatpush1.bf16.msra.mxu0 0
      %1817 = vmatprep.subr.bf16.mxu0 0
      %1818 = vmatpush1.bf16.msra.mxu0 0
      %1819 = vmatprep.subr.bf16.mxu0 0
      %1820 = vmatpush1.bf16.msra.mxu0 0
      %1821 = vmatprep.subr.bf16.mxu0 0
      %1822 = vmatpush1.bf16.msra.mxu0 0
      %1823 = vmatprep.subr.bf16.mxu0 0
      %1824 = vmatpush1.bf16.msra.mxu0 0
      %1825 = vmatprep.subr.bf16.mxu0 0
      %1826 = vmatpush1.bf16.msra.mxu0 0
      %1827 = vmatprep.subr.bf16.mxu0 0
      %1828 = vmatpush1.bf16.msra.mxu0 0
      %1829 = vmatprep.subr.bf16.mxu0 0
      %1830 = vmatpush1.bf16.msra.mxu0 0
      %1831 = vmatprep.subr.bf16.mxu0 0
      %1832 = vmatpush1.bf16.msra.mxu0 0
      %1833 = vmatprep.subr.bf16.mxu0 0
      %1834 = vmatpush1.bf16.msra.mxu0 0
      %1835 = vmatprep.subr.bf16.mxu0 0
      %1836 = vmatpush1.bf16.msra.mxu0 0
      %1837 = vmatprep.subr.bf16.mxu0 0
      %1838 = vmatpush1.bf16.msra.mxu0 0
      %1839 = vmatprep.subr.bf16.mxu0 0
      %1840 = vmatpush1.bf16.msra.mxu0 0
      %1841 = vmatprep.mubr.bf16.mxu0 0
      %1842 = vmatmul.mubr.bf16.gmra.mrb[0].mxu0 %v1741
      %v1843 = vpop.f32.mrb[0].mxu0
      %v1844 = vadd.f32 0.0, %v1843
      %v1845 = vpop.f32.mrb[0].mxu0
      %v1846 = vadd.f32 0.0, %v1845
      %v1847 = vpop.f32.mrb[0].mxu0
      %v1848 = vpop.f32.mrb[0].mxu0
      %1849 = vdwg.mxu0
      %1850 = vmatprep.subr.bf16.mxu0 %v1726
      %1851 = vmatpush1.bf16.msra.mxu0 %v1725
      %1852 = vmatprep.subr.bf16.mxu0 %v1760
      %1853 = vmatpush1.bf16.msra.mxu0 %v1757
      %1854 = vmatprep.subr.bf16.mxu0 0
      %1855 = vmatpush1.bf16.msra.mxu0 0
      %1856 = vmatprep.subr.bf16.mxu0 0
      %1857 = vmatpush1.bf16.msra.mxu0 0
      %1858 = vmatprep.subr.bf16.mxu0 0
      %1859 = vmatpush1.bf16.msra.mxu0 0
      %1860 = vmatprep.subr.bf16.mxu0 0
      %1861 = vmatpush1.bf16.msra.mxu0 0
      %1862 = vmatprep.subr.bf16.mxu0 0
      %1863 = vmatpush1.bf16.msra.mxu0 0
      %1864 = vmatprep.subr.bf16.mxu0 0
      %1865 = vmatpush1.bf16.msra.mxu0 0
      %1866 = vmatprep.subr.bf16.mxu0 0
      %1867 = vmatpush1.bf16.msra.mxu0 0
      %1868 = vmatprep.subr.bf16.mxu0 0
      %1869 = vmatpush1.bf16.msra.mxu0 0
      %1870 = vmatprep.subr.bf16.mxu0 0
      %1871 = vmatpush1.bf16.msra.mxu0 0
      %1872 = vmatprep.subr.bf16.mxu0 0
      %1873 = vmatpush1.bf16.msra.mxu0 0
      %1874 = vmatprep.subr.bf16.mxu0 0
      %1875 = vmatpush1.bf16.msra.mxu0 0
      %1876 = vmatprep.subr.bf16.mxu0 0
      %1877 = vmatpush1.bf16.msra.mxu0 0
      %1878 = vmatprep.subr.bf16.mxu0 0
      %1879 = vmatpush1.bf16.msra.mxu0 0
      %1880 = vmatprep.subr.bf16.mxu0 0
      %1881 = vmatpush1.bf16.msra.mxu0 0
      %1882 = vmatprep.mubr.bf16.mxu0 0
      %1883 = vmatmul.mubr.bf16.gmra.mrb[0].mxu0 %v1741
      %v1884 = vpop.f32.mrb[0].mxu0
      %v1885 = vadd.f32 0.0, %v1884
      %v1886 = vpop.f32.mrb[0].mxu0
      %v1887 = vadd.f32 0.0, %v1886
      %v1888 = vpop.f32.mrb[0].mxu0
      %v1889 = vpop.f32.mrb[0].mxu0
      %1890 = vdwg.mxu0
      %1891 = vmatprep.subr.bf16.mxu0 %v1728
      %1892 = vmatpush1.bf16.msra.mxu0 %v1727
      %1893 = vmatprep.subr.bf16.mxu0 %v1766
      %1894 = vmatpush1.bf16.msra.mxu0 %v1763
      %1895 = vmatprep.subr.bf16.mxu0 0
      %1896 = vmatpush1.bf16.msra.mxu0 0
      %1897 = vmatprep.subr.bf16.mxu0 0
      %1898 = vmatpush1.bf16.msra.mxu0 0
      %1899 = vmatprep.subr.bf16.mxu0 0
      %1900 = vmatpush1.bf16.msra.mxu0 0
      %1901 = vmatprep.subr.bf16.mxu0 0
      %1902 = vmatpush1.bf16.msra.mxu0 0
      %1903 = vmatprep.subr.bf16.mxu0 0
      %1904 = vmatpush1.bf16.msra.mxu0 0
      %1905 = vmatprep.subr.bf16.mxu0 0
      %1906 = vmatpush1.bf16.msra.mxu0 0
      %1907 = vmatprep.subr.bf16.mxu0 0
      %1908 = vmatpush1.bf16.msra.mxu0 0
      %1909 = vmatprep.subr.bf16.mxu0 0
      %1910 = vmatpush1.bf16.msra.mxu0 0
      %1911 = vmatprep.subr.bf16.mxu0 0
      %1912 = vmatpush1.bf16.msra.mxu0 0
      %1913 = vmatprep.subr.bf16.mxu0 0
      %1914 = vmatpush1.bf16.msra.mxu0 0
      %1915 = vmatprep.subr.bf16.mxu0 0
      %1916 = vmatpush1.bf16.msra.mxu0 0
      %1917 = vmatprep.subr.bf16.mxu0 0
      %1918 = vmatpush1.bf16.msra.mxu0 0
      %1919 = vmatprep.subr.bf16.mxu0 0
      %1920 = vmatpush1.bf16.msra.mxu0 0
      %1921 = vmatprep.subr.bf16.mxu0 0
      %1922 = vmatpush1.bf16.msra.mxu0 0
      %1923 = vmatprep.mubr.bf16.mxu0 0
      %1924 = vmatmul.mubr.bf16.gmra.mrb[0].mxu0 %v1741
      %v1925 = vpop.f32.mrb[0].mxu0
      %v1926 = vadd.f32 0.0, %v1925
      %v1927 = vpop.f32.mrb[0].mxu0
      %v1928 = vadd.f32 0.0, %v1927
      %v1929 = vpop.f32.mrb[0].mxu0
      %v1930 = vpop.f32.mrb[0].mxu0
      %1931 = vdwg.mxu0
      %v1933 = vsel %vm1739, %v1654, 0
      %v1936 = vsel %vm1743, %v1646, 0
      %v1939 = vsel %vm1743, %v1647, 0
      %v1942 = vsel %vm1743, %v1648, 0
      %v1945 = vsel %vm1743, %v1649, 0
      %v1948 = vsel %vm1743, %v1650, 0
      %v1951 = vsel %vm1743, %v1651, 0
      %v1954 = vsel %vm1743, %v1652, 0
      %v1957 = vsel %vm1743, %v1653, 0
      %1959 = vmatprep.subr.bf16.mxu0 %v1639
      %1960 = vmatpush1.bf16.msra.mxu0 %v1638
      %1961 = vmatprep.subr.bf16.mxu0 %v1939
      %1962 = vmatpush1.bf16.msra.mxu0 %v1936
      %1963 = vmatprep.subr.bf16.mxu0 0
      %1964 = vmatpush1.bf16.msra.mxu0 0
      %1965 = vmatprep.subr.bf16.mxu0 0
      %1966 = vmatpush1.bf16.msra.mxu0 0
      %1967 = vmatprep.subr.bf16.mxu0 0
      %1968 = vmatpush1.bf16.msra.mxu0 0
      %1969 = vmatprep.subr.bf16.mxu0 0
      %1970 = vmatpush1.bf16.msra.mxu0 0
      %1971 = vmatprep.subr.bf16.mxu0 0
      %1972 = vmatpush1.bf16.msra.mxu0 0
      %1973 = vmatprep.subr.bf16.mxu0 0
      %1974 = vmatpush1.bf16.msra.mxu0 0
      %1975 = vmatprep.subr.bf16.mxu0 0
      %1976 = vmatpush1.bf16.msra.mxu0 0
      %1977 = vmatprep.subr.bf16.mxu0 0
      %1978 = vmatpush1.bf16.msra.mxu0 0
      %1979 = vmatprep.subr.bf16.mxu0 0
      %1980 = vmatpush1.bf16.msra.mxu0 0
      %1981 = vmatprep.subr.bf16.mxu0 0
      %1982 = vmatpush1.bf16.msra.mxu0 0
      %1983 = vmatprep.subr.bf16.mxu0 0
      %1984 = vmatpush1.bf16.msra.mxu0 0
      %1985 = vmatprep.subr.bf16.mxu0 0
      %1986 = vmatpush1.bf16.msra.mxu0 0
      %1987 = vmatprep.subr.bf16.mxu0 0
      %1988 = vmatpush1.bf16.msra.mxu0 0
      %1989 = vmatprep.subr.bf16.mxu0 0
      %1990 = vmatpush1.bf16.msra.mxu0 0
      %1991 = vmatprep.mubr.bf16.mxu0 0
      %1992 = vmatmul.mubr.bf16.gmra.mrb[0].mxu0 %v1933
      %v1993 = vpop.f32.mrb[0].mxu0
      %v1994 = vadd.f32 %v1803, %v1993
      %v1995 = vpop.f32.mrb[0].mxu0
      %v1996 = vadd.f32 %v1805, %v1995
      %v1997 = vpop.f32.mrb[0].mxu0
      %v1998 = vpop.f32.mrb[0].mxu0
      %1999 = vdwg.mxu0
      %2000 = vmatprep.subr.bf16.mxu0 %v1641
      %2001 = vmatpush1.bf16.msra.mxu0 %v1640
      %2002 = vmatprep.subr.bf16.mxu0 %v1945
      %2003 = vmatpush1.bf16.msra.mxu0 %v1942
      %2004 = vmatprep.subr.bf16.mxu0 0
      %2005 = vmatpush1.bf16.msra.mxu0 0
      %2006 = vmatprep.subr.bf16.mxu0 0
      %2007 = vmatpush1.bf16.msra.mxu0 0
      %2008 = vmatprep.subr.bf16.mxu0 0
      %2009 = vmatpush1.bf16.msra.mxu0 0
      %2010 = vmatprep.subr.bf16.mxu0 0
      %2011 = vmatpush1.bf16.msra.mxu0 0
      %2012 = vmatprep.subr.bf16.mxu0 0
      %2013 = vmatpush1.bf16.msra.mxu0 0
      %2014 = vmatprep.subr.bf16.mxu0 0
      %2015 = vmatpush1.bf16.msra.mxu0 0
      %2016 = vmatprep.subr.bf16.mxu0 0
      %2017 = vmatpush1.bf16.msra.mxu0 0
      %2018 = vmatprep.subr.bf16.mxu0 0
      %2019 = vmatpush1.bf16.msra.mxu0 0
      %2020 = vmatprep.subr.bf16.mxu0 0
      %2021 = vmatpush1.bf16.msra.mxu0 0
      %2022 = vmatprep.subr.bf16.mxu0 0
      %2023 = vmatpush1.bf16.msra.mxu0 0
      %2024 = vmatprep.subr.bf16.mxu0 0
      %2025 = vmatpush1.bf16.msra.mxu0 0
      %2026 = vmatprep.subr.bf16.mxu0 0
      %2027 = vmatpush1.bf16.msra.mxu0 0
      %2028 = vmatprep.subr.bf16.mxu0 0
      %2029 = vmatpush1.bf16.msra.mxu0 0
      %2030 = vmatprep.subr.bf16.mxu0 0
      %2031 = vmatpush1.bf16.msra.mxu0 0
      %2032 = vmatprep.mubr.bf16.mxu0 0
      %2033 = vmatmul.mubr.bf16.gmra.mrb[0].mxu0 %v1933
      %v2034 = vpop.f32.mrb[0].mxu0
      %v2035 = vadd.f32 %v1844, %v2034
      %v2036 = vpop.f32.mrb[0].mxu0
      %v2037 = vadd.f32 %v1846, %v2036
      %v2038 = vpop.f32.mrb[0].mxu0
      %v2039 = vpop.f32.mrb[0].mxu0
      %2040 = vdwg.mxu0
      %2041 = vmatprep.subr.bf16.mxu0 %v1643
      %2042 = vmatpush1.bf16.msra.mxu0 %v1642
      %2043 = vmatprep.subr.bf16.mxu0 %v1951
      %2044 = vmatpush1.bf16.msra.mxu0 %v1948
      %2045 = vmatprep.subr.bf16.mxu0 0
      %2046 = vmatpush1.bf16.msra.mxu0 0
      %2047 = vmatprep.subr.bf16.mxu0 0
      %2048 = vmatpush1.bf16.msra.mxu0 0
      %2049 = vmatprep.subr.bf16.mxu0 0
      %2050 = vmatpush1.bf16.msra.mxu0 0
      %2051 = vmatprep.subr.bf16.mxu0 0
      %2052 = vmatpush1.bf16.msra.mxu0 0
      %2053 = vmatprep.subr.bf16.mxu0 0
      %2054 = vmatpush1.bf16.msra.mxu0 0
      %2055 = vmatprep.subr.bf16.mxu0 0
      %2056 = vmatpush1.bf16.msra.mxu0 0
      %2057 = vmatprep.subr.bf16.mxu0 0
      %2058 = vmatpush1.bf16.msra.mxu0 0
      %2059 = vmatprep.subr.bf16.mxu0 0
      %2060 = vmatpush1.bf16.msra.mxu0 0
      %2061 = vmatprep.subr.bf16.mxu0 0
      %2062 = vmatpush1.bf16.msra.mxu0 0
      %2063 = vmatprep.subr.bf16.mxu0 0
      %2064 = vmatpush1.bf16.msra.mxu0 0
      %2065 = vmatprep.subr.bf16.mxu0 0
      %2066 = vmatpush1.bf16.msra.mxu0 0
      %2067 = vmatprep.subr.bf16.mxu0 0
      %2068 = vmatpush1.bf16.msra.mxu0 0
      %2069 = vmatprep.subr.bf16.mxu0 0
      %2070 = vmatpush1.bf16.msra.mxu0 0
      %2071 = vmatprep.subr.bf16.mxu0 0
      %2072 = vmatpush1.bf16.msra.mxu0 0
      %2073 = vmatprep.mubr.bf16.mxu0 0
      %2074 = vmatmul.mubr.bf16.gmra.mrb[0].mxu0 %v1933
      %v2075 = vpop.f32.mrb[0].mxu0
      %v2076 = vadd.f32 %v1885, %v2075
      %v2077 = vpop.f32.mrb[0].mxu0
      %v2078 = vadd.f32 %v1887, %v2077
      %v2079 = vpop.f32.mrb[0].mxu0
      %v2080 = vpop.f32.mrb[0].mxu0
      %2081 = vdwg.mxu0
      %2082 = vmatprep.subr.bf16.mxu0 %v1645
      %2083 = vmatpush1.bf16.msra.mxu0 %v1644
      %2084 = vmatprep.subr.bf16.mxu0 %v1957
      %2085 = vmatpush1.bf16.msra.mxu0 %v1954
      %2086 = vmatprep.subr.bf16.mxu0 0
      %2087 = vmatpush1.bf16.msra.mxu0 0
      %2088 = vmatprep.subr.bf16.mxu0 0
      %2089 = vmatpush1.bf16.msra.mxu0 0
      %2090 = vmatprep.subr.bf16.mxu0 0
      %2091 = vmatpush1.bf16.msra.mxu0 0
      %2092 = vmatprep.subr.bf16.mxu0 0
      %2093 = vmatpush1.bf16.msra.mxu0 0
      %2094 = vmatprep.subr.bf16.mxu0 0
      %2095 = vmatpush1.bf16.msra.mxu0 0
      %2096 = vmatprep.subr.bf16.mxu0 0
      %2097 = vmatpush1.bf16.msra.mxu0 0
      %2098 = vmatprep.subr.bf16.mxu0 0
      %2099 = vmatpush1.bf16.msra.mxu0 0
      %2100 = vmatprep.subr.bf16.mxu0 0
      %2101 = vmatpush1.bf16.msra.mxu0 0
      %2102 = vmatprep.subr.bf16.mxu0 0
      %2103 = vmatpush1.bf16.msra.mxu0 0
      %2104 = vmatprep.subr.bf16.mxu0 0
      %2105 = vmatpush1.bf16.msra.mxu0 0
      %2106 = vmatprep.subr.bf16.mxu0 0
      %2107 = vmatpush1.bf16.msra.mxu0 0
      %2108 = vmatprep.subr.bf16.mxu0 0
      %2109 = vmatpush1.bf16.msra.mxu0 0
      %2110 = vmatprep.subr.bf16.mxu0 0
      %2111 = vmatpush1.bf16.msra.mxu0 0
      %2112 = vmatprep.subr.bf16.mxu0 0
      %2113 = vmatpush1.bf16.msra.mxu0 0
      %2114 = vmatprep.mubr.bf16.mxu0 0
      %2115 = vmatmul.mubr.bf16.gmra.mrb[0].mxu0 %v1933
      %v2116 = vpop.f32.mrb[0].mxu0
      %v2117 = vadd.f32 %v1926, %v2116
      %v2118 = vpop.f32.mrb[0].mxu0
      %v2119 = vadd.f32 %v1928, %v2118
      %v2120 = vpop.f32.mrb[0].mxu0
      %v2121 = vpop.f32.mrb[0].mxu0
      %2122 = vdwg.mxu0
      %2123 = vrot.lane.b32.xlu0 %v1531, 97
      %v2124 = vpop.permute.xlu0 %2123
      %2125 = vrot.lane.b32.xlu0 %v1532, 97
      %v2126 = vpop.permute.xlu0 %2125
      %2127 = vrot.lane.b32.xlu0 %v1533, 97
      %v2128 = vpop.permute.xlu0 %2127
      %2129 = vrot.lane.b32.xlu0 %v1534, 97
      %v2130 = vpop.permute.xlu0 %2129
      %2131 = vrot.lane.b32.xlu0 %v1535, 97
      %v2132 = vpop.permute.xlu0 %2131
      %2133 = vrot.lane.b32.xlu0 %v1536, 97
      %v2134 = vpop.permute.xlu0 %2133
      %2135 = vrot.lane.b32.xlu0 %v1537, 97
      %v2136 = vpop.permute.xlu0 %2135
      %2137 = vrot.lane.b32.xlu0 %v1538, 97
      %v2138 = vpop.permute.xlu0 %2137
      %vm2139 = vcmp.lt.s32.totalorder %v1297, 97
      %v2140 = vsel %vm2139, %v2136, %v2138
      %v2141 = vsel %vm2139, %v2134, %v2136
      %v2142 = vsel %vm2139, %v2132, %v2134
      %v2143 = vsel %vm2139, %v2130, %v2132
      %v2144 = vsel %vm2139, %v2128, %v2130
      %v2145 = vsel %vm2139, %v2126, %v2128
      %v2146 = vsel %vm2139, %v2124, %v2126
      %v2147 = vsel %vm2139, %v2138, %v2124
      %v2148 = vmul.f32 %v2146, %v1457
      %v2149 = vmul.f32 %v2145, %v1458
      %v2150 = vmul.f32 %v2144, %v1459
      %v2151 = vmul.f32 %v2143, %v1460
      %v2152 = vmul.f32 %v2142, %v1461
      %v2153 = vmul.f32 %v2141, %v1462
      %v2154 = vmul.f32 %v2140, %v1463
      %v2155 = vmul.f32 %v2147, %v1464
      %2156 = vrot.lane.b32.xlu0 %v1531, 96
      %v2157 = vpop.permute.xlu0 %2156
      %2158 = vrot.lane.b32.xlu0 %v1532, 96
      %v2159 = vpop.permute.xlu0 %2158
      %2160 = vrot.lane.b32.xlu0 %v1533, 96
      %v2161 = vpop.permute.xlu0 %2160
      %2162 = vrot.lane.b32.xlu0 %v1534, 96
      %v2163 = vpop.permute.xlu0 %2162
      %2164 = vrot.lane.b32.xlu0 %v1535, 96
      %v2165 = vpop.permute.xlu0 %2164
      %2166 = vrot.lane.b32.xlu0 %v1536, 96
      %v2167 = vpop.permute.xlu0 %2166
      %2168 = vrot.lane.b32.xlu0 %v1537, 96
      %v2169 = vpop.permute.xlu0 %2168
      %2170 = vrot.lane.b32.xlu0 %v1538, 96
      %v2171 = vpop.permute.xlu0 %2170
      %vm2172 = vcmp.lt.s32.totalorder %v1297, 96
      %v2173 = vsel %vm2172, %v2169, %v2171
      %v2174 = vsel %vm2172, %v2167, %v2169
      %v2175 = vsel %vm2172, %v2165, %v2167
      %v2176 = vsel %vm2172, %v2163, %v2165
      %v2177 = vsel %vm2172, %v2161, %v2163
      %v2178 = vsel %vm2172, %v2159, %v2161
      %v2179 = vsel %vm2172, %v2157, %v2159
      %v2180 = vsel %vm2172, %v2171, %v2157
      %v2181 = vmul.f32 %v2179, %v1473
      %v2182 = vmul.f32 %v2178, %v1474
      %v2183 = vmul.f32 %v2177, %v1475
      %v2184 = vmul.f32 %v2176, %v1476
      %v2185 = vmul.f32 %v2175, %v1477
      %v2186 = vmul.f32 %v2174, %v1478
      %v2187 = vmul.f32 %v2173, %v1479
      %v2188 = vmul.f32 %v2180, %v1480
      %2189 = vrot.lane.b32.xlu0 %v1531, 95
      %v2190 = vpop.permute.xlu0 %2189
      %2191 = vrot.lane.b32.xlu0 %v1532, 95
      %v2192 = vpop.permute.xlu0 %2191
      %2193 = vrot.lane.b32.xlu0 %v1533, 95
      %v2194 = vpop.permute.xlu0 %2193
      %2195 = vrot.lane.b32.xlu0 %v1534, 95
      %v2196 = vpop.permute.xlu0 %2195
      %2197 = vrot.lane.b32.xlu0 %v1535, 95
      %v2198 = vpop.permute.xlu0 %2197
      %2199 = vrot.lane.b32.xlu0 %v1536, 95
      %v2200 = vpop.permute.xlu0 %2199
      %2201 = vrot.lane.b32.xlu0 %v1537, 95
      %v2202 = vpop.permute.xlu0 %2201
      %2203 = vrot.lane.b32.xlu0 %v1538, 95
      %v2204 = vpop.permute.xlu0 %2203
      %vm2205 = vcmp.lt.s32.totalorder %v1297, 95
      %v2206 = vsel %vm2205, %v2202, %v2204
      %v2207 = vsel %vm2205, %v2200, %v2202
      %v2208 = vsel %vm2205, %v2198, %v2200
      %v2209 = vsel %vm2205, %v2196, %v2198
      %v2210 = vsel %vm2205, %v2194, %v2196
      %v2211 = vsel %vm2205, %v2192, %v2194
      %v2212 = vsel %vm2205, %v2190, %v2192
      %v2213 = vsel %vm2205, %v2204, %v2190
      %v2214 = vmul.f32 %v2212, %v1497
      %v2215 = vmul.f32 %v2211, %v1498
      %v2216 = vmul.f32 %v2210, %v1499
      %v2217 = vmul.f32 %v2209, %v1500
      %v2218 = vmul.f32 %v2208, %v1501
      %v2219 = vmul.f32 %v2207, %v1502
      %v2220 = vmul.f32 %v2206, %v1503
      %v2221 = vmul.f32 %v2213, %v1504
      %v2222 = vpack.c.bf16 %v2181, %v2148
      %v2223 = vpack.c.bf16 %v2182, %v2149
      %v2224 = vpack.c.bf16 %v2183, %v2150
      %v2225 = vpack.c.bf16 %v2184, %v2151
      %v2226 = vpack.c.bf16 %v2185, %v2152
      %v2227 = vpack.c.bf16 %v2186, %v2153
      %v2228 = vpack.c.bf16 %v2187, %v2154
      %v2229 = vpack.c.bf16 %v2188, %v2155
      %v2230 = vpack.c.bf16 %v2214, %v2214
      %v2231 = vpack.c.bf16 %v2215, %v2215
      %v2232 = vpack.c.bf16 %v2216, %v2216
      %v2233 = vpack.c.bf16 %v2217, %v2217
      %v2234 = vpack.c.bf16 %v2218, %v2218
      %v2235 = vpack.c.bf16 %v2219, %v2219
      %v2236 = vpack.c.bf16 %v2220, %v2220
      %v2237 = vpack.c.bf16 %v2221, %v2221
      %s2238 = scalar_lea.vmem %s5, 8
      %v2239 = vld [vmem:[%s2238] sm:$0xf]
      %v2241 = vsel %vm1739, %v2239, 0
      %v2244 = vsel %vm1743, %v2230, 0
      %v2247 = vsel %vm1743, %v2231, 0
      %v2250 = vsel %vm1743, %v2232, 0
      %v2253 = vsel %vm1743, %v2233, 0
      %v2256 = vsel %vm1743, %v2234, 0
      %v2259 = vsel %vm1743, %v2235, 0
      %v2262 = vsel %vm1743, %v2236, 0
      %v2265 = vsel %vm1743, %v2237, 0
      %2267 = vmatprep.subr.bf16.mxu0 %v2223
      %2268 = vmatpush1.bf16.msra.mxu0 %v2222
      %2269 = vmatprep.subr.bf16.mxu0 %v2247
      %2270 = vmatpush1.bf16.msra.mxu0 %v2244
      %2271 = vmatprep.subr.bf16.mxu0 0
      %2272 = vmatpush1.bf16.msra.mxu0 0
      %2273 = vmatprep.subr.bf16.mxu0 0
      %2274 = vmatpush1.bf16.msra.mxu0 0
      %2275 = vmatprep.subr.bf16.mxu0 0
      %2276 = vmatpush1.bf16.msra.mxu0 0
      %2277 = vmatprep.subr.bf16.mxu0 0
      %2278 = vmatpush1.bf16.msra.mxu0 0
      %2279 = vmatprep.subr.bf16.mxu0 0
      %2280 = vmatpush1.bf16.msra.mxu0 0
      %2281 = vmatprep.subr.bf16.mxu0 0
      %2282 = vmatpush1.bf16.msra.mxu0 0
      %2283 = vmatprep.subr.bf16.mxu0 0
      %2284 = vmatpush1.bf16.msra.mxu0 0
      %2285 = vmatprep.subr.bf16.mxu0 0
      %2286 = vmatpush1.bf16.msra.mxu0 0
      %2287 = vmatprep.subr.bf16.mxu0 0
      %2288 = vmatpush1.bf16.msra.mxu0 0
      %2289 = vmatprep.subr.bf16.mxu0 0
      %2290 = vmatpush1.bf16.msra.mxu0 0
      %2291 = vmatprep.subr.bf16.mxu0 0
      %2292 = vmatpush1.bf16.msra.mxu0 0
      %2293 = vmatprep.subr.bf16.mxu0 0
      %2294 = vmatpush1.bf16.msra.mxu0 0
      %2295 = vmatprep.subr.bf16.mxu0 0
      %2296 = vmatpush1.bf16.msra.mxu0 0
      %2297 = vmatprep.subr.bf16.mxu0 0
      %2298 = vmatpush1.bf16.msra.mxu0 0
      %2299 = vmatprep.mubr.bf16.mxu0 0
      %2300 = vmatmul.mubr.bf16.gmra.mrb[0].mxu0 %v2241
      %v2301 = vpop.f32.mrb[0].mxu0
      %v2302 = vadd.f32 0.0, %v2301
      %v2303 = vpop.f32.mrb[0].mxu0
      %v2304 = vadd.f32 0.0, %v2303
      %v2305 = vpop.f32.mrb[0].mxu0
      %v2306 = vpop.f32.mrb[0].mxu0
      %2307 = vdwg.mxu0
      %2308 = vmatprep.subr.bf16.mxu0 %v2225
      %2309 = vmatpush1.bf16.msra.mxu0 %v2224
      %2310 = vmatprep.subr.bf16.mxu0 %v2253
      %2311 = vmatpush1.bf16.msra.mxu0 %v2250
      %2312 = vmatprep.subr.bf16.mxu0 0
      %2313 = vmatpush1.bf16.msra.mxu0 0
      %2314 = vmatprep.subr.bf16.mxu0 0
      %2315 = vmatpush1.bf16.msra.mxu0 0
      %2316 = vmatprep.subr.bf16.mxu0 0
      %2317 = vmatpush1.bf16.msra.mxu0 0
      %2318 = vmatprep.subr.bf16.mxu0 0
      %2319 = vmatpush1.bf16.msra.mxu0 0
      %2320 = vmatprep.subr.bf16.mxu0 0
      %2321 = vmatpush1.bf16.msra.mxu0 0
      %2322 = vmatprep.subr.bf16.mxu0 0
      %2323 = vmatpush1.bf16.msra.mxu0 0
      %2324 = vmatprep.subr.bf16.mxu0 0
      %2325 = vmatpush1.bf16.msra.mxu0 0
      %2326 = vmatprep.subr.bf16.mxu0 0
      %2327 = vmatpush1.bf16.msra.mxu0 0
      %2328 = vmatprep.subr.bf16.mxu0 0
      %2329 = vmatpush1.bf16.msra.mxu0 0
      %2330 = vmatprep.subr.bf16.mxu0 0
      %2331 = vmatpush1.bf16.msra.mxu0 0
      %2332 = vmatprep.subr.bf16.mxu0 0
      %2333 = vmatpush1.bf16.msra.mxu0 0
      %2334 = vmatprep.subr.bf16.mxu0 0
      %2335 = vmatpush1.bf16.msra.mxu0 0
      %2336 = vmatprep.subr.bf16.mxu0 0
      %2337 = vmatpush1.bf16.msra.mxu0 0
      %2338 = vmatprep.subr.bf16.mxu0 0
      %2339 = vmatpush1.bf16.msra.mxu0 0
      %2340 = vmatprep.mubr.bf16.mxu0 0
      %2341 = vmatmul.mubr.bf16.gmra.mrb[0].mxu0 %v2241
      %v2342 = vpop.f32.mrb[0].mxu0
      %v2343 = vadd.f32 0.0, %v2342
      %v2344 = vpop.f32.mrb[0].mxu0
      %v2345 = vadd.f32 0.0, %v2344
      %v2346 = vpop.f32.mrb[0].mxu0
      %v2347 = vpop.f32.mrb[0].mxu0
      %2348 = vdwg.mxu0
      %2349 = vmatprep.subr.bf16.mxu0 %v2227
      %2350 = vmatpush1.bf16.msra.mxu0 %v2226
      %2351 = vmatprep.subr.bf16.mxu0 %v2259
      %2352 = vmatpush1.bf16.msra.mxu0 %v2256
      %2353 = vmatprep.subr.bf16.mxu0 0
      %2354 = vmatpush1.bf16.msra.mxu0 0
      %2355 = vmatprep.subr.bf16.mxu0 0
      %2356 = vmatpush1.bf16.msra.mxu0 0
      %2357 = vmatprep.subr.bf16.mxu0 0
      %2358 = vmatpush1.bf16.msra.mxu0 0
      %2359 = vmatprep.subr.bf16.mxu0 0
      %2360 = vmatpush1.bf16.msra.mxu0 0
      %2361 = vmatprep.subr.bf16.mxu0 0
      %2362 = vmatpush1.bf16.msra.mxu0 0
      %2363 = vmatprep.subr.bf16.mxu0 0
      %2364 = vmatpush1.bf16.msra.mxu0 0
      %2365 = vmatprep.subr.bf16.mxu0 0
      %2366 = vmatpush1.bf16.msra.mxu0 0
      %2367 = vmatprep.subr.bf16.mxu0 0
      %2368 = vmatpush1.bf16.msra.mxu0 0
      %2369 = vmatprep.subr.bf16.mxu0 0
      %2370 = vmatpush1.bf16.msra.mxu0 0
      %2371 = vmatprep.subr.bf16.mxu0 0
      %2372 = vmatpush1.bf16.msra.mxu0 0
      %2373 = vmatprep.subr.bf16.mxu0 0
      %2374 = vmatpush1.bf16.msra.mxu0 0
      %2375 = vmatprep.subr.bf16.mxu0 0
      %2376 = vmatpush1.bf16.msra.mxu0 0
      %2377 = vmatprep.subr.bf16.mxu0 0
      %2378 = vmatpush1.bf16.msra.mxu0 0
      %2379 = vmatprep.subr.bf16.mxu0 0
      %2380 = vmatpush1.bf16.msra.mxu0 0
      %2381 = vmatprep.mubr.bf16.mxu0 0
      %2382 = vmatmul.mubr.bf16.gmra.mrb[0].mxu0 %v2241
      %v2383 = vpop.f32.mrb[0].mxu0
      %v2384 = vadd.f32 0.0, %v2383
      %v2385 = vpop.f32.mrb[0].mxu0
      %v2386 = vadd.f32 0.0, %v2385
      %v2387 = vpop.f32.mrb[0].mxu0
      %v2388 = vpop.f32.mrb[0].mxu0
      %2389 = vdwg.mxu0
      %2390 = vmatprep.subr.bf16.mxu0 %v2229
      %2391 = vmatpush1.bf16.msra.mxu0 %v2228
      %2392 = vmatprep.subr.bf16.mxu0 %v2265
      %2393 = vmatpush1.bf16.msra.mxu0 %v2262
      %2394 = vmatprep.subr.bf16.mxu0 0
      %2395 = vmatpush1.bf16.msra.mxu0 0
      %2396 = vmatprep.subr.bf16.mxu0 0
      %2397 = vmatpush1.bf16.msra.mxu0 0
      %2398 = vmatprep.subr.bf16.mxu0 0
      %2399 = vmatpush1.bf16.msra.mxu0 0
      %2400 = vmatprep.subr.bf16.mxu0 0
      %2401 = vmatpush1.bf16.msra.mxu0 0
      %2402 = vmatprep.subr.bf16.mxu0 0
      %2403 = vmatpush1.bf16.msra.mxu0 0
      %2404 = vmatprep.subr.bf16.mxu0 0
      %2405 = vmatpush1.bf16.msra.mxu0 0
      %2406 = vmatprep.subr.bf16.mxu0 0
      %2407 = vmatpush1.bf16.msra.mxu0 0
      %2408 = vmatprep.subr.bf16.mxu0 0
      %2409 = vmatpush1.bf16.msra.mxu0 0
      %2410 = vmatprep.subr.bf16.mxu0 0
      %2411 = vmatpush1.bf16.msra.mxu0 0
      %2412 = vmatprep.subr.bf16.mxu0 0
      %2413 = vmatpush1.bf16.msra.mxu0 0
      %2414 = vmatprep.subr.bf16.mxu0 0
      %2415 = vmatpush1.bf16.msra.mxu0 0
      %2416 = vmatprep.subr.bf16.mxu0 0
      %2417 = vmatpush1.bf16.msra.mxu0 0
      %2418 = vmatprep.subr.bf16.mxu0 0
      %2419 = vmatpush1.bf16.msra.mxu0 0
      %2420 = vmatprep.subr.bf16.mxu0 0
      %2421 = vmatpush1.bf16.msra.mxu0 0
      %2422 = vmatprep.mubr.bf16.mxu0 0
      %2423 = vmatmul.mubr.bf16.gmra.mrb[0].mxu0 %v2241
      %v2424 = vpop.f32.mrb[0].mxu0
      %v2425 = vadd.f32 0.0, %v2424
      %v2426 = vpop.f32.mrb[0].mxu0
      %v2427 = vadd.f32 0.0, %v2426
      %v2428 = vpop.f32.mrb[0].mxu0
      %v2429 = vpop.f32.mrb[0].mxu0
      %2430 = vdwg.mxu0
      %v2431 = vadd.f32 %v1994, %v2302
      %v2432 = vadd.f32 %v1996, %v2304
      %v2433 = vadd.f32 %v2035, %v2343
      %v2434 = vadd.f32 %v2037, %v2345
      %v2435 = vadd.f32 %v2076, %v2384
      %v2436 = vadd.f32 %v2078, %v2386
      %v2437 = vadd.f32 %v2117, %v2425
      %v2438 = vadd.f32 %v2119, %v2427
      %2439 = vset.pattern.permute.xlu0 2
      %2440 = vperm.xlu0 %2439, %v1505
      %v2441 = vpop.permute.xlu0 %2440
      %v2443 = vadd.f32 %v2431, %v2441
      %v2444 = vadd.f32 %v2432, %v2441
      %v2445 = vadd.f32 %v2433, %v2441
      %v2446 = vadd.f32 %v2434, %v2441
      %v2447 = vadd.f32 %v2435, %v2441
      %v2448 = vadd.f32 %v2436, %v2441
      %v2449 = vadd.f32 %v2437, %v2441
      %v2450 = vadd.f32 %v2438, %v2441
      %v2451 = vadd.f32 %v2443, %v1288
      %v2452 = vadd.f32 %v2444, %v1289
      %v2453 = vadd.f32 %v2445, %v1290
      %v2454 = vadd.f32 %v2446, %v1291
      %v2455 = vadd.f32 %v2447, %v1292
      %v2456 = vadd.f32 %v2448, %v1293
      %v2457 = vadd.f32 %v2449, %v1294
      %v2458 = vadd.f32 %v2450, %v1295
      %2459 = vset.pattern.permute.xlu0 3
      %2460 = vperm.xlu0 %2459, %v1505
      %v2461 = vpop.permute.xlu0 %2460
      %v2463 = vmul.f32 %v1155, %v2461
      %v2464 = vmul.f32 %v1157, %v2461
      %v2465 = vmul.f32 %v1196, %v2461
      %v2466 = vmul.f32 %v1198, %v2461
      %v2467 = vmul.f32 %v1237, %v2461
      %v2468 = vmul.f32 %v1239, %v2461
      %v2469 = vmul.f32 %v1278, %v2461
      %v2470 = vmul.f32 %v1280, %v2461
      %2471 = vset.pattern.permute.xlu0 4
      %2472 = vperm.xlu0 %2471, %v1505
      %v2473 = vpop.permute.xlu0 %2472
      %v2475 = vadd.f32 %v2463, %v2473
      %v2476 = vadd.f32 %v2464, %v2473
      %v2477 = vadd.f32 %v2465, %v2473
      %v2478 = vadd.f32 %v2466, %v2473
      %v2479 = vadd.f32 %v2467, %v2473
      %v2480 = vadd.f32 %v2468, %v2473
      %v2481 = vadd.f32 %v2469, %v2473
      %v2482 = vadd.f32 %v2470, %v2473
      %v2483 = vpack.c.bf16 %v2475, %v2475
      %v2484 = vpack.c.bf16 %v2476, %v2476
      %v2485 = vpack.c.bf16 %v2477, %v2477
      %v2486 = vpack.c.bf16 %v2478, %v2478
      %v2487 = vpack.c.bf16 %v2479, %v2479
      %v2488 = vpack.c.bf16 %v2480, %v2480
      %v2489 = vpack.c.bf16 %v2481, %v2481
      %v2490 = vpack.c.bf16 %v2482, %v2482
      %v2491 = vld [vmem:[%s6] sm:$0xf]
      %2492 = vset.pattern.permute.xlu0 5
      %2493 = vperm.xlu0 %2492, %v1505
      %v2494 = vpop.permute.xlu0 %2493
      %vm2496 = vcmask 64512
      %v2498 = vsel %vm2496, %v2491, 0
      %v2501 = vsel %vm1743, %v2483, 0
      %v2504 = vsel %vm1743, %v2484, 0
      %v2507 = vsel %vm1743, %v2485, 0
      %v2510 = vsel %vm1743, %v2486, 0
      %v2513 = vsel %vm1743, %v2487, 0
      %v2516 = vsel %vm1743, %v2488, 0
      %v2519 = vsel %vm1743, %v2489, 0
      %v2522 = vsel %vm1743, %v2490, 0
      %2524 = vmatprep.subr.bf16.mxu0 %v2504
      %2525 = vmatpush1.bf16.msra.mxu0 %v2501
      %2526 = vmatprep.subr.bf16.mxu0 0
      %2527 = vmatpush1.bf16.msra.mxu0 0
      %2528 = vmatprep.subr.bf16.mxu0 0
      %2529 = vmatpush1.bf16.msra.mxu0 0
      %2530 = vmatprep.subr.bf16.mxu0 0
      %2531 = vmatpush1.bf16.msra.mxu0 0
      %2532 = vmatprep.subr.bf16.mxu0 0
      %2533 = vmatpush1.bf16.msra.mxu0 0
      %2534 = vmatprep.subr.bf16.mxu0 0
      %2535 = vmatpush1.bf16.msra.mxu0 0
      %2536 = vmatprep.subr.bf16.mxu0 0
      %2537 = vmatpush1.bf16.msra.mxu0 0
      %2538 = vmatprep.subr.bf16.mxu0 0
      %2539 = vmatpush1.bf16.msra.mxu0 0
      %2540 = vmatprep.subr.bf16.mxu0 0
      %2541 = vmatpush1.bf16.msra.mxu0 0
      %2542 = vmatprep.subr.bf16.mxu0 0
      %2543 = vmatpush1.bf16.msra.mxu0 0
      %2544 = vmatprep.subr.bf16.mxu0 0
      %2545 = vmatpush1.bf16.msra.mxu0 0
      %2546 = vmatprep.subr.bf16.mxu0 0
      %2547 = vmatpush1.bf16.msra.mxu0 0
      %2548 = vmatprep.subr.bf16.mxu0 0
      %2549 = vmatpush1.bf16.msra.mxu0 0
      %2550 = vmatprep.subr.bf16.mxu0 0
      %2551 = vmatpush1.bf16.msra.mxu0 0
      %2552 = vmatprep.subr.bf16.mxu0 0
      %2553 = vmatpush1.bf16.msra.mxu0 0
      %2554 = vmatprep.subr.bf16.mxu0 0
      %2555 = vmatpush1.bf16.msra.mxu0 0
      %2556 = vmatprep.mubr.bf16.mxu0 0
      %2557 = vmatmul.mubr.bf16.gmra.mrb[0].mxu0 %v2498
      %v2558 = vpop.f32.mrb[0].mxu0
      %v2559 = vadd.f32 %v2494, %v2558
      %v2560 = vpop.f32.mrb[0].mxu0
      %v2561 = vadd.f32 %v2494, %v2560
      %v2562 = vpop.f32.mrb[0].mxu0
      %v2563 = vpop.f32.mrb[0].mxu0
      %2564 = vdwg.mxu0
      %2565 = vmatprep.subr.bf16.mxu0 %v2510
      %2566 = vmatpush1.bf16.msra.mxu0 %v2507
      %2567 = vmatprep.subr.bf16.mxu0 0
      %2568 = vmatpush1.bf16.msra.mxu0 0
      %2569 = vmatprep.subr.bf16.mxu0 0
      %2570 = vmatpush1.bf16.msra.mxu0 0
      %2571 = vmatprep.subr.bf16.mxu0 0
      %2572 = vmatpush1.bf16.msra.mxu0 0
      %2573 = vmatprep.subr.bf16.mxu0 0
      %2574 = vmatpush1.bf16.msra.mxu0 0
      %2575 = vmatprep.subr.bf16.mxu0 0
      %2576 = vmatpush1.bf16.msra.mxu0 0
      %2577 = vmatprep.subr.bf16.mxu0 0
      %2578 = vmatpush1.bf16.msra.mxu0 0
      %2579 = vmatprep.subr.bf16.mxu0 0
      %2580 = vmatpush1.bf16.msra.mxu0 0
      %2581 = vmatprep.subr.bf16.mxu0 0
      %2582 = vmatpush1.bf16.msra.mxu0 0
      %2583 = vmatprep.subr.bf16.mxu0 0
      %2584 = vmatpush1.bf16.msra.mxu0 0
      %2585 = vmatprep.subr.bf16.mxu0 0
      %2586 = vmatpush1.bf16.msra.mxu0 0
      %2587 = vmatprep.subr.bf16.mxu0 0
      %2588 = vmatpush1.bf16.msra.mxu0 0
      %2589 = vmatprep.subr.bf16.mxu0 0
      %2590 = vmatpush1.bf16.msra.mxu0 0
      %2591 = vmatprep.subr.bf16.mxu0 0
      %2592 = vmatpush1.bf16.msra.mxu0 0
      %2593 = vmatprep.subr.bf16.mxu0 0
      %2594 = vmatpush1.bf16.msra.mxu0 0
      %2595 = vmatprep.subr.bf16.mxu0 0
      %2596 = vmatpush1.bf16.msra.mxu0 0
      %2597 = vmatprep.mubr.bf16.mxu0 0
      %2598 = vmatmul.mubr.bf16.gmra.mrb[0].mxu0 %v2498
      %v2599 = vpop.f32.mrb[0].mxu0
      %v2600 = vadd.f32 %v2494, %v2599
      %v2601 = vpop.f32.mrb[0].mxu0
      %v2602 = vadd.f32 %v2494, %v2601
      %v2603 = vpop.f32.mrb[0].mxu0
      %v2604 = vpop.f32.mrb[0].mxu0
      %2605 = vdwg.mxu0
      %2606 = vmatprep.subr.bf16.mxu0 %v2516
      %2607 = vmatpush1.bf16.msra.mxu0 %v2513
      %2608 = vmatprep.subr.bf16.mxu0 0
      %2609 = vmatpush1.bf16.msra.mxu0 0
      %2610 = vmatprep.subr.bf16.mxu0 0
      %2611 = vmatpush1.bf16.msra.mxu0 0
      %2612 = vmatprep.subr.bf16.mxu0 0
      %2613 = vmatpush1.bf16.msra.mxu0 0
      %2614 = vmatprep.subr.bf16.mxu0 0
      %2615 = vmatpush1.bf16.msra.mxu0 0
      %2616 = vmatprep.subr.bf16.mxu0 0
      %2617 = vmatpush1.bf16.msra.mxu0 0
      %2618 = vmatprep.subr.bf16.mxu0 0
      %2619 = vmatpush1.bf16.msra.mxu0 0
      %2620 = vmatprep.subr.bf16.mxu0 0
      %2621 = vmatpush1.bf16.msra.mxu0 0
      %2622 = vmatprep.subr.bf16.mxu0 0
      %2623 = vmatpush1.bf16.msra.mxu0 0
      %2624 = vmatprep.subr.bf16.mxu0 0
      %2625 = vmatpush1.bf16.msra.mxu0 0
      %2626 = vmatprep.subr.bf16.mxu0 0
      %2627 = vmatpush1.bf16.msra.mxu0 0
      %2628 = vmatprep.subr.bf16.mxu0 0
      %2629 = vmatpush1.bf16.msra.mxu0 0
      %2630 = vmatprep.subr.bf16.mxu0 0
      %2631 = vmatpush1.bf16.msra.mxu0 0
      %2632 = vmatprep.subr.bf16.mxu0 0
      %2633 = vmatpush1.bf16.msra.mxu0 0
      %2634 = vmatprep.subr.bf16.mxu0 0
      %2635 = vmatpush1.bf16.msra.mxu0 0
      %2636 = vmatprep.subr.bf16.mxu0 0
      %2637 = vmatpush1.bf16.msra.mxu0 0
      %2638 = vmatprep.mubr.bf16.mxu0 0
      %2639 = vmatmul.mubr.bf16.gmra.mrb[0].mxu0 %v2498
      %v2640 = vpop.f32.mrb[0].mxu0
      %v2641 = vadd.f32 %v2494, %v2640
      %v2642 = vpop.f32.mrb[0].mxu0
      %v2643 = vadd.f32 %v2494, %v2642
      %v2644 = vpop.f32.mrb[0].mxu0
      %v2645 = vpop.f32.mrb[0].mxu0
      %2646 = vdwg.mxu0
      %2647 = vmatprep.subr.bf16.mxu0 %v2522
      %2648 = vmatpush1.bf16.msra.mxu0 %v2519
      %2649 = vmatprep.subr.bf16.mxu0 0
      %2650 = vmatpush1.bf16.msra.mxu0 0
      %2651 = vmatprep.subr.bf16.mxu0 0
      %2652 = vmatpush1.bf16.msra.mxu0 0
      %2653 = vmatprep.subr.bf16.mxu0 0
      %2654 = vmatpush1.bf16.msra.mxu0 0
      %2655 = vmatprep.subr.bf16.mxu0 0
      %2656 = vmatpush1.bf16.msra.mxu0 0
      %2657 = vmatprep.subr.bf16.mxu0 0
      %2658 = vmatpush1.bf16.msra.mxu0 0
      %2659 = vmatprep.subr.bf16.mxu0 0
      %2660 = vmatpush1.bf16.msra.mxu0 0
      %2661 = vmatprep.subr.bf16.mxu0 0
      %2662 = vmatpush1.bf16.msra.mxu0 0
      %2663 = vmatprep.subr.bf16.mxu0 0
      %2664 = vmatpush1.bf16.msra.mxu0 0
      %2665 = vmatprep.subr.bf16.mxu0 0
      %2666 = vmatpush1.bf16.msra.mxu0 0
      %2667 = vmatprep.subr.bf16.mxu0 0
      %2668 = vmatpush1.bf16.msra.mxu0 0
      %2669 = vmatprep.subr.bf16.mxu0 0
      %2670 = vmatpush1.bf16.msra.mxu0 0
      %2671 = vmatprep.subr.bf16.mxu0 0
      %2672 = vmatpush1.bf16.msra.mxu0 0
      %2673 = vmatprep.subr.bf16.mxu0 0
      %2674 = vmatpush1.bf16.msra.mxu0 0
      %2675 = vmatprep.subr.bf16.mxu0 0
      %2676 = vmatpush1.bf16.msra.mxu0 0
      %2677 = vmatprep.subr.bf16.mxu0 0
      %2678 = vmatpush1.bf16.msra.mxu0 0
      %2679 = vmatprep.mubr.bf16.mxu0 0
      %2680 = vmatmul.mubr.bf16.gmra.mrb[0].mxu0 %v2498
      %v2681 = vpop.f32.mrb[0].mxu0
      %v2682 = vadd.f32 %v2494, %v2681
      %v2683 = vpop.f32.mrb[0].mxu0
      %v2684 = vadd.f32 %v2494, %v2683
      %v2685 = vpop.f32.mrb[0].mxu0
      %v2686 = vpop.f32.mrb[0].mxu0
      %2687 = vdwg.mxu0
      %v2688 = vld [vmem:[%s337] sm:$0xff]
      %2689 = vset.pattern.permute.xlu0 6
      %2690 = vperm.xlu0 %2689, %v1505
      %v2691 = vpop.permute.xlu0 %2690
      %v2693 = vmul.f32 %v2451, %v2691
      %v2694 = vmul.f32 %v2452, %v2691
      %v2695 = vmul.f32 %v2453, %v2691
      %v2696 = vmul.f32 %v2454, %v2691
      %v2697 = vmul.f32 %v2455, %v2691
      %v2698 = vmul.f32 %v2456, %v2691
      %v2699 = vmul.f32 %v2457, %v2691
      %v2700 = vmul.f32 %v2458, %v2691
      %2702 = vset.pattern.permute.xlu0 0
      %2703 = vperm.xlu0 %2702, %v2688
      %v2704 = vpop.permute.xlu0 %2703
      %v2706 = vadd.f32 %v2693, %v2704
      %v2707 = vadd.f32 %v2694, %v2704
      %v2708 = vadd.f32 %v2695, %v2704
      %v2709 = vadd.f32 %v2696, %v2704
      %v2710 = vadd.f32 %v2697, %v2704
      %v2711 = vadd.f32 %v2698, %v2704
      %v2712 = vadd.f32 %v2699, %v2704
      %v2713 = vadd.f32 %v2700, %v2704
      %v2714 = vmax.f32 %v2706, 0.0
      %v2715 = vmax.f32 %v2707, 0.0
      %v2716 = vmax.f32 %v2708, 0.0
      %v2717 = vmax.f32 %v2709, 0.0
      %v2718 = vmax.f32 %v2710, 0.0
      %v2719 = vmax.f32 %v2711, 0.0
      %v2720 = vmax.f32 %v2712, 0.0
      %v2721 = vmax.f32 %v2713, 0.0
      %2722 = vrot.lane.b32.xlu0 %v2714, 33
      %v2723 = vpop.permute.xlu0 %2722
      %2724 = vrot.lane.b32.xlu0 %v2715, 33
      %v2725 = vpop.permute.xlu0 %2724
      %2726 = vrot.lane.b32.xlu0 %v2716, 33
      %v2727 = vpop.permute.xlu0 %2726
      %2728 = vrot.lane.b32.xlu0 %v2717, 33
      %v2729 = vpop.permute.xlu0 %2728
      %2730 = vrot.lane.b32.xlu0 %v2718, 33
      %v2731 = vpop.permute.xlu0 %2730
      %2732 = vrot.lane.b32.xlu0 %v2719, 33
      %v2733 = vpop.permute.xlu0 %2732
      %2734 = vrot.lane.b32.xlu0 %v2720, 33
      %v2735 = vpop.permute.xlu0 %2734
      %2736 = vrot.lane.b32.xlu0 %v2721, 33
      %v2737 = vpop.permute.xlu0 %2736
      %v2738 = vsel %vm1555, %v2735, %v2737
      %v2739 = vsel %vm1555, %v2733, %v2735
      %v2740 = vsel %vm1555, %v2731, %v2733
      %v2741 = vsel %vm1555, %v2729, %v2731
      %v2742 = vsel %vm1555, %v2727, %v2729
      %v2743 = vsel %vm1555, %v2725, %v2727
      %v2744 = vsel %vm1555, %v2723, %v2725
      %v2745 = vsel %vm1555, %v2737, %v2723
      %v2746 = vmul.f32 %v2745, %v1361
      %v2747 = vmul.f32 %v2744, %v1362
      %v2748 = vmul.f32 %v2743, %v1363
      %v2749 = vmul.f32 %v2742, %v1364
      %v2750 = vmul.f32 %v2741, %v1365
      %v2751 = vmul.f32 %v2740, %v1366
      %v2752 = vmul.f32 %v2739, %v1367
      %v2753 = vmul.f32 %v2738, %v1368
      %2754 = vrot.lane.b32.xlu0 %v2714, 32
      %v2755 = vpop.permute.xlu0 %2754
      %2756 = vrot.lane.b32.xlu0 %v2715, 32
      %v2757 = vpop.permute.xlu0 %2756
      %2758 = vrot.lane.b32.xlu0 %v2716, 32
      %v2759 = vpop.permute.xlu0 %2758
      %2760 = vrot.lane.b32.xlu0 %v2717, 32
      %v2761 = vpop.permute.xlu0 %2760
      %2762 = vrot.lane.b32.xlu0 %v2718, 32
      %v2763 = vpop.permute.xlu0 %2762
      %2764 = vrot.lane.b32.xlu0 %v2719, 32
      %v2765 = vpop.permute.xlu0 %2764
      %2766 = vrot.lane.b32.xlu0 %v2720, 32
      %v2767 = vpop.permute.xlu0 %2766
      %2768 = vrot.lane.b32.xlu0 %v2721, 32
      %v2769 = vpop.permute.xlu0 %2768
      %v2770 = vsel %vm1588, %v2767, %v2769
      %v2771 = vsel %vm1588, %v2765, %v2767
      %v2772 = vsel %vm1588, %v2763, %v2765
      %v2773 = vsel %vm1588, %v2761, %v2763
      %v2774 = vsel %vm1588, %v2759, %v2761
      %v2775 = vsel %vm1588, %v2757, %v2759
      %v2776 = vsel %vm1588, %v2755, %v2757
      %v2777 = vsel %vm1588, %v2769, %v2755
      %v2778 = vmul.f32 %v2777, %v1377
      %v2779 = vmul.f32 %v2776, %v1378
      %v2780 = vmul.f32 %v2775, %v1379
      %v2781 = vmul.f32 %v2774, %v1380
      %v2782 = vmul.f32 %v2773, %v1381
      %v2783 = vmul.f32 %v2772, %v1382
      %v2784 = vmul.f32 %v2771, %v1383
      %v2785 = vmul.f32 %v2770, %v1384
      %2786 = vrot.lane.b32.xlu0 %v2714, 31
      %v2787 = vpop.permute.xlu0 %2786
      %2788 = vrot.lane.b32.xlu0 %v2715, 31
      %v2789 = vpop.permute.xlu0 %2788
      %2790 = vrot.lane.b32.xlu0 %v2716, 31
      %v2791 = vpop.permute.xlu0 %2790
      %2792 = vrot.lane.b32.xlu0 %v2717, 31
      %v2793 = vpop.permute.xlu0 %2792
      %2794 = vrot.lane.b32.xlu0 %v2718, 31
      %v2795 = vpop.permute.xlu0 %2794
      %2796 = vrot.lane.b32.xlu0 %v2719, 31
      %v2797 = vpop.permute.xlu0 %2796
      %2798 = vrot.lane.b32.xlu0 %v2720, 31
      %v2799 = vpop.permute.xlu0 %2798
      %2800 = vrot.lane.b32.xlu0 %v2721, 31
      %v2801 = vpop.permute.xlu0 %2800
      %v2802 = vsel %vm1621, %v2799, %v2801
      %v2803 = vsel %vm1621, %v2797, %v2799
      %v2804 = vsel %vm1621, %v2795, %v2797
      %v2805 = vsel %vm1621, %v2793, %v2795
      %v2806 = vsel %vm1621, %v2791, %v2793
      %v2807 = vsel %vm1621, %v2789, %v2791
      %v2808 = vsel %vm1621, %v2787, %v2789
      %v2809 = vsel %vm1621, %v2801, %v2787
      %v2810 = vmul.f32 %v2809, %v1401
      %v2811 = vmul.f32 %v2808, %v1402
      %v2812 = vmul.f32 %v2807, %v1403
      %v2813 = vmul.f32 %v2806, %v1404
      %v2814 = vmul.f32 %v2805, %v1405
      %v2815 = vmul.f32 %v2804, %v1406
      %v2816 = vmul.f32 %v2803, %v1407
      %v2817 = vmul.f32 %v2802, %v1408
      %v2818 = vpack.c.bf16 %v2778, %v2746
      %v2819 = vpack.c.bf16 %v2779, %v2747
      %v2820 = vpack.c.bf16 %v2780, %v2748
      %v2821 = vpack.c.bf16 %v2781, %v2749
      %v2822 = vpack.c.bf16 %v2782, %v2750
      %v2823 = vpack.c.bf16 %v2783, %v2751
      %v2824 = vpack.c.bf16 %v2784, %v2752
      %v2825 = vpack.c.bf16 %v2785, %v2753
      %v2826 = vpack.c.bf16 %v2810, %v2810
      %v2827 = vpack.c.bf16 %v2811, %v2811
      %v2828 = vpack.c.bf16 %v2812, %v2812
      %v2829 = vpack.c.bf16 %v2813, %v2813
      %v2830 = vpack.c.bf16 %v2814, %v2814
      %v2831 = vpack.c.bf16 %v2815, %v2815
      %v2832 = vpack.c.bf16 %v2816, %v2816
      %v2833 = vpack.c.bf16 %v2817, %v2817
      %v2834 = vld [vmem:[%s7] sm:$0xf]
      %2835 = vrot.lane.b32.xlu0 %v2714, 1
      %v2836 = vpop.permute.xlu0 %2835
      %2837 = vrot.lane.b32.xlu0 %v2715, 1
      %v2838 = vpop.permute.xlu0 %2837
      %2839 = vrot.lane.b32.xlu0 %v2716, 1
      %v2840 = vpop.permute.xlu0 %2839
      %2841 = vrot.lane.b32.xlu0 %v2717, 1
      %v2842 = vpop.permute.xlu0 %2841
      %2843 = vrot.lane.b32.xlu0 %v2718, 1
      %v2844 = vpop.permute.xlu0 %2843
      %2845 = vrot.lane.b32.xlu0 %v2719, 1
      %v2846 = vpop.permute.xlu0 %2845
      %2847 = vrot.lane.b32.xlu0 %v2720, 1
      %v2848 = vpop.permute.xlu0 %2847
      %2849 = vrot.lane.b32.xlu0 %v2721, 1
      %v2850 = vpop.permute.xlu0 %2849
      %v2851 = vsel %vm1671, %v2848, %v2850
      %v2852 = vsel %vm1671, %v2846, %v2848
      %v2853 = vsel %vm1671, %v2844, %v2846
      %v2854 = vsel %vm1671, %v2842, %v2844
      %v2855 = vsel %vm1671, %v2840, %v2842
      %v2856 = vsel %vm1671, %v2838, %v2840
      %v2857 = vsel %vm1671, %v2836, %v2838
      %v2858 = vsel %vm1671, %v2850, %v2836
      %v2859 = vmul.f32 %v2858, %v1417
      %v2860 = vmul.f32 %v2857, %v1418
      %v2861 = vmul.f32 %v2856, %v1419
      %v2862 = vmul.f32 %v2855, %v1420
      %v2863 = vmul.f32 %v2854, %v1421
      %v2864 = vmul.f32 %v2853, %v1422
      %v2865 = vmul.f32 %v2852, %v1423
      %v2866 = vmul.f32 %v2851, %v1424
      %2867 = vrot.lane.b32.xlu0 %v2714, 127
      %v2868 = vpop.permute.xlu0 %2867
      %2869 = vrot.lane.b32.xlu0 %v2715, 127
      %v2870 = vpop.permute.xlu0 %2869
      %2871 = vrot.lane.b32.xlu0 %v2716, 127
      %v2872 = vpop.permute.xlu0 %2871
      %2873 = vrot.lane.b32.xlu0 %v2717, 127
      %v2874 = vpop.permute.xlu0 %2873
      %2875 = vrot.lane.b32.xlu0 %v2718, 127
      %v2876 = vpop.permute.xlu0 %2875
      %2877 = vrot.lane.b32.xlu0 %v2719, 127
      %v2878 = vpop.permute.xlu0 %2877
      %2879 = vrot.lane.b32.xlu0 %v2720, 127
      %v2880 = vpop.permute.xlu0 %2879
      %2881 = vrot.lane.b32.xlu0 %v2721, 127
      %v2882 = vpop.permute.xlu0 %2881
      %v2883 = vsel %vm1704, %v2880, %v2882
      %v2884 = vsel %vm1704, %v2878, %v2880
      %v2885 = vsel %vm1704, %v2876, %v2878
      %v2886 = vsel %vm1704, %v2874, %v2876
      %v2887 = vsel %vm1704, %v2872, %v2874
      %v2888 = vsel %vm1704, %v2870, %v2872
      %v2889 = vsel %vm1704, %v2868, %v2870
      %v2890 = vsel %vm1704, %v2882, %v2868
      %v2891 = vmul.f32 %v2889, %v1433
      %v2892 = vmul.f32 %v2888, %v1434
      %v2893 = vmul.f32 %v2887, %v1435
      %v2894 = vmul.f32 %v2886, %v1436
      %v2895 = vmul.f32 %v2885, %v1437
      %v2896 = vmul.f32 %v2884, %v1438
      %v2897 = vmul.f32 %v2883, %v1439
      %v2898 = vmul.f32 %v2890, %v1440
      %v2899 = vpack.c.bf16 %v2714, %v2859
      %v2900 = vpack.c.bf16 %v2715, %v2860
      %v2901 = vpack.c.bf16 %v2716, %v2861
      %v2902 = vpack.c.bf16 %v2717, %v2862
      %v2903 = vpack.c.bf16 %v2718, %v2863
      %v2904 = vpack.c.bf16 %v2719, %v2864
      %v2905 = vpack.c.bf16 %v2720, %v2865
      %v2906 = vpack.c.bf16 %v2721, %v2866
      %v2907 = vpack.c.bf16 %v2891, %v2891
      %v2908 = vpack.c.bf16 %v2892, %v2892
      %v2909 = vpack.c.bf16 %v2893, %v2893
      %v2910 = vpack.c.bf16 %v2894, %v2894
      %v2911 = vpack.c.bf16 %v2895, %v2895
      %v2912 = vpack.c.bf16 %v2896, %v2896
      %v2913 = vpack.c.bf16 %v2897, %v2897
      %v2914 = vpack.c.bf16 %v2898, %v2898
      %s2915 = scalar_lea.vmem %s7, 4
      %v2916 = vld [vmem:[%s2915] sm:$0xf]
      %v2918 = vsel %vm1739, %v2916, 0
      %v2921 = vsel %vm1743, %v2907, 0
      %v2924 = vsel %vm1743, %v2908, 0
      %v2927 = vsel %vm1743, %v2909, 0
      %v2930 = vsel %vm1743, %v2910, 0
      %v2933 = vsel %vm1743, %v2911, 0
      %v2936 = vsel %vm1743, %v2912, 0
      %v2939 = vsel %vm1743, %v2913, 0
      %v2942 = vsel %vm1743, %v2914, 0
      %2944 = vmatprep.subr.bf16.mxu0 %v2900
      %2945 = vmatpush1.bf16.msra.mxu0 %v2899
      %2946 = vmatprep.subr.bf16.mxu0 %v2924
      %2947 = vmatpush1.bf16.msra.mxu0 %v2921
      %2948 = vmatprep.subr.bf16.mxu0 0
      %2949 = vmatpush1.bf16.msra.mxu0 0
      %2950 = vmatprep.subr.bf16.mxu0 0
      %2951 = vmatpush1.bf16.msra.mxu0 0
      %2952 = vmatprep.subr.bf16.mxu0 0
      %2953 = vmatpush1.bf16.msra.mxu0 0
      %2954 = vmatprep.subr.bf16.mxu0 0
      %2955 = vmatpush1.bf16.msra.mxu0 0
      %2956 = vmatprep.subr.bf16.mxu0 0
      %2957 = vmatpush1.bf16.msra.mxu0 0
      %2958 = vmatprep.subr.bf16.mxu0 0
      %2959 = vmatpush1.bf16.msra.mxu0 0
      %2960 = vmatprep.subr.bf16.mxu0 0
      %2961 = vmatpush1.bf16.msra.mxu0 0
      %2962 = vmatprep.subr.bf16.mxu0 0
      %2963 = vmatpush1.bf16.msra.mxu0 0
      %2964 = vmatprep.subr.bf16.mxu0 0
      %2965 = vmatpush1.bf16.msra.mxu0 0
      %2966 = vmatprep.subr.bf16.mxu0 0
      %2967 = vmatpush1.bf16.msra.mxu0 0
      %2968 = vmatprep.subr.bf16.mxu0 0
      %2969 = vmatpush1.bf16.msra.mxu0 0
      %2970 = vmatprep.subr.bf16.mxu0 0
      %2971 = vmatpush1.bf16.msra.mxu0 0
      %2972 = vmatprep.subr.bf16.mxu0 0
      %2973 = vmatpush1.bf16.msra.mxu0 0
      %2974 = vmatprep.subr.bf16.mxu0 0
      %2975 = vmatpush1.bf16.msra.mxu0 0
      %2976 = vmatprep.mubr.bf16.mxu0 0
      %2977 = vmatmul.mubr.bf16.gmra.mrb[0].mxu0 %v2918
      %v2978 = vpop.f32.mrb[0].mxu0
      %v2979 = vadd.f32 0.0, %v2978
      %v2980 = vpop.f32.mrb[0].mxu0
      %v2981 = vadd.f32 0.0, %v2980
      %v2982 = vpop.f32.mrb[0].mxu0
      %v2983 = vpop.f32.mrb[0].mxu0
      %2984 = vdwg.mxu0
      %2985 = vmatprep.subr.bf16.mxu0 %v2902
      %2986 = vmatpush1.bf16.msra.mxu0 %v2901
      %2987 = vmatprep.subr.bf16.mxu0 %v2930
      %2988 = vmatpush1.bf16.msra.mxu0 %v2927
      %2989 = vmatprep.subr.bf16.mxu0 0
      %2990 = vmatpush1.bf16.msra.mxu0 0
      %2991 = vmatprep.subr.bf16.mxu0 0
      %2992 = vmatpush1.bf16.msra.mxu0 0
      %2993 = vmatprep.subr.bf16.mxu0 0
      %2994 = vmatpush1.bf16.msra.mxu0 0
      %2995 = vmatprep.subr.bf16.mxu0 0
      %2996 = vmatpush1.bf16.msra.mxu0 0
      %2997 = vmatprep.subr.bf16.mxu0 0
      %2998 = vmatpush1.bf16.msra.mxu0 0
      %2999 = vmatprep.subr.bf16.mxu0 0
      %3000 = vmatpush1.bf16.msra.mxu0 0
      %3001 = vmatprep.subr.bf16.mxu0 0
      %3002 = vmatpush1.bf16.msra.mxu0 0
      %3003 = vmatprep.subr.bf16.mxu0 0
      %3004 = vmatpush1.bf16.msra.mxu0 0
      %3005 = vmatprep.subr.bf16.mxu0 0
      %3006 = vmatpush1.bf16.msra.mxu0 0
      %3007 = vmatprep.subr.bf16.mxu0 0
      %3008 = vmatpush1.bf16.msra.mxu0 0
      %3009 = vmatprep.subr.bf16.mxu0 0
      %3010 = vmatpush1.bf16.msra.mxu0 0
      %3011 = vmatprep.subr.bf16.mxu0 0
      %3012 = vmatpush1.bf16.msra.mxu0 0
      %3013 = vmatprep.subr.bf16.mxu0 0
      %3014 = vmatpush1.bf16.msra.mxu0 0
      %3015 = vmatprep.subr.bf16.mxu0 0
      %3016 = vmatpush1.bf16.msra.mxu0 0
      %3017 = vmatprep.mubr.bf16.mxu0 0
      %3018 = vmatmul.mubr.bf16.gmra.mrb[0].mxu0 %v2918
      %v3019 = vpop.f32.mrb[0].mxu0
      %v3020 = vadd.f32 0.0, %v3019
      %v3021 = vpop.f32.mrb[0].mxu0
      %v3022 = vadd.f32 0.0, %v3021
      %v3023 = vpop.f32.mrb[0].mxu0
      %v3024 = vpop.f32.mrb[0].mxu0
      %3025 = vdwg.mxu0
      %3026 = vmatprep.subr.bf16.mxu0 %v2904
      %3027 = vmatpush1.bf16.msra.mxu0 %v2903
      %3028 = vmatprep.subr.bf16.mxu0 %v2936
      %3029 = vmatpush1.bf16.msra.mxu0 %v2933
      %3030 = vmatprep.subr.bf16.mxu0 0
      %3031 = vmatpush1.bf16.msra.mxu0 0
      %3032 = vmatprep.subr.bf16.mxu0 0
      %3033 = vmatpush1.bf16.msra.mxu0 0
      %3034 = vmatprep.subr.bf16.mxu0 0
      %3035 = vmatpush1.bf16.msra.mxu0 0
      %3036 = vmatprep.subr.bf16.mxu0 0
      %3037 = vmatpush1.bf16.msra.mxu0 0
      %3038 = vmatprep.subr.bf16.mxu0 0
      %3039 = vmatpush1.bf16.msra.mxu0 0
      %3040 = vmatprep.subr.bf16.mxu0 0
      %3041 = vmatpush1.bf16.msra.mxu0 0
      %3042 = vmatprep.subr.bf16.mxu0 0
      %3043 = vmatpush1.bf16.msra.mxu0 0
      %3044 = vmatprep.subr.bf16.mxu0 0
      %3045 = vmatpush1.bf16.msra.mxu0 0
      %3046 = vmatprep.subr.bf16.mxu0 0
      %3047 = vmatpush1.bf16.msra.mxu0 0
      %3048 = vmatprep.subr.bf16.mxu0 0
      %3049 = vmatpush1.bf16.msra.mxu0 0
      %3050 = vmatprep.subr.bf16.mxu0 0
      %3051 = vmatpush1.bf16.msra.mxu0 0
      %3052 = vmatprep.subr.bf16.mxu0 0
      %3053 = vmatpush1.bf16.msra.mxu0 0
      %3054 = vmatprep.subr.bf16.mxu0 0
      %3055 = vmatpush1.bf16.msra.mxu0 0
      %3056 = vmatprep.subr.bf16.mxu0 0
      %3057 = vmatpush1.bf16.msra.mxu0 0
      %3058 = vmatprep.mubr.bf16.mxu0 0
      %3059 = vmatmul.mubr.bf16.gmra.mrb[0].mxu0 %v2918
      %v3060 = vpop.f32.mrb[0].mxu0
      %v3061 = vadd.f32 0.0, %v3060
      %v3062 = vpop.f32.mrb[0].mxu0
      %v3063 = vadd.f32 0.0, %v3062
      %v3064 = vpop.f32.mrb[0].mxu0
      %v3065 = vpop.f32.mrb[0].mxu0
      %3066 = vdwg.mxu0
      %3067 = vmatprep.subr.bf16.mxu0 %v2906
      %3068 = vmatpush1.bf16.msra.mxu0 %v2905
      %3069 = vmatprep.subr.bf16.mxu0 %v2942
      %3070 = vmatpush1.bf16.msra.mxu0 %v2939
      %3071 = vmatprep.subr.bf16.mxu0 0
      %3072 = vmatpush1.bf16.msra.mxu0 0
      %3073 = vmatprep.subr.bf16.mxu0 0
      %3074 = vmatpush1.bf16.msra.mxu0 0
      %3075 = vmatprep.subr.bf16.mxu0 0
      %3076 = vmatpush1.bf16.msra.mxu0 0
      %3077 = vmatprep.subr.bf16.mxu0 0
      %3078 = vmatpush1.bf16.msra.mxu0 0
      %3079 = vmatprep.subr.bf16.mxu0 0
      %3080 = vmatpush1.bf16.msra.mxu0 0
      %3081 = vmatprep.subr.bf16.mxu0 0
      %3082 = vmatpush1.bf16.msra.mxu0 0
      %3083 = vmatprep.subr.bf16.mxu0 0
      %3084 = vmatpush1.bf16.msra.mxu0 0
      %3085 = vmatprep.subr.bf16.mxu0 0
      %3086 = vmatpush1.bf16.msra.mxu0 0
      %3087 = vmatprep.subr.bf16.mxu0 0
      %3088 = vmatpush1.bf16.msra.mxu0 0
      %3089 = vmatprep.subr.bf16.mxu0 0
      %3090 = vmatpush1.bf16.msra.mxu0 0
      %3091 = vmatprep.subr.bf16.mxu0 0
      %3092 = vmatpush1.bf16.msra.mxu0 0
      %3093 = vmatprep.subr.bf16.mxu0 0
      %3094 = vmatpush1.bf16.msra.mxu0 0
      %3095 = vmatprep.subr.bf16.mxu0 0
      %3096 = vmatpush1.bf16.msra.mxu0 0
      %3097 = vmatprep.subr.bf16.mxu0 0
      %3098 = vmatpush1.bf16.msra.mxu0 0
      %3099 = vmatprep.mubr.bf16.mxu0 0
      %3100 = vmatmul.mubr.bf16.gmra.mrb[0].mxu0 %v2918
      %v3101 = vpop.f32.mrb[0].mxu0
      %v3102 = vadd.f32 0.0, %v3101
      %v3103 = vpop.f32.mrb[0].mxu0
      %v3104 = vadd.f32 0.0, %v3103
      %v3105 = vpop.f32.mrb[0].mxu0
      %v3106 = vpop.f32.mrb[0].mxu0
      %3107 = vdwg.mxu0
      %v3109 = vsel %vm1739, %v2834, 0
      %v3112 = vsel %vm1743, %v2826, 0
      %v3115 = vsel %vm1743, %v2827, 0
      %v3118 = vsel %vm1743, %v2828, 0
      %v3121 = vsel %vm1743, %v2829, 0
      %v3124 = vsel %vm1743, %v2830, 0
      %v3127 = vsel %vm1743, %v2831, 0
      %v3130 = vsel %vm1743, %v2832, 0
      %v3133 = vsel %vm1743, %v2833, 0
      %3135 = vmatprep.subr.bf16.mxu0 %v2819
      %3136 = vmatpush1.bf16.msra.mxu0 %v2818
      %3137 = vmatprep.subr.bf16.mxu0 %v3115
      %3138 = vmatpush1.bf16.msra.mxu0 %v3112
      %3139 = vmatprep.subr.bf16.mxu0 0
      %3140 = vmatpush1.bf16.msra.mxu0 0
      %3141 = vmatprep.subr.bf16.mxu0 0
      %3142 = vmatpush1.bf16.msra.mxu0 0
      %3143 = vmatprep.subr.bf16.mxu0 0
      %3144 = vmatpush1.bf16.msra.mxu0 0
      %3145 = vmatprep.subr.bf16.mxu0 0
      %3146 = vmatpush1.bf16.msra.mxu0 0
      %3147 = vmatprep.subr.bf16.mxu0 0
      %3148 = vmatpush1.bf16.msra.mxu0 0
      %3149 = vmatprep.subr.bf16.mxu0 0
      %3150 = vmatpush1.bf16.msra.mxu0 0
      %3151 = vmatprep.subr.bf16.mxu0 0
      %3152 = vmatpush1.bf16.msra.mxu0 0
      %3153 = vmatprep.subr.bf16.mxu0 0
      %3154 = vmatpush1.bf16.msra.mxu0 0
      %3155 = vmatprep.subr.bf16.mxu0 0
      %3156 = vmatpush1.bf16.msra.mxu0 0
      %3157 = vmatprep.subr.bf16.mxu0 0
      %3158 = vmatpush1.bf16.msra.mxu0 0
      %3159 = vmatprep.subr.bf16.mxu0 0
      %3160 = vmatpush1.bf16.msra.mxu0 0
      %3161 = vmatprep.subr.bf16.mxu0 0
      %3162 = vmatpush1.bf16.msra.mxu0 0
      %3163 = vmatprep.subr.bf16.mxu0 0
      %3164 = vmatpush1.bf16.msra.mxu0 0
      %3165 = vmatprep.subr.bf16.mxu0 0
      %3166 = vmatpush1.bf16.msra.mxu0 0
      %3167 = vmatprep.mubr.bf16.mxu0 0
      %3168 = vmatmul.mubr.bf16.gmra.mrb[0].mxu0 %v3109
      %v3169 = vpop.f32.mrb[0].mxu0
      %v3170 = vadd.f32 %v2979, %v3169
      %v3171 = vpop.f32.mrb[0].mxu0
      %v3172 = vadd.f32 %v2981, %v3171
      %v3173 = vpop.f32.mrb[0].mxu0
      %v3174 = vpop.f32.mrb[0].mxu0
      %3175 = vdwg.mxu0
      %3176 = vmatprep.subr.bf16.mxu0 %v2821
      %3177 = vmatpush1.bf16.msra.mxu0 %v2820
      %3178 = vmatprep.subr.bf16.mxu0 %v3121
      %3179 = vmatpush1.bf16.msra.mxu0 %v3118
      %3180 = vmatprep.subr.bf16.mxu0 0
      %3181 = vmatpush1.bf16.msra.mxu0 0
      %3182 = vmatprep.subr.bf16.mxu0 0
      %3183 = vmatpush1.bf16.msra.mxu0 0
      %3184 = vmatprep.subr.bf16.mxu0 0
      %3185 = vmatpush1.bf16.msra.mxu0 0
      %3186 = vmatprep.subr.bf16.mxu0 0
      %3187 = vmatpush1.bf16.msra.mxu0 0
      %3188 = vmatprep.subr.bf16.mxu0 0
      %3189 = vmatpush1.bf16.msra.mxu0 0
      %3190 = vmatprep.subr.bf16.mxu0 0
      %3191 = vmatpush1.bf16.msra.mxu0 0
      %3192 = vmatprep.subr.bf16.mxu0 0
      %3193 = vmatpush1.bf16.msra.mxu0 0
      %3194 = vmatprep.subr.bf16.mxu0 0
      %3195 = vmatpush1.bf16.msra.mxu0 0
      %3196 = vmatprep.subr.bf16.mxu0 0
      %3197 = vmatpush1.bf16.msra.mxu0 0
      %3198 = vmatprep.subr.bf16.mxu0 0
      %3199 = vmatpush1.bf16.msra.mxu0 0
      %3200 = vmatprep.subr.bf16.mxu0 0
      %3201 = vmatpush1.bf16.msra.mxu0 0
      %3202 = vmatprep.subr.bf16.mxu0 0
      %3203 = vmatpush1.bf16.msra.mxu0 0
      %3204 = vmatprep.subr.bf16.mxu0 0
      %3205 = vmatpush1.bf16.msra.mxu0 0
      %3206 = vmatprep.subr.bf16.mxu0 0
      %3207 = vmatpush1.bf16.msra.mxu0 0
      %3208 = vmatprep.mubr.bf16.mxu0 0
      %3209 = vmatmul.mubr.bf16.gmra.mrb[0].mxu0 %v3109
      %v3210 = vpop.f32.mrb[0].mxu0
      %v3211 = vadd.f32 %v3020, %v3210
      %v3212 = vpop.f32.mrb[0].mxu0
      %v3213 = vadd.f32 %v3022, %v3212
      %v3214 = vpop.f32.mrb[0].mxu0
      %v3215 = vpop.f32.mrb[0].mxu0
      %3216 = vdwg.mxu0
      %3217 = vmatprep.subr.bf16.mxu0 %v2823
      %3218 = vmatpush1.bf16.msra.mxu0 %v2822
      %3219 = vmatprep.subr.bf16.mxu0 %v3127
      %3220 = vmatpush1.bf16.msra.mxu0 %v3124
      %3221 = vmatprep.subr.bf16.mxu0 0
      %3222 = vmatpush1.bf16.msra.mxu0 0
      %3223 = vmatprep.subr.bf16.mxu0 0
      %3224 = vmatpush1.bf16.msra.mxu0 0
      %3225 = vmatprep.subr.bf16.mxu0 0
      %3226 = vmatpush1.bf16.msra.mxu0 0
      %3227 = vmatprep.subr.bf16.mxu0 0
      %3228 = vmatpush1.bf16.msra.mxu0 0
      %3229 = vmatprep.subr.bf16.mxu0 0
      %3230 = vmatpush1.bf16.msra.mxu0 0
      %3231 = vmatprep.subr.bf16.mxu0 0
      %3232 = vmatpush1.bf16.msra.mxu0 0
      %3233 = vmatprep.subr.bf16.mxu0 0
      %3234 = vmatpush1.bf16.msra.mxu0 0
      %3235 = vmatprep.subr.bf16.mxu0 0
      %3236 = vmatpush1.bf16.msra.mxu0 0
      %3237 = vmatprep.subr.bf16.mxu0 0
      %3238 = vmatpush1.bf16.msra.mxu0 0
      %3239 = vmatprep.subr.bf16.mxu0 0
      %3240 = vmatpush1.bf16.msra.mxu0 0
      %3241 = vmatprep.subr.bf16.mxu0 0
      %3242 = vmatpush1.bf16.msra.mxu0 0
      %3243 = vmatprep.subr.bf16.mxu0 0
      %3244 = vmatpush1.bf16.msra.mxu0 0
      %3245 = vmatprep.subr.bf16.mxu0 0
      %3246 = vmatpush1.bf16.msra.mxu0 0
      %3247 = vmatprep.subr.bf16.mxu0 0
      %3248 = vmatpush1.bf16.msra.mxu0 0
      %3249 = vmatprep.mubr.bf16.mxu0 0
      %3250 = vmatmul.mubr.bf16.gmra.mrb[0].mxu0 %v3109
      %v3251 = vpop.f32.mrb[0].mxu0
      %v3252 = vadd.f32 %v3061, %v3251
      %v3253 = vpop.f32.mrb[0].mxu0
      %v3254 = vadd.f32 %v3063, %v3253
      %v3255 = vpop.f32.mrb[0].mxu0
      %v3256 = vpop.f32.mrb[0].mxu0
      %3257 = vdwg.mxu0
      %3258 = vmatprep.subr.bf16.mxu0 %v2825
      %3259 = vmatpush1.bf16.msra.mxu0 %v2824
      %3260 = vmatprep.subr.bf16.mxu0 %v3133
      %3261 = vmatpush1.bf16.msra.mxu0 %v3130
      %3262 = vmatprep.subr.bf16.mxu0 0
      %3263 = vmatpush1.bf16.msra.mxu0 0
      %3264 = vmatprep.subr.bf16.mxu0 0
      %3265 = vmatpush1.bf16.msra.mxu0 0
      %3266 = vmatprep.subr.bf16.mxu0 0
      %3267 = vmatpush1.bf16.msra.mxu0 0
      %3268 = vmatprep.subr.bf16.mxu0 0
      %3269 = vmatpush1.bf16.msra.mxu0 0
      %3270 = vmatprep.subr.bf16.mxu0 0
      %3271 = vmatpush1.bf16.msra.mxu0 0
      %3272 = vmatprep.subr.bf16.mxu0 0
      %3273 = vmatpush1.bf16.msra.mxu0 0
      %3274 = vmatprep.subr.bf16.mxu0 0
      %3275 = vmatpush1.bf16.msra.mxu0 0
      %3276 = vmatprep.subr.bf16.mxu0 0
      %3277 = vmatpush1.bf16.msra.mxu0 0
      %3278 = vmatprep.subr.bf16.mxu0 0
      %3279 = vmatpush1.bf16.msra.mxu0 0
      %3280 = vmatprep.subr.bf16.mxu0 0
      %3281 = vmatpush1.bf16.msra.mxu0 0
      %3282 = vmatprep.subr.bf16.mxu0 0
      %3283 = vmatpush1.bf16.msra.mxu0 0
      %3284 = vmatprep.subr.bf16.mxu0 0
      %3285 = vmatpush1.bf16.msra.mxu0 0
      %3286 = vmatprep.subr.bf16.mxu0 0
      %3287 = vmatpush1.bf16.msra.mxu0 0
      %3288 = vmatprep.subr.bf16.mxu0 0
      %3289 = vmatpush1.bf16.msra.mxu0 0
      %3290 = vmatprep.mubr.bf16.mxu0 0
      %3291 = vmatmul.mubr.bf16.gmra.mrb[0].mxu0 %v3109
      %v3292 = vpop.f32.mrb[0].mxu0
      %v3293 = vadd.f32 %v3102, %v3292
      %v3294 = vpop.f32.mrb[0].mxu0
      %v3295 = vadd.f32 %v3104, %v3294
      %v3296 = vpop.f32.mrb[0].mxu0
      %v3297 = vpop.f32.mrb[0].mxu0
      %3298 = vdwg.mxu0
      %3299 = vrot.lane.b32.xlu0 %v2714, 97
      %v3300 = vpop.permute.xlu0 %3299
      %3301 = vrot.lane.b32.xlu0 %v2715, 97
      %v3302 = vpop.permute.xlu0 %3301
      %3303 = vrot.lane.b32.xlu0 %v2716, 97
      %v3304 = vpop.permute.xlu0 %3303
      %3305 = vrot.lane.b32.xlu0 %v2717, 97
      %v3306 = vpop.permute.xlu0 %3305
      %3307 = vrot.lane.b32.xlu0 %v2718, 97
      %v3308 = vpop.permute.xlu0 %3307
      %3309 = vrot.lane.b32.xlu0 %v2719, 97
      %v3310 = vpop.permute.xlu0 %3309
      %3311 = vrot.lane.b32.xlu0 %v2720, 97
      %v3312 = vpop.permute.xlu0 %3311
      %3313 = vrot.lane.b32.xlu0 %v2721, 97
      %v3314 = vpop.permute.xlu0 %3313
      %v3315 = vsel %vm2139, %v3312, %v3314
      %v3316 = vsel %vm2139, %v3310, %v3312
      %v3317 = vsel %vm2139, %v3308, %v3310
      %v3318 = vsel %vm2139, %v3306, %v3308
      %v3319 = vsel %vm2139, %v3304, %v3306
      %v3320 = vsel %vm2139, %v3302, %v3304
      %v3321 = vsel %vm2139, %v3300, %v3302
      %v3322 = vsel %vm2139, %v3314, %v3300
      %v3323 = vmul.f32 %v3321, %v1457
      %v3324 = vmul.f32 %v3320, %v1458
      %v3325 = vmul.f32 %v3319, %v1459
      %v3326 = vmul.f32 %v3318, %v1460
      %v3327 = vmul.f32 %v3317, %v1461
      %v3328 = vmul.f32 %v3316, %v1462
      %v3329 = vmul.f32 %v3315, %v1463
      %v3330 = vmul.f32 %v3322, %v1464
      %3331 = vrot.lane.b32.xlu0 %v2714, 96
      %v3332 = vpop.permute.xlu0 %3331
      %3333 = vrot.lane.b32.xlu0 %v2715, 96
      %v3334 = vpop.permute.xlu0 %3333
      %3335 = vrot.lane.b32.xlu0 %v2716, 96
      %v3336 = vpop.permute.xlu0 %3335
      %3337 = vrot.lane.b32.xlu0 %v2717, 96
      %v3338 = vpop.permute.xlu0 %3337
      %3339 = vrot.lane.b32.xlu0 %v2718, 96
      %v3340 = vpop.permute.xlu0 %3339
      %3341 = vrot.lane.b32.xlu0 %v2719, 96
      %v3342 = vpop.permute.xlu0 %3341
      %3343 = vrot.lane.b32.xlu0 %v2720, 96
      %v3344 = vpop.permute.xlu0 %3343
      %3345 = vrot.lane.b32.xlu0 %v2721, 96
      %v3346 = vpop.permute.xlu0 %3345
      %v3347 = vsel %vm2172, %v3344, %v3346
      %v3348 = vsel %vm2172, %v3342, %v3344
      %v3349 = vsel %vm2172, %v3340, %v3342
      %v3350 = vsel %vm2172, %v3338, %v3340
      %v3351 = vsel %vm2172, %v3336, %v3338
      %v3352 = vsel %vm2172, %v3334, %v3336
      %v3353 = vsel %vm2172, %v3332, %v3334
      %v3354 = vsel %vm2172, %v3346, %v3332
      %v3355 = vmul.f32 %v3353, %v1473
      %v3356 = vmul.f32 %v3352, %v1474
      %v3357 = vmul.f32 %v3351, %v1475
      %v3358 = vmul.f32 %v3350, %v1476
      %v3359 = vmul.f32 %v3349, %v1477
      %v3360 = vmul.f32 %v3348, %v1478
      %v3361 = vmul.f32 %v3347, %v1479
      %v3362 = vmul.f32 %v3354, %v1480
      %3363 = vrot.lane.b32.xlu0 %v2714, 95
      %v3364 = vpop.permute.xlu0 %3363
      %3365 = vrot.lane.b32.xlu0 %v2715, 95
      %v3366 = vpop.permute.xlu0 %3365
      %3367 = vrot.lane.b32.xlu0 %v2716, 95
      %v3368 = vpop.permute.xlu0 %3367
      %3369 = vrot.lane.b32.xlu0 %v2717, 95
      %v3370 = vpop.permute.xlu0 %3369
      %3371 = vrot.lane.b32.xlu0 %v2718, 95
      %v3372 = vpop.permute.xlu0 %3371
      %3373 = vrot.lane.b32.xlu0 %v2719, 95
      %v3374 = vpop.permute.xlu0 %3373
      %3375 = vrot.lane.b32.xlu0 %v2720, 95
      %v3376 = vpop.permute.xlu0 %3375
      %3377 = vrot.lane.b32.xlu0 %v2721, 95
      %v3378 = vpop.permute.xlu0 %3377
      %v3379 = vsel %vm2205, %v3376, %v3378
      %v3380 = vsel %vm2205, %v3374, %v3376
      %v3381 = vsel %vm2205, %v3372, %v3374
      %v3382 = vsel %vm2205, %v3370, %v3372
      %v3383 = vsel %vm2205, %v3368, %v3370
      %v3384 = vsel %vm2205, %v3366, %v3368
      %v3385 = vsel %vm2205, %v3364, %v3366
      %v3386 = vsel %vm2205, %v3378, %v3364
      %v3387 = vmul.f32 %v3385, %v1497
      %v3388 = vmul.f32 %v3384, %v1498
      %v3389 = vmul.f32 %v3383, %v1499
      %v3390 = vmul.f32 %v3382, %v1500
      %v3391 = vmul.f32 %v3381, %v1501
      %v3392 = vmul.f32 %v3380, %v1502
      %v3393 = vmul.f32 %v3379, %v1503
      %v3394 = vmul.f32 %v3386, %v1504
      %v3395 = vpack.c.bf16 %v3355, %v3323
      %v3396 = vpack.c.bf16 %v3356, %v3324
      %v3397 = vpack.c.bf16 %v3357, %v3325
      %v3398 = vpack.c.bf16 %v3358, %v3326
      %v3399 = vpack.c.bf16 %v3359, %v3327
      %v3400 = vpack.c.bf16 %v3360, %v3328
      %v3401 = vpack.c.bf16 %v3361, %v3329
      %v3402 = vpack.c.bf16 %v3362, %v3330
      %v3403 = vpack.c.bf16 %v3387, %v3387
      %v3404 = vpack.c.bf16 %v3388, %v3388
      %v3405 = vpack.c.bf16 %v3389, %v3389
      %v3406 = vpack.c.bf16 %v3390, %v3390
      %v3407 = vpack.c.bf16 %v3391, %v3391
      %v3408 = vpack.c.bf16 %v3392, %v3392
      %v3409 = vpack.c.bf16 %v3393, %v3393
      %v3410 = vpack.c.bf16 %v3394, %v3394
      %s3411 = scalar_lea.vmem %s7, 8
      %v3412 = vld [vmem:[%s3411] sm:$0xf]
      %v3414 = vsel %vm1739, %v3412, 0
      %v3417 = vsel %vm1743, %v3403, 0
      %v3420 = vsel %vm1743, %v3404, 0
      %v3423 = vsel %vm1743, %v3405, 0
      %v3426 = vsel %vm1743, %v3406, 0
      %v3429 = vsel %vm1743, %v3407, 0
      %v3432 = vsel %vm1743, %v3408, 0
      %v3435 = vsel %vm1743, %v3409, 0
      %v3438 = vsel %vm1743, %v3410, 0
      %3440 = vmatprep.subr.bf16.mxu0 %v3396
      %3441 = vmatpush1.bf16.msra.mxu0 %v3395
      %3442 = vmatprep.subr.bf16.mxu0 %v3420
      %3443 = vmatpush1.bf16.msra.mxu0 %v3417
      %3444 = vmatprep.subr.bf16.mxu0 0
      %3445 = vmatpush1.bf16.msra.mxu0 0
      %3446 = vmatprep.subr.bf16.mxu0 0
      %3447 = vmatpush1.bf16.msra.mxu0 0
      %3448 = vmatprep.subr.bf16.mxu0 0
      %3449 = vmatpush1.bf16.msra.mxu0 0
      %3450 = vmatprep.subr.bf16.mxu0 0
      %3451 = vmatpush1.bf16.msra.mxu0 0
      %3452 = vmatprep.subr.bf16.mxu0 0
      %3453 = vmatpush1.bf16.msra.mxu0 0
      %3454 = vmatprep.subr.bf16.mxu0 0
      %3455 = vmatpush1.bf16.msra.mxu0 0
      %3456 = vmatprep.subr.bf16.mxu0 0
      %3457 = vmatpush1.bf16.msra.mxu0 0
      %3458 = vmatprep.subr.bf16.mxu0 0
      %3459 = vmatpush1.bf16.msra.mxu0 0
      %3460 = vmatprep.subr.bf16.mxu0 0
      %3461 = vmatpush1.bf16.msra.mxu0 0
      %3462 = vmatprep.subr.bf16.mxu0 0
      %3463 = vmatpush1.bf16.msra.mxu0 0
      %3464 = vmatprep.subr.bf16.mxu0 0
      %3465 = vmatpush1.bf16.msra.mxu0 0
      %3466 = vmatprep.subr.bf16.mxu0 0
      %3467 = vmatpush1.bf16.msra.mxu0 0
      %3468 = vmatprep.subr.bf16.mxu0 0
      %3469 = vmatpush1.bf16.msra.mxu0 0
      %3470 = vmatprep.subr.bf16.mxu0 0
      %3471 = vmatpush1.bf16.msra.mxu0 0
      %3472 = vmatprep.mubr.bf16.mxu0 0
      %3473 = vmatmul.mubr.bf16.gmra.mrb[0].mxu0 %v3414
      %v3474 = vpop.f32.mrb[0].mxu0
      %v3475 = vadd.f32 0.0, %v3474
      %v3476 = vpop.f32.mrb[0].mxu0
      %v3477 = vadd.f32 0.0, %v3476
      %v3478 = vpop.f32.mrb[0].mxu0
      %v3479 = vpop.f32.mrb[0].mxu0
      %3480 = vdwg.mxu0
      %3481 = vmatprep.subr.bf16.mxu0 %v3398
      %3482 = vmatpush1.bf16.msra.mxu0 %v3397
      %3483 = vmatprep.subr.bf16.mxu0 %v3426
      %3484 = vmatpush1.bf16.msra.mxu0 %v3423
      %3485 = vmatprep.subr.bf16.mxu0 0
      %3486 = vmatpush1.bf16.msra.mxu0 0
      %3487 = vmatprep.subr.bf16.mxu0 0
      %3488 = vmatpush1.bf16.msra.mxu0 0
      %3489 = vmatprep.subr.bf16.mxu0 0
      %3490 = vmatpush1.bf16.msra.mxu0 0
      %3491 = vmatprep.subr.bf16.mxu0 0
      %3492 = vmatpush1.bf16.msra.mxu0 0
      %3493 = vmatprep.subr.bf16.mxu0 0
      %3494 = vmatpush1.bf16.msra.mxu0 0
      %3495 = vmatprep.subr.bf16.mxu0 0
      %3496 = vmatpush1.bf16.msra.mxu0 0
      %3497 = vmatprep.subr.bf16.mxu0 0
      %3498 = vmatpush1.bf16.msra.mxu0 0
      %3499 = vmatprep.subr.bf16.mxu0 0
      %3500 = vmatpush1.bf16.msra.mxu0 0
      %3501 = vmatprep.subr.bf16.mxu0 0
      %3502 = vmatpush1.bf16.msra.mxu0 0
      %3503 = vmatprep.subr.bf16.mxu0 0
      %3504 = vmatpush1.bf16.msra.mxu0 0
      %3505 = vmatprep.subr.bf16.mxu0 0
      %3506 = vmatpush1.bf16.msra.mxu0 0
      %3507 = vmatprep.subr.bf16.mxu0 0
      %3508 = vmatpush1.bf16.msra.mxu0 0
      %3509 = vmatprep.subr.bf16.mxu0 0
      %3510 = vmatpush1.bf16.msra.mxu0 0
      %3511 = vmatprep.subr.bf16.mxu0 0
      %3512 = vmatpush1.bf16.msra.mxu0 0
      %3513 = vmatprep.mubr.bf16.mxu0 0
      %3514 = vmatmul.mubr.bf16.gmra.mrb[0].mxu0 %v3414
      %v3515 = vpop.f32.mrb[0].mxu0
      %v3516 = vadd.f32 0.0, %v3515
      %v3517 = vpop.f32.mrb[0].mxu0
      %v3518 = vadd.f32 0.0, %v3517
      %v3519 = vpop.f32.mrb[0].mxu0
      %v3520 = vpop.f32.mrb[0].mxu0
      %3521 = vdwg.mxu0
      %3522 = vmatprep.subr.bf16.mxu0 %v3400
      %3523 = vmatpush1.bf16.msra.mxu0 %v3399
      %3524 = vmatprep.subr.bf16.mxu0 %v3432
      %3525 = vmatpush1.bf16.msra.mxu0 %v3429
      %3526 = vmatprep.subr.bf16.mxu0 0
      %3527 = vmatpush1.bf16.msra.mxu0 0
      %3528 = vmatprep.subr.bf16.mxu0 0
      %3529 = vmatpush1.bf16.msra.mxu0 0
      %3530 = vmatprep.subr.bf16.mxu0 0
      %3531 = vmatpush1.bf16.msra.mxu0 0
      %3532 = vmatprep.subr.bf16.mxu0 0
      %3533 = vmatpush1.bf16.msra.mxu0 0
      %3534 = vmatprep.subr.bf16.mxu0 0
      %3535 = vmatpush1.bf16.msra.mxu0 0
      %3536 = vmatprep.subr.bf16.mxu0 0
      %3537 = vmatpush1.bf16.msra.mxu0 0
      %3538 = vmatprep.subr.bf16.mxu0 0
      %3539 = vmatpush1.bf16.msra.mxu0 0
      %3540 = vmatprep.subr.bf16.mxu0 0
      %3541 = vmatpush1.bf16.msra.mxu0 0
      %3542 = vmatprep.subr.bf16.mxu0 0
      %3543 = vmatpush1.bf16.msra.mxu0 0
      %3544 = vmatprep.subr.bf16.mxu0 0
      %3545 = vmatpush1.bf16.msra.mxu0 0
      %3546 = vmatprep.subr.bf16.mxu0 0
      %3547 = vmatpush1.bf16.msra.mxu0 0
      %3548 = vmatprep.subr.bf16.mxu0 0
      %3549 = vmatpush1.bf16.msra.mxu0 0
      %3550 = vmatprep.subr.bf16.mxu0 0
      %3551 = vmatpush1.bf16.msra.mxu0 0
      %3552 = vmatprep.subr.bf16.mxu0 0
      %3553 = vmatpush1.bf16.msra.mxu0 0
      %3554 = vmatprep.mubr.bf16.mxu0 0
      %3555 = vmatmul.mubr.bf16.gmra.mrb[0].mxu0 %v3414
      %v3556 = vpop.f32.mrb[0].mxu0
      %v3557 = vadd.f32 0.0, %v3556
      %v3558 = vpop.f32.mrb[0].mxu0
      %v3559 = vadd.f32 0.0, %v3558
      %v3560 = vpop.f32.mrb[0].mxu0
      %v3561 = vpop.f32.mrb[0].mxu0
      %3562 = vdwg.mxu0
      %3563 = vmatprep.subr.bf16.mxu0 %v3402
      %3564 = vmatpush1.bf16.msra.mxu0 %v3401
      %3565 = vmatprep.subr.bf16.mxu0 %v3438
      %3566 = vmatpush1.bf16.msra.mxu0 %v3435
      %3567 = vmatprep.subr.bf16.mxu0 0
      %3568 = vmatpush1.bf16.msra.mxu0 0
      %3569 = vmatprep.subr.bf16.mxu0 0
      %3570 = vmatpush1.bf16.msra.mxu0 0
      %3571 = vmatprep.subr.bf16.mxu0 0
      %3572 = vmatpush1.bf16.msra.mxu0 0
      %3573 = vmatprep.subr.bf16.mxu0 0
      %3574 = vmatpush1.bf16.msra.mxu0 0
      %3575 = vmatprep.subr.bf16.mxu0 0
      %3576 = vmatpush1.bf16.msra.mxu0 0
      %3577 = vmatprep.subr.bf16.mxu0 0
      %3578 = vmatpush1.bf16.msra.mxu0 0
      %3579 = vmatprep.subr.bf16.mxu0 0
      %3580 = vmatpush1.bf16.msra.mxu0 0
      %3581 = vmatprep.subr.bf16.mxu0 0
      %3582 = vmatpush1.bf16.msra.mxu0 0
      %3583 = vmatprep.subr.bf16.mxu0 0
      %3584 = vmatpush1.bf16.msra.mxu0 0
      %3585 = vmatprep.subr.bf16.mxu0 0
      %3586 = vmatpush1.bf16.msra.mxu0 0
      %3587 = vmatprep.subr.bf16.mxu0 0
      %3588 = vmatpush1.bf16.msra.mxu0 0
      %3589 = vmatprep.subr.bf16.mxu0 0
      %3590 = vmatpush1.bf16.msra.mxu0 0
      %3591 = vmatprep.subr.bf16.mxu0 0
      %3592 = vmatpush1.bf16.msra.mxu0 0
      %3593 = vmatprep.subr.bf16.mxu0 0
      %3594 = vmatpush1.bf16.msra.mxu0 0
      %3595 = vmatprep.mubr.bf16.mxu0 0
      %3596 = vmatmul.mubr.bf16.gmra.mrb[0].mxu0 %v3414
      %v3597 = vpop.f32.mrb[0].mxu0
      %v3598 = vadd.f32 0.0, %v3597
      %v3599 = vpop.f32.mrb[0].mxu0
      %v3600 = vadd.f32 0.0, %v3599
      %v3601 = vpop.f32.mrb[0].mxu0
      %v3602 = vpop.f32.mrb[0].mxu0
      %3603 = vdwg.mxu0
      %v3604 = vadd.f32 %v3170, %v3475
      %v3605 = vadd.f32 %v3172, %v3477
      %v3606 = vadd.f32 %v3211, %v3516
      %v3607 = vadd.f32 %v3213, %v3518
      %v3608 = vadd.f32 %v3252, %v3557
      %v3609 = vadd.f32 %v3254, %v3559
      %v3610 = vadd.f32 %v3293, %v3598
      %v3611 = vadd.f32 %v3295, %v3600
      %3612 = vset.pattern.permute.xlu0 7
      %3613 = vperm.xlu0 %3612, %v1505
      %v3614 = vpop.permute.xlu0 %3613
      %v3616 = vadd.f32 %v3604, %v3614
      %v3617 = vadd.f32 %v3605, %v3614
      %v3618 = vadd.f32 %v3606, %v3614
      %v3619 = vadd.f32 %v3607, %v3614
      %v3620 = vadd.f32 %v3608, %v3614
      %v3621 = vadd.f32 %v3609, %v3614
      %v3622 = vadd.f32 %v3610, %v3614
      %v3623 = vadd.f32 %v3611, %v3614
      %v3624 = vadd.f32 %v2559, %v3616
      %v3625 = vadd.f32 %v2561, %v3617
      %v3626 = vadd.f32 %v2600, %v3618
      %v3627 = vadd.f32 %v2602, %v3619
      %v3628 = vadd.f32 %v2641, %v3620
      %v3629 = vadd.f32 %v2643, %v3621
      %v3630 = vadd.f32 %v2682, %v3622
      %v3631 = vadd.f32 %v2684, %v3623
      %3632 = vset.pattern.permute.xlu0 8
      %3633 = vperm.xlu0 %3632, %v1505
      %v3634 = vpop.permute.xlu0 %3633
      %v3636 = vmul.f32 %v3624, %v3634
      %v3637 = vmul.f32 %v3625, %v3634
      %v3638 = vmul.f32 %v3626, %v3634
      %v3639 = vmul.f32 %v3627, %v3634
      %v3640 = vmul.f32 %v3628, %v3634
      %v3641 = vmul.f32 %v3629, %v3634
      %v3642 = vmul.f32 %v3630, %v3634
      %v3643 = vmul.f32 %v3631, %v3634
      %3644 = vset.pattern.permute.xlu0 1
      %3645 = vperm.xlu0 %3644, %v2688
      %v3646 = vpop.permute.xlu0 %3645
      %v3648 = vadd.f32 %v3636, %v3646
      %v3649 = vadd.f32 %v3637, %v3646
      %v3650 = vadd.f32 %v3638, %v3646
      %v3651 = vadd.f32 %v3639, %v3646
      %v3652 = vadd.f32 %v3640, %v3646
      %v3653 = vadd.f32 %v3641, %v3646
      %v3654 = vadd.f32 %v3642, %v3646
      %v3655 = vadd.f32 %v3643, %v3646
      %v3656 = vmax.f32 %v3648, 0.0
      %v3657 = vmax.f32 %v3649, 0.0
      %v3658 = vmax.f32 %v3650, 0.0
      %v3659 = vmax.f32 %v3651, 0.0
      %v3660 = vmax.f32 %v3652, 0.0
      %v3661 = vmax.f32 %v3653, 0.0
      %v3662 = vmax.f32 %v3654, 0.0
      %v3663 = vmax.f32 %v3655, 0.0
      %3664 = vrot.lane.b32.xlu0 %v3656, 33
      %v3665 = vpop.permute.xlu0 %3664
      %3666 = vrot.lane.b32.xlu0 %v3657, 33
      %v3667 = vpop.permute.xlu0 %3666
      %3668 = vrot.lane.b32.xlu0 %v3658, 33
      %v3669 = vpop.permute.xlu0 %3668
      %3670 = vrot.lane.b32.xlu0 %v3659, 33
      %v3671 = vpop.permute.xlu0 %3670
      %3672 = vrot.lane.b32.xlu0 %v3660, 33
      %v3673 = vpop.permute.xlu0 %3672
      %3674 = vrot.lane.b32.xlu0 %v3661, 33
      %v3675 = vpop.permute.xlu0 %3674
      %3676 = vrot.lane.b32.xlu0 %v3662, 33
      %v3677 = vpop.permute.xlu0 %3676
      %3678 = vrot.lane.b32.xlu0 %v3663, 33
      %v3679 = vpop.permute.xlu0 %3678
      %v3680 = vsel %vm1555, %v3677, %v3679
      %v3681 = vsel %vm1555, %v3675, %v3677
      %v3682 = vsel %vm1555, %v3673, %v3675
      %v3683 = vsel %vm1555, %v3671, %v3673
      %v3684 = vsel %vm1555, %v3669, %v3671
      %v3685 = vsel %vm1555, %v3667, %v3669
      %v3686 = vsel %vm1555, %v3665, %v3667
      %v3687 = vsel %vm1555, %v3679, %v3665
      %v3688 = vmul.f32 %v3687, %v1361
      %v3689 = vmul.f32 %v3686, %v1362
      %v3690 = vmul.f32 %v3685, %v1363
      %v3691 = vmul.f32 %v3684, %v1364
      %v3692 = vmul.f32 %v3683, %v1365
      %v3693 = vmul.f32 %v3682, %v1366
      %v3694 = vmul.f32 %v3681, %v1367
      %v3695 = vmul.f32 %v3680, %v1368
      %3696 = vrot.lane.b32.xlu0 %v3656, 32
      %v3697 = vpop.permute.xlu0 %3696
      %3698 = vrot.lane.b32.xlu0 %v3657, 32
      %v3699 = vpop.permute.xlu0 %3698
      %3700 = vrot.lane.b32.xlu0 %v3658, 32
      %v3701 = vpop.permute.xlu0 %3700
      %3702 = vrot.lane.b32.xlu0 %v3659, 32
      %v3703 = vpop.permute.xlu0 %3702
      %3704 = vrot.lane.b32.xlu0 %v3660, 32
      %v3705 = vpop.permute.xlu0 %3704
      %3706 = vrot.lane.b32.xlu0 %v3661, 32
      %v3707 = vpop.permute.xlu0 %3706
      %3708 = vrot.lane.b32.xlu0 %v3662, 32
      %v3709 = vpop.permute.xlu0 %3708
      %3710 = vrot.lane.b32.xlu0 %v3663, 32
      %v3711 = vpop.permute.xlu0 %3710
      %v3712 = vsel %vm1588, %v3709, %v3711
      %v3713 = vsel %vm1588, %v3707, %v3709
      %v3714 = vsel %vm1588, %v3705, %v3707
      %v3715 = vsel %vm1588, %v3703, %v3705
      %v3716 = vsel %vm1588, %v3701, %v3703
      %v3717 = vsel %vm1588, %v3699, %v3701
      %v3718 = vsel %vm1588, %v3697, %v3699
      %v3719 = vsel %vm1588, %v3711, %v3697
      %v3720 = vmul.f32 %v3719, %v1377
      %v3721 = vmul.f32 %v3718, %v1378
      %v3722 = vmul.f32 %v3717, %v1379
      %v3723 = vmul.f32 %v3716, %v1380
      %v3724 = vmul.f32 %v3715, %v1381
      %v3725 = vmul.f32 %v3714, %v1382
      %v3726 = vmul.f32 %v3713, %v1383
      %v3727 = vmul.f32 %v3712, %v1384
      %3728 = vrot.lane.b32.xlu0 %v3656, 31
      %v3729 = vpop.permute.xlu0 %3728
      %3730 = vrot.lane.b32.xlu0 %v3657, 31
      %v3731 = vpop.permute.xlu0 %3730
      %3732 = vrot.lane.b32.xlu0 %v3658, 31
      %v3733 = vpop.permute.xlu0 %3732
      %3734 = vrot.lane.b32.xlu0 %v3659, 31
      %v3735 = vpop.permute.xlu0 %3734
      %3736 = vrot.lane.b32.xlu0 %v3660, 31
      %v3737 = vpop.permute.xlu0 %3736
      %3738 = vrot.lane.b32.xlu0 %v3661, 31
      %v3739 = vpop.permute.xlu0 %3738
      %3740 = vrot.lane.b32.xlu0 %v3662, 31
      %v3741 = vpop.permute.xlu0 %3740
      %3742 = vrot.lane.b32.xlu0 %v3663, 31
      %v3743 = vpop.permute.xlu0 %3742
      %v3744 = vsel %vm1621, %v3741, %v3743
      %v3745 = vsel %vm1621, %v3739, %v3741
      %v3746 = vsel %vm1621, %v3737, %v3739
      %v3747 = vsel %vm1621, %v3735, %v3737
      %v3748 = vsel %vm1621, %v3733, %v3735
      %v3749 = vsel %vm1621, %v3731, %v3733
      %v3750 = vsel %vm1621, %v3729, %v3731
      %v3751 = vsel %vm1621, %v3743, %v3729
      %v3752 = vmul.f32 %v3751, %v1401
      %v3753 = vmul.f32 %v3750, %v1402
      %v3754 = vmul.f32 %v3749, %v1403
      %v3755 = vmul.f32 %v3748, %v1404
      %v3756 = vmul.f32 %v3747, %v1405
      %v3757 = vmul.f32 %v3746, %v1406
      %v3758 = vmul.f32 %v3745, %v1407
      %v3759 = vmul.f32 %v3744, %v1408
      %v3760 = vpack.c.bf16 %v3720, %v3688
      %v3761 = vpack.c.bf16 %v3721, %v3689
      %v3762 = vpack.c.bf16 %v3722, %v3690
      %v3763 = vpack.c.bf16 %v3723, %v3691
      %v3764 = vpack.c.bf16 %v3724, %v3692
      %v3765 = vpack.c.bf16 %v3725, %v3693
      %v3766 = vpack.c.bf16 %v3726, %v3694
      %v3767 = vpack.c.bf16 %v3727, %v3695
      %v3768 = vpack.c.bf16 %v3752, %v3752
      %v3769 = vpack.c.bf16 %v3753, %v3753
      %v3770 = vpack.c.bf16 %v3754, %v3754
      %v3771 = vpack.c.bf16 %v3755, %v3755
      %v3772 = vpack.c.bf16 %v3756, %v3756
      %v3773 = vpack.c.bf16 %v3757, %v3757
      %v3774 = vpack.c.bf16 %v3758, %v3758
      %v3775 = vpack.c.bf16 %v3759, %v3759
      %s3776 = scalar_lea.vmem %s7, 12
      %v3777 = vld [vmem:[%s3776] sm:$0xf]
      %3778 = vrot.lane.b32.xlu0 %v3656, 1
      %v3779 = vpop.permute.xlu0 %3778
      %3780 = vrot.lane.b32.xlu0 %v3657, 1
      %v3781 = vpop.permute.xlu0 %3780
      %3782 = vrot.lane.b32.xlu0 %v3658, 1
      %v3783 = vpop.permute.xlu0 %3782
      %3784 = vrot.lane.b32.xlu0 %v3659, 1
      %v3785 = vpop.permute.xlu0 %3784
      %3786 = vrot.lane.b32.xlu0 %v3660, 1
      %v3787 = vpop.permute.xlu0 %3786
      %3788 = vrot.lane.b32.xlu0 %v3661, 1
      %v3789 = vpop.permute.xlu0 %3788
      %3790 = vrot.lane.b32.xlu0 %v3662, 1
      %v3791 = vpop.permute.xlu0 %3790
      %3792 = vrot.lane.b32.xlu0 %v3663, 1
      %v3793 = vpop.permute.xlu0 %3792
      %v3794 = vsel %vm1671, %v3791, %v3793
      %v3795 = vsel %vm1671, %v3789, %v3791
      %v3796 = vsel %vm1671, %v3787, %v3789
      %v3797 = vsel %vm1671, %v3785, %v3787
      %v3798 = vsel %vm1671, %v3783, %v3785
      %v3799 = vsel %vm1671, %v3781, %v3783
      %v3800 = vsel %vm1671, %v3779, %v3781
      %v3801 = vsel %vm1671, %v3793, %v3779
      %v3802 = vmul.f32 %v3801, %v1417
      %v3803 = vmul.f32 %v3800, %v1418
      %v3804 = vmul.f32 %v3799, %v1419
      %v3805 = vmul.f32 %v3798, %v1420
      %v3806 = vmul.f32 %v3797, %v1421
      %v3807 = vmul.f32 %v3796, %v1422
      %v3808 = vmul.f32 %v3795, %v1423
      %v3809 = vmul.f32 %v3794, %v1424
      %3810 = vrot.lane.b32.xlu0 %v3656, 127
      %v3811 = vpop.permute.xlu0 %3810
      %3812 = vrot.lane.b32.xlu0 %v3657, 127
      %v3813 = vpop.permute.xlu0 %3812
      %3814 = vrot.lane.b32.xlu0 %v3658, 127
      %v3815 = vpop.permute.xlu0 %3814
      %3816 = vrot.lane.b32.xlu0 %v3659, 127
      %v3817 = vpop.permute.xlu0 %3816
      %3818 = vrot.lane.b32.xlu0 %v3660, 127
      %v3819 = vpop.permute.xlu0 %3818
      %3820 = vrot.lane.b32.xlu0 %v3661, 127
      %v3821 = vpop.permute.xlu0 %3820
      %3822 = vrot.lane.b32.xlu0 %v3662, 127
      %v3823 = vpop.permute.xlu0 %3822
      %3824 = vrot.lane.b32.xlu0 %v3663, 127
      %v3825 = vpop.permute.xlu0 %3824
      %v3826 = vsel %vm1704, %v3823, %v3825
      %v3827 = vsel %vm1704, %v3821, %v3823
      %v3828 = vsel %vm1704, %v3819, %v3821
      %v3829 = vsel %vm1704, %v3817, %v3819
      %v3830 = vsel %vm1704, %v3815, %v3817
      %v3831 = vsel %vm1704, %v3813, %v3815
      %v3832 = vsel %vm1704, %v3811, %v3813
      %v3833 = vsel %vm1704, %v3825, %v3811
      %v3834 = vmul.f32 %v3832, %v1433
      %v3835 = vmul.f32 %v3831, %v1434
      %v3836 = vmul.f32 %v3830, %v1435
      %v3837 = vmul.f32 %v3829, %v1436
      %v3838 = vmul.f32 %v3828, %v1437
      %v3839 = vmul.f32 %v3827, %v1438
      %v3840 = vmul.f32 %v3826, %v1439
      %v3841 = vmul.f32 %v3833, %v1440
      %v3842 = vpack.c.bf16 %v3656, %v3802
      %v3843 = vpack.c.bf16 %v3657, %v3803
      %v3844 = vpack.c.bf16 %v3658, %v3804
      %v3845 = vpack.c.bf16 %v3659, %v3805
      %v3846 = vpack.c.bf16 %v3660, %v3806
      %v3847 = vpack.c.bf16 %v3661, %v3807
      %v3848 = vpack.c.bf16 %v3662, %v3808
      %v3849 = vpack.c.bf16 %v3663, %v3809
      %v3850 = vpack.c.bf16 %v3834, %v3834
      %v3851 = vpack.c.bf16 %v3835, %v3835
      %v3852 = vpack.c.bf16 %v3836, %v3836
      %v3853 = vpack.c.bf16 %v3837, %v3837
      %v3854 = vpack.c.bf16 %v3838, %v3838
      %v3855 = vpack.c.bf16 %v3839, %v3839
      %v3856 = vpack.c.bf16 %v3840, %v3840
      %v3857 = vpack.c.bf16 %v3841, %v3841
      %s3858 = scalar_lea.vmem %s7, 16
      %v3859 = vld [vmem:[%s3858] sm:$0xf]
      %v3861 = vsel %vm1739, %v3859, 0
      %v3864 = vsel %vm1743, %v3850, 0
      %v3867 = vsel %vm1743, %v3851, 0
      %v3870 = vsel %vm1743, %v3852, 0
      %v3873 = vsel %vm1743, %v3853, 0
      %v3876 = vsel %vm1743, %v3854, 0
      %v3879 = vsel %vm1743, %v3855, 0
      %v3882 = vsel %vm1743, %v3856, 0
      %v3885 = vsel %vm1743, %v3857, 0
      %3887 = vmatprep.subr.bf16.mxu0 %v3843
      %3888 = vmatpush1.bf16.msra.mxu0 %v3842
      %3889 = vmatprep.subr.bf16.mxu0 %v3867
      %3890 = vmatpush1.bf16.msra.mxu0 %v3864
      %3891 = vmatprep.subr.bf16.mxu0 0
      %3892 = vmatpush1.bf16.msra.mxu0 0
      %3893 = vmatprep.subr.bf16.mxu0 0
      %3894 = vmatpush1.bf16.msra.mxu0 0
      %3895 = vmatprep.subr.bf16.mxu0 0
      %3896 = vmatpush1.bf16.msra.mxu0 0
      %3897 = vmatprep.subr.bf16.mxu0 0
      %3898 = vmatpush1.bf16.msra.mxu0 0
      %3899 = vmatprep.subr.bf16.mxu0 0
      %3900 = vmatpush1.bf16.msra.mxu0 0
      %3901 = vmatprep.subr.bf16.mxu0 0
      %3902 = vmatpush1.bf16.msra.mxu0 0
      %3903 = vmatprep.subr.bf16.mxu0 0
      %3904 = vmatpush1.bf16.msra.mxu0 0
      %3905 = vmatprep.subr.bf16.mxu0 0
      %3906 = vmatpush1.bf16.msra.mxu0 0
      %3907 = vmatprep.subr.bf16.mxu0 0
      %3908 = vmatpush1.bf16.msra.mxu0 0
      %3909 = vmatprep.subr.bf16.mxu0 0
      %3910 = vmatpush1.bf16.msra.mxu0 0
      %3911 = vmatprep.subr.bf16.mxu0 0
      %3912 = vmatpush1.bf16.msra.mxu0 0
      %3913 = vmatprep.subr.bf16.mxu0 0
      %3914 = vmatpush1.bf16.msra.mxu0 0
      %3915 = vmatprep.subr.bf16.mxu0 0
      %3916 = vmatpush1.bf16.msra.mxu0 0
      %3917 = vmatprep.subr.bf16.mxu0 0
      %3918 = vmatpush1.bf16.msra.mxu0 0
      %3919 = vmatprep.mubr.bf16.mxu0 0
      %3920 = vmatmul.mubr.bf16.gmra.mrb[0].mxu0 %v3861
      %v3921 = vpop.f32.mrb[0].mxu0
      %v3922 = vadd.f32 0.0, %v3921
      %v3923 = vpop.f32.mrb[0].mxu0
      %v3924 = vadd.f32 0.0, %v3923
      %v3925 = vpop.f32.mrb[0].mxu0
      %v3926 = vpop.f32.mrb[0].mxu0
      %3927 = vdwg.mxu0
      %3928 = vmatprep.subr.bf16.mxu0 %v3845
      %3929 = vmatpush1.bf16.msra.mxu0 %v3844
      %3930 = vmatprep.subr.bf16.mxu0 %v3873
      %3931 = vmatpush1.bf16.msra.mxu0 %v3870
      %3932 = vmatprep.subr.bf16.mxu0 0
      %3933 = vmatpush1.bf16.msra.mxu0 0
      %3934 = vmatprep.subr.bf16.mxu0 0
      %3935 = vmatpush1.bf16.msra.mxu0 0
      %3936 = vmatprep.subr.bf16.mxu0 0
      %3937 = vmatpush1.bf16.msra.mxu0 0
      %3938 = vmatprep.subr.bf16.mxu0 0
      %3939 = vmatpush1.bf16.msra.mxu0 0
      %3940 = vmatprep.subr.bf16.mxu0 0
      %3941 = vmatpush1.bf16.msra.mxu0 0
      %3942 = vmatprep.subr.bf16.mxu0 0
      %3943 = vmatpush1.bf16.msra.mxu0 0
      %3944 = vmatprep.subr.bf16.mxu0 0
      %3945 = vmatpush1.bf16.msra.mxu0 0
      %3946 = vmatprep.subr.bf16.mxu0 0
      %3947 = vmatpush1.bf16.msra.mxu0 0
      %3948 = vmatprep.subr.bf16.mxu0 0
      %3949 = vmatpush1.bf16.msra.mxu0 0
      %3950 = vmatprep.subr.bf16.mxu0 0
      %3951 = vmatpush1.bf16.msra.mxu0 0
      %3952 = vmatprep.subr.bf16.mxu0 0
      %3953 = vmatpush1.bf16.msra.mxu0 0
      %3954 = vmatprep.subr.bf16.mxu0 0
      %3955 = vmatpush1.bf16.msra.mxu0 0
      %3956 = vmatprep.subr.bf16.mxu0 0
      %3957 = vmatpush1.bf16.msra.mxu0 0
      %3958 = vmatprep.subr.bf16.mxu0 0
      %3959 = vmatpush1.bf16.msra.mxu0 0
      %3960 = vmatprep.mubr.bf16.mxu0 0
      %3961 = vmatmul.mubr.bf16.gmra.mrb[0].mxu0 %v3861
      %v3962 = vpop.f32.mrb[0].mxu0
      %v3963 = vadd.f32 0.0, %v3962
      %v3964 = vpop.f32.mrb[0].mxu0
      %v3965 = vadd.f32 0.0, %v3964
      %v3966 = vpop.f32.mrb[0].mxu0
      %v3967 = vpop.f32.mrb[0].mxu0
      %3968 = vdwg.mxu0
      %3969 = vmatprep.subr.bf16.mxu0 %v3847
      %3970 = vmatpush1.bf16.msra.mxu0 %v3846
      %3971 = vmatprep.subr.bf16.mxu0 %v3879
      %3972 = vmatpush1.bf16.msra.mxu0 %v3876
      %3973 = vmatprep.subr.bf16.mxu0 0
      %3974 = vmatpush1.bf16.msra.mxu0 0
      %3975 = vmatprep.subr.bf16.mxu0 0
      %3976 = vmatpush1.bf16.msra.mxu0 0
      %3977 = vmatprep.subr.bf16.mxu0 0
      %3978 = vmatpush1.bf16.msra.mxu0 0
      %3979 = vmatprep.subr.bf16.mxu0 0
      %3980 = vmatpush1.bf16.msra.mxu0 0
      %3981 = vmatprep.subr.bf16.mxu0 0
      %3982 = vmatpush1.bf16.msra.mxu0 0
      %3983 = vmatprep.subr.bf16.mxu0 0
      %3984 = vmatpush1.bf16.msra.mxu0 0
      %3985 = vmatprep.subr.bf16.mxu0 0
      %3986 = vmatpush1.bf16.msra.mxu0 0
      %3987 = vmatprep.subr.bf16.mxu0 0
      %3988 = vmatpush1.bf16.msra.mxu0 0
      %3989 = vmatprep.subr.bf16.mxu0 0
      %3990 = vmatpush1.bf16.msra.mxu0 0
      %3991 = vmatprep.subr.bf16.mxu0 0
      %3992 = vmatpush1.bf16.msra.mxu0 0
      %3993 = vmatprep.subr.bf16.mxu0 0
      %3994 = vmatpush1.bf16.msra.mxu0 0
      %3995 = vmatprep.subr.bf16.mxu0 0
      %3996 = vmatpush1.bf16.msra.mxu0 0
      %3997 = vmatprep.subr.bf16.mxu0 0
      %3998 = vmatpush1.bf16.msra.mxu0 0
      %3999 = vmatprep.subr.bf16.mxu0 0
      %4000 = vmatpush1.bf16.msra.mxu0 0
      %4001 = vmatprep.mubr.bf16.mxu0 0
      %4002 = vmatmul.mubr.bf16.gmra.mrb[0].mxu0 %v3861
      %v4003 = vpop.f32.mrb[0].mxu0
      %v4004 = vadd.f32 0.0, %v4003
      %v4005 = vpop.f32.mrb[0].mxu0
      %v4006 = vadd.f32 0.0, %v4005
      %v4007 = vpop.f32.mrb[0].mxu0
      %v4008 = vpop.f32.mrb[0].mxu0
      %4009 = vdwg.mxu0
      %4010 = vmatprep.subr.bf16.mxu0 %v3849
      %4011 = vmatpush1.bf16.msra.mxu0 %v3848
      %4012 = vmatprep.subr.bf16.mxu0 %v3885
      %4013 = vmatpush1.bf16.msra.mxu0 %v3882
      %4014 = vmatprep.subr.bf16.mxu0 0
      %4015 = vmatpush1.bf16.msra.mxu0 0
      %4016 = vmatprep.subr.bf16.mxu0 0
      %4017 = vmatpush1.bf16.msra.mxu0 0
      %4018 = vmatprep.subr.bf16.mxu0 0
      %4019 = vmatpush1.bf16.msra.mxu0 0
      %4020 = vmatprep.subr.bf16.mxu0 0
      %4021 = vmatpush1.bf16.msra.mxu0 0
      %4022 = vmatprep.subr.bf16.mxu0 0
      %4023 = vmatpush1.bf16.msra.mxu0 0
      %4024 = vmatprep.subr.bf16.mxu0 0
      %4025 = vmatpush1.bf16.msra.mxu0 0
      %4026 = vmatprep.subr.bf16.mxu0 0
      %4027 = vmatpush1.bf16.msra.mxu0 0
      %4028 = vmatprep.subr.bf16.mxu0 0
      %4029 = vmatpush1.bf16.msra.mxu0 0
      %4030 = vmatprep.subr.bf16.mxu0 0
      %4031 = vmatpush1.bf16.msra.mxu0 0
      %4032 = vmatprep.subr.bf16.mxu0 0
      %4033 = vmatpush1.bf16.msra.mxu0 0
      %4034 = vmatprep.subr.bf16.mxu0 0
      %4035 = vmatpush1.bf16.msra.mxu0 0
      %4036 = vmatprep.subr.bf16.mxu0 0
      %4037 = vmatpush1.bf16.msra.mxu0 0
      %4038 = vmatprep.subr.bf16.mxu0 0
      %4039 = vmatpush1.bf16.msra.mxu0 0
      %4040 = vmatprep.subr.bf16.mxu0 0
      %4041 = vmatpush1.bf16.msra.mxu0 0
      %4042 = vmatprep.mubr.bf16.mxu0 0
      %4043 = vmatmul.mubr.bf16.gmra.mrb[0].mxu0 %v3861
      %v4044 = vpop.f32.mrb[0].mxu0
      %v4045 = vadd.f32 0.0, %v4044
      %v4046 = vpop.f32.mrb[0].mxu0
      %v4047 = vadd.f32 0.0, %v4046
      %v4048 = vpop.f32.mrb[0].mxu0
      %v4049 = vpop.f32.mrb[0].mxu0
      %4050 = vdwg.mxu0
      %v4052 = vsel %vm1739, %v3777, 0
      %v4055 = vsel %vm1743, %v3768, 0
      %v4058 = vsel %vm1743, %v3769, 0
      %v4061 = vsel %vm1743, %v3770, 0
      %v4064 = vsel %vm1743, %v3771, 0
      %v4067 = vsel %vm1743, %v3772, 0
      %v4070 = vsel %vm1743, %v3773, 0
      %v4073 = vsel %vm1743, %v3774, 0
      %v4076 = vsel %vm1743, %v3775, 0
      %4078 = vmatprep.subr.bf16.mxu0 %v3761
      %4079 = vmatpush1.bf16.msra.mxu0 %v3760
      %4080 = vmatprep.subr.bf16.mxu0 %v4058
      %4081 = vmatpush1.bf16.msra.mxu0 %v4055
      %4082 = vmatprep.subr.bf16.mxu0 0
      %4083 = vmatpush1.bf16.msra.mxu0 0
      %4084 = vmatprep.subr.bf16.mxu0 0
      %4085 = vmatpush1.bf16.msra.mxu0 0
      %4086 = vmatprep.subr.bf16.mxu0 0
      %4087 = vmatpush1.bf16.msra.mxu0 0
      %4088 = vmatprep.subr.bf16.mxu0 0
      %4089 = vmatpush1.bf16.msra.mxu0 0
      %4090 = vmatprep.subr.bf16.mxu0 0
      %4091 = vmatpush1.bf16.msra.mxu0 0
      %4092 = vmatprep.subr.bf16.mxu0 0
      %4093 = vmatpush1.bf16.msra.mxu0 0
      %4094 = vmatprep.subr.bf16.mxu0 0
      %4095 = vmatpush1.bf16.msra.mxu0 0
      %4096 = vmatprep.subr.bf16.mxu0 0
      %4097 = vmatpush1.bf16.msra.mxu0 0
      %4098 = vmatprep.subr.bf16.mxu0 0
      %4099 = vmatpush1.bf16.msra.mxu0 0
      %4100 = vmatprep.subr.bf16.mxu0 0
      %4101 = vmatpush1.bf16.msra.mxu0 0
      %4102 = vmatprep.subr.bf16.mxu0 0
      %4103 = vmatpush1.bf16.msra.mxu0 0
      %4104 = vmatprep.subr.bf16.mxu0 0
      %4105 = vmatpush1.bf16.msra.mxu0 0
      %4106 = vmatprep.subr.bf16.mxu0 0
      %4107 = vmatpush1.bf16.msra.mxu0 0
      %4108 = vmatprep.subr.bf16.mxu0 0
      %4109 = vmatpush1.bf16.msra.mxu0 0
      %4110 = vmatprep.mubr.bf16.mxu0 0
      %4111 = vmatmul.mubr.bf16.gmra.mrb[0].mxu0 %v4052
      %v4112 = vpop.f32.mrb[0].mxu0
      %v4113 = vadd.f32 %v3922, %v4112
      %v4114 = vpop.f32.mrb[0].mxu0
      %v4115 = vadd.f32 %v3924, %v4114
      %v4116 = vpop.f32.mrb[0].mxu0
      %v4117 = vpop.f32.mrb[0].mxu0
      %4118 = vdwg.mxu0
      %4119 = vmatprep.subr.bf16.mxu0 %v3763
      %4120 = vmatpush1.bf16.msra.mxu0 %v3762
      %4121 = vmatprep.subr.bf16.mxu0 %v4064
      %4122 = vmatpush1.bf16.msra.mxu0 %v4061
      %4123 = vmatprep.subr.bf16.mxu0 0
      %4124 = vmatpush1.bf16.msra.mxu0 0
      %4125 = vmatprep.subr.bf16.mxu0 0
      %4126 = vmatpush1.bf16.msra.mxu0 0
      %4127 = vmatprep.subr.bf16.mxu0 0
      %4128 = vmatpush1.bf16.msra.mxu0 0
      %4129 = vmatprep.subr.bf16.mxu0 0
      %4130 = vmatpush1.bf16.msra.mxu0 0
      %4131 = vmatprep.subr.bf16.mxu0 0
      %4132 = vmatpush1.bf16.msra.mxu0 0
      %4133 = vmatprep.subr.bf16.mxu0 0
      %4134 = vmatpush1.bf16.msra.mxu0 0
      %4135 = vmatprep.subr.bf16.mxu0 0
      %4136 = vmatpush1.bf16.msra.mxu0 0
      %4137 = vmatprep.subr.bf16.mxu0 0
      %4138 = vmatpush1.bf16.msra.mxu0 0
      %4139 = vmatprep.subr.bf16.mxu0 0
      %4140 = vmatpush1.bf16.msra.mxu0 0
      %4141 = vmatprep.subr.bf16.mxu0 0
      %4142 = vmatpush1.bf16.msra.mxu0 0
      %4143 = vmatprep.subr.bf16.mxu0 0
      %4144 = vmatpush1.bf16.msra.mxu0 0
      %4145 = vmatprep.subr.bf16.mxu0 0
      %4146 = vmatpush1.bf16.msra.mxu0 0
      %4147 = vmatprep.subr.bf16.mxu0 0
      %4148 = vmatpush1.bf16.msra.mxu0 0
      %4149 = vmatprep.subr.bf16.mxu0 0
      %4150 = vmatpush1.bf16.msra.mxu0 0
      %4151 = vmatprep.mubr.bf16.mxu0 0
      %4152 = vmatmul.mubr.bf16.gmra.mrb[0].mxu0 %v4052
      %v4153 = vpop.f32.mrb[0].mxu0
      %v4154 = vadd.f32 %v3963, %v4153
      %v4155 = vpop.f32.mrb[0].mxu0
      %v4156 = vadd.f32 %v3965, %v4155
      %v4157 = vpop.f32.mrb[0].mxu0
      %v4158 = vpop.f32.mrb[0].mxu0
      %4159 = vdwg.mxu0
      %4160 = vmatprep.subr.bf16.mxu0 %v3765
      %4161 = vmatpush1.bf16.msra.mxu0 %v3764
      %4162 = vmatprep.subr.bf16.mxu0 %v4070
      %4163 = vmatpush1.bf16.msra.mxu0 %v4067
      %4164 = vmatprep.subr.bf16.mxu0 0
      %4165 = vmatpush1.bf16.msra.mxu0 0
      %4166 = vmatprep.subr.bf16.mxu0 0
      %4167 = vmatpush1.bf16.msra.mxu0 0
      %4168 = vmatprep.subr.bf16.mxu0 0
      %4169 = vmatpush1.bf16.msra.mxu0 0
      %4170 = vmatprep.subr.bf16.mxu0 0
      %4171 = vmatpush1.bf16.msra.mxu0 0
      %4172 = vmatprep.subr.bf16.mxu0 0
      %4173 = vmatpush1.bf16.msra.mxu0 0
      %4174 = vmatprep.subr.bf16.mxu0 0
      %4175 = vmatpush1.bf16.msra.mxu0 0
      %4176 = vmatprep.subr.bf16.mxu0 0
      %4177 = vmatpush1.bf16.msra.mxu0 0
      %4178 = vmatprep.subr.bf16.mxu0 0
      %4179 = vmatpush1.bf16.msra.mxu0 0
      %4180 = vmatprep.subr.bf16.mxu0 0
      %4181 = vmatpush1.bf16.msra.mxu0 0
      %4182 = vmatprep.subr.bf16.mxu0 0
      %4183 = vmatpush1.bf16.msra.mxu0 0
      %4184 = vmatprep.subr.bf16.mxu0 0
      %4185 = vmatpush1.bf16.msra.mxu0 0
      %4186 = vmatprep.subr.bf16.mxu0 0
      %4187 = vmatpush1.bf16.msra.mxu0 0
      %4188 = vmatprep.subr.bf16.mxu0 0
      %4189 = vmatpush1.bf16.msra.mxu0 0
      %4190 = vmatprep.subr.bf16.mxu0 0
      %4191 = vmatpush1.bf16.msra.mxu0 0
      %4192 = vmatprep.mubr.bf16.mxu0 0
      %4193 = vmatmul.mubr.bf16.gmra.mrb[0].mxu0 %v4052
      %v4194 = vpop.f32.mrb[0].mxu0
      %v4195 = vadd.f32 %v4004, %v4194
      %v4196 = vpop.f32.mrb[0].mxu0
      %v4197 = vadd.f32 %v4006, %v4196
      %v4198 = vpop.f32.mrb[0].mxu0
      %v4199 = vpop.f32.mrb[0].mxu0
      %4200 = vdwg.mxu0
      %4201 = vmatprep.subr.bf16.mxu0 %v3767
      %4202 = vmatpush1.bf16.msra.mxu0 %v3766
      %4203 = vmatprep.subr.bf16.mxu0 %v4076
      %4204 = vmatpush1.bf16.msra.mxu0 %v4073
      %4205 = vmatprep.subr.bf16.mxu0 0
      %4206 = vmatpush1.bf16.msra.mxu0 0
      %4207 = vmatprep.subr.bf16.mxu0 0
      %4208 = vmatpush1.bf16.msra.mxu0 0
      %4209 = vmatprep.subr.bf16.mxu0 0
      %4210 = vmatpush1.bf16.msra.mxu0 0
      %4211 = vmatprep.subr.bf16.mxu0 0
      %4212 = vmatpush1.bf16.msra.mxu0 0
      %4213 = vmatprep.subr.bf16.mxu0 0
      %4214 = vmatpush1.bf16.msra.mxu0 0
      %4215 = vmatprep.subr.bf16.mxu0 0
      %4216 = vmatpush1.bf16.msra.mxu0 0
      %4217 = vmatprep.subr.bf16.mxu0 0
      %4218 = vmatpush1.bf16.msra.mxu0 0
      %4219 = vmatprep.subr.bf16.mxu0 0
      %4220 = vmatpush1.bf16.msra.mxu0 0
      %4221 = vmatprep.subr.bf16.mxu0 0
      %4222 = vmatpush1.bf16.msra.mxu0 0
      %4223 = vmatprep.subr.bf16.mxu0 0
      %4224 = vmatpush1.bf16.msra.mxu0 0
      %4225 = vmatprep.subr.bf16.mxu0 0
      %4226 = vmatpush1.bf16.msra.mxu0 0
      %4227 = vmatprep.subr.bf16.mxu0 0
      %4228 = vmatpush1.bf16.msra.mxu0 0
      %4229 = vmatprep.subr.bf16.mxu0 0
      %4230 = vmatpush1.bf16.msra.mxu0 0
      %4231 = vmatprep.subr.bf16.mxu0 0
      %4232 = vmatpush1.bf16.msra.mxu0 0
      %4233 = vmatprep.mubr.bf16.mxu0 0
      %4234 = vmatmul.mubr.bf16.gmra.mrb[0].mxu0 %v4052
      %v4235 = vpop.f32.mrb[0].mxu0
      %v4236 = vadd.f32 %v4045, %v4235
      %v4237 = vpop.f32.mrb[0].mxu0
      %v4238 = vadd.f32 %v4047, %v4237
      %v4239 = vpop.f32.mrb[0].mxu0
      %v4240 = vpop.f32.mrb[0].mxu0
      %4241 = vdwg.mxu0
      %4242 = vrot.lane.b32.xlu0 %v3656, 97
      %v4243 = vpop.permute.xlu0 %4242
      %4244 = vrot.lane.b32.xlu0 %v3657, 97
      %v4245 = vpop.permute.xlu0 %4244
      %4246 = vrot.lane.b32.xlu0 %v3658, 97
      %v4247 = vpop.permute.xlu0 %4246
      %4248 = vrot.lane.b32.xlu0 %v3659, 97
      %v4249 = vpop.permute.xlu0 %4248
      %4250 = vrot.lane.b32.xlu0 %v3660, 97
      %v4251 = vpop.permute.xlu0 %4250
      %4252 = vrot.lane.b32.xlu0 %v3661, 97
      %v4253 = vpop.permute.xlu0 %4252
      %4254 = vrot.lane.b32.xlu0 %v3662, 97
      %v4255 = vpop.permute.xlu0 %4254
      %4256 = vrot.lane.b32.xlu0 %v3663, 97
      %v4257 = vpop.permute.xlu0 %4256
      %v4258 = vsel %vm2139, %v4255, %v4257
      %v4259 = vsel %vm2139, %v4253, %v4255
      %v4260 = vsel %vm2139, %v4251, %v4253
      %v4261 = vsel %vm2139, %v4249, %v4251
      %v4262 = vsel %vm2139, %v4247, %v4249
      %v4263 = vsel %vm2139, %v4245, %v4247
      %v4264 = vsel %vm2139, %v4243, %v4245
      %v4265 = vsel %vm2139, %v4257, %v4243
      %v4266 = vmul.f32 %v4264, %v1457
      %v4267 = vmul.f32 %v4263, %v1458
      %v4268 = vmul.f32 %v4262, %v1459
      %v4269 = vmul.f32 %v4261, %v1460
      %v4270 = vmul.f32 %v4260, %v1461
      %v4271 = vmul.f32 %v4259, %v1462
      %v4272 = vmul.f32 %v4258, %v1463
      %v4273 = vmul.f32 %v4265, %v1464
      %4274 = vrot.lane.b32.xlu0 %v3656, 96
      %v4275 = vpop.permute.xlu0 %4274
      %4276 = vrot.lane.b32.xlu0 %v3657, 96
      %v4277 = vpop.permute.xlu0 %4276
      %4278 = vrot.lane.b32.xlu0 %v3658, 96
      %v4279 = vpop.permute.xlu0 %4278
      %4280 = vrot.lane.b32.xlu0 %v3659, 96
      %v4281 = vpop.permute.xlu0 %4280
      %4282 = vrot.lane.b32.xlu0 %v3660, 96
      %v4283 = vpop.permute.xlu0 %4282
      %4284 = vrot.lane.b32.xlu0 %v3661, 96
      %v4285 = vpop.permute.xlu0 %4284
      %4286 = vrot.lane.b32.xlu0 %v3662, 96
      %v4287 = vpop.permute.xlu0 %4286
      %4288 = vrot.lane.b32.xlu0 %v3663, 96
      %v4289 = vpop.permute.xlu0 %4288
      %v4290 = vsel %vm2172, %v4287, %v4289
      %v4291 = vsel %vm2172, %v4285, %v4287
      %v4292 = vsel %vm2172, %v4283, %v4285
      %v4293 = vsel %vm2172, %v4281, %v4283
      %v4294 = vsel %vm2172, %v4279, %v4281
      %v4295 = vsel %vm2172, %v4277, %v4279
      %v4296 = vsel %vm2172, %v4275, %v4277
      %v4297 = vsel %vm2172, %v4289, %v4275
      %v4298 = vmul.f32 %v4296, %v1473
      %v4299 = vmul.f32 %v4295, %v1474
      %v4300 = vmul.f32 %v4294, %v1475
      %v4301 = vmul.f32 %v4293, %v1476
      %v4302 = vmul.f32 %v4292, %v1477
      %v4303 = vmul.f32 %v4291, %v1478
      %v4304 = vmul.f32 %v4290, %v1479
      %v4305 = vmul.f32 %v4297, %v1480
      %4306 = vrot.lane.b32.xlu0 %v3656, 95
      %v4307 = vpop.permute.xlu0 %4306
      %4308 = vrot.lane.b32.xlu0 %v3657, 95
      %v4309 = vpop.permute.xlu0 %4308
      %4310 = vrot.lane.b32.xlu0 %v3658, 95
      %v4311 = vpop.permute.xlu0 %4310
      %4312 = vrot.lane.b32.xlu0 %v3659, 95
      %v4313 = vpop.permute.xlu0 %4312
      %4314 = vrot.lane.b32.xlu0 %v3660, 95
      %v4315 = vpop.permute.xlu0 %4314
      %4316 = vrot.lane.b32.xlu0 %v3661, 95
      %v4317 = vpop.permute.xlu0 %4316
      %4318 = vrot.lane.b32.xlu0 %v3662, 95
      %v4319 = vpop.permute.xlu0 %4318
      %4320 = vrot.lane.b32.xlu0 %v3663, 95
      %v4321 = vpop.permute.xlu0 %4320
      %v4322 = vsel %vm2205, %v4319, %v4321
      %v4323 = vsel %vm2205, %v4317, %v4319
      %v4324 = vsel %vm2205, %v4315, %v4317
      %v4325 = vsel %vm2205, %v4313, %v4315
      %v4326 = vsel %vm2205, %v4311, %v4313
      %v4327 = vsel %vm2205, %v4309, %v4311
      %v4328 = vsel %vm2205, %v4307, %v4309
      %v4329 = vsel %vm2205, %v4321, %v4307
      %v4330 = vmul.f32 %v4328, %v1497
      %v4331 = vmul.f32 %v4327, %v1498
      %v4332 = vmul.f32 %v4326, %v1499
      %v4333 = vmul.f32 %v4325, %v1500
      %v4334 = vmul.f32 %v4324, %v1501
      %v4335 = vmul.f32 %v4323, %v1502
      %v4336 = vmul.f32 %v4322, %v1503
      %v4337 = vmul.f32 %v4329, %v1504
      %v4338 = vpack.c.bf16 %v4298, %v4266
      %v4339 = vpack.c.bf16 %v4299, %v4267
      %v4340 = vpack.c.bf16 %v4300, %v4268
      %v4341 = vpack.c.bf16 %v4301, %v4269
      %v4342 = vpack.c.bf16 %v4302, %v4270
      %v4343 = vpack.c.bf16 %v4303, %v4271
      %v4344 = vpack.c.bf16 %v4304, %v4272
      %v4345 = vpack.c.bf16 %v4305, %v4273
      %v4346 = vpack.c.bf16 %v4330, %v4330
      %v4347 = vpack.c.bf16 %v4331, %v4331
      %v4348 = vpack.c.bf16 %v4332, %v4332
      %v4349 = vpack.c.bf16 %v4333, %v4333
      %v4350 = vpack.c.bf16 %v4334, %v4334
      %v4351 = vpack.c.bf16 %v4335, %v4335
      %v4352 = vpack.c.bf16 %v4336, %v4336
      %v4353 = vpack.c.bf16 %v4337, %v4337
      %s4354 = scalar_lea.vmem %s7, 20
      %v4355 = vld [vmem:[%s4354] sm:$0xf]
      %v4357 = vsel %vm1739, %v4355, 0
      %v4360 = vsel %vm1743, %v4346, 0
      %v4363 = vsel %vm1743, %v4347, 0
      %v4366 = vsel %vm1743, %v4348, 0
      %v4369 = vsel %vm1743, %v4349, 0
      %v4372 = vsel %vm1743, %v4350, 0
      %v4375 = vsel %vm1743, %v4351, 0
      %v4378 = vsel %vm1743, %v4352, 0
      %v4381 = vsel %vm1743, %v4353, 0
      %4383 = vmatprep.subr.bf16.mxu0 %v4339
      %4384 = vmatpush1.bf16.msra.mxu0 %v4338
      %4385 = vmatprep.subr.bf16.mxu0 %v4363
      %4386 = vmatpush1.bf16.msra.mxu0 %v4360
      %4387 = vmatprep.subr.bf16.mxu0 0
      %4388 = vmatpush1.bf16.msra.mxu0 0
      %4389 = vmatprep.subr.bf16.mxu0 0
      %4390 = vmatpush1.bf16.msra.mxu0 0
      %4391 = vmatprep.subr.bf16.mxu0 0
      %4392 = vmatpush1.bf16.msra.mxu0 0
      %4393 = vmatprep.subr.bf16.mxu0 0
      %4394 = vmatpush1.bf16.msra.mxu0 0
      %4395 = vmatprep.subr.bf16.mxu0 0
      %4396 = vmatpush1.bf16.msra.mxu0 0
      %4397 = vmatprep.subr.bf16.mxu0 0
      %4398 = vmatpush1.bf16.msra.mxu0 0
      %4399 = vmatprep.subr.bf16.mxu0 0
      %4400 = vmatpush1.bf16.msra.mxu0 0
      %4401 = vmatprep.subr.bf16.mxu0 0
      %4402 = vmatpush1.bf16.msra.mxu0 0
      %4403 = vmatprep.subr.bf16.mxu0 0
      %4404 = vmatpush1.bf16.msra.mxu0 0
      %4405 = vmatprep.subr.bf16.mxu0 0
      %4406 = vmatpush1.bf16.msra.mxu0 0
      %4407 = vmatprep.subr.bf16.mxu0 0
      %4408 = vmatpush1.bf16.msra.mxu0 0
      %4409 = vmatprep.subr.bf16.mxu0 0
      %4410 = vmatpush1.bf16.msra.mxu0 0
      %4411 = vmatprep.subr.bf16.mxu0 0
      %4412 = vmatpush1.bf16.msra.mxu0 0
      %4413 = vmatprep.subr.bf16.mxu0 0
      %4414 = vmatpush1.bf16.msra.mxu0 0
      %4415 = vmatprep.mubr.bf16.mxu0 0
      %4416 = vmatmul.mubr.bf16.gmra.mrb[0].mxu0 %v4357
      %v4417 = vpop.f32.mrb[0].mxu0
      %v4418 = vadd.f32 0.0, %v4417
      %v4419 = vpop.f32.mrb[0].mxu0
      %v4420 = vadd.f32 0.0, %v4419
      %v4421 = vpop.f32.mrb[0].mxu0
      %v4422 = vpop.f32.mrb[0].mxu0
      %4423 = vdwg.mxu0
      %4424 = vmatprep.subr.bf16.mxu0 %v4341
      %4425 = vmatpush1.bf16.msra.mxu0 %v4340
      %4426 = vmatprep.subr.bf16.mxu0 %v4369
      %4427 = vmatpush1.bf16.msra.mxu0 %v4366
      %4428 = vmatprep.subr.bf16.mxu0 0
      %4429 = vmatpush1.bf16.msra.mxu0 0
      %4430 = vmatprep.subr.bf16.mxu0 0
      %4431 = vmatpush1.bf16.msra.mxu0 0
      %4432 = vmatprep.subr.bf16.mxu0 0
      %4433 = vmatpush1.bf16.msra.mxu0 0
      %4434 = vmatprep.subr.bf16.mxu0 0
      %4435 = vmatpush1.bf16.msra.mxu0 0
      %4436 = vmatprep.subr.bf16.mxu0 0
      %4437 = vmatpush1.bf16.msra.mxu0 0
      %4438 = vmatprep.subr.bf16.mxu0 0
      %4439 = vmatpush1.bf16.msra.mxu0 0
      %4440 = vmatprep.subr.bf16.mxu0 0
      %4441 = vmatpush1.bf16.msra.mxu0 0
      %4442 = vmatprep.subr.bf16.mxu0 0
      %4443 = vmatpush1.bf16.msra.mxu0 0
      %4444 = vmatprep.subr.bf16.mxu0 0
      %4445 = vmatpush1.bf16.msra.mxu0 0
      %4446 = vmatprep.subr.bf16.mxu0 0
      %4447 = vmatpush1.bf16.msra.mxu0 0
      %4448 = vmatprep.subr.bf16.mxu0 0
      %4449 = vmatpush1.bf16.msra.mxu0 0
      %4450 = vmatprep.subr.bf16.mxu0 0
      %4451 = vmatpush1.bf16.msra.mxu0 0
      %4452 = vmatprep.subr.bf16.mxu0 0
      %4453 = vmatpush1.bf16.msra.mxu0 0
      %4454 = vmatprep.subr.bf16.mxu0 0
      %4455 = vmatpush1.bf16.msra.mxu0 0
      %4456 = vmatprep.mubr.bf16.mxu0 0
      %4457 = vmatmul.mubr.bf16.gmra.mrb[0].mxu0 %v4357
      %v4458 = vpop.f32.mrb[0].mxu0
      %v4459 = vadd.f32 0.0, %v4458
      %v4460 = vpop.f32.mrb[0].mxu0
      %v4461 = vadd.f32 0.0, %v4460
      %v4462 = vpop.f32.mrb[0].mxu0
      %v4463 = vpop.f32.mrb[0].mxu0
      %4464 = vdwg.mxu0
      %4465 = vmatprep.subr.bf16.mxu0 %v4343
      %4466 = vmatpush1.bf16.msra.mxu0 %v4342
      %4467 = vmatprep.subr.bf16.mxu0 %v4375
      %4468 = vmatpush1.bf16.msra.mxu0 %v4372
      %4469 = vmatprep.subr.bf16.mxu0 0
      %4470 = vmatpush1.bf16.msra.mxu0 0
      %4471 = vmatprep.subr.bf16.mxu0 0
      %4472 = vmatpush1.bf16.msra.mxu0 0
      %4473 = vmatprep.subr.bf16.mxu0 0
      %4474 = vmatpush1.bf16.msra.mxu0 0
      %4475 = vmatprep.subr.bf16.mxu0 0
      %4476 = vmatpush1.bf16.msra.mxu0 0
      %4477 = vmatprep.subr.bf16.mxu0 0
      %4478 = vmatpush1.bf16.msra.mxu0 0
      %4479 = vmatprep.subr.bf16.mxu0 0
      %4480 = vmatpush1.bf16.msra.mxu0 0
      %4481 = vmatprep.subr.bf16.mxu0 0
      %4482 = vmatpush1.bf16.msra.mxu0 0
      %4483 = vmatprep.subr.bf16.mxu0 0
      %4484 = vmatpush1.bf16.msra.mxu0 0
      %4485 = vmatprep.subr.bf16.mxu0 0
      %4486 = vmatpush1.bf16.msra.mxu0 0
      %4487 = vmatprep.subr.bf16.mxu0 0
      %4488 = vmatpush1.bf16.msra.mxu0 0
      %4489 = vmatprep.subr.bf16.mxu0 0
      %4490 = vmatpush1.bf16.msra.mxu0 0
      %4491 = vmatprep.subr.bf16.mxu0 0
      %4492 = vmatpush1.bf16.msra.mxu0 0
      %4493 = vmatprep.subr.bf16.mxu0 0
      %4494 = vmatpush1.bf16.msra.mxu0 0
      %4495 = vmatprep.subr.bf16.mxu0 0
      %4496 = vmatpush1.bf16.msra.mxu0 0
      %4497 = vmatprep.mubr.bf16.mxu0 0
      %4498 = vmatmul.mubr.bf16.gmra.mrb[0].mxu0 %v4357
      %v4499 = vpop.f32.mrb[0].mxu0
      %v4500 = vadd.f32 0.0, %v4499
      %v4501 = vpop.f32.mrb[0].mxu0
      %v4502 = vadd.f32 0.0, %v4501
      %v4503 = vpop.f32.mrb[0].mxu0
      %v4504 = vpop.f32.mrb[0].mxu0
      %4505 = vdwg.mxu0
      %4506 = vmatprep.subr.bf16.mxu0 %v4345
      %4507 = vmatpush1.bf16.msra.mxu0 %v4344
      %4508 = vmatprep.subr.bf16.mxu0 %v4381
      %4509 = vmatpush1.bf16.msra.mxu0 %v4378
      %4510 = vmatprep.subr.bf16.mxu0 0
      %4511 = vmatpush1.bf16.msra.mxu0 0
      %4512 = vmatprep.subr.bf16.mxu0 0
      %4513 = vmatpush1.bf16.msra.mxu0 0
      %4514 = vmatprep.subr.bf16.mxu0 0
      %4515 = vmatpush1.bf16.msra.mxu0 0
      %4516 = vmatprep.subr.bf16.mxu0 0
      %4517 = vmatpush1.bf16.msra.mxu0 0
      %4518 = vmatprep.subr.bf16.mxu0 0
      %4519 = vmatpush1.bf16.msra.mxu0 0
      %4520 = vmatprep.subr.bf16.mxu0 0
      %4521 = vmatpush1.bf16.msra.mxu0 0
      %4522 = vmatprep.subr.bf16.mxu0 0
      %4523 = vmatpush1.bf16.msra.mxu0 0
      %4524 = vmatprep.subr.bf16.mxu0 0
      %4525 = vmatpush1.bf16.msra.mxu0 0
      %4526 = vmatprep.subr.bf16.mxu0 0
      %4527 = vmatpush1.bf16.msra.mxu0 0
      %4528 = vmatprep.subr.bf16.mxu0 0
      %4529 = vmatpush1.bf16.msra.mxu0 0
      %4530 = vmatprep.subr.bf16.mxu0 0
      %4531 = vmatpush1.bf16.msra.mxu0 0
      %4532 = vmatprep.subr.bf16.mxu0 0
      %4533 = vmatpush1.bf16.msra.mxu0 0
      %4534 = vmatprep.subr.bf16.mxu0 0
      %4535 = vmatpush1.bf16.msra.mxu0 0
      %4536 = vmatprep.subr.bf16.mxu0 0
      %4537 = vmatpush1.bf16.msra.mxu0 0
      %4538 = vmatprep.mubr.bf16.mxu0 0
      %4539 = vmatmul.mubr.bf16.gmra.mrb[0].mxu0 %v4357
      %v4540 = vpop.f32.mrb[0].mxu0
      %v4541 = vadd.f32 0.0, %v4540
      %v4542 = vpop.f32.mrb[0].mxu0
      %v4543 = vadd.f32 0.0, %v4542
      %v4544 = vpop.f32.mrb[0].mxu0
      %v4545 = vpop.f32.mrb[0].mxu0
      %4546 = vdwg.mxu0
      %v4547 = vadd.f32 %v4113, %v4418
      %v4548 = vadd.f32 %v4115, %v4420
      %v4549 = vadd.f32 %v4154, %v4459
      %v4550 = vadd.f32 %v4156, %v4461
      %v4551 = vadd.f32 %v4195, %v4500
      %v4552 = vadd.f32 %v4197, %v4502
      %v4553 = vadd.f32 %v4236, %v4541
      %v4554 = vadd.f32 %v4238, %v4543
      %4555 = vset.pattern.permute.xlu0 9
      %4556 = vperm.xlu0 %4555, %v1505
      %v4557 = vpop.permute.xlu0 %4556
      %v4559 = vadd.f32 %v4547, %v4557
      %v4560 = vadd.f32 %v4548, %v4557
      %v4561 = vadd.f32 %v4549, %v4557
      %v4562 = vadd.f32 %v4550, %v4557
      %v4563 = vadd.f32 %v4551, %v4557
      %v4564 = vadd.f32 %v4552, %v4557
      %v4565 = vadd.f32 %v4553, %v4557
      %v4566 = vadd.f32 %v4554, %v4557
      %4567 = vset.pattern.permute.xlu0 10
      %4568 = vperm.xlu0 %4567, %v1505
      %v4569 = vpop.permute.xlu0 %4568
      %v4571 = vmul.f32 %v4559, %v4569
      %v4572 = vmul.f32 %v4560, %v4569
      %v4573 = vmul.f32 %v4561, %v4569
      %v4574 = vmul.f32 %v4562, %v4569
      %v4575 = vmul.f32 %v4563, %v4569
      %v4576 = vmul.f32 %v4564, %v4569
      %v4577 = vmul.f32 %v4565, %v4569
      %v4578 = vmul.f32 %v4566, %v4569
      %4579 = vset.pattern.permute.xlu0 2
      %4580 = vperm.xlu0 %4579, %v2688
      %v4581 = vpop.permute.xlu0 %4580
      %v4583 = vadd.f32 %v4571, %v4581
      %v4584 = vadd.f32 %v4572, %v4581
      %v4585 = vadd.f32 %v4573, %v4581
      %v4586 = vadd.f32 %v4574, %v4581
      %v4587 = vadd.f32 %v4575, %v4581
      %v4588 = vadd.f32 %v4576, %v4581
      %v4589 = vadd.f32 %v4577, %v4581
      %v4590 = vadd.f32 %v4578, %v4581
      %v4591 = vmax.f32 %v4583, 0.0
      %v4592 = vmax.f32 %v4584, 0.0
      %v4593 = vmax.f32 %v4585, 0.0
      %v4594 = vmax.f32 %v4586, 0.0
      %v4595 = vmax.f32 %v4587, 0.0
      %v4596 = vmax.f32 %v4588, 0.0
      %v4597 = vmax.f32 %v4589, 0.0
      %v4598 = vmax.f32 %v4590, 0.0
      %4599 = vrot.lane.b32.xlu0 %v4591, 33
      %v4600 = vpop.permute.xlu0 %4599
      %4601 = vrot.lane.b32.xlu0 %v4592, 33
      %v4602 = vpop.permute.xlu0 %4601
      %4603 = vrot.lane.b32.xlu0 %v4593, 33
      %v4604 = vpop.permute.xlu0 %4603
      %4605 = vrot.lane.b32.xlu0 %v4594, 33
      %v4606 = vpop.permute.xlu0 %4605
      %4607 = vrot.lane.b32.xlu0 %v4595, 33
      %v4608 = vpop.permute.xlu0 %4607
      %4609 = vrot.lane.b32.xlu0 %v4596, 33
      %v4610 = vpop.permute.xlu0 %4609
      %4611 = vrot.lane.b32.xlu0 %v4597, 33
      %v4612 = vpop.permute.xlu0 %4611
      %4613 = vrot.lane.b32.xlu0 %v4598, 33
      %v4614 = vpop.permute.xlu0 %4613
      %v4615 = vsel %vm1555, %v4612, %v4614
      %v4616 = vsel %vm1555, %v4610, %v4612
      %v4617 = vsel %vm1555, %v4608, %v4610
      %v4618 = vsel %vm1555, %v4606, %v4608
      %v4619 = vsel %vm1555, %v4604, %v4606
      %v4620 = vsel %vm1555, %v4602, %v4604
      %v4621 = vsel %vm1555, %v4600, %v4602
      %v4622 = vsel %vm1555, %v4614, %v4600
      %v4623 = vmul.f32 %v4622, %v1361
      %v4624 = vmul.f32 %v4621, %v1362
      %v4625 = vmul.f32 %v4620, %v1363
      %v4626 = vmul.f32 %v4619, %v1364
      %v4627 = vmul.f32 %v4618, %v1365
      %v4628 = vmul.f32 %v4617, %v1366
      %v4629 = vmul.f32 %v4616, %v1367
      %v4630 = vmul.f32 %v4615, %v1368
      %4631 = vrot.lane.b32.xlu0 %v4591, 32
      %v4632 = vpop.permute.xlu0 %4631
      %4633 = vrot.lane.b32.xlu0 %v4592, 32
      %v4634 = vpop.permute.xlu0 %4633
      %4635 = vrot.lane.b32.xlu0 %v4593, 32
      %v4636 = vpop.permute.xlu0 %4635
      %4637 = vrot.lane.b32.xlu0 %v4594, 32
      %v4638 = vpop.permute.xlu0 %4637
      %4639 = vrot.lane.b32.xlu0 %v4595, 32
      %v4640 = vpop.permute.xlu0 %4639
      %4641 = vrot.lane.b32.xlu0 %v4596, 32
      %v4642 = vpop.permute.xlu0 %4641
      %4643 = vrot.lane.b32.xlu0 %v4597, 32
      %v4644 = vpop.permute.xlu0 %4643
      %4645 = vrot.lane.b32.xlu0 %v4598, 32
      %v4646 = vpop.permute.xlu0 %4645
      %v4647 = vsel %vm1588, %v4644, %v4646
      %v4648 = vsel %vm1588, %v4642, %v4644
      %v4649 = vsel %vm1588, %v4640, %v4642
      %v4650 = vsel %vm1588, %v4638, %v4640
      %v4651 = vsel %vm1588, %v4636, %v4638
      %v4652 = vsel %vm1588, %v4634, %v4636
      %v4653 = vsel %vm1588, %v4632, %v4634
      %v4654 = vsel %vm1588, %v4646, %v4632
      %v4655 = vmul.f32 %v4654, %v1377
      %v4656 = vmul.f32 %v4653, %v1378
      %v4657 = vmul.f32 %v4652, %v1379
      %v4658 = vmul.f32 %v4651, %v1380
      %v4659 = vmul.f32 %v4650, %v1381
      %v4660 = vmul.f32 %v4649, %v1382
      %v4661 = vmul.f32 %v4648, %v1383
      %v4662 = vmul.f32 %v4647, %v1384
      %4663 = vrot.lane.b32.xlu0 %v4591, 31
      %v4664 = vpop.permute.xlu0 %4663
      %4665 = vrot.lane.b32.xlu0 %v4592, 31
      %v4666 = vpop.permute.xlu0 %4665
      %4667 = vrot.lane.b32.xlu0 %v4593, 31
      %v4668 = vpop.permute.xlu0 %4667
      %4669 = vrot.lane.b32.xlu0 %v4594, 31
      %v4670 = vpop.permute.xlu0 %4669
      %4671 = vrot.lane.b32.xlu0 %v4595, 31
      %v4672 = vpop.permute.xlu0 %4671
      %4673 = vrot.lane.b32.xlu0 %v4596, 31
      %v4674 = vpop.permute.xlu0 %4673
      %4675 = vrot.lane.b32.xlu0 %v4597, 31
      %v4676 = vpop.permute.xlu0 %4675
      %4677 = vrot.lane.b32.xlu0 %v4598, 31
      %v4678 = vpop.permute.xlu0 %4677
      %v4679 = vsel %vm1621, %v4676, %v4678
      %v4680 = vsel %vm1621, %v4674, %v4676
      %v4681 = vsel %vm1621, %v4672, %v4674
      %v4682 = vsel %vm1621, %v4670, %v4672
      %v4683 = vsel %vm1621, %v4668, %v4670
      %v4684 = vsel %vm1621, %v4666, %v4668
      %v4685 = vsel %vm1621, %v4664, %v4666
      %v4686 = vsel %vm1621, %v4678, %v4664
      %v4687 = vmul.f32 %v4686, %v1401
      %v4688 = vmul.f32 %v4685, %v1402
      %v4689 = vmul.f32 %v4684, %v1403
      %v4690 = vmul.f32 %v4683, %v1404
      %v4691 = vmul.f32 %v4682, %v1405
      %v4692 = vmul.f32 %v4681, %v1406
      %v4693 = vmul.f32 %v4680, %v1407
      %v4694 = vmul.f32 %v4679, %v1408
      %v4695 = vpack.c.bf16 %v4655, %v4623
      %v4696 = vpack.c.bf16 %v4656, %v4624
      %v4697 = vpack.c.bf16 %v4657, %v4625
      %v4698 = vpack.c.bf16 %v4658, %v4626
      %v4699 = vpack.c.bf16 %v4659, %v4627
      %v4700 = vpack.c.bf16 %v4660, %v4628
      %v4701 = vpack.c.bf16 %v4661, %v4629
      %v4702 = vpack.c.bf16 %v4662, %v4630
      %v4703 = vpack.c.bf16 %v4687, %v4687
      %v4704 = vpack.c.bf16 %v4688, %v4688
      %v4705 = vpack.c.bf16 %v4689, %v4689
      %v4706 = vpack.c.bf16 %v4690, %v4690
      %v4707 = vpack.c.bf16 %v4691, %v4691
      %v4708 = vpack.c.bf16 %v4692, %v4692
      %v4709 = vpack.c.bf16 %v4693, %v4693
      %v4710 = vpack.c.bf16 %v4694, %v4694
      %s4711 = scalar_lea.vmem %s7, 24
      %v4712 = vld [vmem:[%s4711] sm:$0xf]
      %4713 = vrot.lane.b32.xlu0 %v4591, 1
      %v4714 = vpop.permute.xlu0 %4713
      %4715 = vrot.lane.b32.xlu0 %v4592, 1
      %v4716 = vpop.permute.xlu0 %4715
      %4717 = vrot.lane.b32.xlu0 %v4593, 1
      %v4718 = vpop.permute.xlu0 %4717
      %4719 = vrot.lane.b32.xlu0 %v4594, 1
      %v4720 = vpop.permute.xlu0 %4719
      %4721 = vrot.lane.b32.xlu0 %v4595, 1
      %v4722 = vpop.permute.xlu0 %4721
      %4723 = vrot.lane.b32.xlu0 %v4596, 1
      %v4724 = vpop.permute.xlu0 %4723
      %4725 = vrot.lane.b32.xlu0 %v4597, 1
      %v4726 = vpop.permute.xlu0 %4725
      %4727 = vrot.lane.b32.xlu0 %v4598, 1
      %v4728 = vpop.permute.xlu0 %4727
      %v4729 = vsel %vm1671, %v4726, %v4728
      %v4730 = vsel %vm1671, %v4724, %v4726
      %v4731 = vsel %vm1671, %v4722, %v4724
      %v4732 = vsel %vm1671, %v4720, %v4722
      %v4733 = vsel %vm1671, %v4718, %v4720
      %v4734 = vsel %vm1671, %v4716, %v4718
      %v4735 = vsel %vm1671, %v4714, %v4716
      %v4736 = vsel %vm1671, %v4728, %v4714
      %v4737 = vmul.f32 %v4736, %v1417
      %v4738 = vmul.f32 %v4735, %v1418
      %v4739 = vmul.f32 %v4734, %v1419
      %v4740 = vmul.f32 %v4733, %v1420
      %v4741 = vmul.f32 %v4732, %v1421
      %v4742 = vmul.f32 %v4731, %v1422
      %v4743 = vmul.f32 %v4730, %v1423
      %v4744 = vmul.f32 %v4729, %v1424
      %4745 = vrot.lane.b32.xlu0 %v4591, 127
      %v4746 = vpop.permute.xlu0 %4745
      %4747 = vrot.lane.b32.xlu0 %v4592, 127
      %v4748 = vpop.permute.xlu0 %4747
      %4749 = vrot.lane.b32.xlu0 %v4593, 127
      %v4750 = vpop.permute.xlu0 %4749
      %4751 = vrot.lane.b32.xlu0 %v4594, 127
      %v4752 = vpop.permute.xlu0 %4751
      %4753 = vrot.lane.b32.xlu0 %v4595, 127
      %v4754 = vpop.permute.xlu0 %4753
      %4755 = vrot.lane.b32.xlu0 %v4596, 127
      %v4756 = vpop.permute.xlu0 %4755
      %4757 = vrot.lane.b32.xlu0 %v4597, 127
      %v4758 = vpop.permute.xlu0 %4757
      %4759 = vrot.lane.b32.xlu0 %v4598, 127
      %v4760 = vpop.permute.xlu0 %4759
      %v4761 = vsel %vm1704, %v4758, %v4760
      %v4762 = vsel %vm1704, %v4756, %v4758
      %v4763 = vsel %vm1704, %v4754, %v4756
      %v4764 = vsel %vm1704, %v4752, %v4754
      %v4765 = vsel %vm1704, %v4750, %v4752
      %v4766 = vsel %vm1704, %v4748, %v4750
      %v4767 = vsel %vm1704, %v4746, %v4748
      %v4768 = vsel %vm1704, %v4760, %v4746
      %v4769 = vmul.f32 %v4767, %v1433
      %v4770 = vmul.f32 %v4766, %v1434
      %v4771 = vmul.f32 %v4765, %v1435
      %v4772 = vmul.f32 %v4764, %v1436
      %v4773 = vmul.f32 %v4763, %v1437
      %v4774 = vmul.f32 %v4762, %v1438
      %v4775 = vmul.f32 %v4761, %v1439
      %v4776 = vmul.f32 %v4768, %v1440
      %v4777 = vpack.c.bf16 %v4591, %v4737
      %v4778 = vpack.c.bf16 %v4592, %v4738
      %v4779 = vpack.c.bf16 %v4593, %v4739
      %v4780 = vpack.c.bf16 %v4594, %v4740
      %v4781 = vpack.c.bf16 %v4595, %v4741
      %v4782 = vpack.c.bf16 %v4596, %v4742
      %v4783 = vpack.c.bf16 %v4597, %v4743
      %v4784 = vpack.c.bf16 %v4598, %v4744
      %v4785 = vpack.c.bf16 %v4769, %v4769
      %v4786 = vpack.c.bf16 %v4770, %v4770
      %v4787 = vpack.c.bf16 %v4771, %v4771
      %v4788 = vpack.c.bf16 %v4772, %v4772
      %v4789 = vpack.c.bf16 %v4773, %v4773
      %v4790 = vpack.c.bf16 %v4774, %v4774
      %v4791 = vpack.c.bf16 %v4775, %v4775
      %v4792 = vpack.c.bf16 %v4776, %v4776
      %s4793 = scalar_lea.vmem %s7, 28
      %v4794 = vld [vmem:[%s4793] sm:$0xf]
      %v4796 = vsel %vm1739, %v4794, 0
      %v4799 = vsel %vm1743, %v4785, 0
      %v4802 = vsel %vm1743, %v4786, 0
      %v4805 = vsel %vm1743, %v4787, 0
      %v4808 = vsel %vm1743, %v4788, 0
      %v4811 = vsel %vm1743, %v4789, 0
      %v4814 = vsel %vm1743, %v4790, 0
      %v4817 = vsel %vm1743, %v4791, 0
      %v4820 = vsel %vm1743, %v4792, 0
      %4822 = vmatprep.subr.bf16.mxu0 %v4778
      %4823 = vmatpush1.bf16.msra.mxu0 %v4777
      %4824 = vmatprep.subr.bf16.mxu0 %v4802
      %4825 = vmatpush1.bf16.msra.mxu0 %v4799
      %4826 = vmatprep.subr.bf16.mxu0 0
      %4827 = vmatpush1.bf16.msra.mxu0 0
      %4828 = vmatprep.subr.bf16.mxu0 0
      %4829 = vmatpush1.bf16.msra.mxu0 0
      %4830 = vmatprep.subr.bf16.mxu0 0
      %4831 = vmatpush1.bf16.msra.mxu0 0
      %4832 = vmatprep.subr.bf16.mxu0 0
      %4833 = vmatpush1.bf16.msra.mxu0 0
      %4834 = vmatprep.subr.bf16.mxu0 0
      %4835 = vmatpush1.bf16.msra.mxu0 0
      %4836 = vmatprep.subr.bf16.mxu0 0
      %4837 = vmatpush1.bf16.msra.mxu0 0
      %4838 = vmatprep.subr.bf16.mxu0 0
      %4839 = vmatpush1.bf16.msra.mxu0 0
      %4840 = vmatprep.subr.bf16.mxu0 0
      %4841 = vmatpush1.bf16.msra.mxu0 0
      %4842 = vmatprep.subr.bf16.mxu0 0
      %4843 = vmatpush1.bf16.msra.mxu0 0
      %4844 = vmatprep.subr.bf16.mxu0 0
      %4845 = vmatpush1.bf16.msra.mxu0 0
      %4846 = vmatprep.subr.bf16.mxu0 0
      %4847 = vmatpush1.bf16.msra.mxu0 0
      %4848 = vmatprep.subr.bf16.mxu0 0
      %4849 = vmatpush1.bf16.msra.mxu0 0
      %4850 = vmatprep.subr.bf16.mxu0 0
      %4851 = vmatpush1.bf16.msra.mxu0 0
      %4852 = vmatprep.subr.bf16.mxu0 0
      %4853 = vmatpush1.bf16.msra.mxu0 0
      %4854 = vmatprep.mubr.bf16.mxu0 0
      %4855 = vmatmul.mubr.bf16.gmra.mrb[0].mxu0 %v4796
      %v4856 = vpop.f32.mrb[0].mxu0
      %v4857 = vadd.f32 0.0, %v4856
      %v4858 = vpop.f32.mrb[0].mxu0
      %v4859 = vadd.f32 0.0, %v4858
      %v4860 = vpop.f32.mrb[0].mxu0
      %v4861 = vpop.f32.mrb[0].mxu0
      %4862 = vdwg.mxu0
      %4863 = vmatprep.subr.bf16.mxu0 %v4780
      %4864 = vmatpush1.bf16.msra.mxu0 %v4779
      %4865 = vmatprep.subr.bf16.mxu0 %v4808
      %4866 = vmatpush1.bf16.msra.mxu0 %v4805
      %4867 = vmatprep.subr.bf16.mxu0 0
      %4868 = vmatpush1.bf16.msra.mxu0 0
      %4869 = vmatprep.subr.bf16.mxu0 0
      %4870 = vmatpush1.bf16.msra.mxu0 0
      %4871 = vmatprep.subr.bf16.mxu0 0
      %4872 = vmatpush1.bf16.msra.mxu0 0
      %4873 = vmatprep.subr.bf16.mxu0 0
      %4874 = vmatpush1.bf16.msra.mxu0 0
      %4875 = vmatprep.subr.bf16.mxu0 0
      %4876 = vmatpush1.bf16.msra.mxu0 0
      %4877 = vmatprep.subr.bf16.mxu0 0
      %4878 = vmatpush1.bf16.msra.mxu0 0
      %4879 = vmatprep.subr.bf16.mxu0 0
      %4880 = vmatpush1.bf16.msra.mxu0 0
      %4881 = vmatprep.subr.bf16.mxu0 0
      %4882 = vmatpush1.bf16.msra.mxu0 0
      %4883 = vmatprep.subr.bf16.mxu0 0
      %4884 = vmatpush1.bf16.msra.mxu0 0
      %4885 = vmatprep.subr.bf16.mxu0 0
      %4886 = vmatpush1.bf16.msra.mxu0 0
      %4887 = vmatprep.subr.bf16.mxu0 0
      %4888 = vmatpush1.bf16.msra.mxu0 0
      %4889 = vmatprep.subr.bf16.mxu0 0
      %4890 = vmatpush1.bf16.msra.mxu0 0
      %4891 = vmatprep.subr.bf16.mxu0 0
      %4892 = vmatpush1.bf16.msra.mxu0 0
      %4893 = vmatprep.subr.bf16.mxu0 0
      %4894 = vmatpush1.bf16.msra.mxu0 0
      %4895 = vmatprep.mubr.bf16.mxu0 0
      %4896 = vmatmul.mubr.bf16.gmra.mrb[0].mxu0 %v4796
      %v4897 = vpop.f32.mrb[0].mxu0
      %v4898 = vadd.f32 0.0, %v4897
      %v4899 = vpop.f32.mrb[0].mxu0
      %v4900 = vadd.f32 0.0, %v4899
      %v4901 = vpop.f32.mrb[0].mxu0
      %v4902 = vpop.f32.mrb[0].mxu0
      %4903 = vdwg.mxu0
      %4904 = vmatprep.subr.bf16.mxu0 %v4782
      %4905 = vmatpush1.bf16.msra.mxu0 %v4781
      %4906 = vmatprep.subr.bf16.mxu0 %v4814
      %4907 = vmatpush1.bf16.msra.mxu0 %v4811
      %4908 = vmatprep.subr.bf16.mxu0 0
      %4909 = vmatpush1.bf16.msra.mxu0 0
      %4910 = vmatprep.subr.bf16.mxu0 0
      %4911 = vmatpush1.bf16.msra.mxu0 0
      %4912 = vmatprep.subr.bf16.mxu0 0
      %4913 = vmatpush1.bf16.msra.mxu0 0
      %4914 = vmatprep.subr.bf16.mxu0 0
      %4915 = vmatpush1.bf16.msra.mxu0 0
      %4916 = vmatprep.subr.bf16.mxu0 0
      %4917 = vmatpush1.bf16.msra.mxu0 0
      %4918 = vmatprep.subr.bf16.mxu0 0
      %4919 = vmatpush1.bf16.msra.mxu0 0
      %4920 = vmatprep.subr.bf16.mxu0 0
      %4921 = vmatpush1.bf16.msra.mxu0 0
      %4922 = vmatprep.subr.bf16.mxu0 0
      %4923 = vmatpush1.bf16.msra.mxu0 0
      %4924 = vmatprep.subr.bf16.mxu0 0
      %4925 = vmatpush1.bf16.msra.mxu0 0
      %4926 = vmatprep.subr.bf16.mxu0 0
      %4927 = vmatpush1.bf16.msra.mxu0 0
      %4928 = vmatprep.subr.bf16.mxu0 0
      %4929 = vmatpush1.bf16.msra.mxu0 0
      %4930 = vmatprep.subr.bf16.mxu0 0
      %4931 = vmatpush1.bf16.msra.mxu0 0
      %4932 = vmatprep.subr.bf16.mxu0 0
      %4933 = vmatpush1.bf16.msra.mxu0 0
      %4934 = vmatprep.subr.bf16.mxu0 0
      %4935 = vmatpush1.bf16.msra.mxu0 0
      %4936 = vmatprep.mubr.bf16.mxu0 0
      %4937 = vmatmul.mubr.bf16.gmra.mrb[0].mxu0 %v4796
      %v4938 = vpop.f32.mrb[0].mxu0
      %v4939 = vadd.f32 0.0, %v4938
      %v4940 = vpop.f32.mrb[0].mxu0
      %v4941 = vadd.f32 0.0, %v4940
      %v4942 = vpop.f32.mrb[0].mxu0
      %v4943 = vpop.f32.mrb[0].mxu0
      %4944 = vdwg.mxu0
      %4945 = vmatprep.subr.bf16.mxu0 %v4784
      %4946 = vmatpush1.bf16.msra.mxu0 %v4783
      %4947 = vmatprep.subr.bf16.mxu0 %v4820
      %4948 = vmatpush1.bf16.msra.mxu0 %v4817
      %4949 = vmatprep.subr.bf16.mxu0 0
      %4950 = vmatpush1.bf16.msra.mxu0 0
      %4951 = vmatprep.subr.bf16.mxu0 0
      %4952 = vmatpush1.bf16.msra.mxu0 0
      %4953 = vmatprep.subr.bf16.mxu0 0
      %4954 = vmatpush1.bf16.msra.mxu0 0
      %4955 = vmatprep.subr.bf16.mxu0 0
      %4956 = vmatpush1.bf16.msra.mxu0 0
      %4957 = vmatprep.subr.bf16.mxu0 0
      %4958 = vmatpush1.bf16.msra.mxu0 0
      %4959 = vmatprep.subr.bf16.mxu0 0
      %4960 = vmatpush1.bf16.msra.mxu0 0
      %4961 = vmatprep.subr.bf16.mxu0 0
      %4962 = vmatpush1.bf16.msra.mxu0 0
      %4963 = vmatprep.subr.bf16.mxu0 0
      %4964 = vmatpush1.bf16.msra.mxu0 0
      %4965 = vmatprep.subr.bf16.mxu0 0
      %4966 = vmatpush1.bf16.msra.mxu0 0
      %4967 = vmatprep.subr.bf16.mxu0 0
      %4968 = vmatpush1.bf16.msra.mxu0 0
      %4969 = vmatprep.subr.bf16.mxu0 0
      %4970 = vmatpush1.bf16.msra.mxu0 0
      %4971 = vmatprep.subr.bf16.mxu0 0
      %4972 = vmatpush1.bf16.msra.mxu0 0
      %4973 = vmatprep.subr.bf16.mxu0 0
      %4974 = vmatpush1.bf16.msra.mxu0 0
      %4975 = vmatprep.subr.bf16.mxu0 0
      %4976 = vmatpush1.bf16.msra.mxu0 0
      %4977 = vmatprep.mubr.bf16.mxu0 0
      %4978 = vmatmul.mubr.bf16.gmra.mrb[0].mxu0 %v4796
      %v4979 = vpop.f32.mrb[0].mxu0
      %v4980 = vadd.f32 0.0, %v4979
      %v4981 = vpop.f32.mrb[0].mxu0
      %v4982 = vadd.f32 0.0, %v4981
      %v4983 = vpop.f32.mrb[0].mxu0
      %v4984 = vpop.f32.mrb[0].mxu0
      %4985 = vdwg.mxu0
      %v4987 = vsel %vm1739, %v4712, 0
      %v4990 = vsel %vm1743, %v4703, 0
      %v4993 = vsel %vm1743, %v4704, 0
      %v4996 = vsel %vm1743, %v4705, 0
      %v4999 = vsel %vm1743, %v4706, 0
      %v5002 = vsel %vm1743, %v4707, 0
      %v5005 = vsel %vm1743, %v4708, 0
      %v5008 = vsel %vm1743, %v4709, 0
      %v5011 = vsel %vm1743, %v4710, 0
      %5013 = vmatprep.subr.bf16.mxu0 %v4696
      %5014 = vmatpush1.bf16.msra.mxu0 %v4695
      %5015 = vmatprep.subr.bf16.mxu0 %v4993
      %5016 = vmatpush1.bf16.msra.mxu0 %v4990
      %5017 = vmatprep.subr.bf16.mxu0 0
      %5018 = vmatpush1.bf16.msra.mxu0 0
      %5019 = vmatprep.subr.bf16.mxu0 0
      %5020 = vmatpush1.bf16.msra.mxu0 0
      %5021 = vmatprep.subr.bf16.mxu0 0
      %5022 = vmatpush1.bf16.msra.mxu0 0
      %5023 = vmatprep.subr.bf16.mxu0 0
      %5024 = vmatpush1.bf16.msra.mxu0 0
      %5025 = vmatprep.subr.bf16.mxu0 0
      %5026 = vmatpush1.bf16.msra.mxu0 0
      %5027 = vmatprep.subr.bf16.mxu0 0
      %5028 = vmatpush1.bf16.msra.mxu0 0
      %5029 = vmatprep.subr.bf16.mxu0 0
      %5030 = vmatpush1.bf16.msra.mxu0 0
      %5031 = vmatprep.subr.bf16.mxu0 0
      %5032 = vmatpush1.bf16.msra.mxu0 0
      %5033 = vmatprep.subr.bf16.mxu0 0
      %5034 = vmatpush1.bf16.msra.mxu0 0
      %5035 = vmatprep.subr.bf16.mxu0 0
      %5036 = vmatpush1.bf16.msra.mxu0 0
      %5037 = vmatprep.subr.bf16.mxu0 0
      %5038 = vmatpush1.bf16.msra.mxu0 0
      %5039 = vmatprep.subr.bf16.mxu0 0
      %5040 = vmatpush1.bf16.msra.mxu0 0
      %5041 = vmatprep.subr.bf16.mxu0 0
      %5042 = vmatpush1.bf16.msra.mxu0 0
      %5043 = vmatprep.subr.bf16.mxu0 0
      %5044 = vmatpush1.bf16.msra.mxu0 0
      %5045 = vmatprep.mubr.bf16.mxu0 0
      %5046 = vmatmul.mubr.bf16.gmra.mrb[0].mxu0 %v4987
      %v5047 = vpop.f32.mrb[0].mxu0
      %v5048 = vadd.f32 %v4857, %v5047
      %v5049 = vpop.f32.mrb[0].mxu0
      %v5050 = vadd.f32 %v4859, %v5049
      %v5051 = vpop.f32.mrb[0].mxu0
      %v5052 = vpop.f32.mrb[0].mxu0
      %5053 = vdwg.mxu0
      %5054 = vmatprep.subr.bf16.mxu0 %v4698
      %5055 = vmatpush1.bf16.msra.mxu0 %v4697
      %5056 = vmatprep.subr.bf16.mxu0 %v4999
      %5057 = vmatpush1.bf16.msra.mxu0 %v4996
      %5058 = vmatprep.subr.bf16.mxu0 0
      %5059 = vmatpush1.bf16.msra.mxu0 0
      %5060 = vmatprep.subr.bf16.mxu0 0
      %5061 = vmatpush1.bf16.msra.mxu0 0
      %5062 = vmatprep.subr.bf16.mxu0 0
      %5063 = vmatpush1.bf16.msra.mxu0 0
      %5064 = vmatprep.subr.bf16.mxu0 0
      %5065 = vmatpush1.bf16.msra.mxu0 0
      %5066 = vmatprep.subr.bf16.mxu0 0
      %5067 = vmatpush1.bf16.msra.mxu0 0
      %5068 = vmatprep.subr.bf16.mxu0 0
      %5069 = vmatpush1.bf16.msra.mxu0 0
      %5070 = vmatprep.subr.bf16.mxu0 0
      %5071 = vmatpush1.bf16.msra.mxu0 0
      %5072 = vmatprep.subr.bf16.mxu0 0
      %5073 = vmatpush1.bf16.msra.mxu0 0
      %5074 = vmatprep.subr.bf16.mxu0 0
      %5075 = vmatpush1.bf16.msra.mxu0 0
      %5076 = vmatprep.subr.bf16.mxu0 0
      %5077 = vmatpush1.bf16.msra.mxu0 0
      %5078 = vmatprep.subr.bf16.mxu0 0
      %5079 = vmatpush1.bf16.msra.mxu0 0
      %5080 = vmatprep.subr.bf16.mxu0 0
      %5081 = vmatpush1.bf16.msra.mxu0 0
      %5082 = vmatprep.subr.bf16.mxu0 0
      %5083 = vmatpush1.bf16.msra.mxu0 0
      %5084 = vmatprep.subr.bf16.mxu0 0
      %5085 = vmatpush1.bf16.msra.mxu0 0
      %5086 = vmatprep.mubr.bf16.mxu0 0
      %5087 = vmatmul.mubr.bf16.gmra.mrb[0].mxu0 %v4987
      %v5088 = vpop.f32.mrb[0].mxu0
      %v5089 = vadd.f32 %v4898, %v5088
      %v5090 = vpop.f32.mrb[0].mxu0
      %v5091 = vadd.f32 %v4900, %v5090
      %v5092 = vpop.f32.mrb[0].mxu0
      %v5093 = vpop.f32.mrb[0].mxu0
      %5094 = vdwg.mxu0
      %5095 = vmatprep.subr.bf16.mxu0 %v4700
      %5096 = vmatpush1.bf16.msra.mxu0 %v4699
      %5097 = vmatprep.subr.bf16.mxu0 %v5005
      %5098 = vmatpush1.bf16.msra.mxu0 %v5002
      %5099 = vmatprep.subr.bf16.mxu0 0
      %5100 = vmatpush1.bf16.msra.mxu0 0
      %5101 = vmatprep.subr.bf16.mxu0 0
      %5102 = vmatpush1.bf16.msra.mxu0 0
      %5103 = vmatprep.subr.bf16.mxu0 0
      %5104 = vmatpush1.bf16.msra.mxu0 0
      %5105 = vmatprep.subr.bf16.mxu0 0
      %5106 = vmatpush1.bf16.msra.mxu0 0
      %5107 = vmatprep.subr.bf16.mxu0 0
      %5108 = vmatpush1.bf16.msra.mxu0 0
      %5109 = vmatprep.subr.bf16.mxu0 0
      %5110 = vmatpush1.bf16.msra.mxu0 0
      %5111 = vmatprep.subr.bf16.mxu0 0
      %5112 = vmatpush1.bf16.msra.mxu0 0
      %5113 = vmatprep.subr.bf16.mxu0 0
      %5114 = vmatpush1.bf16.msra.mxu0 0
      %5115 = vmatprep.subr.bf16.mxu0 0
      %5116 = vmatpush1.bf16.msra.mxu0 0
      %5117 = vmatprep.subr.bf16.mxu0 0
      %5118 = vmatpush1.bf16.msra.mxu0 0
      %5119 = vmatprep.subr.bf16.mxu0 0
      %5120 = vmatpush1.bf16.msra.mxu0 0
      %5121 = vmatprep.subr.bf16.mxu0 0
      %5122 = vmatpush1.bf16.msra.mxu0 0
      %5123 = vmatprep.subr.bf16.mxu0 0
      %5124 = vmatpush1.bf16.msra.mxu0 0
      %5125 = vmatprep.subr.bf16.mxu0 0
      %5126 = vmatpush1.bf16.msra.mxu0 0
      %5127 = vmatprep.mubr.bf16.mxu0 0
      %5128 = vmatmul.mubr.bf16.gmra.mrb[0].mxu0 %v4987
      %v5129 = vpop.f32.mrb[0].mxu0
      %v5130 = vadd.f32 %v4939, %v5129
      %v5131 = vpop.f32.mrb[0].mxu0
      %v5132 = vadd.f32 %v4941, %v5131
      %v5133 = vpop.f32.mrb[0].mxu0
      %v5134 = vpop.f32.mrb[0].mxu0
      %5135 = vdwg.mxu0
      %5136 = vmatprep.subr.bf16.mxu0 %v4702
      %5137 = vmatpush1.bf16.msra.mxu0 %v4701
      %5138 = vmatprep.subr.bf16.mxu0 %v5011
      %5139 = vmatpush1.bf16.msra.mxu0 %v5008
      %5140 = vmatprep.subr.bf16.mxu0 0
      %5141 = vmatpush1.bf16.msra.mxu0 0
      %5142 = vmatprep.subr.bf16.mxu0 0
      %5143 = vmatpush1.bf16.msra.mxu0 0
      %5144 = vmatprep.subr.bf16.mxu0 0
      %5145 = vmatpush1.bf16.msra.mxu0 0
      %5146 = vmatprep.subr.bf16.mxu0 0
      %5147 = vmatpush1.bf16.msra.mxu0 0
      %5148 = vmatprep.subr.bf16.mxu0 0
      %5149 = vmatpush1.bf16.msra.mxu0 0
      %5150 = vmatprep.subr.bf16.mxu0 0
      %5151 = vmatpush1.bf16.msra.mxu0 0
      %5152 = vmatprep.subr.bf16.mxu0 0
      %5153 = vmatpush1.bf16.msra.mxu0 0
      %5154 = vmatprep.subr.bf16.mxu0 0
      %5155 = vmatpush1.bf16.msra.mxu0 0
      %5156 = vmatprep.subr.bf16.mxu0 0
      %5157 = vmatpush1.bf16.msra.mxu0 0
      %5158 = vmatprep.subr.bf16.mxu0 0
      %5159 = vmatpush1.bf16.msra.mxu0 0
      %5160 = vmatprep.subr.bf16.mxu0 0
      %5161 = vmatpush1.bf16.msra.mxu0 0
      %5162 = vmatprep.subr.bf16.mxu0 0
      %5163 = vmatpush1.bf16.msra.mxu0 0
      %5164 = vmatprep.subr.bf16.mxu0 0
      %5165 = vmatpush1.bf16.msra.mxu0 0
      %5166 = vmatprep.subr.bf16.mxu0 0
      %5167 = vmatpush1.bf16.msra.mxu0 0
      %5168 = vmatprep.mubr.bf16.mxu0 0
      %5169 = vmatmul.mubr.bf16.gmra.mrb[0].mxu0 %v4987
      %v5170 = vpop.f32.mrb[0].mxu0
      %v5171 = vadd.f32 %v4980, %v5170
      %v5172 = vpop.f32.mrb[0].mxu0
      %v5173 = vadd.f32 %v4982, %v5172
      %v5174 = vpop.f32.mrb[0].mxu0
      %v5175 = vpop.f32.mrb[0].mxu0
      %5176 = vdwg.mxu0
      %5177 = vrot.lane.b32.xlu0 %v4591, 97
      %v5178 = vpop.permute.xlu0 %5177
      %5179 = vrot.lane.b32.xlu0 %v4592, 97
      %v5180 = vpop.permute.xlu0 %5179
      %5181 = vrot.lane.b32.xlu0 %v4593, 97
      %v5182 = vpop.permute.xlu0 %5181
      %5183 = vrot.lane.b32.xlu0 %v4594, 97
      %v5184 = vpop.permute.xlu0 %5183
      %5185 = vrot.lane.b32.xlu0 %v4595, 97
      %v5186 = vpop.permute.xlu0 %5185
      %5187 = vrot.lane.b32.xlu0 %v4596, 97
      %v5188 = vpop.permute.xlu0 %5187
      %5189 = vrot.lane.b32.xlu0 %v4597, 97
      %v5190 = vpop.permute.xlu0 %5189
      %5191 = vrot.lane.b32.xlu0 %v4598, 97
      %v5192 = vpop.permute.xlu0 %5191
      %v5193 = vsel %vm2139, %v5190, %v5192
      %v5194 = vsel %vm2139, %v5188, %v5190
      %v5195 = vsel %vm2139, %v5186, %v5188
      %v5196 = vsel %vm2139, %v5184, %v5186
      %v5197 = vsel %vm2139, %v5182, %v5184
      %v5198 = vsel %vm2139, %v5180, %v5182
      %v5199 = vsel %vm2139, %v5178, %v5180
      %v5200 = vsel %vm2139, %v5192, %v5178
      %v5201 = vmul.f32 %v5199, %v1457
      %v5202 = vmul.f32 %v5198, %v1458
      %v5203 = vmul.f32 %v5197, %v1459
      %v5204 = vmul.f32 %v5196, %v1460
      %v5205 = vmul.f32 %v5195, %v1461
      %v5206 = vmul.f32 %v5194, %v1462
      %v5207 = vmul.f32 %v5193, %v1463
      %v5208 = vmul.f32 %v5200, %v1464
      %5209 = vrot.lane.b32.xlu0 %v4591, 96
      %v5210 = vpop.permute.xlu0 %5209
      %5211 = vrot.lane.b32.xlu0 %v4592, 96
      %v5212 = vpop.permute.xlu0 %5211
      %5213 = vrot.lane.b32.xlu0 %v4593, 96
      %v5214 = vpop.permute.xlu0 %5213
      %5215 = vrot.lane.b32.xlu0 %v4594, 96
      %v5216 = vpop.permute.xlu0 %5215
      %5217 = vrot.lane.b32.xlu0 %v4595, 96
      %v5218 = vpop.permute.xlu0 %5217
      %5219 = vrot.lane.b32.xlu0 %v4596, 96
      %v5220 = vpop.permute.xlu0 %5219
      %5221 = vrot.lane.b32.xlu0 %v4597, 96
      %v5222 = vpop.permute.xlu0 %5221
      %5223 = vrot.lane.b32.xlu0 %v4598, 96
      %v5224 = vpop.permute.xlu0 %5223
      %v5225 = vsel %vm2172, %v5222, %v5224
      %v5226 = vsel %vm2172, %v5220, %v5222
      %v5227 = vsel %vm2172, %v5218, %v5220
      %v5228 = vsel %vm2172, %v5216, %v5218
      %v5229 = vsel %vm2172, %v5214, %v5216
      %v5230 = vsel %vm2172, %v5212, %v5214
      %v5231 = vsel %vm2172, %v5210, %v5212
      %v5232 = vsel %vm2172, %v5224, %v5210
      %v5233 = vmul.f32 %v5231, %v1473
      %v5234 = vmul.f32 %v5230, %v1474
      %v5235 = vmul.f32 %v5229, %v1475
      %v5236 = vmul.f32 %v5228, %v1476
      %v5237 = vmul.f32 %v5227, %v1477
      %v5238 = vmul.f32 %v5226, %v1478
      %v5239 = vmul.f32 %v5225, %v1479
      %v5240 = vmul.f32 %v5232, %v1480
      %5241 = vrot.lane.b32.xlu0 %v4591, 95
      %v5242 = vpop.permute.xlu0 %5241
      %5243 = vrot.lane.b32.xlu0 %v4592, 95
      %v5244 = vpop.permute.xlu0 %5243
      %5245 = vrot.lane.b32.xlu0 %v4593, 95
      %v5246 = vpop.permute.xlu0 %5245
      %5247 = vrot.lane.b32.xlu0 %v4594, 95
      %v5248 = vpop.permute.xlu0 %5247
      %5249 = vrot.lane.b32.xlu0 %v4595, 95
      %v5250 = vpop.permute.xlu0 %5249
      %5251 = vrot.lane.b32.xlu0 %v4596, 95
      %v5252 = vpop.permute.xlu0 %5251
      %5253 = vrot.lane.b32.xlu0 %v4597, 95
      %v5254 = vpop.permute.xlu0 %5253
      %5255 = vrot.lane.b32.xlu0 %v4598, 95
      %v5256 = vpop.permute.xlu0 %5255
      %v5257 = vsel %vm2205, %v5254, %v5256
      %v5258 = vsel %vm2205, %v5252, %v5254
      %v5259 = vsel %vm2205, %v5250, %v5252
      %v5260 = vsel %vm2205, %v5248, %v5250
      %v5261 = vsel %vm2205, %v5246, %v5248
      %v5262 = vsel %vm2205, %v5244, %v5246
      %v5263 = vsel %vm2205, %v5242, %v5244
      %v5264 = vsel %vm2205, %v5256, %v5242
      %v5265 = vmul.f32 %v5263, %v1497
      %v5266 = vmul.f32 %v5262, %v1498
      %v5267 = vmul.f32 %v5261, %v1499
      %v5268 = vmul.f32 %v5260, %v1500
      %v5269 = vmul.f32 %v5259, %v1501
      %v5270 = vmul.f32 %v5258, %v1502
      %v5271 = vmul.f32 %v5257, %v1503
      %v5272 = vmul.f32 %v5264, %v1504
      %v5273 = vpack.c.bf16 %v5233, %v5201
      %v5274 = vpack.c.bf16 %v5234, %v5202
      %v5275 = vpack.c.bf16 %v5235, %v5203
      %v5276 = vpack.c.bf16 %v5236, %v5204
      %v5277 = vpack.c.bf16 %v5237, %v5205
      %v5278 = vpack.c.bf16 %v5238, %v5206
      %v5279 = vpack.c.bf16 %v5239, %v5207
      %v5280 = vpack.c.bf16 %v5240, %v5208
      %v5281 = vpack.c.bf16 %v5265, %v5265
      %v5282 = vpack.c.bf16 %v5266, %v5266
      %v5283 = vpack.c.bf16 %v5267, %v5267
      %v5284 = vpack.c.bf16 %v5268, %v5268
      %v5285 = vpack.c.bf16 %v5269, %v5269
      %v5286 = vpack.c.bf16 %v5270, %v5270
      %v5287 = vpack.c.bf16 %v5271, %v5271
      %v5288 = vpack.c.bf16 %v5272, %v5272
      %s5289 = scalar_lea.vmem %s7, 32
      %v5290 = vld [vmem:[%s5289] sm:$0xf]
      %v5292 = vsel %vm1739, %v5290, 0
      %v5295 = vsel %vm1743, %v5281, 0
      %v5298 = vsel %vm1743, %v5282, 0
      %v5301 = vsel %vm1743, %v5283, 0
      %v5304 = vsel %vm1743, %v5284, 0
      %v5307 = vsel %vm1743, %v5285, 0
      %v5310 = vsel %vm1743, %v5286, 0
      %v5313 = vsel %vm1743, %v5287, 0
      %v5316 = vsel %vm1743, %v5288, 0
      %5318 = vmatprep.subr.bf16.mxu0 %v5274
      %5319 = vmatpush1.bf16.msra.mxu0 %v5273
      %5320 = vmatprep.subr.bf16.mxu0 %v5298
      %5321 = vmatpush1.bf16.msra.mxu0 %v5295
      %5322 = vmatprep.subr.bf16.mxu0 0
      %5323 = vmatpush1.bf16.msra.mxu0 0
      %5324 = vmatprep.subr.bf16.mxu0 0
      %5325 = vmatpush1.bf16.msra.mxu0 0
      %5326 = vmatprep.subr.bf16.mxu0 0
      %5327 = vmatpush1.bf16.msra.mxu0 0
      %5328 = vmatprep.subr.bf16.mxu0 0
      %5329 = vmatpush1.bf16.msra.mxu0 0
      %5330 = vmatprep.subr.bf16.mxu0 0
      %5331 = vmatpush1.bf16.msra.mxu0 0
      %5332 = vmatprep.subr.bf16.mxu0 0
      %5333 = vmatpush1.bf16.msra.mxu0 0
      %5334 = vmatprep.subr.bf16.mxu0 0
      %5335 = vmatpush1.bf16.msra.mxu0 0
      %5336 = vmatprep.subr.bf16.mxu0 0
      %5337 = vmatpush1.bf16.msra.mxu0 0
      %5338 = vmatprep.subr.bf16.mxu0 0
      %5339 = vmatpush1.bf16.msra.mxu0 0
      %5340 = vmatprep.subr.bf16.mxu0 0
      %5341 = vmatpush1.bf16.msra.mxu0 0
      %5342 = vmatprep.subr.bf16.mxu0 0
      %5343 = vmatpush1.bf16.msra.mxu0 0
      %5344 = vmatprep.subr.bf16.mxu0 0
      %5345 = vmatpush1.bf16.msra.mxu0 0
      %5346 = vmatprep.subr.bf16.mxu0 0
      %5347 = vmatpush1.bf16.msra.mxu0 0
      %5348 = vmatprep.subr.bf16.mxu0 0
      %5349 = vmatpush1.bf16.msra.mxu0 0
      %5350 = vmatprep.mubr.bf16.mxu0 0
      %5351 = vmatmul.mubr.bf16.gmra.mrb[0].mxu0 %v5292
      %v5352 = vpop.f32.mrb[0].mxu0
      %v5353 = vadd.f32 0.0, %v5352
      %v5354 = vpop.f32.mrb[0].mxu0
      %v5355 = vadd.f32 0.0, %v5354
      %v5356 = vpop.f32.mrb[0].mxu0
      %v5357 = vpop.f32.mrb[0].mxu0
      %5358 = vdwg.mxu0
      %5359 = vmatprep.subr.bf16.mxu0 %v5276
      %5360 = vmatpush1.bf16.msra.mxu0 %v5275
      %5361 = vmatprep.subr.bf16.mxu0 %v5304
      %5362 = vmatpush1.bf16.msra.mxu0 %v5301
      %5363 = vmatprep.subr.bf16.mxu0 0
      %5364 = vmatpush1.bf16.msra.mxu0 0
      %5365 = vmatprep.subr.bf16.mxu0 0
      %5366 = vmatpush1.bf16.msra.mxu0 0
      %5367 = vmatprep.subr.bf16.mxu0 0
      %5368 = vmatpush1.bf16.msra.mxu0 0
      %5369 = vmatprep.subr.bf16.mxu0 0
      %5370 = vmatpush1.bf16.msra.mxu0 0
      %5371 = vmatprep.subr.bf16.mxu0 0
      %5372 = vmatpush1.bf16.msra.mxu0 0
      %5373 = vmatprep.subr.bf16.mxu0 0
      %5374 = vmatpush1.bf16.msra.mxu0 0
      %5375 = vmatprep.subr.bf16.mxu0 0
      %5376 = vmatpush1.bf16.msra.mxu0 0
      %5377 = vmatprep.subr.bf16.mxu0 0
      %5378 = vmatpush1.bf16.msra.mxu0 0
      %5379 = vmatprep.subr.bf16.mxu0 0
      %5380 = vmatpush1.bf16.msra.mxu0 0
      %5381 = vmatprep.subr.bf16.mxu0 0
      %5382 = vmatpush1.bf16.msra.mxu0 0
      %5383 = vmatprep.subr.bf16.mxu0 0
      %5384 = vmatpush1.bf16.msra.mxu0 0
      %5385 = vmatprep.subr.bf16.mxu0 0
      %5386 = vmatpush1.bf16.msra.mxu0 0
      %5387 = vmatprep.subr.bf16.mxu0 0
      %5388 = vmatpush1.bf16.msra.mxu0 0
      %5389 = vmatprep.subr.bf16.mxu0 0
      %5390 = vmatpush1.bf16.msra.mxu0 0
      %5391 = vmatprep.mubr.bf16.mxu0 0
      %5392 = vmatmul.mubr.bf16.gmra.mrb[0].mxu0 %v5292
      %v5393 = vpop.f32.mrb[0].mxu0
      %v5394 = vadd.f32 0.0, %v5393
      %v5395 = vpop.f32.mrb[0].mxu0
      %v5396 = vadd.f32 0.0, %v5395
      %v5397 = vpop.f32.mrb[0].mxu0
      %v5398 = vpop.f32.mrb[0].mxu0
      %5399 = vdwg.mxu0
      %5400 = vmatprep.subr.bf16.mxu0 %v5278
      %5401 = vmatpush1.bf16.msra.mxu0 %v5277
      %5402 = vmatprep.subr.bf16.mxu0 %v5310
      %5403 = vmatpush1.bf16.msra.mxu0 %v5307
      %5404 = vmatprep.subr.bf16.mxu0 0
      %5405 = vmatpush1.bf16.msra.mxu0 0
      %5406 = vmatprep.subr.bf16.mxu0 0
      %5407 = vmatpush1.bf16.msra.mxu0 0
      %5408 = vmatprep.subr.bf16.mxu0 0
      %5409 = vmatpush1.bf16.msra.mxu0 0
      %5410 = vmatprep.subr.bf16.mxu0 0
      %5411 = vmatpush1.bf16.msra.mxu0 0
      %5412 = vmatprep.subr.bf16.mxu0 0
      %5413 = vmatpush1.bf16.msra.mxu0 0
      %5414 = vmatprep.subr.bf16.mxu0 0
      %5415 = vmatpush1.bf16.msra.mxu0 0
      %5416 = vmatprep.subr.bf16.mxu0 0
      %5417 = vmatpush1.bf16.msra.mxu0 0
      %5418 = vmatprep.subr.bf16.mxu0 0
      %5419 = vmatpush1.bf16.msra.mxu0 0
      %5420 = vmatprep.subr.bf16.mxu0 0
      %5421 = vmatpush1.bf16.msra.mxu0 0
      %5422 = vmatprep.subr.bf16.mxu0 0
      %5423 = vmatpush1.bf16.msra.mxu0 0
      %5424 = vmatprep.subr.bf16.mxu0 0
      %5425 = vmatpush1.bf16.msra.mxu0 0
      %5426 = vmatprep.subr.bf16.mxu0 0
      %5427 = vmatpush1.bf16.msra.mxu0 0
      %5428 = vmatprep.subr.bf16.mxu0 0
      %5429 = vmatpush1.bf16.msra.mxu0 0
      %5430 = vmatprep.subr.bf16.mxu0 0
      %5431 = vmatpush1.bf16.msra.mxu0 0
      %5432 = vmatprep.mubr.bf16.mxu0 0
      %5433 = vmatmul.mubr.bf16.gmra.mrb[0].mxu0 %v5292
      %v5434 = vpop.f32.mrb[0].mxu0
      %v5435 = vadd.f32 0.0, %v5434
      %v5436 = vpop.f32.mrb[0].mxu0
      %v5437 = vadd.f32 0.0, %v5436
      %v5438 = vpop.f32.mrb[0].mxu0
      %v5439 = vpop.f32.mrb[0].mxu0
      %5440 = vdwg.mxu0
      %5441 = vmatprep.subr.bf16.mxu0 %v5280
      %5442 = vmatpush1.bf16.msra.mxu0 %v5279
      %5443 = vmatprep.subr.bf16.mxu0 %v5316
      %5444 = vmatpush1.bf16.msra.mxu0 %v5313
      %5445 = vmatprep.subr.bf16.mxu0 0
      %5446 = vmatpush1.bf16.msra.mxu0 0
      %5447 = vmatprep.subr.bf16.mxu0 0
      %5448 = vmatpush1.bf16.msra.mxu0 0
      %5449 = vmatprep.subr.bf16.mxu0 0
      %5450 = vmatpush1.bf16.msra.mxu0 0
      %5451 = vmatprep.subr.bf16.mxu0 0
      %5452 = vmatpush1.bf16.msra.mxu0 0
      %5453 = vmatprep.subr.bf16.mxu0 0
      %5454 = vmatpush1.bf16.msra.mxu0 0
      %5455 = vmatprep.subr.bf16.mxu0 0
      %5456 = vmatpush1.bf16.msra.mxu0 0
      %5457 = vmatprep.subr.bf16.mxu0 0
      %5458 = vmatpush1.bf16.msra.mxu0 0
      %5459 = vmatprep.subr.bf16.mxu0 0
      %5460 = vmatpush1.bf16.msra.mxu0 0
      %5461 = vmatprep.subr.bf16.mxu0 0
      %5462 = vmatpush1.bf16.msra.mxu0 0
      %5463 = vmatprep.subr.bf16.mxu0 0
      %5464 = vmatpush1.bf16.msra.mxu0 0
      %5465 = vmatprep.subr.bf16.mxu0 0
      %5466 = vmatpush1.bf16.msra.mxu0 0
      %5467 = vmatprep.subr.bf16.mxu0 0
      %5468 = vmatpush1.bf16.msra.mxu0 0
      %5469 = vmatprep.subr.bf16.mxu0 0
      %5470 = vmatpush1.bf16.msra.mxu0 0
      %5471 = vmatprep.subr.bf16.mxu0 0
      %5472 = vmatpush1.bf16.msra.mxu0 0
      %5473 = vmatprep.mubr.bf16.mxu0 0
      %5474 = vmatmul.mubr.bf16.gmra.mrb[0].mxu0 %v5292
      %v5475 = vpop.f32.mrb[0].mxu0
      %v5476 = vadd.f32 0.0, %v5475
      %v5477 = vpop.f32.mrb[0].mxu0
      %v5478 = vadd.f32 0.0, %v5477
      %v5479 = vpop.f32.mrb[0].mxu0
      %v5480 = vpop.f32.mrb[0].mxu0
      %5481 = vdwg.mxu0
      %v5482 = vadd.f32 %v5048, %v5353
      %v5483 = vadd.f32 %v5050, %v5355
      %v5484 = vadd.f32 %v5089, %v5394
      %v5485 = vadd.f32 %v5091, %v5396
      %v5486 = vadd.f32 %v5130, %v5435
      %v5487 = vadd.f32 %v5132, %v5437
      %v5488 = vadd.f32 %v5171, %v5476
      %v5489 = vadd.f32 %v5173, %v5478
      %5490 = vset.pattern.permute.xlu0 11
      %5491 = vperm.xlu0 %5490, %v1505
      %v5492 = vpop.permute.xlu0 %5491
      %v5494 = vadd.f32 %v5482, %v5492
      %v5495 = vadd.f32 %v5483, %v5492
      %v5496 = vadd.f32 %v5484, %v5492
      %v5497 = vadd.f32 %v5485, %v5492
      %v5498 = vadd.f32 %v5486, %v5492
      %v5499 = vadd.f32 %v5487, %v5492
      %v5500 = vadd.f32 %v5488, %v5492
      %v5501 = vadd.f32 %v5489, %v5492
      %v5502 = vadd.f32 %v3624, %v5494
      %v5503 = vadd.f32 %v3625, %v5495
      %v5504 = vadd.f32 %v3626, %v5496
      %v5505 = vadd.f32 %v3627, %v5497
      %v5506 = vadd.f32 %v3628, %v5498
      %v5507 = vadd.f32 %v3629, %v5499
      %v5508 = vadd.f32 %v3630, %v5500
      %v5509 = vadd.f32 %v3631, %v5501
      %v5510 = vpack.c.bf16 %v5502, %v5502
      %v5511 = vpack.c.bf16 %v5503, %v5503
      %v5512 = vpack.c.bf16 %v5504, %v5504
      %v5513 = vpack.c.bf16 %v5505, %v5505
      %v5514 = vpack.c.bf16 %v5506, %v5506
      %v5515 = vpack.c.bf16 %v5507, %v5507
      %v5516 = vpack.c.bf16 %v5508, %v5508
      %v5517 = vpack.c.bf16 %v5509, %v5509
      %v5526 = vunpack.c.l.b16 %v5510
      %v5527 = vunpack.c.l.b16 %v5511
      %v5528 = vunpack.c.l.b16 %v5512
      %v5529 = vunpack.c.l.b16 %v5513
      %v5530 = vunpack.c.l.b16 %v5514
      %v5531 = vunpack.c.l.b16 %v5515
      %v5532 = vunpack.c.l.b16 %v5516
      %v5533 = vunpack.c.l.b16 %v5517
      %v5534 = vpack.c.b16 %v5527, %v5526
      %v5535 = vpack.c.b16 %v5529, %v5528
      %v5536 = vpack.c.b16 %v5531, %v5530
      %v5537 = vpack.c.b16 %v5533, %v5532
      %5542 = vst [vmem:[%s342] sm:$0xff] %v5534
      %5543 = vst [vmem:[%s342 + $0x8] sm:$0xff] %v5535
      %5544 = vst [vmem:[%s342 + $0x10] sm:$0xff] %v5536
      %5545 = vst [vmem:[%s342 + $0x18] sm:$0xff] %v5537
      %p5546 = scmp.lt.s32.totalorder %s19, 1
      %s5547 = scalar_select %p5546, %s19, 1
      %s5548 = smul.addr %s5547, 8
      %s5549 = smul.addr %s5548, 4
      %s5550 = scalar_lea.vmem %s8, %s5549
      // Predicated region
      $region53: #{upsample_forward.3} parent=51 // pred_check
        %p5551 = pneg %p220
      $region54: #{upsample_forward.3} parent=51 // pred_check_branch
        %5553 = sbr.rel (%p5551) target = $region56
      $region55: #{upsample_forward.3} parent=51 // pred_region
        _
      $region56: #{upsample_forward.3} parent=51 // pred_fallthru
        _
    $region52: #{upsample_forward.3} parent=5 // pred_fallthru
      _
    %p5554 = scmp.le.s32.totalorder 2, %s14
    // Predicated region
    $region57: #{upsample_forward.3} parent=5 // pred_check
      %p5555 = pneg %p5554
    $region58: #{upsample_forward.3} parent=5 // pred_check_branch
      %5557 = sbr.rel (%p5555) target = $region60
    $region59: #{upsample_forward.3} parent=5 // pred_region
      %s5558 = ssub.s32 %s14, 2
      // Predicated region
      $region61: #{upsample_forward.3} parent=59 // pred_check
        %p5559 = pneg %p226
      $region62: #{upsample_forward.3} parent=59 // pred_check_branch
        %5561 = sbr.rel (%p5559) target = $region64
      $region63: #{upsample_forward.3} parent=59 // pred_region
        %p5562 = scmp.lt.s32.totalorder %s20, 1
        %s5563 = scalar_select %p5562, %s20, 1
        %s5564 = smul.addr %s5563, 8
        %s5565 = smul.addr %s5564, 4
        %s5566 = scalar_lea.vmem %s8, %s5565
      $region64: #{upsample_forward.3} parent=59 // pred_fallthru
        _
    $region60: #{upsample_forward.3} parent=5 // pred_fallthru
      _
  $region6: #{upsample_forward.3} parent=0 // loop_footer
    %s18 = sadd.s32 1, %s14
  $region7: #{upsample_forward.3} parent=0 // loop_footer_branch
    %13 = sbr.rel target = $region3
  $region8: #{upsample_forward.3} parent=0 // loop_exit
    _

</llo_original>
